<compile_context>
chip_gen: v7x
topology: tpu7x:2x2x1
jax: 0.10.0
libtpu: 0.0.40
codegen_flags: <defaults>
</compile_context>

<pallas_src>
import functools

import jax
import jax.numpy as jnp
from jax import lax
from jax.experimental import pallas as pl
from jax.experimental.pallas import tpu as pltpu

NUM_INPUTS_1 = 3072
NUM_OUTPUTS_1 = 1024
NUM_OUTPUTS_2 = 256
NUM_OUTPUTS_3 = 17
N3_PAD = 128                          # lane-pad 17-wide layer-3 for dense MXU/stores
VMEM_LIMIT_BYTES = 48 * 1024 * 1024   # safely below v7x's 64 MiB physical VMEM


# --------------------------------------------------------------------------
# Kernels
# --------------------------------------------------------------------------
def _mlp_logits(x_ref, w1_ref, b1_ref, w2_ref, b2_ref, w3_ref, b3_ref):
    """Shared 3-layer MLP body. bf16 MXU operands, f32 accumulation. -> (rows, 128)."""
    z1 = jnp.dot(x_ref[...].astype(jnp.bfloat16), w1_ref[...],
                 preferred_element_type=jnp.float32) + b1_ref[...]
    z1 = jnp.maximum(z1, 0.0)
    z2 = jnp.dot(z1.astype(jnp.bfloat16), w2_ref[...],
                 preferred_element_type=jnp.float32) + b2_ref[...]
    z2 = jnp.maximum(z2, 0.0)
    return jnp.dot(z2.astype(jnp.bfloat16), w3_ref[...],
                   preferred_element_type=jnp.float32) + b3_ref[...]


def fused_mlp_logsoftmax_kernel(x_ref, w1_ref, b1_ref, w2_ref, b2_ref,
                                w3_ref, b3_ref, o_ref):
    """batch <= tm: whole batch in one tile -> fuse the axis-0 log_softmax."""
    logits = _mlp_logits(x_ref, w1_ref, b1_ref, w2_ref, b2_ref, w3_ref, b3_ref)
    m = jnp.max(logits, axis=0, keepdims=True)
    shifted = logits - m
    lse = jnp.log(jnp.sum(jnp.exp(shifted), axis=0, keepdims=True))
    o_ref[...] = (shifted - lse)[:, :NUM_OUTPUTS_3]


def mlp_logits_kernel(x_ref, w1_ref, b1_ref, w2_ref, b2_ref, w3_ref, b3_ref,
                      logits_ref):
    """batch > tm, pass 1: raw (tm, 128) lane-dense logits per batch tile."""
    logits_ref[...] = _mlp_logits(x_ref, w1_ref, b1_ref, w2_ref, b2_ref,
                                  w3_ref, b3_ref)


def softmax_stats_kernel(logits_ref, lse_ref, m_sc, l_sc, *, batch, tm):
    """Pass 2a: online (max, sum-exp) reduction over batch tiles -> lse (1, 128)."""
    i = pl.program_id(0)

    @pl.when(i == 0)
    def _():
        m_sc[...] = jnp.full_like(m_sc, -jnp.inf)
        l_sc[...] = jnp.zeros_like(l_sc)

    x = logits_ref[...]                                        # (tm, 128) f32
    # Mask rows past the real batch (ragged last tile) to -inf so they cannot
    # contaminate the axis-0 reduction.
    row = lax.broadcasted_iota(jnp.int32, x.shape, 0) + i * tm
    x = jnp.where(row < batch, x, -jnp.inf)

    m_prev = m_sc[...]
    m_new = jnp.maximum(m_prev, jnp.max(x, axis=0, keepdims=True))
    alpha = jnp.exp(m_prev - m_new)
    l_sc[...] = alpha * l_sc[...] + jnp.sum(jnp.exp(x - m_new), axis=0,
                                            keepdims=True)
    m_sc[...] = m_new

    @pl.when(i == pl.num_programs(0) - 1)
    def _():
        lse_ref[...] = m_sc[...] + jnp.log(l_sc[...])


def softmax_apply_kernel(logits_ref, lse_ref, o_ref):
    """Pass 2b: out = logits - lse, sliced to the real 17 outputs."""
    o_ref[...] = logits_ref[...][:, :NUM_OUTPUTS_3] - lse_ref[...][:, :NUM_OUTPUTS_3]


# --------------------------------------------------------------------------
# Wrapper
# --------------------------------------------------------------------------
def net_forward(x, w1, b1, w2, b2, w3, b3, *, tm=512):
    """Forward pass. Weights are bf16; w3/b3 are lane-padded to 128 cols."""
    x2 = x.reshape(-1, NUM_INPUTS_1).astype(jnp.float32)
    batch = x2.shape[0]
    weights = (w1, b1, w2, b2, w3, b3)

    def resident(shape):
        # Constant block index -> VMEM-resident across the grid (fetched once).
        return pl.BlockSpec(shape, lambda i: (0, 0))

    weight_specs = [
        resident((NUM_INPUTS_1, NUM_OUTPUTS_1)),     # W1 (bf16, 6 MiB, resident)
        resident((1, NUM_OUTPUTS_1)),                # b1
        resident((NUM_OUTPUTS_1, NUM_OUTPUTS_2)),    # W2
        resident((1, NUM_OUTPUTS_2)),                # b2
        resident((NUM_OUTPUTS_2, N3_PAD)),           # W3 (lane-padded)
        resident((1, N3_PAD)),                       # b3 (lane-padded)
    ]

    # ---------------- small batch: single fused kernel ----------------
    if batch <= tm:
        return pl.pallas_call(
            fused_mlp_logsoftmax_kernel,
            out_shape=jax.ShapeDtypeStruct((batch, NUM_OUTPUTS_3), jnp.float32),
            grid_spec=pltpu.PrefetchScalarGridSpec(
                num_scalar_prefetch=0,
                grid=(1,),
                in_specs=[pl.BlockSpec((batch, NUM_INPUTS_1),
                                       lambda i: (0, 0))] + weight_specs,
                out_specs=pl.BlockSpec((batch, NUM_OUTPUTS_3), lambda i: (0, 0)),
            ),
            compiler_params=pltpu.CompilerParams(
                dimension_semantics=("arbitrary",),
                vmem_limit_bytes=VMEM_LIMIT_BYTES,
            ),
        )(x2, *weights)

    # ---------------- large batch: tiled two-pass path ----------------
    n_tiles = pl.cdiv(batch, tm)   # ragged last tile handled by Pallas masking

    # Pass 1: per-batch-tile MLP -> lane-dense (batch, 128) f32 logits.
    logits = pl.pallas_call(
        mlp_logits_kernel,
        out_shape=jax.ShapeDtypeStruct((batch, N3_PAD), jnp.float32),
        grid_spec=pltpu.PrefetchScalarGridSpec(
            num_scalar_prefetch=0,
            grid=(n_tiles,),
            in_specs=[pl.BlockSpec((tm, NUM_INPUTS_1),
                                   lambda i: (i, 0))] + weight_specs,
            out_specs=pl.BlockSpec((tm, N3_PAD), lambda i: (i, 0)),
        ),
        compiler_params=pltpu.CompilerParams(
            dimension_semantics=("parallel",),
            vmem_limit_bytes=VMEM_LIMIT_BYTES,
        ),
    )(x2, *weights)

    # Pass 2a: tiled online cross-batch-tile (max, sum-exp) -> lse (1, 128).
    lse = pl.pallas_call(
        functools.partial(softmax_stats_kernel, batch=batch, tm=tm),
        out_shape=jax.ShapeDtypeStruct((1, N3_PAD), jnp.float32),
        grid_spec=pltpu.PrefetchScalarGridSpec(
            num_scalar_prefetch=0,
            grid=(n_tiles,),
            in_specs=[pl.BlockSpec((tm, N3_PAD), lambda i: (i, 0))],
            out_specs=pl.BlockSpec((1, N3_PAD), lambda i: (0, 0)),
            scratch_shapes=[pltpu.VMEM((1, N3_PAD), jnp.float32),
                            pltpu.VMEM((1, N3_PAD), jnp.float32)],
        ),
        compiler_params=pltpu.CompilerParams(
            dimension_semantics=("arbitrary",),
            vmem_limit_bytes=VMEM_LIMIT_BYTES,
        ),
    )(logits)

    # Pass 2b: elementwise apply, writing the final (batch, 17) directly.
    return pl.pallas_call(
        softmax_apply_kernel,
        out_shape=jax.ShapeDtypeStruct((batch, NUM_OUTPUTS_3), jnp.float32),
        grid_spec=pltpu.PrefetchScalarGridSpec(
            num_scalar_prefetch=0,
            grid=(n_tiles,),
            in_specs=[pl.BlockSpec((tm, N3_PAD), lambda i: (i, 0)),
                      pl.BlockSpec((1, N3_PAD), lambda i: (0, 0))],
            out_specs=pl.BlockSpec((tm, NUM_OUTPUTS_3), lambda i: (i, 0)),
        ),
        compiler_params=pltpu.CompilerParams(
            dimension_semantics=("parallel",),
            vmem_limit_bytes=VMEM_LIMIT_BYTES,
        ),
    )(logits, lse)


# --------------------------------------------------------------------------
# Params / reference / test
# --------------------------------------------------------------------------
def init_params(key):
    """Deterministic init mimicking nn.Linear's U(-1/sqrt(fan_in), 1/sqrt(fan_in))."""
    ks = jax.random.split(key, 6)

    def linear(kw, kb, fan_in, fan_out):
        bound = 1.0 / jnp.sqrt(jnp.float32(fan_in))
        w = jax.random.uniform(kw, (fan_in, fan_out), jnp.float32, -bound, bound)
        b = jax.random.uniform(kb, (1, fan_out), jnp.float32, -bound, bound)
        return w, b

    w1, b1 = linear(ks[0], ks[1], NUM_INPUTS_1, NUM_OUTPUTS_1)
    w2, b2 = linear(ks[2], ks[3], NUM_OUTPUTS_1, NUM_OUTPUTS_2)
    w3, b3 = linear(ks[4], ks[5], NUM_OUTPUTS_2, NUM_OUTPUTS_3)
    return w1, b1, w2, b2, w3, b3


def prepare_params(w1, b1, w2, b2, w3, b3):
    """Store weights as bf16 (halves HBM streaming) and lane-pad layer 3."""
    pad = ((0, 0), (0, N3_PAD - NUM_OUTPUTS_3))
    return (w1.astype(jnp.bfloat16), b1,
            w2.astype(jnp.bfloat16), b2,
            jnp.pad(w3, pad).astype(jnp.bfloat16),
            jnp.pad(b3, pad))


def reference_forward(x, w1, b1, w2, b2, w3, b3):
    """Pure-JAX reference with the same bf16-weight / bf16-MXU-operand
    quantization as the kernel (f32 accumulation and elementwise math)."""
    bf = jnp.bfloat16
    x2 = x.reshape(-1, NUM_INPUTS_1).astype(jnp.float32)
    z1 = jnp.dot(x2.astype(bf), w1.astype(bf),
                 preferred_element_type=jnp.float32) + b1
    z1 = jnp.maximum(z1, 0.0)
    z2 = jnp.dot(z1.astype(bf), w2.astype(bf),
                 preferred_element_type=jnp.float32) + b2
    z2 = jnp.maximum(z2, 0.0)
    logits = jnp.dot(z2.astype(bf), w3.astype(bf),
                     preferred_element_type=jnp.float32) + b3
    return jax.nn.log_softmax(logits, axis=0)


if __name__ == "__main__":
    key = jax.random.PRNGKey(0)
    kx, kx2, kp = jax.random.split(key, 3)

    raw_params = init_params(kp)
    params = prepare_params(*raw_params)   # bf16 weights, lane-padded layer 3

    # ---- small-batch (fused single-kernel) path: batch=2, 3*32*32 = 3072 ----
    x = jax.random.normal(kx, (2, 3, 32, 32), dtype=jnp.float32)
    out = jax.jit(net_forward)(x, *params)
    out = jax.block_until_ready(out)
    ref = reference_forward(x, *raw_params)
    assert out.shape == (2, NUM_OUTPUTS_3)
    assert jnp.allclose(out, ref, atol=2e-3, rtol=2e-3), float(
        jnp.max(jnp.abs(out - ref)))

    # ---- multi-tile (pass 1 + tiled axis-0 log_softmax) path with a ragged
    #      last batch tile: batch=30, tm forced to 16 to exercise the grid.
    x_big = jax.random.normal(kx2, (30, 3, 32, 32), dtype=jnp.float32)
    fwd_tiled = jax.jit(functools.partial(net_forward, tm=16))
    out_big = jax.block_until_ready(fwd_tiled(x_big, *params))
    ref_big = reference_forward(x_big, *raw_params)
    assert out_big.shape == (30, NUM_OUTPUTS_3)
    assert jnp.allclose(out_big, ref_big, atol=2e-3, rtol=2e-3), float(
        jnp.max(jnp.abs(out_big - ref_big)))

    print("KERNEL_OK")
</pallas_src>

<mosaic_0001>
module attributes {stable_mosaic.version = 11 : i64} {
  func.func @fused_mlp_logsoftmax_kernel(%arg0: i32, %arg1: memref<2x3072xf32, #tpu.memory_space<vmem>>, %arg2: memref<3072x1024xbf16, #tpu.memory_space<vmem>>, %arg3: memref<1x1024xf32, #tpu.memory_space<vmem>>, %arg4: memref<1024x256xbf16, #tpu.memory_space<vmem>>, %arg5: memref<1x256xf32, #tpu.memory_space<vmem>>, %arg6: memref<256x128xbf16, #tpu.memory_space<vmem>>, %arg7: memref<1x128xf32, #tpu.memory_space<vmem>>, %arg8: memref<2x17xf32, #tpu.memory_space<vmem>>) attributes {dimension_semantics = [#tpu.dimension_semantics<arbitrary>], iteration_bounds = array<i64: 1>, scalar_prefetch = 0 : i64, scratch_operands = 0 : i64, tpu.core_type = #tpu.core_type<tc>, window_params = [{pipeline_mode = #tpu.pipeline_mode<synchronous>, transform_indices = @transform_0, window_bounds = array<i64: 2, 3072>}, {pipeline_mode = #tpu.pipeline_mode<synchronous>, transform_indices = @transform_1, window_bounds = array<i64: 3072, 1024>}, {pipeline_mode = #tpu.pipeline_mode<synchronous>, transform_indices = @transform_2, window_bounds = array<i64: 1, 1024>}, {pipeline_mode = #tpu.pipeline_mode<synchronous>, transform_indices = @transform_3, window_bounds = array<i64: 1024, 256>}, {pipeline_mode = #tpu.pipeline_mode<synchronous>, transform_indices = @transform_4, window_bounds = array<i64: 1, 256>}, {pipeline_mode = #tpu.pipeline_mode<synchronous>, transform_indices = @transform_5, window_bounds = array<i64: 256, 128>}, {pipeline_mode = #tpu.pipeline_mode<synchronous>, transform_indices = @transform_6, window_bounds = array<i64: 1, 128>}, {pipeline_mode = #tpu.pipeline_mode<synchronous>, transform_indices = @transform_7, window_bounds = array<i64: 2, 17>}]} {
    %c0 = arith.constant 0 : index
    %c0_0 = arith.constant 0 : index
    %0 = vector.load %arg1[%c0, %c0_0] : memref<2x3072xf32, #tpu.memory_space<vmem>>, vector<2x3072xf32>
    %1 = arith.truncf %0 : vector<2x3072xf32> to vector<2x3072xbf16>
    %c0_1 = arith.constant 0 : index
    %c0_2 = arith.constant 0 : index
    %2 = vector.load %arg2[%c0_1, %c0_2] : memref<3072x1024xbf16, #tpu.memory_space<vmem>>, vector<3072x1024xbf16>
    %cst = arith.constant dense<0.000000e+00> : vector<2x1024xf32>
    %3 = tpu.matmul %1, %2, %cst {dimension_numbers = #tpu.dot_dimension_numbers<[1], [0], [0], [1], [0, 0, 1, 1], [], []>} : vector<2x3072xbf16>, vector<3072x1024xbf16>, vector<2x1024xf32> -> vector<2x1024xf32>
    %c0_3 = arith.constant 0 : index
    %c0_4 = arith.constant 0 : index
    %4 = vector.load %arg3[%c0_3, %c0_4] : memref<1x1024xf32, #tpu.memory_space<vmem>>, vector<1x1024xf32>
    %5 = vector.broadcast %4 : vector<1x1024xf32> to vector<2x1024xf32>
    %6 = arith.addf %3, %5 : vector<2x1024xf32>
    %cst_5 = arith.constant 0.000000e+00 : f32
    %7 = vector.broadcast %cst_5 : f32 to vector<2x1024xf32>
    %8 = arith.maximumf %6, %7 : vector<2x1024xf32>
    %9 = arith.truncf %8 : vector<2x1024xf32> to vector<2x1024xbf16>
    %c0_6 = arith.constant 0 : index
    %c0_7 = arith.constant 0 : index
    %10 = vector.load %arg4[%c0_6, %c0_7] : memref<1024x256xbf16, #tpu.memory_space<vmem>>, vector<1024x256xbf16>
    %cst_8 = arith.constant dense<0.000000e+00> : vector<2x256xf32>
    %11 = tpu.matmul %9, %10, %cst_8 {dimension_numbers = #tpu.dot_dimension_numbers<[1], [0], [0], [1], [0, 0, 1, 1], [], []>} : vector<2x1024xbf16>, vector<1024x256xbf16>, vector<2x256xf32> -> vector<2x256xf32>
    %c0_9 = arith.constant 0 : index
    %c0_10 = arith.constant 0 : index
    %12 = vector.load %arg5[%c0_9, %c0_10] : memref<1x256xf32, #tpu.memory_space<vmem>>, vector<1x256xf32>
    %13 = vector.broadcast %12 : vector<1x256xf32> to vector<2x256xf32>
    %14 = arith.addf %11, %13 : vector<2x256xf32>
    %cst_11 = arith.constant 0.000000e+00 : f32
    %15 = vector.broadcast %cst_11 : f32 to vector<2x256xf32>
    %16 = arith.maximumf %14, %15 : vector<2x256xf32>
    %17 = arith.truncf %16 : vector<2x256xf32> to vector<2x256xbf16>
    %c0_12 = arith.constant 0 : index
    %c0_13 = arith.constant 0 : index
    %18 = vector.load %arg6[%c0_12, %c0_13] : memref<256x128xbf16, #tpu.memory_space<vmem>>, vector<256x128xbf16>
    %cst_14 = arith.constant dense<0.000000e+00> : vector<2x128xf32>
    %19 = tpu.matmul %17, %18, %cst_14 {dimension_numbers = #tpu.dot_dimension_numbers<[1], [0], [0], [1], [0, 0, 1, 1], [], []>} : vector<2x256xbf16>, vector<256x128xbf16>, vector<2x128xf32> -> vector<2x128xf32>
    %c0_15 = arith.constant 0 : index
    %c0_16 = arith.constant 0 : index
    %20 = vector.load %arg7[%c0_15, %c0_16] : memref<1x128xf32, #tpu.memory_space<vmem>>, vector<1x128xf32>
    %21 = vector.broadcast %20 : vector<1x128xf32> to vector<2x128xf32>
    %22 = arith.addf %19, %21 : vector<2x128xf32>
    %cst_17 = arith.constant dense<0xFF800000> : vector<128xf32>
    %23 = vector.multi_reduction <maximumf>, %22, %cst_17 [0] : vector<2x128xf32> to vector<128xf32>
    %24 = vector.shape_cast %23 : vector<128xf32> to vector<1x128xf32>
    %25 = vector.broadcast %24 : vector<1x128xf32> to vector<2x128xf32>
    %26 = arith.subf %22, %25 : vector<2x128xf32>
    %27 = math.exp %26 : vector<2x128xf32>
    %cst_18 = arith.constant dense<0.000000e+00> : vector<128xf32>
    %28 = vector.multi_reduction <add>, %27, %cst_18 [0] : vector<2x128xf32> to vector<128xf32>
    %29 = vector.shape_cast %28 : vector<128xf32> to vector<1x128xf32>
    %30 = math.log %29 : vector<1x128xf32>
    %31 = vector.broadcast %30 : vector<1x128xf32> to vector<2x128xf32>
    %32 = arith.subf %26, %31 : vector<2x128xf32>
    %33 = vector.extract_strided_slice %32 {offsets = [0, 0], sizes = [2, 17], strides = [1, 1]} : vector<2x128xf32> to vector<2x17xf32>
    %c0_19 = arith.constant 0 : index
    %c0_20 = arith.constant 0 : index
    %34 = vector.load %arg8[%c0_19, %c0_20] : memref<2x17xf32, #tpu.memory_space<vmem>>, vector<2x17xf32>
    tpu.vector_store %arg8[%c0_19, %c0_20], %33 {strides = array<i32>} : memref<2x17xf32, #tpu.memory_space<vmem>>, vector<2x17xf32>,
    return
  }
  func.func @transform_0(%arg0: i32) -> (i32, i32) {
    %c0_i32 = arith.constant 0 : i32
    %c0_i32_0 = arith.constant 0 : i32
    %c0_i32_1 = arith.constant 0 : i32
    return %c0_i32, %c0_i32_0 : i32, i32
  }
  func.func @transform_1(%arg0: i32) -> (i32, i32) {
    %c0_i32 = arith.constant 0 : i32
    %c0_i32_0 = arith.constant 0 : i32
    %c0_i32_1 = arith.constant 0 : i32
    return %c0_i32, %c0_i32_0 : i32, i32
  }
  func.func @transform_2(%arg0: i32) -> (i32, i32) {
    %c0_i32 = arith.constant 0 : i32
    %c0_i32_0 = arith.constant 0 : i32
    %c0_i32_1 = arith.constant 0 : i32
    return %c0_i32, %c0_i32_0 : i32, i32
  }
  func.func @transform_3(%arg0: i32) -> (i32, i32) {
    %c0_i32 = arith.constant 0 : i32
    %c0_i32_0 = arith.constant 0 : i32
    %c0_i32_1 = arith.constant 0 : i32
    return %c0_i32, %c0_i32_0 : i32, i32
  }
  func.func @transform_4(%arg0: i32) -> (i32, i32) {
    %c0_i32 = arith.constant 0 : i32
    %c0_i32_0 = arith.constant 0 : i32
    %c0_i32_1 = arith.constant 0 : i32
    return %c0_i32, %c0_i32_0 : i32, i32
  }
  func.func @transform_5(%arg0: i32) -> (i32, i32) {
    %c0_i32 = arith.constant 0 : i32
    %c0_i32_0 = arith.constant 0 : i32
    %c0_i32_1 = arith.constant 0 : i32
    return %c0_i32, %c0_i32_0 : i32, i32
  }
  func.func @transform_6(%arg0: i32) -> (i32, i32) {
    %c0_i32 = arith.constant 0 : i32
    %c0_i32_0 = arith.constant 0 : i32
    %c0_i32_1 = arith.constant 0 : i32
    return %c0_i32, %c0_i32_0 : i32, i32
  }
  func.func @transform_7(%arg0: i32) -> (i32, i32) {
    %c0_i32 = arith.constant 0 : i32
    %c0_i32_0 = arith.constant 0 : i32
    %c0_i32_1 = arith.constant 0 : i32
    return %c0_i32, %c0_i32_0 : i32, i32
  }
}

</mosaic_0001>

<llo_original>
// kernel: net_forward.1
$region0: #{net_forward.1}
  #allocation0 [shape = 'u32[]', space=smem, size = 0x4, offset = 0x4, fixed_abs, tag = 'smem constant byte address 0x4 - core index']
  #allocation1 [shape = 'u32[144,128]{1,0:T(1,128)}', space=vmem, size = 0x12000, scoped, tag = 'internal scratch']
  %s0 = inlined_call_operand.vmem [shape: f32[2,3072], index: 0, kind: input, shape index: {}]
  %s1 = inlined_call_operand.hbm [shape: bf16[3072,1024], index: 1, kind: input, shape index: {}]
  %s2 = inlined_call_operand.hbm [shape: f32[1,1024], index: 2, kind: input, shape index: {}]
  %s3 = inlined_call_operand.hbm [shape: bf16[1024,256], index: 3, kind: input, shape index: {}]
  %s4 = inlined_call_operand.hbm [shape: f32[1,256], index: 4, kind: input, shape index: {}]
  %s5 = inlined_call_operand.hbm [shape: bf16[256,128], index: 5, kind: input, shape index: {}]
  %s6 = inlined_call_operand.hbm [shape: f32[1,128], index: 6, kind: input, shape index: {}]
  %s7 = inlined_call_operand.hbm [shape: f32[2,17], index: 7, kind: output, shape index: {}]
  %s8 = sld [smem:[#allocation0]]
  $region62: #{net_forward.1} parent=0
    _
  %s10 = ssub.s32 1, %s8
  %s11 = scalar_select 0, %s10, %s8
  $region1: #{net_forward.1} parent=0
    #allocation2 [shape = 'u8[6291456]{0}', space=vmem, size = 0x600000, scoped, tag = 'input window, operand 1, single buffered']
    #allocation3 [shape = 's32[1]{0}', space=sflag, size = 0x4, scoped, tag = 'scoped memory for net_forward.1']
    #allocation4 [shape = 's32[1]{0}', space=sflag, size = 0x4, scoped, tag = 'scoped memory for net_forward.1']
    #allocation5 [shape = 'u8[4096]{0}', space=vmem, size = 0x1000, scoped, tag = 'input window, operand 2, single buffered']
    #allocation6 [shape = 's32[1]{0}', space=sflag, size = 0x4, scoped, tag = 'scoped memory for net_forward.1']
    #allocation7 [shape = 'u8[524288]{0}', space=vmem, size = 0x80000, scoped, tag = 'input window, operand 3, single buffered']
    #allocation8 [shape = 'u8[1024]{0}', space=vmem, size = 0x400, scoped, tag = 'input window, operand 4, single buffered']
    #allocation9 [shape = 's32[1]{0}', space=sflag, size = 0x4, scoped, tag = 'scoped memory for net_forward.1']
    #allocation10 [shape = 'u8[65536]{0}', space=vmem, size = 0x10000, scoped, tag = 'input window, operand 5, single buffered']
    #allocation11 [shape = 'u8[512]{0}', space=vmem, size = 0x400, scoped, tag = 'input window, operand 6, single buffered']
    #allocation12 [shape = 's32[1]{0}', space=sflag, size = 0x4, scoped, tag = 'scoped memory for net_forward.1']
    #allocation13 [shape = 'u8[1024]{0}', space=vmem, size = 0x400, scoped, tag = 'output window, operand 0, single buffered']
    %12 = vsyncpa [#allocation3], 0
    %13 = vsyncpa [#allocation6], 0
    %14 = vsyncpa [#allocation9], 0
    %15 = vsyncpa [#allocation12], 0
    %16 = vsyncpa [#allocation4], 0
    // Predicated region
    $region2: #{net_forward.1} parent=1 // pred_check
      _
    $region3: #{net_forward.1} parent=1 // pred_check_branch
      %18 = sbr.rel (0) target = $region5
    $region4: #{net_forward.1} parent=1 // pred_region
      _
    $region5: #{net_forward.1} parent=1 // pred_fallthru
      _
    // Predicated region
    $region6: #{net_forward.1} parent=1 // pred_check
      _
    $region7: #{net_forward.1} parent=1 // pred_check_branch
      %20 = sbr.rel (0) target = $region9
    $region8: #{net_forward.1} parent=1 // pred_region
      %s22 = ssub.s32 196608, 196608
      %23 = vsyncadd [#allocation3], %s22
      %s24 = sshll.u32 [#allocation2], 4
      %s25 = int_to_ptr.vmem [resolvable:$true] %s24
      %30 = dma.hbm_to_vmem [thread:$0]  %s1, 196608, %s25, [#allocation3], 512, 512, 32
    $region9: #{net_forward.1} parent=1 // pred_fallthru
      _
    // Predicated region
    $region10: #{net_forward.1} parent=1 // pred_check
      _
    $region11: #{net_forward.1} parent=1 // pred_check_branch
      %32 = sbr.rel (0) target = $region13
    $region12: #{net_forward.1} parent=1 // pred_region
      %s34 = ssub.s32 128, 128
      %35 = vsyncadd [#allocation6], %s34
      %s37 = sshll.u32 [#allocation5], 4
      %s38 = int_to_ptr.vmem [resolvable:$true] %s37
      %40 = dma.hbm_to_vmem [thread:$0]  %s2, 128, %s38, [#allocation6]
    $region13: #{net_forward.1} parent=1 // pred_fallthru
      _
    // Predicated region
    $region14: #{net_forward.1} parent=1 // pred_check
      _
    $region15: #{net_forward.1} parent=1 // pred_check_branch
      %42 = sbr.rel (0) target = $region17
    $region16: #{net_forward.1} parent=1 // pred_region
      %s44 = ssub.s32 16384, 16384
      %45 = vsyncadd [#allocation6], %s44
      %s46 = sshll.u32 [#allocation7], 4
      %s47 = int_to_ptr.vmem [resolvable:$true] %s46
      %52 = dma.hbm_to_vmem [thread:$0]  %s3, 16384, %s47, [#allocation6], 128, 128, 8
    $region17: #{net_forward.1} parent=1 // pred_fallthru
      _
    // Predicated region
    $region18: #{net_forward.1} parent=1 // pred_check
      _
    $region19: #{net_forward.1} parent=1 // pred_check_branch
      %54 = sbr.rel (0) target = $region21
    $region20: #{net_forward.1} parent=1 // pred_region
      %s56 = ssub.s32 32, 32
      %57 = vsyncadd [#allocation9], %s56
      %s59 = sshll.u32 [#allocation8], 4
      %s60 = int_to_ptr.vmem [resolvable:$true] %s59
      %62 = dma.hbm_to_vmem [thread:$0]  %s4, 32, %s60, [#allocation9]
    $region21: #{net_forward.1} parent=1 // pred_fallthru
      _
    // Predicated region
    $region22: #{net_forward.1} parent=1 // pred_check
      _
    $region23: #{net_forward.1} parent=1 // pred_check_branch
      %64 = sbr.rel (0) target = $region25
    $region24: #{net_forward.1} parent=1 // pred_region
      %s66 = ssub.s32 2048, 2048
      %67 = vsyncadd [#allocation9], %s66
      %s68 = sshll.u32 [#allocation10], 4
      %s69 = int_to_ptr.vmem [resolvable:$true] %s68
      %74 = dma.hbm_to_vmem [thread:$0]  %s5, 2048, %s69, [#allocation9], 64, 64, 4
    $region25: #{net_forward.1} parent=1 // pred_fallthru
      _
    // Predicated region
    $region26: #{net_forward.1} parent=1 // pred_check
      _
    $region27: #{net_forward.1} parent=1 // pred_check_branch
      %76 = sbr.rel (0) target = $region29
    $region28: #{net_forward.1} parent=1 // pred_region
      %s78 = ssub.s32 16, 16
      %79 = vsyncadd [#allocation12], %s78
      %s81 = sshll.u32 [#allocation11], 4
      %s82 = int_to_ptr.vmem [resolvable:$true] %s81
      %84 = dma.hbm_to_vmem [thread:$0]  %s6, 16, %s82, [#allocation12]
    $region29: #{net_forward.1} parent=1 // pred_fallthru
      _
    // Predicated region
    $region30: #{net_forward.1} parent=1 // pred_check
      _
    $region31: #{net_forward.1} parent=1 // pred_check_branch
      %86 = sbr.rel (0) target = $region33
    $region32: #{net_forward.1} parent=1 // pred_region
      %87 = dma.done [#allocation3], 196608
    $region33: #{net_forward.1} parent=1 // pred_fallthru
      _
    // Predicated region
    $region34: #{net_forward.1} parent=1 // pred_check
      _
    $region35: #{net_forward.1} parent=1 // pred_check_branch
      %89 = sbr.rel (0) target = $region37
    $region36: #{net_forward.1} parent=1 // pred_region
      %90 = dma.done [#allocation6], 128
    $region37: #{net_forward.1} parent=1 // pred_fallthru
      _
    // Predicated region
    $region38: #{net_forward.1} parent=1 // pred_check
      _
    $region39: #{net_forward.1} parent=1 // pred_check_branch
      %92 = sbr.rel (0) target = $region41
    $region40: #{net_forward.1} parent=1 // pred_region
      %93 = dma.done [#allocation6], 16384
    $region41: #{net_forward.1} parent=1 // pred_fallthru
      _
    // Predicated region
    $region42: #{net_forward.1} parent=1 // pred_check
      _
    $region43: #{net_forward.1} parent=1 // pred_check_branch
      %95 = sbr.rel (0) target = $region45
    $region44: #{net_forward.1} parent=1 // pred_region
      %96 = dma.done [#allocation9], 32
    $region45: #{net_forward.1} parent=1 // pred_fallthru
      _
    // Predicated region
    $region46: #{net_forward.1} parent=1 // pred_check
      _
    $region47: #{net_forward.1} parent=1 // pred_check_branch
      %98 = sbr.rel (0) target = $region49
    $region48: #{net_forward.1} parent=1 // pred_region
      %99 = dma.done [#allocation9], 2048
    $region49: #{net_forward.1} parent=1 // pred_fallthru
      _
    // Predicated region
    $region50: #{net_forward.1} parent=1 // pred_check
      _
    $region51: #{net_forward.1} parent=1 // pred_check_branch
      %101 = sbr.rel (0) target = $region53
    $region52: #{net_forward.1} parent=1 // pred_region
      %102 = dma.done [#allocation12], 16
    $region53: #{net_forward.1} parent=1 // pred_fallthru
      _
    %v104 = vld [vmem:[%s0] sm:$0xff]
    %v105 = vld [vmem:[%s0 + $0x8] sm:$0xff]
    %v106 = vld [vmem:[%s0 + $0x10] sm:$0xff]
    %v107 = vld [vmem:[%s0 + $0x18] sm:$0xff]
    %v108 = vld [vmem:[%s0 + $0x20] sm:$0xff]
    %v109 = vld [vmem:[%s0 + $0x28] sm:$0xff]
    %v116 = vcombine.high %v104, %v104
    %v118 = vunpack.c.l.s4 1983009808
    %v119 = vunpack.c.0.s8 %v118
    %v120 = vlaneseq
    %v121 = vshrl.u32 %v120, 7
    %v122 = vsub.s32 %v119, %v121
    %v123 = vrot.slane %v104, %v122
    %v125 = vunpack.c.l.s4 1983009808
    %v126 = vunpack.c.0.s8 %v125
    %v127 = vlaneseq
    %v128 = vshrl.u32 %v127, 7
    %v129 = vsub.s32 %v126, %v128
    %v130 = vrot.slane %v116, %v129
    %v131 = vcombine.high %v123, %v123
    %v132 = vcombine.high %v130, %v130
    %v133 = vcombine.high %v105, %v105
    %v135 = vunpack.c.l.s4 1983009808
    %v136 = vunpack.c.0.s8 %v135
    %v137 = vlaneseq
    %v138 = vshrl.u32 %v137, 7
    %v139 = vsub.s32 %v136, %v138
    %v140 = vrot.slane %v105, %v139
    %v142 = vunpack.c.l.s4 1983009808
    %v143 = vunpack.c.0.s8 %v142
    %v144 = vlaneseq
    %v145 = vshrl.u32 %v144, 7
    %v146 = vsub.s32 %v143, %v145
    %v147 = vrot.slane %v133, %v146
    %v148 = vcombine.high %v140, %v140
    %v149 = vcombine.high %v147, %v147
    %v150 = vcombine.high %v106, %v106
    %v152 = vunpack.c.l.s4 1983009808
    %v153 = vunpack.c.0.s8 %v152
    %v154 = vlaneseq
    %v155 = vshrl.u32 %v154, 7
    %v156 = vsub.s32 %v153, %v155
    %v157 = vrot.slane %v106, %v156
    %v159 = vunpack.c.l.s4 1983009808
    %v160 = vunpack.c.0.s8 %v159
    %v161 = vlaneseq
    %v162 = vshrl.u32 %v161, 7
    %v163 = vsub.s32 %v160, %v162
    %v164 = vrot.slane %v150, %v163
    %v165 = vcombine.high %v157, %v157
    %v166 = vcombine.high %v164, %v164
    %v167 = vcombine.high %v107, %v107
    %v169 = vunpack.c.l.s4 1983009808
    %v170 = vunpack.c.0.s8 %v169
    %v171 = vlaneseq
    %v172 = vshrl.u32 %v171, 7
    %v173 = vsub.s32 %v170, %v172
    %v174 = vrot.slane %v107, %v173
    %v176 = vunpack.c.l.s4 1983009808
    %v177 = vunpack.c.0.s8 %v176
    %v178 = vlaneseq
    %v179 = vshrl.u32 %v178, 7
    %v180 = vsub.s32 %v177, %v179
    %v181 = vrot.slane %v167, %v180
    %v182 = vcombine.high %v174, %v174
    %v183 = vcombine.high %v181, %v181
    %v184 = vcombine.high %v108, %v108
    %v186 = vunpack.c.l.s4 1983009808
    %v187 = vunpack.c.0.s8 %v186
    %v188 = vlaneseq
    %v189 = vshrl.u32 %v188, 7
    %v190 = vsub.s32 %v187, %v189
    %v191 = vrot.slane %v108, %v190
    %v193 = vunpack.c.l.s4 1983009808
    %v194 = vunpack.c.0.s8 %v193
    %v195 = vlaneseq
    %v196 = vshrl.u32 %v195, 7
    %v197 = vsub.s32 %v194, %v196
    %v198 = vrot.slane %v184, %v197
    %v199 = vcombine.high %v191, %v191
    %v200 = vcombine.high %v198, %v198
    %v201 = vcombine.high %v109, %v109
    %v203 = vunpack.c.l.s4 1983009808
    %v204 = vunpack.c.0.s8 %v203
    %v205 = vlaneseq
    %v206 = vshrl.u32 %v205, 7
    %v207 = vsub.s32 %v204, %v206
    %v208 = vrot.slane %v109, %v207
    %v210 = vunpack.c.l.s4 1983009808
    %v211 = vunpack.c.0.s8 %v210
    %v212 = vlaneseq
    %v213 = vshrl.u32 %v212, 7
    %v214 = vsub.s32 %v211, %v213
    %v215 = vrot.slane %v201, %v214
    %v216 = vcombine.high %v208, %v208
    %v217 = vcombine.high %v215, %v215
    %v242 = vpack.c.bf16 %v123, %v123
    %v243 = vpack.c.bf16 %v131, %v131
    %v244 = vpack.c.bf16 %v130, %v130
    %v245 = vpack.c.bf16 %v132, %v132
    %v246 = vpack.c.bf16 %v140, %v140
    %v247 = vpack.c.bf16 %v148, %v148
    %v248 = vpack.c.bf16 %v147, %v147
    %v249 = vpack.c.bf16 %v149, %v149
    %v250 = vpack.c.bf16 %v157, %v157
    %v251 = vpack.c.bf16 %v165, %v165
    %v252 = vpack.c.bf16 %v164, %v164
    %v253 = vpack.c.bf16 %v166, %v166
    %v254 = vpack.c.bf16 %v174, %v174
    %v255 = vpack.c.bf16 %v182, %v182
    %v256 = vpack.c.bf16 %v181, %v181
    %v257 = vpack.c.bf16 %v183, %v183
    %v258 = vpack.c.bf16 %v191, %v191
    %v259 = vpack.c.bf16 %v199, %v199
    %v260 = vpack.c.bf16 %v198, %v198
    %v261 = vpack.c.bf16 %v200, %v200
    %v262 = vpack.c.bf16 %v208, %v208
    %v263 = vpack.c.bf16 %v216, %v216
    %v264 = vpack.c.bf16 %v215, %v215
    %v265 = vpack.c.bf16 %v217, %v217
    %v266 = vld [vmem:[#allocation2] sm:$0xff]
    %v267 = vld [vmem:[#allocation2 + $0x8] sm:$0xff]
    %v268 = vld [vmem:[#allocation2 + $0x10] sm:$0xff]
    %v269 = vld [vmem:[#allocation2 + $0x18] sm:$0xff]
    %v270 = vld [vmem:[#allocation2 + $0x20] sm:$0xff]
    %v271 = vld [vmem:[#allocation2 + $0x28] sm:$0xff]
    %v272 = vld [vmem:[#allocation2 + $0x30] sm:$0xff]
    %v273 = vld [vmem:[#allocation2 + $0x38] sm:$0xff]
    %v274 = vld [vmem:[#allocation2 + $0x40] sm:$0xff]
    %v275 = vld [vmem:[#allocation2 + $0x48] sm:$0xff]
    %v276 = vld [vmem:[#allocation2 + $0x50] sm:$0xff]
    %v277 = vld [vmem:[#allocation2 + $0x58] sm:$0xff]
    %v278 = vld [vmem:[#allocation2 + $0x60] sm:$0xff]
    %v279 = vld [vmem:[#allocation2 + $0x68] sm:$0xff]
    %v280 = vld [vmem:[#allocation2 + $0x70] sm:$0xff]
    %v281 = vld [vmem:[#allocation2 + $0x78] sm:$0xff]
    %v282 = vld [vmem:[#allocation2 + $0x80] sm:$0xff]
    %v283 = vld [vmem:[#allocation2 + $0x88] sm:$0xff]
    %v284 = vld [vmem:[#allocation2 + $0x90] sm:$0xff]
    %v285 = vld [vmem:[#allocation2 + $0x98] sm:$0xff]
    %v286 = vld [vmem:[#allocation2 + $0xa0] sm:$0xff]
    %v287 = vld [vmem:[#allocation2 + $0xa8] sm:$0xff]
    %v288 = vld [vmem:[#allocation2 + $0xb0] sm:$0xff]
    %v289 = vld [vmem:[#allocation2 + $0xb8] sm:$0xff]
    %v290 = vld [vmem:[#allocation2 + $0xc0] sm:$0xff]
    %v291 = vld [vmem:[#allocation2 + $0xc8] sm:$0xff]
    %v292 = vld [vmem:[#allocation2 + $0xd0] sm:$0xff]
    %v293 = vld [vmem:[#allocation2 + $0xd8] sm:$0xff]
    %v294 = vld [vmem:[#allocation2 + $0xe0] sm:$0xff]
    %v295 = vld [vmem:[#allocation2 + $0xe8] sm:$0xff]
    %v296 = vld [vmem:[#allocation2 + $0xf0] sm:$0xff]
    %v297 = vld [vmem:[#allocation2 + $0xf8] sm:$0xff]
    %v298 = vld [vmem:[#allocation2 + $0x100] sm:$0xff]
    %v299 = vld [vmem:[#allocation2 + $0x108] sm:$0xff]
    %v300 = vld [vmem:[#allocation2 + $0x110] sm:$0xff]
    %v301 = vld [vmem:[#allocation2 + $0x118] sm:$0xff]
    %v302 = vld [vmem:[#allocation2 + $0x120] sm:$0xff]
    %v303 = vld [vmem:[#allocation2 + $0x128] sm:$0xff]
    %v304 = vld [vmem:[#allocation2 + $0x130] sm:$0xff]
    %v305 = vld [vmem:[#allocation2 + $0x138] sm:$0xff]
    %v306 = vld [vmem:[#allocation2 + $0x140] sm:$0xff]
    %v307 = vld [vmem:[#allocation2 + $0x148] sm:$0xff]
    %v308 = vld [vmem:[#allocation2 + $0x150] sm:$0xff]
    %v309 = vld [vmem:[#allocation2 + $0x158] sm:$0xff]
    %v310 = vld [vmem:[#allocation2 + $0x160] sm:$0xff]
    %v311 = vld [vmem:[#allocation2 + $0x168] sm:$0xff]
    %v312 = vld [vmem:[#allocation2 + $0x170] sm:$0xff]
    %v313 = vld [vmem:[#allocation2 + $0x178] sm:$0xff]
    %v314 = vld [vmem:[#allocation2 + $0x180] sm:$0xff]
    %v315 = vld [vmem:[#allocation2 + $0x188] sm:$0xff]
    %v316 = vld [vmem:[#allocation2 + $0x190] sm:$0xff]
    %v317 = vld [vmem:[#allocation2 + $0x198] sm:$0xff]
    %v318 = vld [vmem:[#allocation2 + $0x1a0] sm:$0xff]
    %v319 = vld [vmem:[#allocation2 + $0x1a8] sm:$0xff]
    %v320 = vld [vmem:[#allocation2 + $0x1b0] sm:$0xff]
    %v321 = vld [vmem:[#allocation2 + $0x1b8] sm:$0xff]
    %v322 = vld [vmem:[#allocation2 + $0x1c0] sm:$0xff]
    %v323 = vld [vmem:[#allocation2 + $0x1c8] sm:$0xff]
    %v324 = vld [vmem:[#allocation2 + $0x1d0] sm:$0xff]
    %v325 = vld [vmem:[#allocation2 + $0x1d8] sm:$0xff]
    %v326 = vld [vmem:[#allocation2 + $0x1e0] sm:$0xff]
    %v327 = vld [vmem:[#allocation2 + $0x1e8] sm:$0xff]
    %v328 = vld [vmem:[#allocation2 + $0x1f0] sm:$0xff]
    %v329 = vld [vmem:[#allocation2 + $0x1f8] sm:$0xff]
    %v330 = vld [vmem:[#allocation2 + $0x200] sm:$0xff]
    %v331 = vld [vmem:[#allocation2 + $0x208] sm:$0xff]
    %v332 = vld [vmem:[#allocation2 + $0x210] sm:$0xff]
    %v333 = vld [vmem:[#allocation2 + $0x218] sm:$0xff]
    %v334 = vld [vmem:[#allocation2 + $0x220] sm:$0xff]
    %v335 = vld [vmem:[#allocation2 + $0x228] sm:$0xff]
    %v336 = vld [vmem:[#allocation2 + $0x230] sm:$0xff]
    %v337 = vld [vmem:[#allocation2 + $0x238] sm:$0xff]
    %v338 = vld [vmem:[#allocation2 + $0x240] sm:$0xff]
    %v339 = vld [vmem:[#allocation2 + $0x248] sm:$0xff]
    %v340 = vld [vmem:[#allocation2 + $0x250] sm:$0xff]
    %v341 = vld [vmem:[#allocation2 + $0x258] sm:$0xff]
    %v342 = vld [vmem:[#allocation2 + $0x260] sm:$0xff]
    %v343 = vld [vmem:[#allocation2 + $0x268] sm:$0xff]
    %v344 = vld [vmem:[#allocation2 + $0x270] sm:$0xff]
    %v345 = vld [vmem:[#allocation2 + $0x278] sm:$0xff]
    %v346 = vld [vmem:[#allocation2 + $0x280] sm:$0xff]
    %v347 = vld [vmem:[#allocation2 + $0x288] sm:$0xff]
    %v348 = vld [vmem:[#allocation2 + $0x290] sm:$0xff]
    %v349 = vld [vmem:[#allocation2 + $0x298] sm:$0xff]
    %v350 = vld [vmem:[#allocation2 + $0x2a0] sm:$0xff]
    %v351 = vld [vmem:[#allocation2 + $0x2a8] sm:$0xff]
    %v352 = vld [vmem:[#allocation2 + $0x2b0] sm:$0xff]
    %v353 = vld [vmem:[#allocation2 + $0x2b8] sm:$0xff]
    %v354 = vld [vmem:[#allocation2 + $0x2c0] sm:$0xff]
    %v355 = vld [vmem:[#allocation2 + $0x2c8] sm:$0xff]
    %v356 = vld [vmem:[#allocation2 + $0x2d0] sm:$0xff]
    %v357 = vld [vmem:[#allocation2 + $0x2d8] sm:$0xff]
    %v358 = vld [vmem:[#allocation2 + $0x2e0] sm:$0xff]
    %v359 = vld [vmem:[#allocation2 + $0x2e8] sm:$0xff]
    %v360 = vld [vmem:[#allocation2 + $0x2f0] sm:$0xff]
    %v361 = vld [vmem:[#allocation2 + $0x2f8] sm:$0xff]
    %v362 = vld [vmem:[#allocation2 + $0x300] sm:$0xff]
    %v363 = vld [vmem:[#allocation2 + $0x308] sm:$0xff]
    %v364 = vld [vmem:[#allocation2 + $0x310] sm:$0xff]
    %v365 = vld [vmem:[#allocation2 + $0x318] sm:$0xff]
    %v366 = vld [vmem:[#allocation2 + $0x320] sm:$0xff]
    %v367 = vld [vmem:[#allocation2 + $0x328] sm:$0xff]
    %v368 = vld [vmem:[#allocation2 + $0x330] sm:$0xff]
    %v369 = vld [vmem:[#allocation2 + $0x338] sm:$0xff]
    %v370 = vld [vmem:[#allocation2 + $0x340] sm:$0xff]
    %v371 = vld [vmem:[#allocation2 + $0x348] sm:$0xff]
    %v372 = vld [vmem:[#allocation2 + $0x350] sm:$0xff]
    %v373 = vld [vmem:[#allocation2 + $0x358] sm:$0xff]
    %v374 = vld [vmem:[#allocation2 + $0x360] sm:$0xff]
    %v375 = vld [vmem:[#allocation2 + $0x368] sm:$0xff]
    %v376 = vld [vmem:[#allocation2 + $0x370] sm:$0xff]
    %v377 = vld [vmem:[#allocation2 + $0x378] sm:$0xff]
    %v378 = vld [vmem:[#allocation2 + $0x380] sm:$0xff]
    %v379 = vld [vmem:[#allocation2 + $0x388] sm:$0xff]
    %v380 = vld [vmem:[#allocation2 + $0x390] sm:$0xff]
    %v381 = vld [vmem:[#allocation2 + $0x398] sm:$0xff]
    %v382 = vld [vmem:[#allocation2 + $0x3a0] sm:$0xff]
    %v383 = vld [vmem:[#allocation2 + $0x3a8] sm:$0xff]
    %v384 = vld [vmem:[#allocation2 + $0x3b0] sm:$0xff]
    %v385 = vld [vmem:[#allocation2 + $0x3b8] sm:$0xff]
    %v386 = vld [vmem:[#allocation2 + $0x3c0] sm:$0xff]
    %v387 = vld [vmem:[#allocation2 + $0x3c8] sm:$0xff]
    %v388 = vld [vmem:[#allocation2 + $0x3d0] sm:$0xff]
    %v389 = vld [vmem:[#allocation2 + $0x3d8] sm:$0xff]
    %v390 = vld [vmem:[#allocation2 + $0x3e0] sm:$0xff]
    %v391 = vld [vmem:[#allocation2 + $0x3e8] sm:$0xff]
    %v392 = vld [vmem:[#allocation2 + $0x3f0] sm:$0xff]
    %v393 = vld [vmem:[#allocation2 + $0x3f8] sm:$0xff]
    %v394 = vld [vmem:[#allocation2 + $0x400] sm:$0xff]
    %v395 = vld [vmem:[#allocation2 + $0x408] sm:$0xff]
    %v396 = vld [vmem:[#allocation2 + $0x410] sm:$0xff]
    %v397 = vld [vmem:[#allocation2 + $0x418] sm:$0xff]
    %v398 = vld [vmem:[#allocation2 + $0x420] sm:$0xff]
    %v399 = vld [vmem:[#allocation2 + $0x428] sm:$0xff]
    %v400 = vld [vmem:[#allocation2 + $0x430] sm:$0xff]
    %v401 = vld [vmem:[#allocation2 + $0x438] sm:$0xff]
    %v402 = vld [vmem:[#allocation2 + $0x440] sm:$0xff]
    %v403 = vld [vmem:[#allocation2 + $0x448] sm:$0xff]
    %v404 = vld [vmem:[#allocation2 + $0x450] sm:$0xff]
    %v405 = vld [vmem:[#allocation2 + $0x458] sm:$0xff]
    %v406 = vld [vmem:[#allocation2 + $0x460] sm:$0xff]
    %v407 = vld [vmem:[#allocation2 + $0x468] sm:$0xff]
    %v408 = vld [vmem:[#allocation2 + $0x470] sm:$0xff]
    %v409 = vld [vmem:[#allocation2 + $0x478] sm:$0xff]
    %v410 = vld [vmem:[#allocation2 + $0x480] sm:$0xff]
    %v411 = vld [vmem:[#allocation2 + $0x488] sm:$0xff]
    %v412 = vld [vmem:[#allocation2 + $0x490] sm:$0xff]
    %v413 = vld [vmem:[#allocation2 + $0x498] sm:$0xff]
    %v414 = vld [vmem:[#allocation2 + $0x4a0] sm:$0xff]
    %v415 = vld [vmem:[#allocation2 + $0x4a8] sm:$0xff]
    %v416 = vld [vmem:[#allocation2 + $0x4b0] sm:$0xff]
    %v417 = vld [vmem:[#allocation2 + $0x4b8] sm:$0xff]
    %v418 = vld [vmem:[#allocation2 + $0x4c0] sm:$0xff]
    %v419 = vld [vmem:[#allocation2 + $0x4c8] sm:$0xff]
    %v420 = vld [vmem:[#allocation2 + $0x4d0] sm:$0xff]
    %v421 = vld [vmem:[#allocation2 + $0x4d8] sm:$0xff]
    %v422 = vld [vmem:[#allocation2 + $0x4e0] sm:$0xff]
    %v423 = vld [vmem:[#allocation2 + $0x4e8] sm:$0xff]
    %v424 = vld [vmem:[#allocation2 + $0x4f0] sm:$0xff]
    %v425 = vld [vmem:[#allocation2 + $0x4f8] sm:$0xff]
    %v426 = vld [vmem:[#allocation2 + $0x500] sm:$0xff]
    %v427 = vld [vmem:[#allocation2 + $0x508] sm:$0xff]
    %v428 = vld [vmem:[#allocation2 + $0x510] sm:$0xff]
    %v429 = vld [vmem:[#allocation2 + $0x518] sm:$0xff]
    %v430 = vld [vmem:[#allocation2 + $0x520] sm:$0xff]
    %v431 = vld [vmem:[#allocation2 + $0x528] sm:$0xff]
    %v432 = vld [vmem:[#allocation2 + $0x530] sm:$0xff]
    %v433 = vld [vmem:[#allocation2 + $0x538] sm:$0xff]
    %v434 = vld [vmem:[#allocation2 + $0x540] sm:$0xff]
    %v435 = vld [vmem:[#allocation2 + $0x548] sm:$0xff]
    %v436 = vld [vmem:[#allocation2 + $0x550] sm:$0xff]
    %v437 = vld [vmem:[#allocation2 + $0x558] sm:$0xff]
    %v438 = vld [vmem:[#allocation2 + $0x560] sm:$0xff]
    %v439 = vld [vmem:[#allocation2 + $0x568] sm:$0xff]
    %v440 = vld [vmem:[#allocation2 + $0x570] sm:$0xff]
    %v441 = vld [vmem:[#allocation2 + $0x578] sm:$0xff]
    %v442 = vld [vmem:[#allocation2 + $0x580] sm:$0xff]
    %v443 = vld [vmem:[#allocation2 + $0x588] sm:$0xff]
    %v444 = vld [vmem:[#allocation2 + $0x590] sm:$0xff]
    %v445 = vld [vmem:[#allocation2 + $0x598] sm:$0xff]
    %v446 = vld [vmem:[#allocation2 + $0x5a0] sm:$0xff]
    %v447 = vld [vmem:[#allocation2 + $0x5a8] sm:$0xff]
    %v448 = vld [vmem:[#allocation2 + $0x5b0] sm:$0xff]
    %v449 = vld [vmem:[#allocation2 + $0x5b8] sm:$0xff]
    %v450 = vld [vmem:[#allocation2 + $0x5c0] sm:$0xff]
    %v451 = vld [vmem:[#allocation2 + $0x5c8] sm:$0xff]
    %v452 = vld [vmem:[#allocation2 + $0x5d0] sm:$0xff]
    %v453 = vld [vmem:[#allocation2 + $0x5d8] sm:$0xff]
    %v454 = vld [vmem:[#allocation2 + $0x5e0] sm:$0xff]
    %v455 = vld [vmem:[#allocation2 + $0x5e8] sm:$0xff]
    %v456 = vld [vmem:[#allocation2 + $0x5f0] sm:$0xff]
    %v457 = vld [vmem:[#allocation2 + $0x5f8] sm:$0xff]
    %v458 = vld [vmem:[#allocation2 + $0x600] sm:$0xff]
    %v459 = vld [vmem:[#allocation2 + $0x608] sm:$0xff]
    %v460 = vld [vmem:[#allocation2 + $0x610] sm:$0xff]
    %v461 = vld [vmem:[#allocation2 + $0x618] sm:$0xff]
    %v462 = vld [vmem:[#allocation2 + $0x620] sm:$0xff]
    %v463 = vld [vmem:[#allocation2 + $0x628] sm:$0xff]
    %v464 = vld [vmem:[#allocation2 + $0x630] sm:$0xff]
    %v465 = vld [vmem:[#allocation2 + $0x638] sm:$0xff]
    %v466 = vld [vmem:[#allocation2 + $0x640] sm:$0xff]
    %v467 = vld [vmem:[#allocation2 + $0x648] sm:$0xff]
    %v468 = vld [vmem:[#allocation2 + $0x650] sm:$0xff]
    %v469 = vld [vmem:[#allocation2 + $0x658] sm:$0xff]
    %v470 = vld [vmem:[#allocation2 + $0x660] sm:$0xff]
    %v471 = vld [vmem:[#allocation2 + $0x668] sm:$0xff]
    %v472 = vld [vmem:[#allocation2 + $0x670] sm:$0xff]
    %v473 = vld [vmem:[#allocation2 + $0x678] sm:$0xff]
    %v474 = vld [vmem:[#allocation2 + $0x680] sm:$0xff]
    %v475 = vld [vmem:[#allocation2 + $0x688] sm:$0xff]
    %v476 = vld [vmem:[#allocation2 + $0x690] sm:$0xff]
    %v477 = vld [vmem:[#allocation2 + $0x698] sm:$0xff]
    %v478 = vld [vmem:[#allocation2 + $0x6a0] sm:$0xff]
    %v479 = vld [vmem:[#allocation2 + $0x6a8] sm:$0xff]
    %v480 = vld [vmem:[#allocation2 + $0x6b0] sm:$0xff]
    %v481 = vld [vmem:[#allocation2 + $0x6b8] sm:$0xff]
    %v482 = vld [vmem:[#allocation2 + $0x6c0] sm:$0xff]
    %v483 = vld [vmem:[#allocation2 + $0x6c8] sm:$0xff]
    %v484 = vld [vmem:[#allocation2 + $0x6d0] sm:$0xff]
    %v485 = vld [vmem:[#allocation2 + $0x6d8] sm:$0xff]
    %v486 = vld [vmem:[#allocation2 + $0x6e0] sm:$0xff]
    %v487 = vld [vmem:[#allocation2 + $0x6e8] sm:$0xff]
    %v488 = vld [vmem:[#allocation2 + $0x6f0] sm:$0xff]
    %v489 = vld [vmem:[#allocation2 + $0x6f8] sm:$0xff]
    %v490 = vld [vmem:[#allocation2 + $0x700] sm:$0xff]
    %v491 = vld [vmem:[#allocation2 + $0x708] sm:$0xff]
    %v492 = vld [vmem:[#allocation2 + $0x710] sm:$0xff]
    %v493 = vld [vmem:[#allocation2 + $0x718] sm:$0xff]
    %v494 = vld [vmem:[#allocation2 + $0x720] sm:$0xff]
    %v495 = vld [vmem:[#allocation2 + $0x728] sm:$0xff]
    %v496 = vld [vmem:[#allocation2 + $0x730] sm:$0xff]
    %v497 = vld [vmem:[#allocation2 + $0x738] sm:$0xff]
    %v498 = vld [vmem:[#allocation2 + $0x740] sm:$0xff]
    %v499 = vld [vmem:[#allocation2 + $0x748] sm:$0xff]
    %v500 = vld [vmem:[#allocation2 + $0x750] sm:$0xff]
    %v501 = vld [vmem:[#allocation2 + $0x758] sm:$0xff]
    %v502 = vld [vmem:[#allocation2 + $0x760] sm:$0xff]
    %v503 = vld [vmem:[#allocation2 + $0x768] sm:$0xff]
    %v504 = vld [vmem:[#allocation2 + $0x770] sm:$0xff]
    %v505 = vld [vmem:[#allocation2 + $0x778] sm:$0xff]
    %v506 = vld [vmem:[#allocation2 + $0x780] sm:$0xff]
    %v507 = vld [vmem:[#allocation2 + $0x788] sm:$0xff]
    %v508 = vld [vmem:[#allocation2 + $0x790] sm:$0xff]
    %v509 = vld [vmem:[#allocation2 + $0x798] sm:$0xff]
    %v510 = vld [vmem:[#allocation2 + $0x7a0] sm:$0xff]
    %v511 = vld [vmem:[#allocation2 + $0x7a8] sm:$0xff]
    %v512 = vld [vmem:[#allocation2 + $0x7b0] sm:$0xff]
    %v513 = vld [vmem:[#allocation2 + $0x7b8] sm:$0xff]
    %v514 = vld [vmem:[#allocation2 + $0x7c0] sm:$0xff]
    %v515 = vld [vmem:[#allocation2 + $0x7c8] sm:$0xff]
    %v516 = vld [vmem:[#allocation2 + $0x7d0] sm:$0xff]
    %v517 = vld [vmem:[#allocation2 + $0x7d8] sm:$0xff]
    %v518 = vld [vmem:[#allocation2 + $0x7e0] sm:$0xff]
    %v519 = vld [vmem:[#allocation2 + $0x7e8] sm:$0xff]
    %v520 = vld [vmem:[#allocation2 + $0x7f0] sm:$0xff]
    %v521 = vld [vmem:[#allocation2 + $0x7f8] sm:$0xff]
    %v522 = vld [vmem:[#allocation2 + $0x800] sm:$0xff]
    %v523 = vld [vmem:[#allocation2 + $0x808] sm:$0xff]
    %v524 = vld [vmem:[#allocation2 + $0x810] sm:$0xff]
    %v525 = vld [vmem:[#allocation2 + $0x818] sm:$0xff]
    %v526 = vld [vmem:[#allocation2 + $0x820] sm:$0xff]
    %v527 = vld [vmem:[#allocation2 + $0x828] sm:$0xff]
    %v528 = vld [vmem:[#allocation2 + $0x830] sm:$0xff]
    %v529 = vld [vmem:[#allocation2 + $0x838] sm:$0xff]
    %v530 = vld [vmem:[#allocation2 + $0x840] sm:$0xff]
    %v531 = vld [vmem:[#allocation2 + $0x848] sm:$0xff]
    %v532 = vld [vmem:[#allocation2 + $0x850] sm:$0xff]
    %v533 = vld [vmem:[#allocation2 + $0x858] sm:$0xff]
    %v534 = vld [vmem:[#allocation2 + $0x860] sm:$0xff]
    %v535 = vld [vmem:[#allocation2 + $0x868] sm:$0xff]
    %v536 = vld [vmem:[#allocation2 + $0x870] sm:$0xff]
    %v537 = vld [vmem:[#allocation2 + $0x878] sm:$0xff]
    %v538 = vld [vmem:[#allocation2 + $0x880] sm:$0xff]
    %v539 = vld [vmem:[#allocation2 + $0x888] sm:$0xff]
    %v540 = vld [vmem:[#allocation2 + $0x890] sm:$0xff]
    %v541 = vld [vmem:[#allocation2 + $0x898] sm:$0xff]
    %v542 = vld [vmem:[#allocation2 + $0x8a0] sm:$0xff]
    %v543 = vld [vmem:[#allocation2 + $0x8a8] sm:$0xff]
    %v544 = vld [vmem:[#allocation2 + $0x8b0] sm:$0xff]
    %v545 = vld [vmem:[#allocation2 + $0x8b8] sm:$0xff]
    %v546 = vld [vmem:[#allocation2 + $0x8c0] sm:$0xff]
    %v547 = vld [vmem:[#allocation2 + $0x8c8] sm:$0xff]
    %v548 = vld [vmem:[#allocation2 + $0x8d0] sm:$0xff]
    %v549 = vld [vmem:[#allocation2 + $0x8d8] sm:$0xff]
    %v550 = vld [vmem:[#allocation2 + $0x8e0] sm:$0xff]
    %v551 = vld [vmem:[#allocation2 + $0x8e8] sm:$0xff]
    %v552 = vld [vmem:[#allocation2 + $0x8f0] sm:$0xff]
    %v553 = vld [vmem:[#allocation2 + $0x8f8] sm:$0xff]
    %v554 = vld [vmem:[#allocation2 + $0x900] sm:$0xff]
    %v555 = vld [vmem:[#allocation2 + $0x908] sm:$0xff]
    %v556 = vld [vmem:[#allocation2 + $0x910] sm:$0xff]
    %v557 = vld [vmem:[#allocation2 + $0x918] sm:$0xff]
    %v558 = vld [vmem:[#allocation2 + $0x920] sm:$0xff]
    %v559 = vld [vmem:[#allocation2 + $0x928] sm:$0xff]
    %v560 = vld [vmem:[#allocation2 + $0x930] sm:$0xff]
    %v561 = vld [vmem:[#allocation2 + $0x938] sm:$0xff]
    %v562 = vld [vmem:[#allocation2 + $0x940] sm:$0xff]
    %v563 = vld [vmem:[#allocation2 + $0x948] sm:$0xff]
    %v564 = vld [vmem:[#allocation2 + $0x950] sm:$0xff]
    %v565 = vld [vmem:[#allocation2 + $0x958] sm:$0xff]
    %v566 = vld [vmem:[#allocation2 + $0x960] sm:$0xff]
    %v567 = vld [vmem:[#allocation2 + $0x968] sm:$0xff]
    %v568 = vld [vmem:[#allocation2 + $0x970] sm:$0xff]
    %v569 = vld [vmem:[#allocation2 + $0x978] sm:$0xff]
    %v570 = vld [vmem:[#allocation2 + $0x980] sm:$0xff]
    %v571 = vld [vmem:[#allocation2 + $0x988] sm:$0xff]
    %v572 = vld [vmem:[#allocation2 + $0x990] sm:$0xff]
    %v573 = vld [vmem:[#allocation2 + $0x998] sm:$0xff]
    %v574 = vld [vmem:[#allocation2 + $0x9a0] sm:$0xff]
    %v575 = vld [vmem:[#allocation2 + $0x9a8] sm:$0xff]
    %v576 = vld [vmem:[#allocation2 + $0x9b0] sm:$0xff]
    %v577 = vld [vmem:[#allocation2 + $0x9b8] sm:$0xff]
    %v578 = vld [vmem:[#allocation2 + $0x9c0] sm:$0xff]
    %v579 = vld [vmem:[#allocation2 + $0x9c8] sm:$0xff]
    %v580 = vld [vmem:[#allocation2 + $0x9d0] sm:$0xff]
    %v581 = vld [vmem:[#allocation2 + $0x9d8] sm:$0xff]
    %v582 = vld [vmem:[#allocation2 + $0x9e0] sm:$0xff]
    %v583 = vld [vmem:[#allocation2 + $0x9e8] sm:$0xff]
    %v584 = vld [vmem:[#allocation2 + $0x9f0] sm:$0xff]
    %v585 = vld [vmem:[#allocation2 + $0x9f8] sm:$0xff]
    %v586 = vld [vmem:[#allocation2 + $0xa00] sm:$0xff]
    %v587 = vld [vmem:[#allocation2 + $0xa08] sm:$0xff]
    %v588 = vld [vmem:[#allocation2 + $0xa10] sm:$0xff]
    %v589 = vld [vmem:[#allocation2 + $0xa18] sm:$0xff]
    %v590 = vld [vmem:[#allocation2 + $0xa20] sm:$0xff]
    %v591 = vld [vmem:[#allocation2 + $0xa28] sm:$0xff]
    %v592 = vld [vmem:[#allocation2 + $0xa30] sm:$0xff]
    %v593 = vld [vmem:[#allocation2 + $0xa38] sm:$0xff]
    %v594 = vld [vmem:[#allocation2 + $0xa40] sm:$0xff]
    %v595 = vld [vmem:[#allocation2 + $0xa48] sm:$0xff]
    %v596 = vld [vmem:[#allocation2 + $0xa50] sm:$0xff]
    %v597 = vld [vmem:[#allocation2 + $0xa58] sm:$0xff]
    %v598 = vld [vmem:[#allocation2 + $0xa60] sm:$0xff]
    %v599 = vld [vmem:[#allocation2 + $0xa68] sm:$0xff]
    %v600 = vld [vmem:[#allocation2 + $0xa70] sm:$0xff]
    %v601 = vld [vmem:[#allocation2 + $0xa78] sm:$0xff]
    %v602 = vld [vmem:[#allocation2 + $0xa80] sm:$0xff]
    %v603 = vld [vmem:[#allocation2 + $0xa88] sm:$0xff]
    %v604 = vld [vmem:[#allocation2 + $0xa90] sm:$0xff]
    %v605 = vld [vmem:[#allocation2 + $0xa98] sm:$0xff]
    %v606 = vld [vmem:[#allocation2 + $0xaa0] sm:$0xff]
    %v607 = vld [vmem:[#allocation2 + $0xaa8] sm:$0xff]
    %v608 = vld [vmem:[#allocation2 + $0xab0] sm:$0xff]
    %v609 = vld [vmem:[#allocation2 + $0xab8] sm:$0xff]
    %v610 = vld [vmem:[#allocation2 + $0xac0] sm:$0xff]
    %v611 = vld [vmem:[#allocation2 + $0xac8] sm:$0xff]
    %v612 = vld [vmem:[#allocation2 + $0xad0] sm:$0xff]
    %v613 = vld [vmem:[#allocation2 + $0xad8] sm:$0xff]
    %v614 = vld [vmem:[#allocation2 + $0xae0] sm:$0xff]
    %v615 = vld [vmem:[#allocation2 + $0xae8] sm:$0xff]
    %v616 = vld [vmem:[#allocation2 + $0xaf0] sm:$0xff]
    %v617 = vld [vmem:[#allocation2 + $0xaf8] sm:$0xff]
    %v618 = vld [vmem:[#allocation2 + $0xb00] sm:$0xff]
    %v619 = vld [vmem:[#allocation2 + $0xb08] sm:$0xff]
    %v620 = vld [vmem:[#allocation2 + $0xb10] sm:$0xff]
    %v621 = vld [vmem:[#allocation2 + $0xb18] sm:$0xff]
    %v622 = vld [vmem:[#allocation2 + $0xb20] sm:$0xff]
    %v623 = vld [vmem:[#allocation2 + $0xb28] sm:$0xff]
    %v624 = vld [vmem:[#allocation2 + $0xb30] sm:$0xff]
    %v625 = vld [vmem:[#allocation2 + $0xb38] sm:$0xff]
    %v626 = vld [vmem:[#allocation2 + $0xb40] sm:$0xff]
    %v627 = vld [vmem:[#allocation2 + $0xb48] sm:$0xff]
    %v628 = vld [vmem:[#allocation2 + $0xb50] sm:$0xff]
    %v629 = vld [vmem:[#allocation2 + $0xb58] sm:$0xff]
    %v630 = vld [vmem:[#allocation2 + $0xb60] sm:$0xff]
    %v631 = vld [vmem:[#allocation2 + $0xb68] sm:$0xff]
    %v632 = vld [vmem:[#allocation2 + $0xb70] sm:$0xff]
    %v633 = vld [vmem:[#allocation2 + $0xb78] sm:$0xff]
    %v634 = vld [vmem:[#allocation2 + $0xb80] sm:$0xff]
    %v635 = vld [vmem:[#allocation2 + $0xb88] sm:$0xff]
    %v636 = vld [vmem:[#allocation2 + $0xb90] sm:$0xff]
    %v637 = vld [vmem:[#allocation2 + $0xb98] sm:$0xff]
    %v638 = vld [vmem:[#allocation2 + $0xba0] sm:$0xff]
    %v639 = vld [vmem:[#allocation2 + $0xba8] sm:$0xff]
    %v640 = vld [vmem:[#allocation2 + $0xbb0] sm:$0xff]
    %v641 = vld [vmem:[#allocation2 + $0xbb8] sm:$0xff]
    %v642 = vld [vmem:[#allocation2 + $0xbc0] sm:$0xff]
    %v643 = vld [vmem:[#allocation2 + $0xbc8] sm:$0xff]
    %v644 = vld [vmem:[#allocation2 + $0xbd0] sm:$0xff]
    %v645 = vld [vmem:[#allocation2 + $0xbd8] sm:$0xff]
    %v646 = vld [vmem:[#allocation2 + $0xbe0] sm:$0xff]
    %v647 = vld [vmem:[#allocation2 + $0xbe8] sm:$0xff]
    %v648 = vld [vmem:[#allocation2 + $0xbf0] sm:$0xff]
    %v649 = vld [vmem:[#allocation2 + $0xbf8] sm:$0xff]
    %v650 = vld [vmem:[#allocation2 + $0xc00] sm:$0xff]
    %v651 = vld [vmem:[#allocation2 + $0xc08] sm:$0xff]
    %v652 = vld [vmem:[#allocation2 + $0xc10] sm:$0xff]
    %v653 = vld [vmem:[#allocation2 + $0xc18] sm:$0xff]
    %v654 = vld [vmem:[#allocation2 + $0xc20] sm:$0xff]
    %v655 = vld [vmem:[#allocation2 + $0xc28] sm:$0xff]
    %v656 = vld [vmem:[#allocation2 + $0xc30] sm:$0xff]
    %v657 = vld [vmem:[#allocation2 + $0xc38] sm:$0xff]
    %v658 = vld [vmem:[#allocation2 + $0xc40] sm:$0xff]
    %v659 = vld [vmem:[#allocation2 + $0xc48] sm:$0xff]
    %v660 = vld [vmem:[#allocation2 + $0xc50] sm:$0xff]
    %v661 = vld [vmem:[#allocation2 + $0xc58] sm:$0xff]
    %v662 = vld [vmem:[#allocation2 + $0xc60] sm:$0xff]
    %v663 = vld [vmem:[#allocation2 + $0xc68] sm:$0xff]
    %v664 = vld [vmem:[#allocation2 + $0xc70] sm:$0xff]
    %v665 = vld [vmem:[#allocation2 + $0xc78] sm:$0xff]
    %v666 = vld [vmem:[#allocation2 + $0xc80] sm:$0xff]
    %v667 = vld [vmem:[#allocation2 + $0xc88] sm:$0xff]
    %v668 = vld [vmem:[#allocation2 + $0xc90] sm:$0xff]
    %v669 = vld [vmem:[#allocation2 + $0xc98] sm:$0xff]
    %v670 = vld [vmem:[#allocation2 + $0xca0] sm:$0xff]
    %v671 = vld [vmem:[#allocation2 + $0xca8] sm:$0xff]
    %v672 = vld [vmem:[#allocation2 + $0xcb0] sm:$0xff]
    %v673 = vld [vmem:[#allocation2 + $0xcb8] sm:$0xff]
    %v674 = vld [vmem:[#allocation2 + $0xcc0] sm:$0xff]
    %v675 = vld [vmem:[#allocation2 + $0xcc8] sm:$0xff]
    %v676 = vld [vmem:[#allocation2 + $0xcd0] sm:$0xff]
    %v677 = vld [vmem:[#allocation2 + $0xcd8] sm:$0xff]
    %v678 = vld [vmem:[#allocation2 + $0xce0] sm:$0xff]
    %v679 = vld [vmem:[#allocation2 + $0xce8] sm:$0xff]
    %v680 = vld [vmem:[#allocation2 + $0xcf0] sm:$0xff]
    %v681 = vld [vmem:[#allocation2 + $0xcf8] sm:$0xff]
    %v682 = vld [vmem:[#allocation2 + $0xd00] sm:$0xff]
    %v683 = vld [vmem:[#allocation2 + $0xd08] sm:$0xff]
    %v684 = vld [vmem:[#allocation2 + $0xd10] sm:$0xff]
    %v685 = vld [vmem:[#allocation2 + $0xd18] sm:$0xff]
    %v686 = vld [vmem:[#allocation2 + $0xd20] sm:$0xff]
    %v687 = vld [vmem:[#allocation2 + $0xd28] sm:$0xff]
    %v688 = vld [vmem:[#allocation2 + $0xd30] sm:$0xff]
    %v689 = vld [vmem:[#allocation2 + $0xd38] sm:$0xff]
    %v690 = vld [vmem:[#allocation2 + $0xd40] sm:$0xff]
    %v691 = vld [vmem:[#allocation2 + $0xd48] sm:$0xff]
    %v692 = vld [vmem:[#allocation2 + $0xd50] sm:$0xff]
    %v693 = vld [vmem:[#allocation2 + $0xd58] sm:$0xff]
    %v694 = vld [vmem:[#allocation2 + $0xd60] sm:$0xff]
    %v695 = vld [vmem:[#allocation2 + $0xd68] sm:$0xff]
    %v696 = vld [vmem:[#allocation2 + $0xd70] sm:$0xff]
    %v697 = vld [vmem:[#allocation2 + $0xd78] sm:$0xff]
    %v698 = vld [vmem:[#allocation2 + $0xd80] sm:$0xff]
    %v699 = vld [vmem:[#allocation2 + $0xd88] sm:$0xff]
    %v700 = vld [vmem:[#allocation2 + $0xd90] sm:$0xff]
    %v701 = vld [vmem:[#allocation2 + $0xd98] sm:$0xff]
    %v702 = vld [vmem:[#allocation2 + $0xda0] sm:$0xff]
    %v703 = vld [vmem:[#allocation2 + $0xda8] sm:$0xff]
    %v704 = vld [vmem:[#allocation2 + $0xdb0] sm:$0xff]
    %v705 = vld [vmem:[#allocation2 + $0xdb8] sm:$0xff]
    %v706 = vld [vmem:[#allocation2 + $0xdc0] sm:$0xff]
    %v707 = vld [vmem:[#allocation2 + $0xdc8] sm:$0xff]
    %v708 = vld [vmem:[#allocation2 + $0xdd0] sm:$0xff]
    %v709 = vld [vmem:[#allocation2 + $0xdd8] sm:$0xff]
    %v710 = vld [vmem:[#allocation2 + $0xde0] sm:$0xff]
    %v711 = vld [vmem:[#allocation2 + $0xde8] sm:$0xff]
    %v712 = vld [vmem:[#allocation2 + $0xdf0] sm:$0xff]
    %v713 = vld [vmem:[#allocation2 + $0xdf8] sm:$0xff]
    %v714 = vld [vmem:[#allocation2 + $0xe00] sm:$0xff]
    %v715 = vld [vmem:[#allocation2 + $0xe08] sm:$0xff]
    %v716 = vld [vmem:[#allocation2 + $0xe10] sm:$0xff]
    %v717 = vld [vmem:[#allocation2 + $0xe18] sm:$0xff]
    %v718 = vld [vmem:[#allocation2 + $0xe20] sm:$0xff]
    %v719 = vld [vmem:[#allocation2 + $0xe28] sm:$0xff]
    %v720 = vld [vmem:[#allocation2 + $0xe30] sm:$0xff]
    %v721 = vld [vmem:[#allocation2 + $0xe38] sm:$0xff]
    %v722 = vld [vmem:[#allocation2 + $0xe40] sm:$0xff]
    %v723 = vld [vmem:[#allocation2 + $0xe48] sm:$0xff]
    %v724 = vld [vmem:[#allocation2 + $0xe50] sm:$0xff]
    %v725 = vld [vmem:[#allocation2 + $0xe58] sm:$0xff]
    %v726 = vld [vmem:[#allocation2 + $0xe60] sm:$0xff]
    %v727 = vld [vmem:[#allocation2 + $0xe68] sm:$0xff]
    %v728 = vld [vmem:[#allocation2 + $0xe70] sm:$0xff]
    %v729 = vld [vmem:[#allocation2 + $0xe78] sm:$0xff]
    %v730 = vld [vmem:[#allocation2 + $0xe80] sm:$0xff]
    %v731 = vld [vmem:[#allocation2 + $0xe88] sm:$0xff]
    %v732 = vld [vmem:[#allocation2 + $0xe90] sm:$0xff]
    %v733 = vld [vmem:[#allocation2 + $0xe98] sm:$0xff]
    %v734 = vld [vmem:[#allocation2 + $0xea0] sm:$0xff]
    %v735 = vld [vmem:[#allocation2 + $0xea8] sm:$0xff]
    %v736 = vld [vmem:[#allocation2 + $0xeb0] sm:$0xff]
    %v737 = vld [vmem:[#allocation2 + $0xeb8] sm:$0xff]
    %v738 = vld [vmem:[#allocation2 + $0xec0] sm:$0xff]
    %v739 = vld [vmem:[#allocation2 + $0xec8] sm:$0xff]
    %v740 = vld [vmem:[#allocation2 + $0xed0] sm:$0xff]
    %v741 = vld [vmem:[#allocation2 + $0xed8] sm:$0xff]
    %v742 = vld [vmem:[#allocation2 + $0xee0] sm:$0xff]
    %v743 = vld [vmem:[#allocation2 + $0xee8] sm:$0xff]
    %v744 = vld [vmem:[#allocation2 + $0xef0] sm:$0xff]
    %v745 = vld [vmem:[#allocation2 + $0xef8] sm:$0xff]
    %v746 = vld [vmem:[#allocation2 + $0xf00] sm:$0xff]
    %v747 = vld [vmem:[#allocation2 + $0xf08] sm:$0xff]
    %v748 = vld [vmem:[#allocation2 + $0xf10] sm:$0xff]
    %v749 = vld [vmem:[#allocation2 + $0xf18] sm:$0xff]
    %v750 = vld [vmem:[#allocation2 + $0xf20] sm:$0xff]
    %v751 = vld [vmem:[#allocation2 + $0xf28] sm:$0xff]
    %v752 = vld [vmem:[#allocation2 + $0xf30] sm:$0xff]
    %v753 = vld [vmem:[#allocation2 + $0xf38] sm:$0xff]
    %v754 = vld [vmem:[#allocation2 + $0xf40] sm:$0xff]
    %v755 = vld [vmem:[#allocation2 + $0xf48] sm:$0xff]
    %v756 = vld [vmem:[#allocation2 + $0xf50] sm:$0xff]
    %v757 = vld [vmem:[#allocation2 + $0xf58] sm:$0xff]
    %v758 = vld [vmem:[#allocation2 + $0xf60] sm:$0xff]
    %v759 = vld [vmem:[#allocation2 + $0xf68] sm:$0xff]
    %v760 = vld [vmem:[#allocation2 + $0xf70] sm:$0xff]
    %v761 = vld [vmem:[#allocation2 + $0xf78] sm:$0xff]
    %v762 = vld [vmem:[#allocation2 + $0xf80] sm:$0xff]
    %v763 = vld [vmem:[#allocation2 + $0xf88] sm:$0xff]
    %v764 = vld [vmem:[#allocation2 + $0xf90] sm:$0xff]
    %v765 = vld [vmem:[#allocation2 + $0xf98] sm:$0xff]
    %v766 = vld [vmem:[#allocation2 + $0xfa0] sm:$0xff]
    %v767 = vld [vmem:[#allocation2 + $0xfa8] sm:$0xff]
    %v768 = vld [vmem:[#allocation2 + $0xfb0] sm:$0xff]
    %v769 = vld [vmem:[#allocation2 + $0xfb8] sm:$0xff]
    %v770 = vld [vmem:[#allocation2 + $0xfc0] sm:$0xff]
    %v771 = vld [vmem:[#allocation2 + $0xfc8] sm:$0xff]
    %v772 = vld [vmem:[#allocation2 + $0xfd0] sm:$0xff]
    %v773 = vld [vmem:[#allocation2 + $0xfd8] sm:$0xff]
    %v774 = vld [vmem:[#allocation2 + $0xfe0] sm:$0xff]
    %v775 = vld [vmem:[#allocation2 + $0xfe8] sm:$0xff]
    %v776 = vld [vmem:[#allocation2 + $0xff0] sm:$0xff]
    %v777 = vld [vmem:[#allocation2 + $0xff8] sm:$0xff]
    %v778 = vld [vmem:[#allocation2 + $0x1000] sm:$0xff]
    %v779 = vld [vmem:[#allocation2 + $0x1008] sm:$0xff]
    %v780 = vld [vmem:[#allocation2 + $0x1010] sm:$0xff]
    %v781 = vld [vmem:[#allocation2 + $0x1018] sm:$0xff]
    %v782 = vld [vmem:[#allocation2 + $0x1020] sm:$0xff]
    %v783 = vld [vmem:[#allocation2 + $0x1028] sm:$0xff]
    %v784 = vld [vmem:[#allocation2 + $0x1030] sm:$0xff]
    %v785 = vld [vmem:[#allocation2 + $0x1038] sm:$0xff]
    %v786 = vld [vmem:[#allocation2 + $0x1040] sm:$0xff]
    %v787 = vld [vmem:[#allocation2 + $0x1048] sm:$0xff]
    %v788 = vld [vmem:[#allocation2 + $0x1050] sm:$0xff]
    %v789 = vld [vmem:[#allocation2 + $0x1058] sm:$0xff]
    %v790 = vld [vmem:[#allocation2 + $0x1060] sm:$0xff]
    %v791 = vld [vmem:[#allocation2 + $0x1068] sm:$0xff]
    %v792 = vld [vmem:[#allocation2 + $0x1070] sm:$0xff]
    %v793 = vld [vmem:[#allocation2 + $0x1078] sm:$0xff]
    %v794 = vld [vmem:[#allocation2 + $0x1080] sm:$0xff]
    %v795 = vld [vmem:[#allocation2 + $0x1088] sm:$0xff]
    %v796 = vld [vmem:[#allocation2 + $0x1090] sm:$0xff]
    %v797 = vld [vmem:[#allocation2 + $0x1098] sm:$0xff]
    %v798 = vld [vmem:[#allocation2 + $0x10a0] sm:$0xff]
    %v799 = vld [vmem:[#allocation2 + $0x10a8] sm:$0xff]
    %v800 = vld [vmem:[#allocation2 + $0x10b0] sm:$0xff]
    %v801 = vld [vmem:[#allocation2 + $0x10b8] sm:$0xff]
    %v802 = vld [vmem:[#allocation2 + $0x10c0] sm:$0xff]
    %v803 = vld [vmem:[#allocation2 + $0x10c8] sm:$0xff]
    %v804 = vld [vmem:[#allocation2 + $0x10d0] sm:$0xff]
    %v805 = vld [vmem:[#allocation2 + $0x10d8] sm:$0xff]
    %v806 = vld [vmem:[#allocation2 + $0x10e0] sm:$0xff]
    %v807 = vld [vmem:[#allocation2 + $0x10e8] sm:$0xff]
    %v808 = vld [vmem:[#allocation2 + $0x10f0] sm:$0xff]
    %v809 = vld [vmem:[#allocation2 + $0x10f8] sm:$0xff]
    %v810 = vld [vmem:[#allocation2 + $0x1100] sm:$0xff]
    %v811 = vld [vmem:[#allocation2 + $0x1108] sm:$0xff]
    %v812 = vld [vmem:[#allocation2 + $0x1110] sm:$0xff]
    %v813 = vld [vmem:[#allocation2 + $0x1118] sm:$0xff]
    %v814 = vld [vmem:[#allocation2 + $0x1120] sm:$0xff]
    %v815 = vld [vmem:[#allocation2 + $0x1128] sm:$0xff]
    %v816 = vld [vmem:[#allocation2 + $0x1130] sm:$0xff]
    %v817 = vld [vmem:[#allocation2 + $0x1138] sm:$0xff]
    %v818 = vld [vmem:[#allocation2 + $0x1140] sm:$0xff]
    %v819 = vld [vmem:[#allocation2 + $0x1148] sm:$0xff]
    %v820 = vld [vmem:[#allocation2 + $0x1150] sm:$0xff]
    %v821 = vld [vmem:[#allocation2 + $0x1158] sm:$0xff]
    %v822 = vld [vmem:[#allocation2 + $0x1160] sm:$0xff]
    %v823 = vld [vmem:[#allocation2 + $0x1168] sm:$0xff]
    %v824 = vld [vmem:[#allocation2 + $0x1170] sm:$0xff]
    %v825 = vld [vmem:[#allocation2 + $0x1178] sm:$0xff]
    %v826 = vld [vmem:[#allocation2 + $0x1180] sm:$0xff]
    %v827 = vld [vmem:[#allocation2 + $0x1188] sm:$0xff]
    %v828 = vld [vmem:[#allocation2 + $0x1190] sm:$0xff]
    %v829 = vld [vmem:[#allocation2 + $0x1198] sm:$0xff]
    %v830 = vld [vmem:[#allocation2 + $0x11a0] sm:$0xff]
    %v831 = vld [vmem:[#allocation2 + $0x11a8] sm:$0xff]
    %v832 = vld [vmem:[#allocation2 + $0x11b0] sm:$0xff]
    %v833 = vld [vmem:[#allocation2 + $0x11b8] sm:$0xff]
    %v834 = vld [vmem:[#allocation2 + $0x11c0] sm:$0xff]
    %v835 = vld [vmem:[#allocation2 + $0x11c8] sm:$0xff]
    %v836 = vld [vmem:[#allocation2 + $0x11d0] sm:$0xff]
    %v837 = vld [vmem:[#allocation2 + $0x11d8] sm:$0xff]
    %v838 = vld [vmem:[#allocation2 + $0x11e0] sm:$0xff]
    %v839 = vld [vmem:[#allocation2 + $0x11e8] sm:$0xff]
    %v840 = vld [vmem:[#allocation2 + $0x11f0] sm:$0xff]
    %v841 = vld [vmem:[#allocation2 + $0x11f8] sm:$0xff]
    %v842 = vld [vmem:[#allocation2 + $0x1200] sm:$0xff]
    %v843 = vld [vmem:[#allocation2 + $0x1208] sm:$0xff]
    %v844 = vld [vmem:[#allocation2 + $0x1210] sm:$0xff]
    %v845 = vld [vmem:[#allocation2 + $0x1218] sm:$0xff]
    %v846 = vld [vmem:[#allocation2 + $0x1220] sm:$0xff]
    %v847 = vld [vmem:[#allocation2 + $0x1228] sm:$0xff]
    %v848 = vld [vmem:[#allocation2 + $0x1230] sm:$0xff]
    %v849 = vld [vmem:[#allocation2 + $0x1238] sm:$0xff]
    %v850 = vld [vmem:[#allocation2 + $0x1240] sm:$0xff]
    %v851 = vld [vmem:[#allocation2 + $0x1248] sm:$0xff]
    %v852 = vld [vmem:[#allocation2 + $0x1250] sm:$0xff]
    %v853 = vld [vmem:[#allocation2 + $0x1258] sm:$0xff]
    %v854 = vld [vmem:[#allocation2 + $0x1260] sm:$0xff]
    %v855 = vld [vmem:[#allocation2 + $0x1268] sm:$0xff]
    %v856 = vld [vmem:[#allocation2 + $0x1270] sm:$0xff]
    %v857 = vld [vmem:[#allocation2 + $0x1278] sm:$0xff]
    %v858 = vld [vmem:[#allocation2 + $0x1280] sm:$0xff]
    %v859 = vld [vmem:[#allocation2 + $0x1288] sm:$0xff]
    %v860 = vld [vmem:[#allocation2 + $0x1290] sm:$0xff]
    %v861 = vld [vmem:[#allocation2 + $0x1298] sm:$0xff]
    %v862 = vld [vmem:[#allocation2 + $0x12a0] sm:$0xff]
    %v863 = vld [vmem:[#allocation2 + $0x12a8] sm:$0xff]
    %v864 = vld [vmem:[#allocation2 + $0x12b0] sm:$0xff]
    %v865 = vld [vmem:[#allocation2 + $0x12b8] sm:$0xff]
    %v866 = vld [vmem:[#allocation2 + $0x12c0] sm:$0xff]
    %v867 = vld [vmem:[#allocation2 + $0x12c8] sm:$0xff]
    %v868 = vld [vmem:[#allocation2 + $0x12d0] sm:$0xff]
    %v869 = vld [vmem:[#allocation2 + $0x12d8] sm:$0xff]
    %v870 = vld [vmem:[#allocation2 + $0x12e0] sm:$0xff]
    %v871 = vld [vmem:[#allocation2 + $0x12e8] sm:$0xff]
    %v872 = vld [vmem:[#allocation2 + $0x12f0] sm:$0xff]
    %v873 = vld [vmem:[#allocation2 + $0x12f8] sm:$0xff]
    %v874 = vld [vmem:[#allocation2 + $0x1300] sm:$0xff]
    %v875 = vld [vmem:[#allocation2 + $0x1308] sm:$0xff]
    %v876 = vld [vmem:[#allocation2 + $0x1310] sm:$0xff]
    %v877 = vld [vmem:[#allocation2 + $0x1318] sm:$0xff]
    %v878 = vld [vmem:[#allocation2 + $0x1320] sm:$0xff]
    %v879 = vld [vmem:[#allocation2 + $0x1328] sm:$0xff]
    %v880 = vld [vmem:[#allocation2 + $0x1330] sm:$0xff]
    %v881 = vld [vmem:[#allocation2 + $0x1338] sm:$0xff]
    %v882 = vld [vmem:[#allocation2 + $0x1340] sm:$0xff]
    %v883 = vld [vmem:[#allocation2 + $0x1348] sm:$0xff]
    %v884 = vld [vmem:[#allocation2 + $0x1350] sm:$0xff]
    %v885 = vld [vmem:[#allocation2 + $0x1358] sm:$0xff]
    %v886 = vld [vmem:[#allocation2 + $0x1360] sm:$0xff]
    %v887 = vld [vmem:[#allocation2 + $0x1368] sm:$0xff]
    %v888 = vld [vmem:[#allocation2 + $0x1370] sm:$0xff]
    %v889 = vld [vmem:[#allocation2 + $0x1378] sm:$0xff]
    %v890 = vld [vmem:[#allocation2 + $0x1380] sm:$0xff]
    %v891 = vld [vmem:[#allocation2 + $0x1388] sm:$0xff]
    %v892 = vld [vmem:[#allocation2 + $0x1390] sm:$0xff]
    %v893 = vld [vmem:[#allocation2 + $0x1398] sm:$0xff]
    %v894 = vld [vmem:[#allocation2 + $0x13a0] sm:$0xff]
    %v895 = vld [vmem:[#allocation2 + $0x13a8] sm:$0xff]
    %v896 = vld [vmem:[#allocation2 + $0x13b0] sm:$0xff]
    %v897 = vld [vmem:[#allocation2 + $0x13b8] sm:$0xff]
    %v898 = vld [vmem:[#allocation2 + $0x13c0] sm:$0xff]
    %v899 = vld [vmem:[#allocation2 + $0x13c8] sm:$0xff]
    %v900 = vld [vmem:[#allocation2 + $0x13d0] sm:$0xff]
    %v901 = vld [vmem:[#allocation2 + $0x13d8] sm:$0xff]
    %v902 = vld [vmem:[#allocation2 + $0x13e0] sm:$0xff]
    %v903 = vld [vmem:[#allocation2 + $0x13e8] sm:$0xff]
    %v904 = vld [vmem:[#allocation2 + $0x13f0] sm:$0xff]
    %v905 = vld [vmem:[#allocation2 + $0x13f8] sm:$0xff]
    %v906 = vld [vmem:[#allocation2 + $0x1400] sm:$0xff]
    %v907 = vld [vmem:[#allocation2 + $0x1408] sm:$0xff]
    %v908 = vld [vmem:[#allocation2 + $0x1410] sm:$0xff]
    %v909 = vld [vmem:[#allocation2 + $0x1418] sm:$0xff]
    %v910 = vld [vmem:[#allocation2 + $0x1420] sm:$0xff]
    %v911 = vld [vmem:[#allocation2 + $0x1428] sm:$0xff]
    %v912 = vld [vmem:[#allocation2 + $0x1430] sm:$0xff]
    %v913 = vld [vmem:[#allocation2 + $0x1438] sm:$0xff]
    %v914 = vld [vmem:[#allocation2 + $0x1440] sm:$0xff]
    %v915 = vld [vmem:[#allocation2 + $0x1448] sm:$0xff]
    %v916 = vld [vmem:[#allocation2 + $0x1450] sm:$0xff]
    %v917 = vld [vmem:[#allocation2 + $0x1458] sm:$0xff]
    %v918 = vld [vmem:[#allocation2 + $0x1460] sm:$0xff]
    %v919 = vld [vmem:[#allocation2 + $0x1468] sm:$0xff]
    %v920 = vld [vmem:[#allocation2 + $0x1470] sm:$0xff]
    %v921 = vld [vmem:[#allocation2 + $0x1478] sm:$0xff]
    %v922 = vld [vmem:[#allocation2 + $0x1480] sm:$0xff]
    %v923 = vld [vmem:[#allocation2 + $0x1488] sm:$0xff]
    %v924 = vld [vmem:[#allocation2 + $0x1490] sm:$0xff]
    %v925 = vld [vmem:[#allocation2 + $0x1498] sm:$0xff]
    %v926 = vld [vmem:[#allocation2 + $0x14a0] sm:$0xff]
    %v927 = vld [vmem:[#allocation2 + $0x14a8] sm:$0xff]
    %v928 = vld [vmem:[#allocation2 + $0x14b0] sm:$0xff]
    %v929 = vld [vmem:[#allocation2 + $0x14b8] sm:$0xff]
    %v930 = vld [vmem:[#allocation2 + $0x14c0] sm:$0xff]
    %v931 = vld [vmem:[#allocation2 + $0x14c8] sm:$0xff]
    %v932 = vld [vmem:[#allocation2 + $0x14d0] sm:$0xff]
    %v933 = vld [vmem:[#allocation2 + $0x14d8] sm:$0xff]
    %v934 = vld [vmem:[#allocation2 + $0x14e0] sm:$0xff]
    %v935 = vld [vmem:[#allocation2 + $0x14e8] sm:$0xff]
    %v936 = vld [vmem:[#allocation2 + $0x14f0] sm:$0xff]
    %v937 = vld [vmem:[#allocation2 + $0x14f8] sm:$0xff]
    %v938 = vld [vmem:[#allocation2 + $0x1500] sm:$0xff]
    %v939 = vld [vmem:[#allocation2 + $0x1508] sm:$0xff]
    %v940 = vld [vmem:[#allocation2 + $0x1510] sm:$0xff]
    %v941 = vld [vmem:[#allocation2 + $0x1518] sm:$0xff]
    %v942 = vld [vmem:[#allocation2 + $0x1520] sm:$0xff]
    %v943 = vld [vmem:[#allocation2 + $0x1528] sm:$0xff]
    %v944 = vld [vmem:[#allocation2 + $0x1530] sm:$0xff]
    %v945 = vld [vmem:[#allocation2 + $0x1538] sm:$0xff]
    %v946 = vld [vmem:[#allocation2 + $0x1540] sm:$0xff]
    %v947 = vld [vmem:[#allocation2 + $0x1548] sm:$0xff]
    %v948 = vld [vmem:[#allocation2 + $0x1550] sm:$0xff]
    %v949 = vld [vmem:[#allocation2 + $0x1558] sm:$0xff]
    %v950 = vld [vmem:[#allocation2 + $0x1560] sm:$0xff]
    %v951 = vld [vmem:[#allocation2 + $0x1568] sm:$0xff]
    %v952 = vld [vmem:[#allocation2 + $0x1570] sm:$0xff]
    %v953 = vld [vmem:[#allocation2 + $0x1578] sm:$0xff]
    %v954 = vld [vmem:[#allocation2 + $0x1580] sm:$0xff]
    %v955 = vld [vmem:[#allocation2 + $0x1588] sm:$0xff]
    %v956 = vld [vmem:[#allocation2 + $0x1590] sm:$0xff]
    %v957 = vld [vmem:[#allocation2 + $0x1598] sm:$0xff]
    %v958 = vld [vmem:[#allocation2 + $0x15a0] sm:$0xff]
    %v959 = vld [vmem:[#allocation2 + $0x15a8] sm:$0xff]
    %v960 = vld [vmem:[#allocation2 + $0x15b0] sm:$0xff]
    %v961 = vld [vmem:[#allocation2 + $0x15b8] sm:$0xff]
    %v962 = vld [vmem:[#allocation2 + $0x15c0] sm:$0xff]
    %v963 = vld [vmem:[#allocation2 + $0x15c8] sm:$0xff]
    %v964 = vld [vmem:[#allocation2 + $0x15d0] sm:$0xff]
    %v965 = vld [vmem:[#allocation2 + $0x15d8] sm:$0xff]
    %v966 = vld [vmem:[#allocation2 + $0x15e0] sm:$0xff]
    %v967 = vld [vmem:[#allocation2 + $0x15e8] sm:$0xff]
    %v968 = vld [vmem:[#allocation2 + $0x15f0] sm:$0xff]
    %v969 = vld [vmem:[#allocation2 + $0x15f8] sm:$0xff]
    %v970 = vld [vmem:[#allocation2 + $0x1600] sm:$0xff]
    %v971 = vld [vmem:[#allocation2 + $0x1608] sm:$0xff]
    %v972 = vld [vmem:[#allocation2 + $0x1610] sm:$0xff]
    %v973 = vld [vmem:[#allocation2 + $0x1618] sm:$0xff]
    %v974 = vld [vmem:[#allocation2 + $0x1620] sm:$0xff]
    %v975 = vld [vmem:[#allocation2 + $0x1628] sm:$0xff]
    %v976 = vld [vmem:[#allocation2 + $0x1630] sm:$0xff]
    %v977 = vld [vmem:[#allocation2 + $0x1638] sm:$0xff]
    %v978 = vld [vmem:[#allocation2 + $0x1640] sm:$0xff]
    %v979 = vld [vmem:[#allocation2 + $0x1648] sm:$0xff]
    %v980 = vld [vmem:[#allocation2 + $0x1650] sm:$0xff]
    %v981 = vld [vmem:[#allocation2 + $0x1658] sm:$0xff]
    %v982 = vld [vmem:[#allocation2 + $0x1660] sm:$0xff]
    %v983 = vld [vmem:[#allocation2 + $0x1668] sm:$0xff]
    %v984 = vld [vmem:[#allocation2 + $0x1670] sm:$0xff]
    %v985 = vld [vmem:[#allocation2 + $0x1678] sm:$0xff]
    %v986 = vld [vmem:[#allocation2 + $0x1680] sm:$0xff]
    %v987 = vld [vmem:[#allocation2 + $0x1688] sm:$0xff]
    %v988 = vld [vmem:[#allocation2 + $0x1690] sm:$0xff]
    %v989 = vld [vmem:[#allocation2 + $0x1698] sm:$0xff]
    %v990 = vld [vmem:[#allocation2 + $0x16a0] sm:$0xff]
    %v991 = vld [vmem:[#allocation2 + $0x16a8] sm:$0xff]
    %v992 = vld [vmem:[#allocation2 + $0x16b0] sm:$0xff]
    %v993 = vld [vmem:[#allocation2 + $0x16b8] sm:$0xff]
    %v994 = vld [vmem:[#allocation2 + $0x16c0] sm:$0xff]
    %v995 = vld [vmem:[#allocation2 + $0x16c8] sm:$0xff]
    %v996 = vld [vmem:[#allocation2 + $0x16d0] sm:$0xff]
    %v997 = vld [vmem:[#allocation2 + $0x16d8] sm:$0xff]
    %v998 = vld [vmem:[#allocation2 + $0x16e0] sm:$0xff]
    %v999 = vld [vmem:[#allocation2 + $0x16e8] sm:$0xff]
    %v1000 = vld [vmem:[#allocation2 + $0x16f0] sm:$0xff]
    %v1001 = vld [vmem:[#allocation2 + $0x16f8] sm:$0xff]
    %v1002 = vld [vmem:[#allocation2 + $0x1700] sm:$0xff]
    %v1003 = vld [vmem:[#allocation2 + $0x1708] sm:$0xff]
    %v1004 = vld [vmem:[#allocation2 + $0x1710] sm:$0xff]
    %v1005 = vld [vmem:[#allocation2 + $0x1718] sm:$0xff]
    %v1006 = vld [vmem:[#allocation2 + $0x1720] sm:$0xff]
    %v1007 = vld [vmem:[#allocation2 + $0x1728] sm:$0xff]
    %v1008 = vld [vmem:[#allocation2 + $0x1730] sm:$0xff]
    %v1009 = vld [vmem:[#allocation2 + $0x1738] sm:$0xff]
    %v1010 = vld [vmem:[#allocation2 + $0x1740] sm:$0xff]
    %v1011 = vld [vmem:[#allocation2 + $0x1748] sm:$0xff]
    %v1012 = vld [vmem:[#allocation2 + $0x1750] sm:$0xff]
    %v1013 = vld [vmem:[#allocation2 + $0x1758] sm:$0xff]
    %v1014 = vld [vmem:[#allocation2 + $0x1760] sm:$0xff]
    %v1015 = vld [vmem:[#allocation2 + $0x1768] sm:$0xff]
    %v1016 = vld [vmem:[#allocation2 + $0x1770] sm:$0xff]
    %v1017 = vld [vmem:[#allocation2 + $0x1778] sm:$0xff]
    %v1018 = vld [vmem:[#allocation2 + $0x1780] sm:$0xff]
    %v1019 = vld [vmem:[#allocation2 + $0x1788] sm:$0xff]
    %v1020 = vld [vmem:[#allocation2 + $0x1790] sm:$0xff]
    %v1021 = vld [vmem:[#allocation2 + $0x1798] sm:$0xff]
    %v1022 = vld [vmem:[#allocation2 + $0x17a0] sm:$0xff]
    %v1023 = vld [vmem:[#allocation2 + $0x17a8] sm:$0xff]
    %v1024 = vld [vmem:[#allocation2 + $0x17b0] sm:$0xff]
    %v1025 = vld [vmem:[#allocation2 + $0x17b8] sm:$0xff]
    %v1026 = vld [vmem:[#allocation2 + $0x17c0] sm:$0xff]
    %v1027 = vld [vmem:[#allocation2 + $0x17c8] sm:$0xff]
    %v1028 = vld [vmem:[#allocation2 + $0x17d0] sm:$0xff]
    %v1029 = vld [vmem:[#allocation2 + $0x17d8] sm:$0xff]
    %v1030 = vld [vmem:[#allocation2 + $0x17e0] sm:$0xff]
    %v1031 = vld [vmem:[#allocation2 + $0x17e8] sm:$0xff]
    %v1032 = vld [vmem:[#allocation2 + $0x17f0] sm:$0xff]
    %v1033 = vld [vmem:[#allocation2 + $0x17f8] sm:$0xff]
    %v1034 = vld [vmem:[#allocation2 + $0x1800] sm:$0xff]
    %v1035 = vld [vmem:[#allocation2 + $0x1808] sm:$0xff]
    %v1036 = vld [vmem:[#allocation2 + $0x1810] sm:$0xff]
    %v1037 = vld [vmem:[#allocation2 + $0x1818] sm:$0xff]
    %v1038 = vld [vmem:[#allocation2 + $0x1820] sm:$0xff]
    %v1039 = vld [vmem:[#allocation2 + $0x1828] sm:$0xff]
    %v1040 = vld [vmem:[#allocation2 + $0x1830] sm:$0xff]
    %v1041 = vld [vmem:[#allocation2 + $0x1838] sm:$0xff]
    %v1042 = vld [vmem:[#allocation2 + $0x1840] sm:$0xff]
    %v1043 = vld [vmem:[#allocation2 + $0x1848] sm:$0xff]
    %v1044 = vld [vmem:[#allocation2 + $0x1850] sm:$0xff]
    %v1045 = vld [vmem:[#allocation2 + $0x1858] sm:$0xff]
    %v1046 = vld [vmem:[#allocation2 + $0x1860] sm:$0xff]
    %v1047 = vld [vmem:[#allocation2 + $0x1868] sm:$0xff]
    %v1048 = vld [vmem:[#allocation2 + $0x1870] sm:$0xff]
    %v1049 = vld [vmem:[#allocation2 + $0x1878] sm:$0xff]
    %v1050 = vld [vmem:[#allocation2 + $0x1880] sm:$0xff]
    %v1051 = vld [vmem:[#allocation2 + $0x1888] sm:$0xff]
    %v1052 = vld [vmem:[#allocation2 + $0x1890] sm:$0xff]
    %v1053 = vld [vmem:[#allocation2 + $0x1898] sm:$0xff]
    %v1054 = vld [vmem:[#allocation2 + $0x18a0] sm:$0xff]
    %v1055 = vld [vmem:[#allocation2 + $0x18a8] sm:$0xff]
    %v1056 = vld [vmem:[#allocation2 + $0x18b0] sm:$0xff]
    %v1057 = vld [vmem:[#allocation2 + $0x18b8] sm:$0xff]
    %v1058 = vld [vmem:[#allocation2 + $0x18c0] sm:$0xff]
    %v1059 = vld [vmem:[#allocation2 + $0x18c8] sm:$0xff]
    %v1060 = vld [vmem:[#allocation2 + $0x18d0] sm:$0xff]
    %v1061 = vld [vmem:[#allocation2 + $0x18d8] sm:$0xff]
    %v1062 = vld [vmem:[#allocation2 + $0x18e0] sm:$0xff]
    %v1063 = vld [vmem:[#allocation2 + $0x18e8] sm:$0xff]
    %v1064 = vld [vmem:[#allocation2 + $0x18f0] sm:$0xff]
    %v1065 = vld [vmem:[#allocation2 + $0x18f8] sm:$0xff]
    %v1066 = vld [vmem:[#allocation2 + $0x1900] sm:$0xff]
    %v1067 = vld [vmem:[#allocation2 + $0x1908] sm:$0xff]
    %v1068 = vld [vmem:[#allocation2 + $0x1910] sm:$0xff]
    %v1069 = vld [vmem:[#allocation2 + $0x1918] sm:$0xff]
    %v1070 = vld [vmem:[#allocation2 + $0x1920] sm:$0xff]
    %v1071 = vld [vmem:[#allocation2 + $0x1928] sm:$0xff]
    %v1072 = vld [vmem:[#allocation2 + $0x1930] sm:$0xff]
    %v1073 = vld [vmem:[#allocation2 + $0x1938] sm:$0xff]
    %v1074 = vld [vmem:[#allocation2 + $0x1940] sm:$0xff]
    %v1075 = vld [vmem:[#allocation2 + $0x1948] sm:$0xff]
    %v1076 = vld [vmem:[#allocation2 + $0x1950] sm:$0xff]
    %v1077 = vld [vmem:[#allocation2 + $0x1958] sm:$0xff]
    %v1078 = vld [vmem:[#allocation2 + $0x1960] sm:$0xff]
    %v1079 = vld [vmem:[#allocation2 + $0x1968] sm:$0xff]
    %v1080 = vld [vmem:[#allocation2 + $0x1970] sm:$0xff]
    %v1081 = vld [vmem:[#allocation2 + $0x1978] sm:$0xff]
    %v1082 = vld [vmem:[#allocation2 + $0x1980] sm:$0xff]
    %v1083 = vld [vmem:[#allocation2 + $0x1988] sm:$0xff]
    %v1084 = vld [vmem:[#allocation2 + $0x1990] sm:$0xff]
    %v1085 = vld [vmem:[#allocation2 + $0x1998] sm:$0xff]
    %v1086 = vld [vmem:[#allocation2 + $0x19a0] sm:$0xff]
    %v1087 = vld [vmem:[#allocation2 + $0x19a8] sm:$0xff]
    %v1088 = vld [vmem:[#allocation2 + $0x19b0] sm:$0xff]
    %v1089 = vld [vmem:[#allocation2 + $0x19b8] sm:$0xff]
    %v1090 = vld [vmem:[#allocation2 + $0x19c0] sm:$0xff]
    %v1091 = vld [vmem:[#allocation2 + $0x19c8] sm:$0xff]
    %v1092 = vld [vmem:[#allocation2 + $0x19d0] sm:$0xff]
    %v1093 = vld [vmem:[#allocation2 + $0x19d8] sm:$0xff]
    %v1094 = vld [vmem:[#allocation2 + $0x19e0] sm:$0xff]
    %v1095 = vld [vmem:[#allocation2 + $0x19e8] sm:$0xff]
    %v1096 = vld [vmem:[#allocation2 + $0x19f0] sm:$0xff]
    %v1097 = vld [vmem:[#allocation2 + $0x19f8] sm:$0xff]
    %v1098 = vld [vmem:[#allocation2 + $0x1a00] sm:$0xff]
    %v1099 = vld [vmem:[#allocation2 + $0x1a08] sm:$0xff]
    %v1100 = vld [vmem:[#allocation2 + $0x1a10] sm:$0xff]
    %v1101 = vld [vmem:[#allocation2 + $0x1a18] sm:$0xff]
    %v1102 = vld [vmem:[#allocation2 + $0x1a20] sm:$0xff]
    %v1103 = vld [vmem:[#allocation2 + $0x1a28] sm:$0xff]
    %v1104 = vld [vmem:[#allocation2 + $0x1a30] sm:$0xff]
    %v1105 = vld [vmem:[#allocation2 + $0x1a38] sm:$0xff]
    %v1106 = vld [vmem:[#allocation2 + $0x1a40] sm:$0xff]
    %v1107 = vld [vmem:[#allocation2 + $0x1a48] sm:$0xff]
    %v1108 = vld [vmem:[#allocation2 + $0x1a50] sm:$0xff]
    %v1109 = vld [vmem:[#allocation2 + $0x1a58] sm:$0xff]
    %v1110 = vld [vmem:[#allocation2 + $0x1a60] sm:$0xff]
    %v1111 = vld [vmem:[#allocation2 + $0x1a68] sm:$0xff]
    %v1112 = vld [vmem:[#allocation2 + $0x1a70] sm:$0xff]
    %v1113 = vld [vmem:[#allocation2 + $0x1a78] sm:$0xff]
    %v1114 = vld [vmem:[#allocation2 + $0x1a80] sm:$0xff]
    %v1115 = vld [vmem:[#allocation2 + $0x1a88] sm:$0xff]
    %v1116 = vld [vmem:[#allocation2 + $0x1a90] sm:$0xff]
    %v1117 = vld [vmem:[#allocation2 + $0x1a98] sm:$0xff]
    %v1118 = vld [vmem:[#allocation2 + $0x1aa0] sm:$0xff]
    %v1119 = vld [vmem:[#allocation2 + $0x1aa8] sm:$0xff]
    %v1120 = vld [vmem:[#allocation2 + $0x1ab0] sm:$0xff]
    %v1121 = vld [vmem:[#allocation2 + $0x1ab8] sm:$0xff]
    %v1122 = vld [vmem:[#allocation2 + $0x1ac0] sm:$0xff]
    %v1123 = vld [vmem:[#allocation2 + $0x1ac8] sm:$0xff]
    %v1124 = vld [vmem:[#allocation2 + $0x1ad0] sm:$0xff]
    %v1125 = vld [vmem:[#allocation2 + $0x1ad8] sm:$0xff]
    %v1126 = vld [vmem:[#allocation2 + $0x1ae0] sm:$0xff]
    %v1127 = vld [vmem:[#allocation2 + $0x1ae8] sm:$0xff]
    %v1128 = vld [vmem:[#allocation2 + $0x1af0] sm:$0xff]
    %v1129 = vld [vmem:[#allocation2 + $0x1af8] sm:$0xff]
    %v1130 = vld [vmem:[#allocation2 + $0x1b00] sm:$0xff]
    %v1131 = vld [vmem:[#allocation2 + $0x1b08] sm:$0xff]
    %v1132 = vld [vmem:[#allocation2 + $0x1b10] sm:$0xff]
    %v1133 = vld [vmem:[#allocation2 + $0x1b18] sm:$0xff]
    %v1134 = vld [vmem:[#allocation2 + $0x1b20] sm:$0xff]
    %v1135 = vld [vmem:[#allocation2 + $0x1b28] sm:$0xff]
    %v1136 = vld [vmem:[#allocation2 + $0x1b30] sm:$0xff]
    %v1137 = vld [vmem:[#allocation2 + $0x1b38] sm:$0xff]
    %v1138 = vld [vmem:[#allocation2 + $0x1b40] sm:$0xff]
    %v1139 = vld [vmem:[#allocation2 + $0x1b48] sm:$0xff]
    %v1140 = vld [vmem:[#allocation2 + $0x1b50] sm:$0xff]
    %v1141 = vld [vmem:[#allocation2 + $0x1b58] sm:$0xff]
    %v1142 = vld [vmem:[#allocation2 + $0x1b60] sm:$0xff]
    %v1143 = vld [vmem:[#allocation2 + $0x1b68] sm:$0xff]
    %v1144 = vld [vmem:[#allocation2 + $0x1b70] sm:$0xff]
    %v1145 = vld [vmem:[#allocation2 + $0x1b78] sm:$0xff]
    %v1146 = vld [vmem:[#allocation2 + $0x1b80] sm:$0xff]
    %v1147 = vld [vmem:[#allocation2 + $0x1b88] sm:$0xff]
    %v1148 = vld [vmem:[#allocation2 + $0x1b90] sm:$0xff]
    %v1149 = vld [vmem:[#allocation2 + $0x1b98] sm:$0xff]
    %v1150 = vld [vmem:[#allocation2 + $0x1ba0] sm:$0xff]
    %v1151 = vld [vmem:[#allocation2 + $0x1ba8] sm:$0xff]
    %v1152 = vld [vmem:[#allocation2 + $0x1bb0] sm:$0xff]
    %v1153 = vld [vmem:[#allocation2 + $0x1bb8] sm:$0xff]
    %v1154 = vld [vmem:[#allocation2 + $0x1bc0] sm:$0xff]
    %v1155 = vld [vmem:[#allocation2 + $0x1bc8] sm:$0xff]
    %v1156 = vld [vmem:[#allocation2 + $0x1bd0] sm:$0xff]
    %v1157 = vld [vmem:[#allocation2 + $0x1bd8] sm:$0xff]
    %v1158 = vld [vmem:[#allocation2 + $0x1be0] sm:$0xff]
    %v1159 = vld [vmem:[#allocation2 + $0x1be8] sm:$0xff]
    %v1160 = vld [vmem:[#allocation2 + $0x1bf0] sm:$0xff]
    %v1161 = vld [vmem:[#allocation2 + $0x1bf8] sm:$0xff]
    %v1162 = vld [vmem:[#allocation2 + $0x1c00] sm:$0xff]
    %v1163 = vld [vmem:[#allocation2 + $0x1c08] sm:$0xff]
    %v1164 = vld [vmem:[#allocation2 + $0x1c10] sm:$0xff]
    %v1165 = vld [vmem:[#allocation2 + $0x1c18] sm:$0xff]
    %v1166 = vld [vmem:[#allocation2 + $0x1c20] sm:$0xff]
    %v1167 = vld [vmem:[#allocation2 + $0x1c28] sm:$0xff]
    %v1168 = vld [vmem:[#allocation2 + $0x1c30] sm:$0xff]
    %v1169 = vld [vmem:[#allocation2 + $0x1c38] sm:$0xff]
    %v1170 = vld [vmem:[#allocation2 + $0x1c40] sm:$0xff]
    %v1171 = vld [vmem:[#allocation2 + $0x1c48] sm:$0xff]
    %v1172 = vld [vmem:[#allocation2 + $0x1c50] sm:$0xff]
    %v1173 = vld [vmem:[#allocation2 + $0x1c58] sm:$0xff]
    %v1174 = vld [vmem:[#allocation2 + $0x1c60] sm:$0xff]
    %v1175 = vld [vmem:[#allocation2 + $0x1c68] sm:$0xff]
    %v1176 = vld [vmem:[#allocation2 + $0x1c70] sm:$0xff]
    %v1177 = vld [vmem:[#allocation2 + $0x1c78] sm:$0xff]
    %v1178 = vld [vmem:[#allocation2 + $0x1c80] sm:$0xff]
    %v1179 = vld [vmem:[#allocation2 + $0x1c88] sm:$0xff]
    %v1180 = vld [vmem:[#allocation2 + $0x1c90] sm:$0xff]
    %v1181 = vld [vmem:[#allocation2 + $0x1c98] sm:$0xff]
    %v1182 = vld [vmem:[#allocation2 + $0x1ca0] sm:$0xff]
    %v1183 = vld [vmem:[#allocation2 + $0x1ca8] sm:$0xff]
    %v1184 = vld [vmem:[#allocation2 + $0x1cb0] sm:$0xff]
    %v1185 = vld [vmem:[#allocation2 + $0x1cb8] sm:$0xff]
    %v1186 = vld [vmem:[#allocation2 + $0x1cc0] sm:$0xff]
    %v1187 = vld [vmem:[#allocation2 + $0x1cc8] sm:$0xff]
    %v1188 = vld [vmem:[#allocation2 + $0x1cd0] sm:$0xff]
    %v1189 = vld [vmem:[#allocation2 + $0x1cd8] sm:$0xff]
    %v1190 = vld [vmem:[#allocation2 + $0x1ce0] sm:$0xff]
    %v1191 = vld [vmem:[#allocation2 + $0x1ce8] sm:$0xff]
    %v1192 = vld [vmem:[#allocation2 + $0x1cf0] sm:$0xff]
    %v1193 = vld [vmem:[#allocation2 + $0x1cf8] sm:$0xff]
    %v1194 = vld [vmem:[#allocation2 + $0x1d00] sm:$0xff]
    %v1195 = vld [vmem:[#allocation2 + $0x1d08] sm:$0xff]
    %v1196 = vld [vmem:[#allocation2 + $0x1d10] sm:$0xff]
    %v1197 = vld [vmem:[#allocation2 + $0x1d18] sm:$0xff]
    %v1198 = vld [vmem:[#allocation2 + $0x1d20] sm:$0xff]
    %v1199 = vld [vmem:[#allocation2 + $0x1d28] sm:$0xff]
    %v1200 = vld [vmem:[#allocation2 + $0x1d30] sm:$0xff]
    %v1201 = vld [vmem:[#allocation2 + $0x1d38] sm:$0xff]
    %v1202 = vld [vmem:[#allocation2 + $0x1d40] sm:$0xff]
    %v1203 = vld [vmem:[#allocation2 + $0x1d48] sm:$0xff]
    %v1204 = vld [vmem:[#allocation2 + $0x1d50] sm:$0xff]
    %v1205 = vld [vmem:[#allocation2 + $0x1d58] sm:$0xff]
    %v1206 = vld [vmem:[#allocation2 + $0x1d60] sm:$0xff]
    %v1207 = vld [vmem:[#allocation2 + $0x1d68] sm:$0xff]
    %v1208 = vld [vmem:[#allocation2 + $0x1d70] sm:$0xff]
    %v1209 = vld [vmem:[#allocation2 + $0x1d78] sm:$0xff]
    %v1210 = vld [vmem:[#allocation2 + $0x1d80] sm:$0xff]
    %v1211 = vld [vmem:[#allocation2 + $0x1d88] sm:$0xff]
    %v1212 = vld [vmem:[#allocation2 + $0x1d90] sm:$0xff]
    %v1213 = vld [vmem:[#allocation2 + $0x1d98] sm:$0xff]
    %v1214 = vld [vmem:[#allocation2 + $0x1da0] sm:$0xff]
    %v1215 = vld [vmem:[#allocation2 + $0x1da8] sm:$0xff]
    %v1216 = vld [vmem:[#allocation2 + $0x1db0] sm:$0xff]
    %v1217 = vld [vmem:[#allocation2 + $0x1db8] sm:$0xff]
    %v1218 = vld [vmem:[#allocation2 + $0x1dc0] sm:$0xff]
    %v1219 = vld [vmem:[#allocation2 + $0x1dc8] sm:$0xff]
    %v1220 = vld [vmem:[#allocation2 + $0x1dd0] sm:$0xff]
    %v1221 = vld [vmem:[#allocation2 + $0x1dd8] sm:$0xff]
    %v1222 = vld [vmem:[#allocation2 + $0x1de0] sm:$0xff]
    %v1223 = vld [vmem:[#allocation2 + $0x1de8] sm:$0xff]
    %v1224 = vld [vmem:[#allocation2 + $0x1df0] sm:$0xff]
    %v1225 = vld [vmem:[#allocation2 + $0x1df8] sm:$0xff]
    %v1226 = vld [vmem:[#allocation2 + $0x1e00] sm:$0xff]
    %v1227 = vld [vmem:[#allocation2 + $0x1e08] sm:$0xff]
    %v1228 = vld [vmem:[#allocation2 + $0x1e10] sm:$0xff]
    %v1229 = vld [vmem:[#allocation2 + $0x1e18] sm:$0xff]
    %v1230 = vld [vmem:[#allocation2 + $0x1e20] sm:$0xff]
    %v1231 = vld [vmem:[#allocation2 + $0x1e28] sm:$0xff]
    %v1232 = vld [vmem:[#allocation2 + $0x1e30] sm:$0xff]
    %v1233 = vld [vmem:[#allocation2 + $0x1e38] sm:$0xff]
    %v1234 = vld [vmem:[#allocation2 + $0x1e40] sm:$0xff]
    %v1235 = vld [vmem:[#allocation2 + $0x1e48] sm:$0xff]
    %v1236 = vld [vmem:[#allocation2 + $0x1e50] sm:$0xff]
    %v1237 = vld [vmem:[#allocation2 + $0x1e58] sm:$0xff]
    %v1238 = vld [vmem:[#allocation2 + $0x1e60] sm:$0xff]
    %v1239 = vld [vmem:[#allocation2 + $0x1e68] sm:$0xff]
    %v1240 = vld [vmem:[#allocation2 + $0x1e70] sm:$0xff]
    %v1241 = vld [vmem:[#allocation2 + $0x1e78] sm:$0xff]
    %v1242 = vld [vmem:[#allocation2 + $0x1e80] sm:$0xff]
    %v1243 = vld [vmem:[#allocation2 + $0x1e88] sm:$0xff]
    %v1244 = vld [vmem:[#allocation2 + $0x1e90] sm:$0xff]
    %v1245 = vld [vmem:[#allocation2 + $0x1e98] sm:$0xff]
    %v1246 = vld [vmem:[#allocation2 + $0x1ea0] sm:$0xff]
    %v1247 = vld [vmem:[#allocation2 + $0x1ea8] sm:$0xff]
    %v1248 = vld [vmem:[#allocation2 + $0x1eb0] sm:$0xff]
    %v1249 = vld [vmem:[#allocation2 + $0x1eb8] sm:$0xff]
    %v1250 = vld [vmem:[#allocation2 + $0x1ec0] sm:$0xff]
    %v1251 = vld [vmem:[#allocation2 + $0x1ec8] sm:$0xff]
    %v1252 = vld [vmem:[#allocation2 + $0x1ed0] sm:$0xff]
    %v1253 = vld [vmem:[#allocation2 + $0x1ed8] sm:$0xff]
    %v1254 = vld [vmem:[#allocation2 + $0x1ee0] sm:$0xff]
    %v1255 = vld [vmem:[#allocation2 + $0x1ee8] sm:$0xff]
    %v1256 = vld [vmem:[#allocation2 + $0x1ef0] sm:$0xff]
    %v1257 = vld [vmem:[#allocation2 + $0x1ef8] sm:$0xff]
    %v1258 = vld [vmem:[#allocation2 + $0x1f00] sm:$0xff]
    %v1259 = vld [vmem:[#allocation2 + $0x1f08] sm:$0xff]
    %v1260 = vld [vmem:[#allocation2 + $0x1f10] sm:$0xff]
    %v1261 = vld [vmem:[#allocation2 + $0x1f18] sm:$0xff]
    %v1262 = vld [vmem:[#allocation2 + $0x1f20] sm:$0xff]
    %v1263 = vld [vmem:[#allocation2 + $0x1f28] sm:$0xff]
    %v1264 = vld [vmem:[#allocation2 + $0x1f30] sm:$0xff]
    %v1265 = vld [vmem:[#allocation2 + $0x1f38] sm:$0xff]
    %v1266 = vld [vmem:[#allocation2 + $0x1f40] sm:$0xff]
    %v1267 = vld [vmem:[#allocation2 + $0x1f48] sm:$0xff]
    %v1268 = vld [vmem:[#allocation2 + $0x1f50] sm:$0xff]
    %v1269 = vld [vmem:[#allocation2 + $0x1f58] sm:$0xff]
    %v1270 = vld [vmem:[#allocation2 + $0x1f60] sm:$0xff]
    %v1271 = vld [vmem:[#allocation2 + $0x1f68] sm:$0xff]
    %v1272 = vld [vmem:[#allocation2 + $0x1f70] sm:$0xff]
    %v1273 = vld [vmem:[#allocation2 + $0x1f78] sm:$0xff]
    %v1274 = vld [vmem:[#allocation2 + $0x1f80] sm:$0xff]
    %v1275 = vld [vmem:[#allocation2 + $0x1f88] sm:$0xff]
    %v1276 = vld [vmem:[#allocation2 + $0x1f90] sm:$0xff]
    %v1277 = vld [vmem:[#allocation2 + $0x1f98] sm:$0xff]
    %v1278 = vld [vmem:[#allocation2 + $0x1fa0] sm:$0xff]
    %v1279 = vld [vmem:[#allocation2 + $0x1fa8] sm:$0xff]
    %v1280 = vld [vmem:[#allocation2 + $0x1fb0] sm:$0xff]
    %v1281 = vld [vmem:[#allocation2 + $0x1fb8] sm:$0xff]
    %v1282 = vld [vmem:[#allocation2 + $0x1fc0] sm:$0xff]
    %v1283 = vld [vmem:[#allocation2 + $0x1fc8] sm:$0xff]
    %v1284 = vld [vmem:[#allocation2 + $0x1fd0] sm:$0xff]
    %v1285 = vld [vmem:[#allocation2 + $0x1fd8] sm:$0xff]
    %v1286 = vld [vmem:[#allocation2 + $0x1fe0] sm:$0xff]
    %v1287 = vld [vmem:[#allocation2 + $0x1fe8] sm:$0xff]
    %v1288 = vld [vmem:[#allocation2 + $0x1ff0] sm:$0xff]
    %v1289 = vld [vmem:[#allocation2 + $0x1ff8] sm:$0xff]
    %v1290 = vld [vmem:[#allocation2 + $0x2000] sm:$0xff]
    %v1291 = vld [vmem:[#allocation2 + $0x2008] sm:$0xff]
    %v1292 = vld [vmem:[#allocation2 + $0x2010] sm:$0xff]
    %v1293 = vld [vmem:[#allocation2 + $0x2018] sm:$0xff]
    %v1294 = vld [vmem:[#allocation2 + $0x2020] sm:$0xff]
    %v1295 = vld [vmem:[#allocation2 + $0x2028] sm:$0xff]
    %v1296 = vld [vmem:[#allocation2 + $0x2030] sm:$0xff]
    %v1297 = vld [vmem:[#allocation2 + $0x2038] sm:$0xff]
    %v1298 = vld [vmem:[#allocation2 + $0x2040] sm:$0xff]
    %v1299 = vld [vmem:[#allocation2 + $0x2048] sm:$0xff]
    %v1300 = vld [vmem:[#allocation2 + $0x2050] sm:$0xff]
    %v1301 = vld [vmem:[#allocation2 + $0x2058] sm:$0xff]
    %v1302 = vld [vmem:[#allocation2 + $0x2060] sm:$0xff]
    %v1303 = vld [vmem:[#allocation2 + $0x2068] sm:$0xff]
    %v1304 = vld [vmem:[#allocation2 + $0x2070] sm:$0xff]
    %v1305 = vld [vmem:[#allocation2 + $0x2078] sm:$0xff]
    %v1306 = vld [vmem:[#allocation2 + $0x2080] sm:$0xff]
    %v1307 = vld [vmem:[#allocation2 + $0x2088] sm:$0xff]
    %v1308 = vld [vmem:[#allocation2 + $0x2090] sm:$0xff]
    %v1309 = vld [vmem:[#allocation2 + $0x2098] sm:$0xff]
    %v1310 = vld [vmem:[#allocation2 + $0x20a0] sm:$0xff]
    %v1311 = vld [vmem:[#allocation2 + $0x20a8] sm:$0xff]
    %v1312 = vld [vmem:[#allocation2 + $0x20b0] sm:$0xff]
    %v1313 = vld [vmem:[#allocation2 + $0x20b8] sm:$0xff]
    %v1314 = vld [vmem:[#allocation2 + $0x20c0] sm:$0xff]
    %v1315 = vld [vmem:[#allocation2 + $0x20c8] sm:$0xff]
    %v1316 = vld [vmem:[#allocation2 + $0x20d0] sm:$0xff]
    %v1317 = vld [vmem:[#allocation2 + $0x20d8] sm:$0xff]
    %v1318 = vld [vmem:[#allocation2 + $0x20e0] sm:$0xff]
    %v1319 = vld [vmem:[#allocation2 + $0x20e8] sm:$0xff]
    %v1320 = vld [vmem:[#allocation2 + $0x20f0] sm:$0xff]
    %v1321 = vld [vmem:[#allocation2 + $0x20f8] sm:$0xff]
    %v1322 = vld [vmem:[#allocation2 + $0x2100] sm:$0xff]
    %v1323 = vld [vmem:[#allocation2 + $0x2108] sm:$0xff]
    %v1324 = vld [vmem:[#allocation2 + $0x2110] sm:$0xff]
    %v1325 = vld [vmem:[#allocation2 + $0x2118] sm:$0xff]
    %v1326 = vld [vmem:[#allocation2 + $0x2120] sm:$0xff]
    %v1327 = vld [vmem:[#allocation2 + $0x2128] sm:$0xff]
    %v1328 = vld [vmem:[#allocation2 + $0x2130] sm:$0xff]
    %v1329 = vld [vmem:[#allocation2 + $0x2138] sm:$0xff]
    %v1330 = vld [vmem:[#allocation2 + $0x2140] sm:$0xff]
    %v1331 = vld [vmem:[#allocation2 + $0x2148] sm:$0xff]
    %v1332 = vld [vmem:[#allocation2 + $0x2150] sm:$0xff]
    %v1333 = vld [vmem:[#allocation2 + $0x2158] sm:$0xff]
    %v1334 = vld [vmem:[#allocation2 + $0x2160] sm:$0xff]
    %v1335 = vld [vmem:[#allocation2 + $0x2168] sm:$0xff]
    %v1336 = vld [vmem:[#allocation2 + $0x2170] sm:$0xff]
    %v1337 = vld [vmem:[#allocation2 + $0x2178] sm:$0xff]
    %v1338 = vld [vmem:[#allocation2 + $0x2180] sm:$0xff]
    %v1339 = vld [vmem:[#allocation2 + $0x2188] sm:$0xff]
    %v1340 = vld [vmem:[#allocation2 + $0x2190] sm:$0xff]
    %v1341 = vld [vmem:[#allocation2 + $0x2198] sm:$0xff]
    %v1342 = vld [vmem:[#allocation2 + $0x21a0] sm:$0xff]
    %v1343 = vld [vmem:[#allocation2 + $0x21a8] sm:$0xff]
    %v1344 = vld [vmem:[#allocation2 + $0x21b0] sm:$0xff]
    %v1345 = vld [vmem:[#allocation2 + $0x21b8] sm:$0xff]
    %v1346 = vld [vmem:[#allocation2 + $0x21c0] sm:$0xff]
    %v1347 = vld [vmem:[#allocation2 + $0x21c8] sm:$0xff]
    %v1348 = vld [vmem:[#allocation2 + $0x21d0] sm:$0xff]
    %v1349 = vld [vmem:[#allocation2 + $0x21d8] sm:$0xff]
    %v1350 = vld [vmem:[#allocation2 + $0x21e0] sm:$0xff]
    %v1351 = vld [vmem:[#allocation2 + $0x21e8] sm:$0xff]
    %v1352 = vld [vmem:[#allocation2 + $0x21f0] sm:$0xff]
    %v1353 = vld [vmem:[#allocation2 + $0x21f8] sm:$0xff]
    %v1354 = vld [vmem:[#allocation2 + $0x2200] sm:$0xff]
    %v1355 = vld [vmem:[#allocation2 + $0x2208] sm:$0xff]
    %v1356 = vld [vmem:[#allocation2 + $0x2210] sm:$0xff]
    %v1357 = vld [vmem:[#allocation2 + $0x2218] sm:$0xff]
    %v1358 = vld [vmem:[#allocation2 + $0x2220] sm:$0xff]
    %v1359 = vld [vmem:[#allocation2 + $0x2228] sm:$0xff]
    %v1360 = vld [vmem:[#allocation2 + $0x2230] sm:$0xff]
    %v1361 = vld [vmem:[#allocation2 + $0x2238] sm:$0xff]
    %v1362 = vld [vmem:[#allocation2 + $0x2240] sm:$0xff]
    %v1363 = vld [vmem:[#allocation2 + $0x2248] sm:$0xff]
    %v1364 = vld [vmem:[#allocation2 + $0x2250] sm:$0xff]
    %v1365 = vld [vmem:[#allocation2 + $0x2258] sm:$0xff]
    %v1366 = vld [vmem:[#allocation2 + $0x2260] sm:$0xff]
    %v1367 = vld [vmem:[#allocation2 + $0x2268] sm:$0xff]
    %v1368 = vld [vmem:[#allocation2 + $0x2270] sm:$0xff]
    %v1369 = vld [vmem:[#allocation2 + $0x2278] sm:$0xff]
    %v1370 = vld [vmem:[#allocation2 + $0x2280] sm:$0xff]
    %v1371 = vld [vmem:[#allocation2 + $0x2288] sm:$0xff]
    %v1372 = vld [vmem:[#allocation2 + $0x2290] sm:$0xff]
    %v1373 = vld [vmem:[#allocation2 + $0x2298] sm:$0xff]
    %v1374 = vld [vmem:[#allocation2 + $0x22a0] sm:$0xff]
    %v1375 = vld [vmem:[#allocation2 + $0x22a8] sm:$0xff]
    %v1376 = vld [vmem:[#allocation2 + $0x22b0] sm:$0xff]
    %v1377 = vld [vmem:[#allocation2 + $0x22b8] sm:$0xff]
    %v1378 = vld [vmem:[#allocation2 + $0x22c0] sm:$0xff]
    %v1379 = vld [vmem:[#allocation2 + $0x22c8] sm:$0xff]
    %v1380 = vld [vmem:[#allocation2 + $0x22d0] sm:$0xff]
    %v1381 = vld [vmem:[#allocation2 + $0x22d8] sm:$0xff]
    %v1382 = vld [vmem:[#allocation2 + $0x22e0] sm:$0xff]
    %v1383 = vld [vmem:[#allocation2 + $0x22e8] sm:$0xff]
    %v1384 = vld [vmem:[#allocation2 + $0x22f0] sm:$0xff]
    %v1385 = vld [vmem:[#allocation2 + $0x22f8] sm:$0xff]
    %v1386 = vld [vmem:[#allocation2 + $0x2300] sm:$0xff]
    %v1387 = vld [vmem:[#allocation2 + $0x2308] sm:$0xff]
    %v1388 = vld [vmem:[#allocation2 + $0x2310] sm:$0xff]
    %v1389 = vld [vmem:[#allocation2 + $0x2318] sm:$0xff]
    %v1390 = vld [vmem:[#allocation2 + $0x2320] sm:$0xff]
    %v1391 = vld [vmem:[#allocation2 + $0x2328] sm:$0xff]
    %v1392 = vld [vmem:[#allocation2 + $0x2330] sm:$0xff]
    %v1393 = vld [vmem:[#allocation2 + $0x2338] sm:$0xff]
    %v1394 = vld [vmem:[#allocation2 + $0x2340] sm:$0xff]
    %v1395 = vld [vmem:[#allocation2 + $0x2348] sm:$0xff]
    %v1396 = vld [vmem:[#allocation2 + $0x2350] sm:$0xff]
    %v1397 = vld [vmem:[#allocation2 + $0x2358] sm:$0xff]
    %v1398 = vld [vmem:[#allocation2 + $0x2360] sm:$0xff]
    %v1399 = vld [vmem:[#allocation2 + $0x2368] sm:$0xff]
    %v1400 = vld [vmem:[#allocation2 + $0x2370] sm:$0xff]
    %v1401 = vld [vmem:[#allocation2 + $0x2378] sm:$0xff]
    %v1402 = vld [vmem:[#allocation2 + $0x2380] sm:$0xff]
    %v1403 = vld [vmem:[#allocation2 + $0x2388] sm:$0xff]
    %v1404 = vld [vmem:[#allocation2 + $0x2390] sm:$0xff]
    %v1405 = vld [vmem:[#allocation2 + $0x2398] sm:$0xff]
    %v1406 = vld [vmem:[#allocation2 + $0x23a0] sm:$0xff]
    %v1407 = vld [vmem:[#allocation2 + $0x23a8] sm:$0xff]
    %v1408 = vld [vmem:[#allocation2 + $0x23b0] sm:$0xff]
    %v1409 = vld [vmem:[#allocation2 + $0x23b8] sm:$0xff]
    %v1410 = vld [vmem:[#allocation2 + $0x23c0] sm:$0xff]
    %v1411 = vld [vmem:[#allocation2 + $0x23c8] sm:$0xff]
    %v1412 = vld [vmem:[#allocation2 + $0x23d0] sm:$0xff]
    %v1413 = vld [vmem:[#allocation2 + $0x23d8] sm:$0xff]
    %v1414 = vld [vmem:[#allocation2 + $0x23e0] sm:$0xff]
    %v1415 = vld [vmem:[#allocation2 + $0x23e8] sm:$0xff]
    %v1416 = vld [vmem:[#allocation2 + $0x23f0] sm:$0xff]
    %v1417 = vld [vmem:[#allocation2 + $0x23f8] sm:$0xff]
    %v1418 = vld [vmem:[#allocation2 + $0x2400] sm:$0xff]
    %v1419 = vld [vmem:[#allocation2 + $0x2408] sm:$0xff]
    %v1420 = vld [vmem:[#allocation2 + $0x2410] sm:$0xff]
    %v1421 = vld [vmem:[#allocation2 + $0x2418] sm:$0xff]
    %v1422 = vld [vmem:[#allocation2 + $0x2420] sm:$0xff]
    %v1423 = vld [vmem:[#allocation2 + $0x2428] sm:$0xff]
    %v1424 = vld [vmem:[#allocation2 + $0x2430] sm:$0xff]
    %v1425 = vld [vmem:[#allocation2 + $0x2438] sm:$0xff]
    %v1426 = vld [vmem:[#allocation2 + $0x2440] sm:$0xff]
    %v1427 = vld [vmem:[#allocation2 + $0x2448] sm:$0xff]
    %v1428 = vld [vmem:[#allocation2 + $0x2450] sm:$0xff]
    %v1429 = vld [vmem:[#allocation2 + $0x2458] sm:$0xff]
    %v1430 = vld [vmem:[#allocation2 + $0x2460] sm:$0xff]
    %v1431 = vld [vmem:[#allocation2 + $0x2468] sm:$0xff]
    %v1432 = vld [vmem:[#allocation2 + $0x2470] sm:$0xff]
    %v1433 = vld [vmem:[#allocation2 + $0x2478] sm:$0xff]
    %v1434 = vld [vmem:[#allocation2 + $0x2480] sm:$0xff]
    %v1435 = vld [vmem:[#allocation2 + $0x2488] sm:$0xff]
    %v1436 = vld [vmem:[#allocation2 + $0x2490] sm:$0xff]
    %v1437 = vld [vmem:[#allocation2 + $0x2498] sm:$0xff]
    %v1438 = vld [vmem:[#allocation2 + $0x24a0] sm:$0xff]
    %v1439 = vld [vmem:[#allocation2 + $0x24a8] sm:$0xff]
    %v1440 = vld [vmem:[#allocation2 + $0x24b0] sm:$0xff]
    %v1441 = vld [vmem:[#allocation2 + $0x24b8] sm:$0xff]
    %v1442 = vld [vmem:[#allocation2 + $0x24c0] sm:$0xff]
    %v1443 = vld [vmem:[#allocation2 + $0x24c8] sm:$0xff]
    %v1444 = vld [vmem:[#allocation2 + $0x24d0] sm:$0xff]
    %v1445 = vld [vmem:[#allocation2 + $0x24d8] sm:$0xff]
    %v1446 = vld [vmem:[#allocation2 + $0x24e0] sm:$0xff]
    %v1447 = vld [vmem:[#allocation2 + $0x24e8] sm:$0xff]
    %v1448 = vld [vmem:[#allocation2 + $0x24f0] sm:$0xff]
    %v1449 = vld [vmem:[#allocation2 + $0x24f8] sm:$0xff]
    %v1450 = vld [vmem:[#allocation2 + $0x2500] sm:$0xff]
    %v1451 = vld [vmem:[#allocation2 + $0x2508] sm:$0xff]
    %v1452 = vld [vmem:[#allocation2 + $0x2510] sm:$0xff]
    %v1453 = vld [vmem:[#allocation2 + $0x2518] sm:$0xff]
    %v1454 = vld [vmem:[#allocation2 + $0x2520] sm:$0xff]
    %v1455 = vld [vmem:[#allocation2 + $0x2528] sm:$0xff]
    %v1456 = vld [vmem:[#allocation2 + $0x2530] sm:$0xff]
    %v1457 = vld [vmem:[#allocation2 + $0x2538] sm:$0xff]
    %v1458 = vld [vmem:[#allocation2 + $0x2540] sm:$0xff]
    %v1459 = vld [vmem:[#allocation2 + $0x2548] sm:$0xff]
    %v1460 = vld [vmem:[#allocation2 + $0x2550] sm:$0xff]
    %v1461 = vld [vmem:[#allocation2 + $0x2558] sm:$0xff]
    %v1462 = vld [vmem:[#allocation2 + $0x2560] sm:$0xff]
    %v1463 = vld [vmem:[#allocation2 + $0x2568] sm:$0xff]
    %v1464 = vld [vmem:[#allocation2 + $0x2570] sm:$0xff]
    %v1465 = vld [vmem:[#allocation2 + $0x2578] sm:$0xff]
    %v1466 = vld [vmem:[#allocation2 + $0x2580] sm:$0xff]
    %v1467 = vld [vmem:[#allocation2 + $0x2588] sm:$0xff]
    %v1468 = vld [vmem:[#allocation2 + $0x2590] sm:$0xff]
    %v1469 = vld [vmem:[#allocation2 + $0x2598] sm:$0xff]
    %v1470 = vld [vmem:[#allocation2 + $0x25a0] sm:$0xff]
    %v1471 = vld [vmem:[#allocation2 + $0x25a8] sm:$0xff]
    %v1472 = vld [vmem:[#allocation2 + $0x25b0] sm:$0xff]
    %v1473 = vld [vmem:[#allocation2 + $0x25b8] sm:$0xff]
    %v1474 = vld [vmem:[#allocation2 + $0x25c0] sm:$0xff]
    %v1475 = vld [vmem:[#allocation2 + $0x25c8] sm:$0xff]
    %v1476 = vld [vmem:[#allocation2 + $0x25d0] sm:$0xff]
    %v1477 = vld [vmem:[#allocation2 + $0x25d8] sm:$0xff]
    %v1478 = vld [vmem:[#allocation2 + $0x25e0] sm:$0xff]
    %v1479 = vld [vmem:[#allocation2 + $0x25e8] sm:$0xff]
    %v1480 = vld [vmem:[#allocation2 + $0x25f0] sm:$0xff]
    %v1481 = vld [vmem:[#allocation2 + $0x25f8] sm:$0xff]
    %v1482 = vld [vmem:[#allocation2 + $0x2600] sm:$0xff]
    %v1483 = vld [vmem:[#allocation2 + $0x2608] sm:$0xff]
    %v1484 = vld [vmem:[#allocation2 + $0x2610] sm:$0xff]
    %v1485 = vld [vmem:[#allocation2 + $0x2618] sm:$0xff]
    %v1486 = vld [vmem:[#allocation2 + $0x2620] sm:$0xff]
    %v1487 = vld [vmem:[#allocation2 + $0x2628] sm:$0xff]
    %v1488 = vld [vmem:[#allocation2 + $0x2630] sm:$0xff]
    %v1489 = vld [vmem:[#allocation2 + $0x2638] sm:$0xff]
    %v1490 = vld [vmem:[#allocation2 + $0x2640] sm:$0xff]
    %v1491 = vld [vmem:[#allocation2 + $0x2648] sm:$0xff]
    %v1492 = vld [vmem:[#allocation2 + $0x2650] sm:$0xff]
    %v1493 = vld [vmem:[#allocation2 + $0x2658] sm:$0xff]
    %v1494 = vld [vmem:[#allocation2 + $0x2660] sm:$0xff]
    %v1495 = vld [vmem:[#allocation2 + $0x2668] sm:$0xff]
    %v1496 = vld [vmem:[#allocation2 + $0x2670] sm:$0xff]
    %v1497 = vld [vmem:[#allocation2 + $0x2678] sm:$0xff]
    %v1498 = vld [vmem:[#allocation2 + $0x2680] sm:$0xff]
    %v1499 = vld [vmem:[#allocation2 + $0x2688] sm:$0xff]
    %v1500 = vld [vmem:[#allocation2 + $0x2690] sm:$0xff]
    %v1501 = vld [vmem:[#allocation2 + $0x2698] sm:$0xff]
    %v1502 = vld [vmem:[#allocation2 + $0x26a0] sm:$0xff]
    %v1503 = vld [vmem:[#allocation2 + $0x26a8] sm:$0xff]
    %v1504 = vld [vmem:[#allocation2 + $0x26b0] sm:$0xff]
    %v1505 = vld [vmem:[#allocation2 + $0x26b8] sm:$0xff]
    %v1506 = vld [vmem:[#allocation2 + $0x26c0] sm:$0xff]
    %v1507 = vld [vmem:[#allocation2 + $0x26c8] sm:$0xff]
    %v1508 = vld [vmem:[#allocation2 + $0x26d0] sm:$0xff]
    %v1509 = vld [vmem:[#allocation2 + $0x26d8] sm:$0xff]
    %v1510 = vld [vmem:[#allocation2 + $0x26e0] sm:$0xff]
    %v1511 = vld [vmem:[#allocation2 + $0x26e8] sm:$0xff]
    %v1512 = vld [vmem:[#allocation2 + $0x26f0] sm:$0xff]
    %v1513 = vld [vmem:[#allocation2 + $0x26f8] sm:$0xff]
    %v1514 = vld [vmem:[#allocation2 + $0x2700] sm:$0xff]
    %v1515 = vld [vmem:[#allocation2 + $0x2708] sm:$0xff]
    %v1516 = vld [vmem:[#allocation2 + $0x2710] sm:$0xff]
    %v1517 = vld [vmem:[#allocation2 + $0x2718] sm:$0xff]
    %v1518 = vld [vmem:[#allocation2 + $0x2720] sm:$0xff]
    %v1519 = vld [vmem:[#allocation2 + $0x2728] sm:$0xff]
    %v1520 = vld [vmem:[#allocation2 + $0x2730] sm:$0xff]
    %v1521 = vld [vmem:[#allocation2 + $0x2738] sm:$0xff]
    %v1522 = vld [vmem:[#allocation2 + $0x2740] sm:$0xff]
    %v1523 = vld [vmem:[#allocation2 + $0x2748] sm:$0xff]
    %v1524 = vld [vmem:[#allocation2 + $0x2750] sm:$0xff]
    %v1525 = vld [vmem:[#allocation2 + $0x2758] sm:$0xff]
    %v1526 = vld [vmem:[#allocation2 + $0x2760] sm:$0xff]
    %v1527 = vld [vmem:[#allocation2 + $0x2768] sm:$0xff]
    %v1528 = vld [vmem:[#allocation2 + $0x2770] sm:$0xff]
    %v1529 = vld [vmem:[#allocation2 + $0x2778] sm:$0xff]
    %v1530 = vld [vmem:[#allocation2 + $0x2780] sm:$0xff]
    %v1531 = vld [vmem:[#allocation2 + $0x2788] sm:$0xff]
    %v1532 = vld [vmem:[#allocation2 + $0x2790] sm:$0xff]
    %v1533 = vld [vmem:[#allocation2 + $0x2798] sm:$0xff]
    %v1534 = vld [vmem:[#allocation2 + $0x27a0] sm:$0xff]
    %v1535 = vld [vmem:[#allocation2 + $0x27a8] sm:$0xff]
    %v1536 = vld [vmem:[#allocation2 + $0x27b0] sm:$0xff]
    %v1537 = vld [vmem:[#allocation2 + $0x27b8] sm:$0xff]
    %v1538 = vld [vmem:[#allocation2 + $0x27c0] sm:$0xff]
    %v1539 = vld [vmem:[#allocation2 + $0x27c8] sm:$0xff]
    %v1540 = vld [vmem:[#allocation2 + $0x27d0] sm:$0xff]
    %v1541 = vld [vmem:[#allocation2 + $0x27d8] sm:$0xff]
    %v1542 = vld [vmem:[#allocation2 + $0x27e0] sm:$0xff]
    %v1543 = vld [vmem:[#allocation2 + $0x27e8] sm:$0xff]
    %v1544 = vld [vmem:[#allocation2 + $0x27f0] sm:$0xff]
    %v1545 = vld [vmem:[#allocation2 + $0x27f8] sm:$0xff]
    %v1546 = vld [vmem:[#allocation2 + $0x2800] sm:$0xff]
    %v1547 = vld [vmem:[#allocation2 + $0x2808] sm:$0xff]
    %v1548 = vld [vmem:[#allocation2 + $0x2810] sm:$0xff]
    %v1549 = vld [vmem:[#allocation2 + $0x2818] sm:$0xff]
    %v1550 = vld [vmem:[#allocation2 + $0x2820] sm:$0xff]
    %v1551 = vld [vmem:[#allocation2 + $0x2828] sm:$0xff]
    %v1552 = vld [vmem:[#allocation2 + $0x2830] sm:$0xff]
    %v1553 = vld [vmem:[#allocation2 + $0x2838] sm:$0xff]
    %v1554 = vld [vmem:[#allocation2 + $0x2840] sm:$0xff]
    %v1555 = vld [vmem:[#allocation2 + $0x2848] sm:$0xff]
    %v1556 = vld [vmem:[#allocation2 + $0x2850] sm:$0xff]
    %v1557 = vld [vmem:[#allocation2 + $0x2858] sm:$0xff]
    %v1558 = vld [vmem:[#allocation2 + $0x2860] sm:$0xff]
    %v1559 = vld [vmem:[#allocation2 + $0x2868] sm:$0xff]
    %v1560 = vld [vmem:[#allocation2 + $0x2870] sm:$0xff]
    %v1561 = vld [vmem:[#allocation2 + $0x2878] sm:$0xff]
    %v1562 = vld [vmem:[#allocation2 + $0x2880] sm:$0xff]
    %v1563 = vld [vmem:[#allocation2 + $0x2888] sm:$0xff]
    %v1564 = vld [vmem:[#allocation2 + $0x2890] sm:$0xff]
    %v1565 = vld [vmem:[#allocation2 + $0x2898] sm:$0xff]
    %v1566 = vld [vmem:[#allocation2 + $0x28a0] sm:$0xff]
    %v1567 = vld [vmem:[#allocation2 + $0x28a8] sm:$0xff]
    %v1568 = vld [vmem:[#allocation2 + $0x28b0] sm:$0xff]
    %v1569 = vld [vmem:[#allocation2 + $0x28b8] sm:$0xff]
    %v1570 = vld [vmem:[#allocation2 + $0x28c0] sm:$0xff]
    %v1571 = vld [vmem:[#allocation2 + $0x28c8] sm:$0xff]
    %v1572 = vld [vmem:[#allocation2 + $0x28d0] sm:$0xff]
    %v1573 = vld [vmem:[#allocation2 + $0x28d8] sm:$0xff]
    %v1574 = vld [vmem:[#allocation2 + $0x28e0] sm:$0xff]
    %v1575 = vld [vmem:[#allocation2 + $0x28e8] sm:$0xff]
    %v1576 = vld [vmem:[#allocation2 + $0x28f0] sm:$0xff]
    %v1577 = vld [vmem:[#allocation2 + $0x28f8] sm:$0xff]
    %v1578 = vld [vmem:[#allocation2 + $0x2900] sm:$0xff]
    %v1579 = vld [vmem:[#allocation2 + $0x2908] sm:$0xff]
    %v1580 = vld [vmem:[#allocation2 + $0x2910] sm:$0xff]
    %v1581 = vld [vmem:[#allocation2 + $0x2918] sm:$0xff]
    %v1582 = vld [vmem:[#allocation2 + $0x2920] sm:$0xff]
    %v1583 = vld [vmem:[#allocation2 + $0x2928] sm:$0xff]
    %v1584 = vld [vmem:[#allocation2 + $0x2930] sm:$0xff]
    %v1585 = vld [vmem:[#allocation2 + $0x2938] sm:$0xff]
    %v1586 = vld [vmem:[#allocation2 + $0x2940] sm:$0xff]
    %v1587 = vld [vmem:[#allocation2 + $0x2948] sm:$0xff]
    %v1588 = vld [vmem:[#allocation2 + $0x2950] sm:$0xff]
    %v1589 = vld [vmem:[#allocation2 + $0x2958] sm:$0xff]
    %v1590 = vld [vmem:[#allocation2 + $0x2960] sm:$0xff]
    %v1591 = vld [vmem:[#allocation2 + $0x2968] sm:$0xff]
    %v1592 = vld [vmem:[#allocation2 + $0x2970] sm:$0xff]
    %v1593 = vld [vmem:[#allocation2 + $0x2978] sm:$0xff]
    %v1594 = vld [vmem:[#allocation2 + $0x2980] sm:$0xff]
    %v1595 = vld [vmem:[#allocation2 + $0x2988] sm:$0xff]
    %v1596 = vld [vmem:[#allocation2 + $0x2990] sm:$0xff]
    %v1597 = vld [vmem:[#allocation2 + $0x2998] sm:$0xff]
    %v1598 = vld [vmem:[#allocation2 + $0x29a0] sm:$0xff]
    %v1599 = vld [vmem:[#allocation2 + $0x29a8] sm:$0xff]
    %v1600 = vld [vmem:[#allocation2 + $0x29b0] sm:$0xff]
    %v1601 = vld [vmem:[#allocation2 + $0x29b8] sm:$0xff]
    %v1602 = vld [vmem:[#allocation2 + $0x29c0] sm:$0xff]
    %v1603 = vld [vmem:[#allocation2 + $0x29c8] sm:$0xff]
    %v1604 = vld [vmem:[#allocation2 + $0x29d0] sm:$0xff]
    %v1605 = vld [vmem:[#allocation2 + $0x29d8] sm:$0xff]
    %v1606 = vld [vmem:[#allocation2 + $0x29e0] sm:$0xff]
    %v1607 = vld [vmem:[#allocation2 + $0x29e8] sm:$0xff]
    %v1608 = vld [vmem:[#allocation2 + $0x29f0] sm:$0xff]
    %v1609 = vld [vmem:[#allocation2 + $0x29f8] sm:$0xff]
    %v1610 = vld [vmem:[#allocation2 + $0x2a00] sm:$0xff]
    %v1611 = vld [vmem:[#allocation2 + $0x2a08] sm:$0xff]
    %v1612 = vld [vmem:[#allocation2 + $0x2a10] sm:$0xff]
    %v1613 = vld [vmem:[#allocation2 + $0x2a18] sm:$0xff]
    %v1614 = vld [vmem:[#allocation2 + $0x2a20] sm:$0xff]
    %v1615 = vld [vmem:[#allocation2 + $0x2a28] sm:$0xff]
    %v1616 = vld [vmem:[#allocation2 + $0x2a30] sm:$0xff]
    %v1617 = vld [vmem:[#allocation2 + $0x2a38] sm:$0xff]
    %v1618 = vld [vmem:[#allocation2 + $0x2a40] sm:$0xff]
    %v1619 = vld [vmem:[#allocation2 + $0x2a48] sm:$0xff]
    %v1620 = vld [vmem:[#allocation2 + $0x2a50] sm:$0xff]
    %v1621 = vld [vmem:[#allocation2 + $0x2a58] sm:$0xff]
    %v1622 = vld [vmem:[#allocation2 + $0x2a60] sm:$0xff]
    %v1623 = vld [vmem:[#allocation2 + $0x2a68] sm:$0xff]
    %v1624 = vld [vmem:[#allocation2 + $0x2a70] sm:$0xff]
    %v1625 = vld [vmem:[#allocation2 + $0x2a78] sm:$0xff]
    %v1626 = vld [vmem:[#allocation2 + $0x2a80] sm:$0xff]
    %v1627 = vld [vmem:[#allocation2 + $0x2a88] sm:$0xff]
    %v1628 = vld [vmem:[#allocation2 + $0x2a90] sm:$0xff]
    %v1629 = vld [vmem:[#allocation2 + $0x2a98] sm:$0xff]
    %v1630 = vld [vmem:[#allocation2 + $0x2aa0] sm:$0xff]
    %v1631 = vld [vmem:[#allocation2 + $0x2aa8] sm:$0xff]
    %v1632 = vld [vmem:[#allocation2 + $0x2ab0] sm:$0xff]
    %v1633 = vld [vmem:[#allocation2 + $0x2ab8] sm:$0xff]
    %v1634 = vld [vmem:[#allocation2 + $0x2ac0] sm:$0xff]
    %v1635 = vld [vmem:[#allocation2 + $0x2ac8] sm:$0xff]
    %v1636 = vld [vmem:[#allocation2 + $0x2ad0] sm:$0xff]
    %v1637 = vld [vmem:[#allocation2 + $0x2ad8] sm:$0xff]
    %v1638 = vld [vmem:[#allocation2 + $0x2ae0] sm:$0xff]
    %v1639 = vld [vmem:[#allocation2 + $0x2ae8] sm:$0xff]
    %v1640 = vld [vmem:[#allocation2 + $0x2af0] sm:$0xff]
    %v1641 = vld [vmem:[#allocation2 + $0x2af8] sm:$0xff]
    %v1642 = vld [vmem:[#allocation2 + $0x2b00] sm:$0xff]
    %v1643 = vld [vmem:[#allocation2 + $0x2b08] sm:$0xff]
    %v1644 = vld [vmem:[#allocation2 + $0x2b10] sm:$0xff]
    %v1645 = vld [vmem:[#allocation2 + $0x2b18] sm:$0xff]
    %v1646 = vld [vmem:[#allocation2 + $0x2b20] sm:$0xff]
    %v1647 = vld [vmem:[#allocation2 + $0x2b28] sm:$0xff]
    %v1648 = vld [vmem:[#allocation2 + $0x2b30] sm:$0xff]
    %v1649 = vld [vmem:[#allocation2 + $0x2b38] sm:$0xff]
    %v1650 = vld [vmem:[#allocation2 + $0x2b40] sm:$0xff]
    %v1651 = vld [vmem:[#allocation2 + $0x2b48] sm:$0xff]
    %v1652 = vld [vmem:[#allocation2 + $0x2b50] sm:$0xff]
    %v1653 = vld [vmem:[#allocation2 + $0x2b58] sm:$0xff]
    %v1654 = vld [vmem:[#allocation2 + $0x2b60] sm:$0xff]
    %v1655 = vld [vmem:[#allocation2 + $0x2b68] sm:$0xff]
    %v1656 = vld [vmem:[#allocation2 + $0x2b70] sm:$0xff]
    %v1657 = vld [vmem:[#allocation2 + $0x2b78] sm:$0xff]
    %v1658 = vld [vmem:[#allocation2 + $0x2b80] sm:$0xff]
    %v1659 = vld [vmem:[#allocation2 + $0x2b88] sm:$0xff]
    %v1660 = vld [vmem:[#allocation2 + $0x2b90] sm:$0xff]
    %v1661 = vld [vmem:[#allocation2 + $0x2b98] sm:$0xff]
    %v1662 = vld [vmem:[#allocation2 + $0x2ba0] sm:$0xff]
    %v1663 = vld [vmem:[#allocation2 + $0x2ba8] sm:$0xff]
    %v1664 = vld [vmem:[#allocation2 + $0x2bb0] sm:$0xff]
    %v1665 = vld [vmem:[#allocation2 + $0x2bb8] sm:$0xff]
    %v1666 = vld [vmem:[#allocation2 + $0x2bc0] sm:$0xff]
    %v1667 = vld [vmem:[#allocation2 + $0x2bc8] sm:$0xff]
    %v1668 = vld [vmem:[#allocation2 + $0x2bd0] sm:$0xff]
    %v1669 = vld [vmem:[#allocation2 + $0x2bd8] sm:$0xff]
    %v1670 = vld [vmem:[#allocation2 + $0x2be0] sm:$0xff]
    %v1671 = vld [vmem:[#allocation2 + $0x2be8] sm:$0xff]
    %v1672 = vld [vmem:[#allocation2 + $0x2bf0] sm:$0xff]
    %v1673 = vld [vmem:[#allocation2 + $0x2bf8] sm:$0xff]
    %v1674 = vld [vmem:[#allocation2 + $0x2c00] sm:$0xff]
    %v1675 = vld [vmem:[#allocation2 + $0x2c08] sm:$0xff]
    %v1676 = vld [vmem:[#allocation2 + $0x2c10] sm:$0xff]
    %v1677 = vld [vmem:[#allocation2 + $0x2c18] sm:$0xff]
    %v1678 = vld [vmem:[#allocation2 + $0x2c20] sm:$0xff]
    %v1679 = vld [vmem:[#allocation2 + $0x2c28] sm:$0xff]
    %v1680 = vld [vmem:[#allocation2 + $0x2c30] sm:$0xff]
    %v1681 = vld [vmem:[#allocation2 + $0x2c38] sm:$0xff]
    %v1682 = vld [vmem:[#allocation2 + $0x2c40] sm:$0xff]
    %v1683 = vld [vmem:[#allocation2 + $0x2c48] sm:$0xff]
    %v1684 = vld [vmem:[#allocation2 + $0x2c50] sm:$0xff]
    %v1685 = vld [vmem:[#allocation2 + $0x2c58] sm:$0xff]
    %v1686 = vld [vmem:[#allocation2 + $0x2c60] sm:$0xff]
    %v1687 = vld [vmem:[#allocation2 + $0x2c68] sm:$0xff]
    %v1688 = vld [vmem:[#allocation2 + $0x2c70] sm:$0xff]
    %v1689 = vld [vmem:[#allocation2 + $0x2c78] sm:$0xff]
    %v1690 = vld [vmem:[#allocation2 + $0x2c80] sm:$0xff]
    %v1691 = vld [vmem:[#allocation2 + $0x2c88] sm:$0xff]
    %v1692 = vld [vmem:[#allocation2 + $0x2c90] sm:$0xff]
    %v1693 = vld [vmem:[#allocation2 + $0x2c98] sm:$0xff]
    %v1694 = vld [vmem:[#allocation2 + $0x2ca0] sm:$0xff]
    %v1695 = vld [vmem:[#allocation2 + $0x2ca8] sm:$0xff]
    %v1696 = vld [vmem:[#allocation2 + $0x2cb0] sm:$0xff]
    %v1697 = vld [vmem:[#allocation2 + $0x2cb8] sm:$0xff]
    %v1698 = vld [vmem:[#allocation2 + $0x2cc0] sm:$0xff]
    %v1699 = vld [vmem:[#allocation2 + $0x2cc8] sm:$0xff]
    %v1700 = vld [vmem:[#allocation2 + $0x2cd0] sm:$0xff]
    %v1701 = vld [vmem:[#allocation2 + $0x2cd8] sm:$0xff]
    %v1702 = vld [vmem:[#allocation2 + $0x2ce0] sm:$0xff]
    %v1703 = vld [vmem:[#allocation2 + $0x2ce8] sm:$0xff]
    %v1704 = vld [vmem:[#allocation2 + $0x2cf0] sm:$0xff]
    %v1705 = vld [vmem:[#allocation2 + $0x2cf8] sm:$0xff]
    %v1706 = vld [vmem:[#allocation2 + $0x2d00] sm:$0xff]
    %v1707 = vld [vmem:[#allocation2 + $0x2d08] sm:$0xff]
    %v1708 = vld [vmem:[#allocation2 + $0x2d10] sm:$0xff]
    %v1709 = vld [vmem:[#allocation2 + $0x2d18] sm:$0xff]
    %v1710 = vld [vmem:[#allocation2 + $0x2d20] sm:$0xff]
    %v1711 = vld [vmem:[#allocation2 + $0x2d28] sm:$0xff]
    %v1712 = vld [vmem:[#allocation2 + $0x2d30] sm:$0xff]
    %v1713 = vld [vmem:[#allocation2 + $0x2d38] sm:$0xff]
    %v1714 = vld [vmem:[#allocation2 + $0x2d40] sm:$0xff]
    %v1715 = vld [vmem:[#allocation2 + $0x2d48] sm:$0xff]
    %v1716 = vld [vmem:[#allocation2 + $0x2d50] sm:$0xff]
    %v1717 = vld [vmem:[#allocation2 + $0x2d58] sm:$0xff]
    %v1718 = vld [vmem:[#allocation2 + $0x2d60] sm:$0xff]
    %v1719 = vld [vmem:[#allocation2 + $0x2d68] sm:$0xff]
    %v1720 = vld [vmem:[#allocation2 + $0x2d70] sm:$0xff]
    %v1721 = vld [vmem:[#allocation2 + $0x2d78] sm:$0xff]
    %v1722 = vld [vmem:[#allocation2 + $0x2d80] sm:$0xff]
    %v1723 = vld [vmem:[#allocation2 + $0x2d88] sm:$0xff]
    %v1724 = vld [vmem:[#allocation2 + $0x2d90] sm:$0xff]
    %v1725 = vld [vmem:[#allocation2 + $0x2d98] sm:$0xff]
    %v1726 = vld [vmem:[#allocation2 + $0x2da0] sm:$0xff]
    %v1727 = vld [vmem:[#allocation2 + $0x2da8] sm:$0xff]
    %v1728 = vld [vmem:[#allocation2 + $0x2db0] sm:$0xff]
    %v1729 = vld [vmem:[#allocation2 + $0x2db8] sm:$0xff]
    %v1730 = vld [vmem:[#allocation2 + $0x2dc0] sm:$0xff]
    %v1731 = vld [vmem:[#allocation2 + $0x2dc8] sm:$0xff]
    %v1732 = vld [vmem:[#allocation2 + $0x2dd0] sm:$0xff]
    %v1733 = vld [vmem:[#allocation2 + $0x2dd8] sm:$0xff]
    %v1734 = vld [vmem:[#allocation2 + $0x2de0] sm:$0xff]
    %v1735 = vld [vmem:[#allocation2 + $0x2de8] sm:$0xff]
    %v1736 = vld [vmem:[#allocation2 + $0x2df0] sm:$0xff]
    %v1737 = vld [vmem:[#allocation2 + $0x2df8] sm:$0xff]
    %v1738 = vld [vmem:[#allocation2 + $0x2e00] sm:$0xff]
    %v1739 = vld [vmem:[#allocation2 + $0x2e08] sm:$0xff]
    %v1740 = vld [vmem:[#allocation2 + $0x2e10] sm:$0xff]
    %v1741 = vld [vmem:[#allocation2 + $0x2e18] sm:$0xff]
    %v1742 = vld [vmem:[#allocation2 + $0x2e20] sm:$0xff]
    %v1743 = vld [vmem:[#allocation2 + $0x2e28] sm:$0xff]
    %v1744 = vld [vmem:[#allocation2 + $0x2e30] sm:$0xff]
    %v1745 = vld [vmem:[#allocation2 + $0x2e38] sm:$0xff]
    %v1746 = vld [vmem:[#allocation2 + $0x2e40] sm:$0xff]
    %v1747 = vld [vmem:[#allocation2 + $0x2e48] sm:$0xff]
    %v1748 = vld [vmem:[#allocation2 + $0x2e50] sm:$0xff]
    %v1749 = vld [vmem:[#allocation2 + $0x2e58] sm:$0xff]
    %v1750 = vld [vmem:[#allocation2 + $0x2e60] sm:$0xff]
    %v1751 = vld [vmem:[#allocation2 + $0x2e68] sm:$0xff]
    %v1752 = vld [vmem:[#allocation2 + $0x2e70] sm:$0xff]
    %v1753 = vld [vmem:[#allocation2 + $0x2e78] sm:$0xff]
    %v1754 = vld [vmem:[#allocation2 + $0x2e80] sm:$0xff]
    %v1755 = vld [vmem:[#allocation2 + $0x2e88] sm:$0xff]
    %v1756 = vld [vmem:[#allocation2 + $0x2e90] sm:$0xff]
    %v1757 = vld [vmem:[#allocation2 + $0x2e98] sm:$0xff]
    %v1758 = vld [vmem:[#allocation2 + $0x2ea0] sm:$0xff]
    %v1759 = vld [vmem:[#allocation2 + $0x2ea8] sm:$0xff]
    %v1760 = vld [vmem:[#allocation2 + $0x2eb0] sm:$0xff]
    %v1761 = vld [vmem:[#allocation2 + $0x2eb8] sm:$0xff]
    %v1762 = vld [vmem:[#allocation2 + $0x2ec0] sm:$0xff]
    %v1763 = vld [vmem:[#allocation2 + $0x2ec8] sm:$0xff]
    %v1764 = vld [vmem:[#allocation2 + $0x2ed0] sm:$0xff]
    %v1765 = vld [vmem:[#allocation2 + $0x2ed8] sm:$0xff]
    %v1766 = vld [vmem:[#allocation2 + $0x2ee0] sm:$0xff]
    %v1767 = vld [vmem:[#allocation2 + $0x2ee8] sm:$0xff]
    %v1768 = vld [vmem:[#allocation2 + $0x2ef0] sm:$0xff]
    %v1769 = vld [vmem:[#allocation2 + $0x2ef8] sm:$0xff]
    %v1770 = vld [vmem:[#allocation2 + $0x2f00] sm:$0xff]
    %v1771 = vld [vmem:[#allocation2 + $0x2f08] sm:$0xff]
    %v1772 = vld [vmem:[#allocation2 + $0x2f10] sm:$0xff]
    %v1773 = vld [vmem:[#allocation2 + $0x2f18] sm:$0xff]
    %v1774 = vld [vmem:[#allocation2 + $0x2f20] sm:$0xff]
    %v1775 = vld [vmem:[#allocation2 + $0x2f28] sm:$0xff]
    %v1776 = vld [vmem:[#allocation2 + $0x2f30] sm:$0xff]
    %v1777 = vld [vmem:[#allocation2 + $0x2f38] sm:$0xff]
    %v1778 = vld [vmem:[#allocation2 + $0x2f40] sm:$0xff]
    %v1779 = vld [vmem:[#allocation2 + $0x2f48] sm:$0xff]
    %v1780 = vld [vmem:[#allocation2 + $0x2f50] sm:$0xff]
    %v1781 = vld [vmem:[#allocation2 + $0x2f58] sm:$0xff]
    %v1782 = vld [vmem:[#allocation2 + $0x2f60] sm:$0xff]
    %v1783 = vld [vmem:[#allocation2 + $0x2f68] sm:$0xff]
    %v1784 = vld [vmem:[#allocation2 + $0x2f70] sm:$0xff]
    %v1785 = vld [vmem:[#allocation2 + $0x2f78] sm:$0xff]
    %v1786 = vld [vmem:[#allocation2 + $0x2f80] sm:$0xff]
    %v1787 = vld [vmem:[#allocation2 + $0x2f88] sm:$0xff]
    %v1788 = vld [vmem:[#allocation2 + $0x2f90] sm:$0xff]
    %v1789 = vld [vmem:[#allocation2 + $0x2f98] sm:$0xff]
    %v1790 = vld [vmem:[#allocation2 + $0x2fa0] sm:$0xff]
    %v1791 = vld [vmem:[#allocation2 + $0x2fa8] sm:$0xff]
    %v1792 = vld [vmem:[#allocation2 + $0x2fb0] sm:$0xff]
    %v1793 = vld [vmem:[#allocation2 + $0x2fb8] sm:$0xff]
    %v1794 = vld [vmem:[#allocation2 + $0x2fc0] sm:$0xff]
    %v1795 = vld [vmem:[#allocation2 + $0x2fc8] sm:$0xff]
    %v1796 = vld [vmem:[#allocation2 + $0x2fd0] sm:$0xff]
    %v1797 = vld [vmem:[#allocation2 + $0x2fd8] sm:$0xff]
    %v1798 = vld [vmem:[#allocation2 + $0x2fe0] sm:$0xff]
    %v1799 = vld [vmem:[#allocation2 + $0x2fe8] sm:$0xff]
    %v1800 = vld [vmem:[#allocation2 + $0x2ff0] sm:$0xff]
    %v1801 = vld [vmem:[#allocation2 + $0x2ff8] sm:$0xff]
    %v1802 = vld [vmem:[#allocation5] sm:$0xff]
    %v1804 = vlaneseq
    %v1805 = vshrl.u32 %v1804, 7
    %v1806 = vsub.s32 0, %v1805
    %v1807 = vrot.slane %v1802, %v1806
    %v1808 = vlaneseq
    %v1809 = vshrl.u32 %v1808, 7
    %v1810 = vsub.s32 1, %v1809
    %v1811 = vrot.slane %v1802, %v1810
    %v1812 = vlaneseq
    %v1813 = vshrl.u32 %v1812, 7
    %v1814 = vsub.s32 2, %v1813
    %v1815 = vrot.slane %v1802, %v1814
    %v1816 = vlaneseq
    %v1817 = vshrl.u32 %v1816, 7
    %v1818 = vsub.s32 3, %v1817
    %v1819 = vrot.slane %v1802, %v1818
    %v1820 = vlaneseq
    %v1821 = vshrl.u32 %v1820, 7
    %v1822 = vsub.s32 4, %v1821
    %v1823 = vrot.slane %v1802, %v1822
    %v1824 = vlaneseq
    %v1825 = vshrl.u32 %v1824, 7
    %v1826 = vsub.s32 5, %v1825
    %v1827 = vrot.slane %v1802, %v1826
    %v1828 = vlaneseq
    %v1829 = vshrl.u32 %v1828, 7
    %v1830 = vsub.s32 6, %v1829
    %v1831 = vrot.slane %v1802, %v1830
    %v1832 = vlaneseq
    %v1833 = vshrl.u32 %v1832, 7
    %v1834 = vsub.s32 7, %v1833
    %v1835 = vrot.slane %v1802, %v1834
    %v3380 = vunpack.c.l.b16 %v266
    %v3381 = vunpack.c.h.b16 %v266
    %v3382 = vunpack.c.l.b16 %v267
    %v3383 = vunpack.c.h.b16 %v267
    %v3384 = vunpack.c.l.b16 %v268
    %v3385 = vunpack.c.h.b16 %v268
    %v3386 = vunpack.c.l.b16 %v269
    %v3387 = vunpack.c.h.b16 %v269
    %v3388 = vunpack.c.l.b16 %v270
    %v3389 = vunpack.c.h.b16 %v270
    %v3390 = vunpack.c.l.b16 %v271
    %v3391 = vunpack.c.h.b16 %v271
    %v3392 = vunpack.c.l.b16 %v272
    %v3393 = vunpack.c.h.b16 %v272
    %v3394 = vunpack.c.l.b16 %v273
    %v3395 = vunpack.c.h.b16 %v273
    %v3396 = vunpack.c.l.b16 %v274
    %v3397 = vunpack.c.h.b16 %v274
    %v3398 = vunpack.c.l.b16 %v275
    %v3399 = vunpack.c.h.b16 %v275
    %v3400 = vunpack.c.l.b16 %v276
    %v3401 = vunpack.c.h.b16 %v276
    %v3402 = vunpack.c.l.b16 %v277
    %v3403 = vunpack.c.h.b16 %v277
    %v3404 = vunpack.c.l.b16 %v278
    %v3405 = vunpack.c.h.b16 %v278
    %v3406 = vunpack.c.l.b16 %v279
    %v3407 = vunpack.c.h.b16 %v279
    %v3408 = vunpack.c.l.b16 %v280
    %v3409 = vunpack.c.h.b16 %v280
    %v3410 = vunpack.c.l.b16 %v281
    %v3411 = vunpack.c.h.b16 %v281
    %v3412 = vunpack.c.l.b16 %v282
    %v3413 = vunpack.c.h.b16 %v282
    %v3414 = vunpack.c.l.b16 %v283
    %v3415 = vunpack.c.h.b16 %v283
    %v3416 = vunpack.c.l.b16 %v284
    %v3417 = vunpack.c.h.b16 %v284
    %v3418 = vunpack.c.l.b16 %v285
    %v3419 = vunpack.c.h.b16 %v285
    %v3420 = vunpack.c.l.b16 %v286
    %v3421 = vunpack.c.h.b16 %v286
    %v3422 = vunpack.c.l.b16 %v287
    %v3423 = vunpack.c.h.b16 %v287
    %v3424 = vunpack.c.l.b16 %v288
    %v3425 = vunpack.c.h.b16 %v288
    %v3426 = vunpack.c.l.b16 %v289
    %v3427 = vunpack.c.h.b16 %v289
    %v3428 = vunpack.c.l.b16 %v290
    %v3429 = vunpack.c.h.b16 %v290
    %v3430 = vunpack.c.l.b16 %v291
    %v3431 = vunpack.c.h.b16 %v291
    %v3432 = vunpack.c.l.b16 %v292
    %v3433 = vunpack.c.h.b16 %v292
    %v3434 = vunpack.c.l.b16 %v293
    %v3435 = vunpack.c.h.b16 %v293
    %v3436 = vunpack.c.l.b16 %v294
    %v3437 = vunpack.c.h.b16 %v294
    %v3438 = vunpack.c.l.b16 %v295
    %v3439 = vunpack.c.h.b16 %v295
    %v3440 = vunpack.c.l.b16 %v296
    %v3441 = vunpack.c.h.b16 %v296
    %v3442 = vunpack.c.l.b16 %v297
    %v3443 = vunpack.c.h.b16 %v297
    %v3444 = vunpack.c.l.b16 %v298
    %v3445 = vunpack.c.h.b16 %v298
    %v3446 = vunpack.c.l.b16 %v299
    %v3447 = vunpack.c.h.b16 %v299
    %v3448 = vunpack.c.l.b16 %v300
    %v3449 = vunpack.c.h.b16 %v300
    %v3450 = vunpack.c.l.b16 %v301
    %v3451 = vunpack.c.h.b16 %v301
    %v3452 = vunpack.c.l.b16 %v302
    %v3453 = vunpack.c.h.b16 %v302
    %v3454 = vunpack.c.l.b16 %v303
    %v3455 = vunpack.c.h.b16 %v303
    %v3456 = vunpack.c.l.b16 %v304
    %v3457 = vunpack.c.h.b16 %v304
    %v3458 = vunpack.c.l.b16 %v305
    %v3459 = vunpack.c.h.b16 %v305
    %v3460 = vunpack.c.l.b16 %v306
    %v3461 = vunpack.c.h.b16 %v306
    %v3462 = vunpack.c.l.b16 %v307
    %v3463 = vunpack.c.h.b16 %v307
    %v3464 = vunpack.c.l.b16 %v308
    %v3465 = vunpack.c.h.b16 %v308
    %v3466 = vunpack.c.l.b16 %v309
    %v3467 = vunpack.c.h.b16 %v309
    %v3468 = vunpack.c.l.b16 %v310
    %v3469 = vunpack.c.h.b16 %v310
    %v3470 = vunpack.c.l.b16 %v311
    %v3471 = vunpack.c.h.b16 %v311
    %v3472 = vunpack.c.l.b16 %v312
    %v3473 = vunpack.c.h.b16 %v312
    %v3474 = vunpack.c.l.b16 %v313
    %v3475 = vunpack.c.h.b16 %v313
    %v3476 = vunpack.c.l.b16 %v314
    %v3477 = vunpack.c.h.b16 %v314
    %v3478 = vunpack.c.l.b16 %v315
    %v3479 = vunpack.c.h.b16 %v315
    %v3480 = vunpack.c.l.b16 %v316
    %v3481 = vunpack.c.h.b16 %v316
    %v3482 = vunpack.c.l.b16 %v317
    %v3483 = vunpack.c.h.b16 %v317
    %v3484 = vunpack.c.l.b16 %v318
    %v3485 = vunpack.c.h.b16 %v318
    %v3486 = vunpack.c.l.b16 %v319
    %v3487 = vunpack.c.h.b16 %v319
    %v3488 = vunpack.c.l.b16 %v320
    %v3489 = vunpack.c.h.b16 %v320
    %v3490 = vunpack.c.l.b16 %v321
    %v3491 = vunpack.c.h.b16 %v321
    %v3492 = vunpack.c.l.b16 %v322
    %v3493 = vunpack.c.h.b16 %v322
    %v3494 = vunpack.c.l.b16 %v323
    %v3495 = vunpack.c.h.b16 %v323
    %v3496 = vunpack.c.l.b16 %v324
    %v3497 = vunpack.c.h.b16 %v324
    %v3498 = vunpack.c.l.b16 %v325
    %v3499 = vunpack.c.h.b16 %v325
    %v3500 = vunpack.c.l.b16 %v326
    %v3501 = vunpack.c.h.b16 %v326
    %v3502 = vunpack.c.l.b16 %v327
    %v3503 = vunpack.c.h.b16 %v327
    %v3504 = vunpack.c.l.b16 %v328
    %v3505 = vunpack.c.h.b16 %v328
    %v3506 = vunpack.c.l.b16 %v329
    %v3507 = vunpack.c.h.b16 %v329
    %v3508 = vunpack.c.l.b16 %v330
    %v3509 = vunpack.c.h.b16 %v330
    %v3510 = vunpack.c.l.b16 %v331
    %v3511 = vunpack.c.h.b16 %v331
    %v3512 = vunpack.c.l.b16 %v332
    %v3513 = vunpack.c.h.b16 %v332
    %v3514 = vunpack.c.l.b16 %v333
    %v3515 = vunpack.c.h.b16 %v333
    %v3516 = vunpack.c.l.b16 %v334
    %v3517 = vunpack.c.h.b16 %v334
    %v3518 = vunpack.c.l.b16 %v335
    %v3519 = vunpack.c.h.b16 %v335
    %v3520 = vunpack.c.l.b16 %v336
    %v3521 = vunpack.c.h.b16 %v336
    %v3522 = vunpack.c.l.b16 %v337
    %v3523 = vunpack.c.h.b16 %v337
    %v3524 = vunpack.c.l.b16 %v338
    %v3525 = vunpack.c.h.b16 %v338
    %v3526 = vunpack.c.l.b16 %v339
    %v3527 = vunpack.c.h.b16 %v339
    %v3528 = vunpack.c.l.b16 %v340
    %v3529 = vunpack.c.h.b16 %v340
    %v3530 = vunpack.c.l.b16 %v341
    %v3531 = vunpack.c.h.b16 %v341
    %v3532 = vunpack.c.l.b16 %v342
    %v3533 = vunpack.c.h.b16 %v342
    %v3534 = vunpack.c.l.b16 %v343
    %v3535 = vunpack.c.h.b16 %v343
    %v3536 = vunpack.c.l.b16 %v344
    %v3537 = vunpack.c.h.b16 %v344
    %v3538 = vunpack.c.l.b16 %v345
    %v3539 = vunpack.c.h.b16 %v345
    %v3540 = vunpack.c.l.b16 %v346
    %v3541 = vunpack.c.h.b16 %v346
    %v3542 = vunpack.c.l.b16 %v347
    %v3543 = vunpack.c.h.b16 %v347
    %v3544 = vunpack.c.l.b16 %v348
    %v3545 = vunpack.c.h.b16 %v348
    %v3546 = vunpack.c.l.b16 %v349
    %v3547 = vunpack.c.h.b16 %v349
    %v3548 = vunpack.c.l.b16 %v350
    %v3549 = vunpack.c.h.b16 %v350
    %v3550 = vunpack.c.l.b16 %v351
    %v3551 = vunpack.c.h.b16 %v351
    %v3552 = vunpack.c.l.b16 %v352
    %v3553 = vunpack.c.h.b16 %v352
    %v3554 = vunpack.c.l.b16 %v353
    %v3555 = vunpack.c.h.b16 %v353
    %v3556 = vunpack.c.l.b16 %v354
    %v3557 = vunpack.c.h.b16 %v354
    %v3558 = vunpack.c.l.b16 %v355
    %v3559 = vunpack.c.h.b16 %v355
    %v3560 = vunpack.c.l.b16 %v356
    %v3561 = vunpack.c.h.b16 %v356
    %v3562 = vunpack.c.l.b16 %v357
    %v3563 = vunpack.c.h.b16 %v357
    %v3564 = vunpack.c.l.b16 %v358
    %v3565 = vunpack.c.h.b16 %v358
    %v3566 = vunpack.c.l.b16 %v359
    %v3567 = vunpack.c.h.b16 %v359
    %v3568 = vunpack.c.l.b16 %v360
    %v3569 = vunpack.c.h.b16 %v360
    %v3570 = vunpack.c.l.b16 %v361
    %v3571 = vunpack.c.h.b16 %v361
    %v3572 = vunpack.c.l.b16 %v362
    %v3573 = vunpack.c.h.b16 %v362
    %v3574 = vunpack.c.l.b16 %v363
    %v3575 = vunpack.c.h.b16 %v363
    %v3576 = vunpack.c.l.b16 %v364
    %v3577 = vunpack.c.h.b16 %v364
    %v3578 = vunpack.c.l.b16 %v365
    %v3579 = vunpack.c.h.b16 %v365
    %v3580 = vunpack.c.l.b16 %v366
    %v3581 = vunpack.c.h.b16 %v366
    %v3582 = vunpack.c.l.b16 %v367
    %v3583 = vunpack.c.h.b16 %v367
    %v3584 = vunpack.c.l.b16 %v368
    %v3585 = vunpack.c.h.b16 %v368
    %v3586 = vunpack.c.l.b16 %v369
    %v3587 = vunpack.c.h.b16 %v369
    %v3588 = vunpack.c.l.b16 %v370
    %v3589 = vunpack.c.h.b16 %v370
    %v3590 = vunpack.c.l.b16 %v371
    %v3591 = vunpack.c.h.b16 %v371
    %v3592 = vunpack.c.l.b16 %v372
    %v3593 = vunpack.c.h.b16 %v372
    %v3594 = vunpack.c.l.b16 %v373
    %v3595 = vunpack.c.h.b16 %v373
    %v3596 = vunpack.c.l.b16 %v374
    %v3597 = vunpack.c.h.b16 %v374
    %v3598 = vunpack.c.l.b16 %v375
    %v3599 = vunpack.c.h.b16 %v375
    %v3600 = vunpack.c.l.b16 %v376
    %v3601 = vunpack.c.h.b16 %v376
    %v3602 = vunpack.c.l.b16 %v377
    %v3603 = vunpack.c.h.b16 %v377
    %v3604 = vunpack.c.l.b16 %v378
    %v3605 = vunpack.c.h.b16 %v378
    %v3606 = vunpack.c.l.b16 %v379
    %v3607 = vunpack.c.h.b16 %v379
    %v3608 = vunpack.c.l.b16 %v380
    %v3609 = vunpack.c.h.b16 %v380
    %v3610 = vunpack.c.l.b16 %v381
    %v3611 = vunpack.c.h.b16 %v381
    %v3612 = vunpack.c.l.b16 %v382
    %v3613 = vunpack.c.h.b16 %v382
    %v3614 = vunpack.c.l.b16 %v383
    %v3615 = vunpack.c.h.b16 %v383
    %v3616 = vunpack.c.l.b16 %v384
    %v3617 = vunpack.c.h.b16 %v384
    %v3618 = vunpack.c.l.b16 %v385
    %v3619 = vunpack.c.h.b16 %v385
    %v3620 = vunpack.c.l.b16 %v386
    %v3621 = vunpack.c.h.b16 %v386
    %v3622 = vunpack.c.l.b16 %v387
    %v3623 = vunpack.c.h.b16 %v387
    %v3624 = vunpack.c.l.b16 %v388
    %v3625 = vunpack.c.h.b16 %v388
    %v3626 = vunpack.c.l.b16 %v389
    %v3627 = vunpack.c.h.b16 %v389
    %v3628 = vunpack.c.l.b16 %v390
    %v3629 = vunpack.c.h.b16 %v390
    %v3630 = vunpack.c.l.b16 %v391
    %v3631 = vunpack.c.h.b16 %v391
    %v3632 = vunpack.c.l.b16 %v392
    %v3633 = vunpack.c.h.b16 %v392
    %v3634 = vunpack.c.l.b16 %v393
    %v3635 = vunpack.c.h.b16 %v393
    %v3636 = vunpack.c.l.b16 %v394
    %v3637 = vunpack.c.h.b16 %v394
    %v3638 = vunpack.c.l.b16 %v395
    %v3639 = vunpack.c.h.b16 %v395
    %v3640 = vunpack.c.l.b16 %v396
    %v3641 = vunpack.c.h.b16 %v396
    %v3642 = vunpack.c.l.b16 %v397
    %v3643 = vunpack.c.h.b16 %v397
    %v3644 = vunpack.c.l.b16 %v398
    %v3645 = vunpack.c.h.b16 %v398
    %v3646 = vunpack.c.l.b16 %v399
    %v3647 = vunpack.c.h.b16 %v399
    %v3648 = vunpack.c.l.b16 %v400
    %v3649 = vunpack.c.h.b16 %v400
    %v3650 = vunpack.c.l.b16 %v401
    %v3651 = vunpack.c.h.b16 %v401
    %v3652 = vunpack.c.l.b16 %v402
    %v3653 = vunpack.c.h.b16 %v402
    %v3654 = vunpack.c.l.b16 %v403
    %v3655 = vunpack.c.h.b16 %v403
    %v3656 = vunpack.c.l.b16 %v404
    %v3657 = vunpack.c.h.b16 %v404
    %v3658 = vunpack.c.l.b16 %v405
    %v3659 = vunpack.c.h.b16 %v405
    %v3660 = vunpack.c.l.b16 %v406
    %v3661 = vunpack.c.h.b16 %v406
    %v3662 = vunpack.c.l.b16 %v407
    %v3663 = vunpack.c.h.b16 %v407
    %v3664 = vunpack.c.l.b16 %v408
    %v3665 = vunpack.c.h.b16 %v408
    %v3666 = vunpack.c.l.b16 %v409
    %v3667 = vunpack.c.h.b16 %v409
    %v3668 = vunpack.c.l.b16 %v410
    %v3669 = vunpack.c.h.b16 %v410
    %v3670 = vunpack.c.l.b16 %v411
    %v3671 = vunpack.c.h.b16 %v411
    %v3672 = vunpack.c.l.b16 %v412
    %v3673 = vunpack.c.h.b16 %v412
    %v3674 = vunpack.c.l.b16 %v413
    %v3675 = vunpack.c.h.b16 %v413
    %v3676 = vunpack.c.l.b16 %v414
    %v3677 = vunpack.c.h.b16 %v414
    %v3678 = vunpack.c.l.b16 %v415
    %v3679 = vunpack.c.h.b16 %v415
    %v3680 = vunpack.c.l.b16 %v416
    %v3681 = vunpack.c.h.b16 %v416
    %v3682 = vunpack.c.l.b16 %v417
    %v3683 = vunpack.c.h.b16 %v417
    %v3684 = vunpack.c.l.b16 %v418
    %v3685 = vunpack.c.h.b16 %v418
    %v3686 = vunpack.c.l.b16 %v419
    %v3687 = vunpack.c.h.b16 %v419
    %v3688 = vunpack.c.l.b16 %v420
    %v3689 = vunpack.c.h.b16 %v420
    %v3690 = vunpack.c.l.b16 %v421
    %v3691 = vunpack.c.h.b16 %v421
    %v3692 = vunpack.c.l.b16 %v422
    %v3693 = vunpack.c.h.b16 %v422
    %v3694 = vunpack.c.l.b16 %v423
    %v3695 = vunpack.c.h.b16 %v423
    %v3696 = vunpack.c.l.b16 %v424
    %v3697 = vunpack.c.h.b16 %v424
    %v3698 = vunpack.c.l.b16 %v425
    %v3699 = vunpack.c.h.b16 %v425
    %v3700 = vunpack.c.l.b16 %v426
    %v3701 = vunpack.c.h.b16 %v426
    %v3702 = vunpack.c.l.b16 %v427
    %v3703 = vunpack.c.h.b16 %v427
    %v3704 = vunpack.c.l.b16 %v428
    %v3705 = vunpack.c.h.b16 %v428
    %v3706 = vunpack.c.l.b16 %v429
    %v3707 = vunpack.c.h.b16 %v429
    %v3708 = vunpack.c.l.b16 %v430
    %v3709 = vunpack.c.h.b16 %v430
    %v3710 = vunpack.c.l.b16 %v431
    %v3711 = vunpack.c.h.b16 %v431
    %v3712 = vunpack.c.l.b16 %v432
    %v3713 = vunpack.c.h.b16 %v432
    %v3714 = vunpack.c.l.b16 %v433
    %v3715 = vunpack.c.h.b16 %v433
    %v3716 = vunpack.c.l.b16 %v434
    %v3717 = vunpack.c.h.b16 %v434
    %v3718 = vunpack.c.l.b16 %v435
    %v3719 = vunpack.c.h.b16 %v435
    %v3720 = vunpack.c.l.b16 %v436
    %v3721 = vunpack.c.h.b16 %v436
    %v3722 = vunpack.c.l.b16 %v437
    %v3723 = vunpack.c.h.b16 %v437
    %v3724 = vunpack.c.l.b16 %v438
    %v3725 = vunpack.c.h.b16 %v438
    %v3726 = vunpack.c.l.b16 %v439
    %v3727 = vunpack.c.h.b16 %v439
    %v3728 = vunpack.c.l.b16 %v440
    %v3729 = vunpack.c.h.b16 %v440
    %v3730 = vunpack.c.l.b16 %v441
    %v3731 = vunpack.c.h.b16 %v441
    %v3732 = vunpack.c.l.b16 %v442
    %v3733 = vunpack.c.h.b16 %v442
    %v3734 = vunpack.c.l.b16 %v443
    %v3735 = vunpack.c.h.b16 %v443
    %v3736 = vunpack.c.l.b16 %v444
    %v3737 = vunpack.c.h.b16 %v444
    %v3738 = vunpack.c.l.b16 %v445
    %v3739 = vunpack.c.h.b16 %v445
    %v3740 = vunpack.c.l.b16 %v446
    %v3741 = vunpack.c.h.b16 %v446
    %v3742 = vunpack.c.l.b16 %v447
    %v3743 = vunpack.c.h.b16 %v447
    %v3744 = vunpack.c.l.b16 %v448
    %v3745 = vunpack.c.h.b16 %v448
    %v3746 = vunpack.c.l.b16 %v449
    %v3747 = vunpack.c.h.b16 %v449
    %v3748 = vunpack.c.l.b16 %v450
    %v3749 = vunpack.c.h.b16 %v450
    %v3750 = vunpack.c.l.b16 %v451
    %v3751 = vunpack.c.h.b16 %v451
    %v3752 = vunpack.c.l.b16 %v452
    %v3753 = vunpack.c.h.b16 %v452
    %v3754 = vunpack.c.l.b16 %v453
    %v3755 = vunpack.c.h.b16 %v453
    %v3756 = vunpack.c.l.b16 %v454
    %v3757 = vunpack.c.h.b16 %v454
    %v3758 = vunpack.c.l.b16 %v455
    %v3759 = vunpack.c.h.b16 %v455
    %v3760 = vunpack.c.l.b16 %v456
    %v3761 = vunpack.c.h.b16 %v456
    %v3762 = vunpack.c.l.b16 %v457
    %v3763 = vunpack.c.h.b16 %v457
    %v3764 = vunpack.c.l.b16 %v458
    %v3765 = vunpack.c.h.b16 %v458
    %v3766 = vunpack.c.l.b16 %v459
    %v3767 = vunpack.c.h.b16 %v459
    %v3768 = vunpack.c.l.b16 %v460
    %v3769 = vunpack.c.h.b16 %v460
    %v3770 = vunpack.c.l.b16 %v461
    %v3771 = vunpack.c.h.b16 %v461
    %v3772 = vunpack.c.l.b16 %v462
    %v3773 = vunpack.c.h.b16 %v462
    %v3774 = vunpack.c.l.b16 %v463
    %v3775 = vunpack.c.h.b16 %v463
    %v3776 = vunpack.c.l.b16 %v464
    %v3777 = vunpack.c.h.b16 %v464
    %v3778 = vunpack.c.l.b16 %v465
    %v3779 = vunpack.c.h.b16 %v465
    %v3780 = vunpack.c.l.b16 %v466
    %v3781 = vunpack.c.h.b16 %v466
    %v3782 = vunpack.c.l.b16 %v467
    %v3783 = vunpack.c.h.b16 %v467
    %v3784 = vunpack.c.l.b16 %v468
    %v3785 = vunpack.c.h.b16 %v468
    %v3786 = vunpack.c.l.b16 %v469
    %v3787 = vunpack.c.h.b16 %v469
    %v3788 = vunpack.c.l.b16 %v470
    %v3789 = vunpack.c.h.b16 %v470
    %v3790 = vunpack.c.l.b16 %v471
    %v3791 = vunpack.c.h.b16 %v471
    %v3792 = vunpack.c.l.b16 %v472
    %v3793 = vunpack.c.h.b16 %v472
    %v3794 = vunpack.c.l.b16 %v473
    %v3795 = vunpack.c.h.b16 %v473
    %v3796 = vunpack.c.l.b16 %v474
    %v3797 = vunpack.c.h.b16 %v474
    %v3798 = vunpack.c.l.b16 %v475
    %v3799 = vunpack.c.h.b16 %v475
    %v3800 = vunpack.c.l.b16 %v476
    %v3801 = vunpack.c.h.b16 %v476
    %v3802 = vunpack.c.l.b16 %v477
    %v3803 = vunpack.c.h.b16 %v477
    %v3804 = vunpack.c.l.b16 %v478
    %v3805 = vunpack.c.h.b16 %v478
    %v3806 = vunpack.c.l.b16 %v479
    %v3807 = vunpack.c.h.b16 %v479
    %v3808 = vunpack.c.l.b16 %v480
    %v3809 = vunpack.c.h.b16 %v480
    %v3810 = vunpack.c.l.b16 %v481
    %v3811 = vunpack.c.h.b16 %v481
    %v3812 = vunpack.c.l.b16 %v482
    %v3813 = vunpack.c.h.b16 %v482
    %v3814 = vunpack.c.l.b16 %v483
    %v3815 = vunpack.c.h.b16 %v483
    %v3816 = vunpack.c.l.b16 %v484
    %v3817 = vunpack.c.h.b16 %v484
    %v3818 = vunpack.c.l.b16 %v485
    %v3819 = vunpack.c.h.b16 %v485
    %v3820 = vunpack.c.l.b16 %v486
    %v3821 = vunpack.c.h.b16 %v486
    %v3822 = vunpack.c.l.b16 %v487
    %v3823 = vunpack.c.h.b16 %v487
    %v3824 = vunpack.c.l.b16 %v488
    %v3825 = vunpack.c.h.b16 %v488
    %v3826 = vunpack.c.l.b16 %v489
    %v3827 = vunpack.c.h.b16 %v489
    %v3828 = vunpack.c.l.b16 %v490
    %v3829 = vunpack.c.h.b16 %v490
    %v3830 = vunpack.c.l.b16 %v491
    %v3831 = vunpack.c.h.b16 %v491
    %v3832 = vunpack.c.l.b16 %v492
    %v3833 = vunpack.c.h.b16 %v492
    %v3834 = vunpack.c.l.b16 %v493
    %v3835 = vunpack.c.h.b16 %v493
    %v3836 = vunpack.c.l.b16 %v494
    %v3837 = vunpack.c.h.b16 %v494
    %v3838 = vunpack.c.l.b16 %v495
    %v3839 = vunpack.c.h.b16 %v495
    %v3840 = vunpack.c.l.b16 %v496
    %v3841 = vunpack.c.h.b16 %v496
    %v3842 = vunpack.c.l.b16 %v497
    %v3843 = vunpack.c.h.b16 %v497
    %v3844 = vunpack.c.l.b16 %v498
    %v3845 = vunpack.c.h.b16 %v498
    %v3846 = vunpack.c.l.b16 %v499
    %v3847 = vunpack.c.h.b16 %v499
    %v3848 = vunpack.c.l.b16 %v500
    %v3849 = vunpack.c.h.b16 %v500
    %v3850 = vunpack.c.l.b16 %v501
    %v3851 = vunpack.c.h.b16 %v501
    %v3852 = vunpack.c.l.b16 %v502
    %v3853 = vunpack.c.h.b16 %v502
    %v3854 = vunpack.c.l.b16 %v503
    %v3855 = vunpack.c.h.b16 %v503
    %v3856 = vunpack.c.l.b16 %v504
    %v3857 = vunpack.c.h.b16 %v504
    %v3858 = vunpack.c.l.b16 %v505
    %v3859 = vunpack.c.h.b16 %v505
    %v3860 = vunpack.c.l.b16 %v506
    %v3861 = vunpack.c.h.b16 %v506
    %v3862 = vunpack.c.l.b16 %v507
    %v3863 = vunpack.c.h.b16 %v507
    %v3864 = vunpack.c.l.b16 %v508
    %v3865 = vunpack.c.h.b16 %v508
    %v3866 = vunpack.c.l.b16 %v509
    %v3867 = vunpack.c.h.b16 %v509
    %v3868 = vunpack.c.l.b16 %v510
    %v3869 = vunpack.c.h.b16 %v510
    %v3870 = vunpack.c.l.b16 %v511
    %v3871 = vunpack.c.h.b16 %v511
    %v3872 = vunpack.c.l.b16 %v512
    %v3873 = vunpack.c.h.b16 %v512
    %v3874 = vunpack.c.l.b16 %v513
    %v3875 = vunpack.c.h.b16 %v513
    %v3876 = vunpack.c.l.b16 %v514
    %v3877 = vunpack.c.h.b16 %v514
    %v3878 = vunpack.c.l.b16 %v515
    %v3879 = vunpack.c.h.b16 %v515
    %v3880 = vunpack.c.l.b16 %v516
    %v3881 = vunpack.c.h.b16 %v516
    %v3882 = vunpack.c.l.b16 %v517
    %v3883 = vunpack.c.h.b16 %v517
    %v3884 = vunpack.c.l.b16 %v518
    %v3885 = vunpack.c.h.b16 %v518
    %v3886 = vunpack.c.l.b16 %v519
    %v3887 = vunpack.c.h.b16 %v519
    %v3888 = vunpack.c.l.b16 %v520
    %v3889 = vunpack.c.h.b16 %v520
    %v3890 = vunpack.c.l.b16 %v521
    %v3891 = vunpack.c.h.b16 %v521
    %v3892 = vunpack.c.l.b16 %v522
    %v3893 = vunpack.c.h.b16 %v522
    %v3894 = vunpack.c.l.b16 %v523
    %v3895 = vunpack.c.h.b16 %v523
    %v3896 = vunpack.c.l.b16 %v524
    %v3897 = vunpack.c.h.b16 %v524
    %v3898 = vunpack.c.l.b16 %v525
    %v3899 = vunpack.c.h.b16 %v525
    %v3900 = vunpack.c.l.b16 %v526
    %v3901 = vunpack.c.h.b16 %v526
    %v3902 = vunpack.c.l.b16 %v527
    %v3903 = vunpack.c.h.b16 %v527
    %v3904 = vunpack.c.l.b16 %v528
    %v3905 = vunpack.c.h.b16 %v528
    %v3906 = vunpack.c.l.b16 %v529
    %v3907 = vunpack.c.h.b16 %v529
    %v3908 = vunpack.c.l.b16 %v530
    %v3909 = vunpack.c.h.b16 %v530
    %v3910 = vunpack.c.l.b16 %v531
    %v3911 = vunpack.c.h.b16 %v531
    %v3912 = vunpack.c.l.b16 %v532
    %v3913 = vunpack.c.h.b16 %v532
    %v3914 = vunpack.c.l.b16 %v533
    %v3915 = vunpack.c.h.b16 %v533
    %v3916 = vunpack.c.l.b16 %v534
    %v3917 = vunpack.c.h.b16 %v534
    %v3918 = vunpack.c.l.b16 %v535
    %v3919 = vunpack.c.h.b16 %v535
    %v3920 = vunpack.c.l.b16 %v536
    %v3921 = vunpack.c.h.b16 %v536
    %v3922 = vunpack.c.l.b16 %v537
    %v3923 = vunpack.c.h.b16 %v537
    %v3924 = vunpack.c.l.b16 %v538
    %v3925 = vunpack.c.h.b16 %v538
    %v3926 = vunpack.c.l.b16 %v539
    %v3927 = vunpack.c.h.b16 %v539
    %v3928 = vunpack.c.l.b16 %v540
    %v3929 = vunpack.c.h.b16 %v540
    %v3930 = vunpack.c.l.b16 %v541
    %v3931 = vunpack.c.h.b16 %v541
    %v3932 = vunpack.c.l.b16 %v542
    %v3933 = vunpack.c.h.b16 %v542
    %v3934 = vunpack.c.l.b16 %v543
    %v3935 = vunpack.c.h.b16 %v543
    %v3936 = vunpack.c.l.b16 %v544
    %v3937 = vunpack.c.h.b16 %v544
    %v3938 = vunpack.c.l.b16 %v545
    %v3939 = vunpack.c.h.b16 %v545
    %v3940 = vunpack.c.l.b16 %v546
    %v3941 = vunpack.c.h.b16 %v546
    %v3942 = vunpack.c.l.b16 %v547
    %v3943 = vunpack.c.h.b16 %v547
    %v3944 = vunpack.c.l.b16 %v548
    %v3945 = vunpack.c.h.b16 %v548
    %v3946 = vunpack.c.l.b16 %v549
    %v3947 = vunpack.c.h.b16 %v549
    %v3948 = vunpack.c.l.b16 %v550
    %v3949 = vunpack.c.h.b16 %v550
    %v3950 = vunpack.c.l.b16 %v551
    %v3951 = vunpack.c.h.b16 %v551
    %v3952 = vunpack.c.l.b16 %v552
    %v3953 = vunpack.c.h.b16 %v552
    %v3954 = vunpack.c.l.b16 %v553
    %v3955 = vunpack.c.h.b16 %v553
    %v3956 = vunpack.c.l.b16 %v554
    %v3957 = vunpack.c.h.b16 %v554
    %v3958 = vunpack.c.l.b16 %v555
    %v3959 = vunpack.c.h.b16 %v555
    %v3960 = vunpack.c.l.b16 %v556
    %v3961 = vunpack.c.h.b16 %v556
    %v3962 = vunpack.c.l.b16 %v557
    %v3963 = vunpack.c.h.b16 %v557
    %v3964 = vunpack.c.l.b16 %v558
    %v3965 = vunpack.c.h.b16 %v558
    %v3966 = vunpack.c.l.b16 %v559
    %v3967 = vunpack.c.h.b16 %v559
    %v3968 = vunpack.c.l.b16 %v560
    %v3969 = vunpack.c.h.b16 %v560
    %v3970 = vunpack.c.l.b16 %v561
    %v3971 = vunpack.c.h.b16 %v561
    %v3972 = vunpack.c.l.b16 %v562
    %v3973 = vunpack.c.h.b16 %v562
    %v3974 = vunpack.c.l.b16 %v563
    %v3975 = vunpack.c.h.b16 %v563
    %v3976 = vunpack.c.l.b16 %v564
    %v3977 = vunpack.c.h.b16 %v564
    %v3978 = vunpack.c.l.b16 %v565
    %v3979 = vunpack.c.h.b16 %v565
    %v3980 = vunpack.c.l.b16 %v566
    %v3981 = vunpack.c.h.b16 %v566
    %v3982 = vunpack.c.l.b16 %v567
    %v3983 = vunpack.c.h.b16 %v567
    %v3984 = vunpack.c.l.b16 %v568
    %v3985 = vunpack.c.h.b16 %v568
    %v3986 = vunpack.c.l.b16 %v569
    %v3987 = vunpack.c.h.b16 %v569
    %v3988 = vunpack.c.l.b16 %v570
    %v3989 = vunpack.c.h.b16 %v570
    %v3990 = vunpack.c.l.b16 %v571
    %v3991 = vunpack.c.h.b16 %v571
    %v3992 = vunpack.c.l.b16 %v572
    %v3993 = vunpack.c.h.b16 %v572
    %v3994 = vunpack.c.l.b16 %v573
    %v3995 = vunpack.c.h.b16 %v573
    %v3996 = vunpack.c.l.b16 %v574
    %v3997 = vunpack.c.h.b16 %v574
    %v3998 = vunpack.c.l.b16 %v575
    %v3999 = vunpack.c.h.b16 %v575
    %v4000 = vunpack.c.l.b16 %v576
    %v4001 = vunpack.c.h.b16 %v576
    %v4002 = vunpack.c.l.b16 %v577
    %v4003 = vunpack.c.h.b16 %v577
    %v4004 = vunpack.c.l.b16 %v578
    %v4005 = vunpack.c.h.b16 %v578
    %v4006 = vunpack.c.l.b16 %v579
    %v4007 = vunpack.c.h.b16 %v579
    %v4008 = vunpack.c.l.b16 %v580
    %v4009 = vunpack.c.h.b16 %v580
    %v4010 = vunpack.c.l.b16 %v581
    %v4011 = vunpack.c.h.b16 %v581
    %v4012 = vunpack.c.l.b16 %v582
    %v4013 = vunpack.c.h.b16 %v582
    %v4014 = vunpack.c.l.b16 %v583
    %v4015 = vunpack.c.h.b16 %v583
    %v4016 = vunpack.c.l.b16 %v584
    %v4017 = vunpack.c.h.b16 %v584
    %v4018 = vunpack.c.l.b16 %v585
    %v4019 = vunpack.c.h.b16 %v585
    %v4020 = vunpack.c.l.b16 %v586
    %v4021 = vunpack.c.h.b16 %v586
    %v4022 = vunpack.c.l.b16 %v587
    %v4023 = vunpack.c.h.b16 %v587
    %v4024 = vunpack.c.l.b16 %v588
    %v4025 = vunpack.c.h.b16 %v588
    %v4026 = vunpack.c.l.b16 %v589
    %v4027 = vunpack.c.h.b16 %v589
    %v4028 = vunpack.c.l.b16 %v590
    %v4029 = vunpack.c.h.b16 %v590
    %v4030 = vunpack.c.l.b16 %v591
    %v4031 = vunpack.c.h.b16 %v591
    %v4032 = vunpack.c.l.b16 %v592
    %v4033 = vunpack.c.h.b16 %v592
    %v4034 = vunpack.c.l.b16 %v593
    %v4035 = vunpack.c.h.b16 %v593
    %v4036 = vunpack.c.l.b16 %v594
    %v4037 = vunpack.c.h.b16 %v594
    %v4038 = vunpack.c.l.b16 %v595
    %v4039 = vunpack.c.h.b16 %v595
    %v4040 = vunpack.c.l.b16 %v596
    %v4041 = vunpack.c.h.b16 %v596
    %v4042 = vunpack.c.l.b16 %v597
    %v4043 = vunpack.c.h.b16 %v597
    %v4044 = vunpack.c.l.b16 %v598
    %v4045 = vunpack.c.h.b16 %v598
    %v4046 = vunpack.c.l.b16 %v599
    %v4047 = vunpack.c.h.b16 %v599
    %v4048 = vunpack.c.l.b16 %v600
    %v4049 = vunpack.c.h.b16 %v600
    %v4050 = vunpack.c.l.b16 %v601
    %v4051 = vunpack.c.h.b16 %v601
    %v4052 = vunpack.c.l.b16 %v602
    %v4053 = vunpack.c.h.b16 %v602
    %v4054 = vunpack.c.l.b16 %v603
    %v4055 = vunpack.c.h.b16 %v603
    %v4056 = vunpack.c.l.b16 %v604
    %v4057 = vunpack.c.h.b16 %v604
    %v4058 = vunpack.c.l.b16 %v605
    %v4059 = vunpack.c.h.b16 %v605
    %v4060 = vunpack.c.l.b16 %v606
    %v4061 = vunpack.c.h.b16 %v606
    %v4062 = vunpack.c.l.b16 %v607
    %v4063 = vunpack.c.h.b16 %v607
    %v4064 = vunpack.c.l.b16 %v608
    %v4065 = vunpack.c.h.b16 %v608
    %v4066 = vunpack.c.l.b16 %v609
    %v4067 = vunpack.c.h.b16 %v609
    %v4068 = vunpack.c.l.b16 %v610
    %v4069 = vunpack.c.h.b16 %v610
    %v4070 = vunpack.c.l.b16 %v611
    %v4071 = vunpack.c.h.b16 %v611
    %v4072 = vunpack.c.l.b16 %v612
    %v4073 = vunpack.c.h.b16 %v612
    %v4074 = vunpack.c.l.b16 %v613
    %v4075 = vunpack.c.h.b16 %v613
    %v4076 = vunpack.c.l.b16 %v614
    %v4077 = vunpack.c.h.b16 %v614
    %v4078 = vunpack.c.l.b16 %v615
    %v4079 = vunpack.c.h.b16 %v615
    %v4080 = vunpack.c.l.b16 %v616
    %v4081 = vunpack.c.h.b16 %v616
    %v4082 = vunpack.c.l.b16 %v617
    %v4083 = vunpack.c.h.b16 %v617
    %v4084 = vunpack.c.l.b16 %v618
    %v4085 = vunpack.c.h.b16 %v618
    %v4086 = vunpack.c.l.b16 %v619
    %v4087 = vunpack.c.h.b16 %v619
    %v4088 = vunpack.c.l.b16 %v620
    %v4089 = vunpack.c.h.b16 %v620
    %v4090 = vunpack.c.l.b16 %v621
    %v4091 = vunpack.c.h.b16 %v621
    %v4092 = vunpack.c.l.b16 %v622
    %v4093 = vunpack.c.h.b16 %v622
    %v4094 = vunpack.c.l.b16 %v623
    %v4095 = vunpack.c.h.b16 %v623
    %v4096 = vunpack.c.l.b16 %v624
    %v4097 = vunpack.c.h.b16 %v624
    %v4098 = vunpack.c.l.b16 %v625
    %v4099 = vunpack.c.h.b16 %v625
    %v4100 = vunpack.c.l.b16 %v626
    %v4101 = vunpack.c.h.b16 %v626
    %v4102 = vunpack.c.l.b16 %v627
    %v4103 = vunpack.c.h.b16 %v627
    %v4104 = vunpack.c.l.b16 %v628
    %v4105 = vunpack.c.h.b16 %v628
    %v4106 = vunpack.c.l.b16 %v629
    %v4107 = vunpack.c.h.b16 %v629
    %v4108 = vunpack.c.l.b16 %v630
    %v4109 = vunpack.c.h.b16 %v630
    %v4110 = vunpack.c.l.b16 %v631
    %v4111 = vunpack.c.h.b16 %v631
    %v4112 = vunpack.c.l.b16 %v632
    %v4113 = vunpack.c.h.b16 %v632
    %v4114 = vunpack.c.l.b16 %v633
    %v4115 = vunpack.c.h.b16 %v633
    %v4116 = vunpack.c.l.b16 %v634
    %v4117 = vunpack.c.h.b16 %v634
    %v4118 = vunpack.c.l.b16 %v635
    %v4119 = vunpack.c.h.b16 %v635
    %v4120 = vunpack.c.l.b16 %v636
    %v4121 = vunpack.c.h.b16 %v636
    %v4122 = vunpack.c.l.b16 %v637
    %v4123 = vunpack.c.h.b16 %v637
    %v4124 = vunpack.c.l.b16 %v638
    %v4125 = vunpack.c.h.b16 %v638
    %v4126 = vunpack.c.l.b16 %v639
    %v4127 = vunpack.c.h.b16 %v639
    %v4128 = vunpack.c.l.b16 %v640
    %v4129 = vunpack.c.h.b16 %v640
    %v4130 = vunpack.c.l.b16 %v641
    %v4131 = vunpack.c.h.b16 %v641
    %v4132 = vunpack.c.l.b16 %v642
    %v4133 = vunpack.c.h.b16 %v642
    %v4134 = vunpack.c.l.b16 %v643
    %v4135 = vunpack.c.h.b16 %v643
    %v4136 = vunpack.c.l.b16 %v644
    %v4137 = vunpack.c.h.b16 %v644
    %v4138 = vunpack.c.l.b16 %v645
    %v4139 = vunpack.c.h.b16 %v645
    %v4140 = vunpack.c.l.b16 %v646
    %v4141 = vunpack.c.h.b16 %v646
    %v4142 = vunpack.c.l.b16 %v647
    %v4143 = vunpack.c.h.b16 %v647
    %v4144 = vunpack.c.l.b16 %v648
    %v4145 = vunpack.c.h.b16 %v648
    %v4146 = vunpack.c.l.b16 %v649
    %v4147 = vunpack.c.h.b16 %v649
    %v4148 = vunpack.c.l.b16 %v650
    %v4149 = vunpack.c.h.b16 %v650
    %v4150 = vunpack.c.l.b16 %v651
    %v4151 = vunpack.c.h.b16 %v651
    %v4152 = vunpack.c.l.b16 %v652
    %v4153 = vunpack.c.h.b16 %v652
    %v4154 = vunpack.c.l.b16 %v653
    %v4155 = vunpack.c.h.b16 %v653
    %v4156 = vunpack.c.l.b16 %v654
    %v4157 = vunpack.c.h.b16 %v654
    %v4158 = vunpack.c.l.b16 %v655
    %v4159 = vunpack.c.h.b16 %v655
    %v4160 = vunpack.c.l.b16 %v656
    %v4161 = vunpack.c.h.b16 %v656
    %v4162 = vunpack.c.l.b16 %v657
    %v4163 = vunpack.c.h.b16 %v657
    %v4164 = vunpack.c.l.b16 %v658
    %v4165 = vunpack.c.h.b16 %v658
    %v4166 = vunpack.c.l.b16 %v659
    %v4167 = vunpack.c.h.b16 %v659
    %v4168 = vunpack.c.l.b16 %v660
    %v4169 = vunpack.c.h.b16 %v660
    %v4170 = vunpack.c.l.b16 %v661
    %v4171 = vunpack.c.h.b16 %v661
    %v4172 = vunpack.c.l.b16 %v662
    %v4173 = vunpack.c.h.b16 %v662
    %v4174 = vunpack.c.l.b16 %v663
    %v4175 = vunpack.c.h.b16 %v663
    %v4176 = vunpack.c.l.b16 %v664
    %v4177 = vunpack.c.h.b16 %v664
    %v4178 = vunpack.c.l.b16 %v665
    %v4179 = vunpack.c.h.b16 %v665
    %v4180 = vunpack.c.l.b16 %v666
    %v4181 = vunpack.c.h.b16 %v666
    %v4182 = vunpack.c.l.b16 %v667
    %v4183 = vunpack.c.h.b16 %v667
    %v4184 = vunpack.c.l.b16 %v668
    %v4185 = vunpack.c.h.b16 %v668
    %v4186 = vunpack.c.l.b16 %v669
    %v4187 = vunpack.c.h.b16 %v669
    %v4188 = vunpack.c.l.b16 %v670
    %v4189 = vunpack.c.h.b16 %v670
    %v4190 = vunpack.c.l.b16 %v671
    %v4191 = vunpack.c.h.b16 %v671
    %v4192 = vunpack.c.l.b16 %v672
    %v4193 = vunpack.c.h.b16 %v672
    %v4194 = vunpack.c.l.b16 %v673
    %v4195 = vunpack.c.h.b16 %v673
    %v4196 = vunpack.c.l.b16 %v674
    %v4197 = vunpack.c.h.b16 %v674
    %v4198 = vunpack.c.l.b16 %v675
    %v4199 = vunpack.c.h.b16 %v675
    %v4200 = vunpack.c.l.b16 %v676
    %v4201 = vunpack.c.h.b16 %v676
    %v4202 = vunpack.c.l.b16 %v677
    %v4203 = vunpack.c.h.b16 %v677
    %v4204 = vunpack.c.l.b16 %v678
    %v4205 = vunpack.c.h.b16 %v678
    %v4206 = vunpack.c.l.b16 %v679
    %v4207 = vunpack.c.h.b16 %v679
    %v4208 = vunpack.c.l.b16 %v680
    %v4209 = vunpack.c.h.b16 %v680
    %v4210 = vunpack.c.l.b16 %v681
    %v4211 = vunpack.c.h.b16 %v681
    %v4212 = vunpack.c.l.b16 %v682
    %v4213 = vunpack.c.h.b16 %v682
    %v4214 = vunpack.c.l.b16 %v683
    %v4215 = vunpack.c.h.b16 %v683
    %v4216 = vunpack.c.l.b16 %v684
    %v4217 = vunpack.c.h.b16 %v684
    %v4218 = vunpack.c.l.b16 %v685
    %v4219 = vunpack.c.h.b16 %v685
    %v4220 = vunpack.c.l.b16 %v686
    %v4221 = vunpack.c.h.b16 %v686
    %v4222 = vunpack.c.l.b16 %v687
    %v4223 = vunpack.c.h.b16 %v687
    %v4224 = vunpack.c.l.b16 %v688
    %v4225 = vunpack.c.h.b16 %v688
    %v4226 = vunpack.c.l.b16 %v689
    %v4227 = vunpack.c.h.b16 %v689
    %v4228 = vunpack.c.l.b16 %v690
    %v4229 = vunpack.c.h.b16 %v690
    %v4230 = vunpack.c.l.b16 %v691
    %v4231 = vunpack.c.h.b16 %v691
    %v4232 = vunpack.c.l.b16 %v692
    %v4233 = vunpack.c.h.b16 %v692
    %v4234 = vunpack.c.l.b16 %v693
    %v4235 = vunpack.c.h.b16 %v693
    %v4236 = vunpack.c.l.b16 %v694
    %v4237 = vunpack.c.h.b16 %v694
    %v4238 = vunpack.c.l.b16 %v695
    %v4239 = vunpack.c.h.b16 %v695
    %v4240 = vunpack.c.l.b16 %v696
    %v4241 = vunpack.c.h.b16 %v696
    %v4242 = vunpack.c.l.b16 %v697
    %v4243 = vunpack.c.h.b16 %v697
    %v4244 = vunpack.c.l.b16 %v698
    %v4245 = vunpack.c.h.b16 %v698
    %v4246 = vunpack.c.l.b16 %v699
    %v4247 = vunpack.c.h.b16 %v699
    %v4248 = vunpack.c.l.b16 %v700
    %v4249 = vunpack.c.h.b16 %v700
    %v4250 = vunpack.c.l.b16 %v701
    %v4251 = vunpack.c.h.b16 %v701
    %v4252 = vunpack.c.l.b16 %v702
    %v4253 = vunpack.c.h.b16 %v702
    %v4254 = vunpack.c.l.b16 %v703
    %v4255 = vunpack.c.h.b16 %v703
    %v4256 = vunpack.c.l.b16 %v704
    %v4257 = vunpack.c.h.b16 %v704
    %v4258 = vunpack.c.l.b16 %v705
    %v4259 = vunpack.c.h.b16 %v705
    %v4260 = vunpack.c.l.b16 %v706
    %v4261 = vunpack.c.h.b16 %v706
    %v4262 = vunpack.c.l.b16 %v707
    %v4263 = vunpack.c.h.b16 %v707
    %v4264 = vunpack.c.l.b16 %v708
    %v4265 = vunpack.c.h.b16 %v708
    %v4266 = vunpack.c.l.b16 %v709
    %v4267 = vunpack.c.h.b16 %v709
    %v4268 = vunpack.c.l.b16 %v710
    %v4269 = vunpack.c.h.b16 %v710
    %v4270 = vunpack.c.l.b16 %v711
    %v4271 = vunpack.c.h.b16 %v711
    %v4272 = vunpack.c.l.b16 %v712
    %v4273 = vunpack.c.h.b16 %v712
    %v4274 = vunpack.c.l.b16 %v713
    %v4275 = vunpack.c.h.b16 %v713
    %v4276 = vunpack.c.l.b16 %v714
    %v4277 = vunpack.c.h.b16 %v714
    %v4278 = vunpack.c.l.b16 %v715
    %v4279 = vunpack.c.h.b16 %v715
    %v4280 = vunpack.c.l.b16 %v716
    %v4281 = vunpack.c.h.b16 %v716
    %v4282 = vunpack.c.l.b16 %v717
    %v4283 = vunpack.c.h.b16 %v717
    %v4284 = vunpack.c.l.b16 %v718
    %v4285 = vunpack.c.h.b16 %v718
    %v4286 = vunpack.c.l.b16 %v719
    %v4287 = vunpack.c.h.b16 %v719
    %v4288 = vunpack.c.l.b16 %v720
    %v4289 = vunpack.c.h.b16 %v720
    %v4290 = vunpack.c.l.b16 %v721
    %v4291 = vunpack.c.h.b16 %v721
    %v4292 = vunpack.c.l.b16 %v722
    %v4293 = vunpack.c.h.b16 %v722
    %v4294 = vunpack.c.l.b16 %v723
    %v4295 = vunpack.c.h.b16 %v723
    %v4296 = vunpack.c.l.b16 %v724
    %v4297 = vunpack.c.h.b16 %v724
    %v4298 = vunpack.c.l.b16 %v725
    %v4299 = vunpack.c.h.b16 %v725
    %v4300 = vunpack.c.l.b16 %v726
    %v4301 = vunpack.c.h.b16 %v726
    %v4302 = vunpack.c.l.b16 %v727
    %v4303 = vunpack.c.h.b16 %v727
    %v4304 = vunpack.c.l.b16 %v728
    %v4305 = vunpack.c.h.b16 %v728
    %v4306 = vunpack.c.l.b16 %v729
    %v4307 = vunpack.c.h.b16 %v729
    %v4308 = vunpack.c.l.b16 %v730
    %v4309 = vunpack.c.h.b16 %v730
    %v4310 = vunpack.c.l.b16 %v731
    %v4311 = vunpack.c.h.b16 %v731
    %v4312 = vunpack.c.l.b16 %v732
    %v4313 = vunpack.c.h.b16 %v732
    %v4314 = vunpack.c.l.b16 %v733
    %v4315 = vunpack.c.h.b16 %v733
    %v4316 = vunpack.c.l.b16 %v734
    %v4317 = vunpack.c.h.b16 %v734
    %v4318 = vunpack.c.l.b16 %v735
    %v4319 = vunpack.c.h.b16 %v735
    %v4320 = vunpack.c.l.b16 %v736
    %v4321 = vunpack.c.h.b16 %v736
    %v4322 = vunpack.c.l.b16 %v737
    %v4323 = vunpack.c.h.b16 %v737
    %v4324 = vunpack.c.l.b16 %v738
    %v4325 = vunpack.c.h.b16 %v738
    %v4326 = vunpack.c.l.b16 %v739
    %v4327 = vunpack.c.h.b16 %v739
    %v4328 = vunpack.c.l.b16 %v740
    %v4329 = vunpack.c.h.b16 %v740
    %v4330 = vunpack.c.l.b16 %v741
    %v4331 = vunpack.c.h.b16 %v741
    %v4332 = vunpack.c.l.b16 %v742
    %v4333 = vunpack.c.h.b16 %v742
    %v4334 = vunpack.c.l.b16 %v743
    %v4335 = vunpack.c.h.b16 %v743
    %v4336 = vunpack.c.l.b16 %v744
    %v4337 = vunpack.c.h.b16 %v744
    %v4338 = vunpack.c.l.b16 %v745
    %v4339 = vunpack.c.h.b16 %v745
    %v4340 = vunpack.c.l.b16 %v746
    %v4341 = vunpack.c.h.b16 %v746
    %v4342 = vunpack.c.l.b16 %v747
    %v4343 = vunpack.c.h.b16 %v747
    %v4344 = vunpack.c.l.b16 %v748
    %v4345 = vunpack.c.h.b16 %v748
    %v4346 = vunpack.c.l.b16 %v749
    %v4347 = vunpack.c.h.b16 %v749
    %v4348 = vunpack.c.l.b16 %v750
    %v4349 = vunpack.c.h.b16 %v750
    %v4350 = vunpack.c.l.b16 %v751
    %v4351 = vunpack.c.h.b16 %v751
    %v4352 = vunpack.c.l.b16 %v752
    %v4353 = vunpack.c.h.b16 %v752
    %v4354 = vunpack.c.l.b16 %v753
    %v4355 = vunpack.c.h.b16 %v753
    %v4356 = vunpack.c.l.b16 %v754
    %v4357 = vunpack.c.h.b16 %v754
    %v4358 = vunpack.c.l.b16 %v755
    %v4359 = vunpack.c.h.b16 %v755
    %v4360 = vunpack.c.l.b16 %v756
    %v4361 = vunpack.c.h.b16 %v756
    %v4362 = vunpack.c.l.b16 %v757
    %v4363 = vunpack.c.h.b16 %v757
    %v4364 = vunpack.c.l.b16 %v758
    %v4365 = vunpack.c.h.b16 %v758
    %v4366 = vunpack.c.l.b16 %v759
    %v4367 = vunpack.c.h.b16 %v759
    %v4368 = vunpack.c.l.b16 %v760
    %v4369 = vunpack.c.h.b16 %v760
    %v4370 = vunpack.c.l.b16 %v761
    %v4371 = vunpack.c.h.b16 %v761
    %v4372 = vunpack.c.l.b16 %v762
    %v4373 = vunpack.c.h.b16 %v762
    %v4374 = vunpack.c.l.b16 %v763
    %v4375 = vunpack.c.h.b16 %v763
    %v4376 = vunpack.c.l.b16 %v764
    %v4377 = vunpack.c.h.b16 %v764
    %v4378 = vunpack.c.l.b16 %v765
    %v4379 = vunpack.c.h.b16 %v765
    %v4380 = vunpack.c.l.b16 %v766
    %v4381 = vunpack.c.h.b16 %v766
    %v4382 = vunpack.c.l.b16 %v767
    %v4383 = vunpack.c.h.b16 %v767
    %v4384 = vunpack.c.l.b16 %v768
    %v4385 = vunpack.c.h.b16 %v768
    %v4386 = vunpack.c.l.b16 %v769
    %v4387 = vunpack.c.h.b16 %v769
    %v4388 = vunpack.c.l.b16 %v770
    %v4389 = vunpack.c.h.b16 %v770
    %v4390 = vunpack.c.l.b16 %v771
    %v4391 = vunpack.c.h.b16 %v771
    %v4392 = vunpack.c.l.b16 %v772
    %v4393 = vunpack.c.h.b16 %v772
    %v4394 = vunpack.c.l.b16 %v773
    %v4395 = vunpack.c.h.b16 %v773
    %v4396 = vunpack.c.l.b16 %v774
    %v4397 = vunpack.c.h.b16 %v774
    %v4398 = vunpack.c.l.b16 %v775
    %v4399 = vunpack.c.h.b16 %v775
    %v4400 = vunpack.c.l.b16 %v776
    %v4401 = vunpack.c.h.b16 %v776
    %v4402 = vunpack.c.l.b16 %v777
    %v4403 = vunpack.c.h.b16 %v777
    %v4404 = vunpack.c.l.b16 %v778
    %v4405 = vunpack.c.h.b16 %v778
    %v4406 = vunpack.c.l.b16 %v779
    %v4407 = vunpack.c.h.b16 %v779
    %v4408 = vunpack.c.l.b16 %v780
    %v4409 = vunpack.c.h.b16 %v780
    %v4410 = vunpack.c.l.b16 %v781
    %v4411 = vunpack.c.h.b16 %v781
    %v4412 = vunpack.c.l.b16 %v782
    %v4413 = vunpack.c.h.b16 %v782
    %v4414 = vunpack.c.l.b16 %v783
    %v4415 = vunpack.c.h.b16 %v783
    %v4416 = vunpack.c.l.b16 %v784
    %v4417 = vunpack.c.h.b16 %v784
    %v4418 = vunpack.c.l.b16 %v785
    %v4419 = vunpack.c.h.b16 %v785
    %v4420 = vunpack.c.l.b16 %v786
    %v4421 = vunpack.c.h.b16 %v786
    %v4422 = vunpack.c.l.b16 %v787
    %v4423 = vunpack.c.h.b16 %v787
    %v4424 = vunpack.c.l.b16 %v788
    %v4425 = vunpack.c.h.b16 %v788
    %v4426 = vunpack.c.l.b16 %v789
    %v4427 = vunpack.c.h.b16 %v789
    %v4428 = vunpack.c.l.b16 %v790
    %v4429 = vunpack.c.h.b16 %v790
    %v4430 = vunpack.c.l.b16 %v791
    %v4431 = vunpack.c.h.b16 %v791
    %v4432 = vunpack.c.l.b16 %v792
    %v4433 = vunpack.c.h.b16 %v792
    %v4434 = vunpack.c.l.b16 %v793
    %v4435 = vunpack.c.h.b16 %v793
    %v4436 = vunpack.c.l.b16 %v794
    %v4437 = vunpack.c.h.b16 %v794
    %v4438 = vunpack.c.l.b16 %v795
    %v4439 = vunpack.c.h.b16 %v795
    %v4440 = vunpack.c.l.b16 %v796
    %v4441 = vunpack.c.h.b16 %v796
    %v4442 = vunpack.c.l.b16 %v797
    %v4443 = vunpack.c.h.b16 %v797
    %v4444 = vunpack.c.l.b16 %v798
    %v4445 = vunpack.c.h.b16 %v798
    %v4446 = vunpack.c.l.b16 %v799
    %v4447 = vunpack.c.h.b16 %v799
    %v4448 = vunpack.c.l.b16 %v800
    %v4449 = vunpack.c.h.b16 %v800
    %v4450 = vunpack.c.l.b16 %v801
    %v4451 = vunpack.c.h.b16 %v801
    %v4452 = vunpack.c.l.b16 %v802
    %v4453 = vunpack.c.h.b16 %v802
    %v4454 = vunpack.c.l.b16 %v803
    %v4455 = vunpack.c.h.b16 %v803
    %v4456 = vunpack.c.l.b16 %v804
    %v4457 = vunpack.c.h.b16 %v804
    %v4458 = vunpack.c.l.b16 %v805
    %v4459 = vunpack.c.h.b16 %v805
    %v4460 = vunpack.c.l.b16 %v806
    %v4461 = vunpack.c.h.b16 %v806
    %v4462 = vunpack.c.l.b16 %v807
    %v4463 = vunpack.c.h.b16 %v807
    %v4464 = vunpack.c.l.b16 %v808
    %v4465 = vunpack.c.h.b16 %v808
    %v4466 = vunpack.c.l.b16 %v809
    %v4467 = vunpack.c.h.b16 %v809
    %v4468 = vunpack.c.l.b16 %v810
    %v4469 = vunpack.c.h.b16 %v810
    %v4470 = vunpack.c.l.b16 %v811
    %v4471 = vunpack.c.h.b16 %v811
    %v4472 = vunpack.c.l.b16 %v812
    %v4473 = vunpack.c.h.b16 %v812
    %v4474 = vunpack.c.l.b16 %v813
    %v4475 = vunpack.c.h.b16 %v813
    %v4476 = vunpack.c.l.b16 %v814
    %v4477 = vunpack.c.h.b16 %v814
    %v4478 = vunpack.c.l.b16 %v815
    %v4479 = vunpack.c.h.b16 %v815
    %v4480 = vunpack.c.l.b16 %v816
    %v4481 = vunpack.c.h.b16 %v816
    %v4482 = vunpack.c.l.b16 %v817
    %v4483 = vunpack.c.h.b16 %v817
    %v4484 = vunpack.c.l.b16 %v818
    %v4485 = vunpack.c.h.b16 %v818
    %v4486 = vunpack.c.l.b16 %v819
    %v4487 = vunpack.c.h.b16 %v819
    %v4488 = vunpack.c.l.b16 %v820
    %v4489 = vunpack.c.h.b16 %v820
    %v4490 = vunpack.c.l.b16 %v821
    %v4491 = vunpack.c.h.b16 %v821
    %v4492 = vunpack.c.l.b16 %v822
    %v4493 = vunpack.c.h.b16 %v822
    %v4494 = vunpack.c.l.b16 %v823
    %v4495 = vunpack.c.h.b16 %v823
    %v4496 = vunpack.c.l.b16 %v824
    %v4497 = vunpack.c.h.b16 %v824
    %v4498 = vunpack.c.l.b16 %v825
    %v4499 = vunpack.c.h.b16 %v825
    %v4500 = vunpack.c.l.b16 %v826
    %v4501 = vunpack.c.h.b16 %v826
    %v4502 = vunpack.c.l.b16 %v827
    %v4503 = vunpack.c.h.b16 %v827
    %v4504 = vunpack.c.l.b16 %v828
    %v4505 = vunpack.c.h.b16 %v828
    %v4506 = vunpack.c.l.b16 %v829
    %v4507 = vunpack.c.h.b16 %v829
    %v4508 = vunpack.c.l.b16 %v830
    %v4509 = vunpack.c.h.b16 %v830
    %v4510 = vunpack.c.l.b16 %v831
    %v4511 = vunpack.c.h.b16 %v831
    %v4512 = vunpack.c.l.b16 %v832
    %v4513 = vunpack.c.h.b16 %v832
    %v4514 = vunpack.c.l.b16 %v833
    %v4515 = vunpack.c.h.b16 %v833
    %v4516 = vunpack.c.l.b16 %v834
    %v4517 = vunpack.c.h.b16 %v834
    %v4518 = vunpack.c.l.b16 %v835
    %v4519 = vunpack.c.h.b16 %v835
    %v4520 = vunpack.c.l.b16 %v836
    %v4521 = vunpack.c.h.b16 %v836
    %v4522 = vunpack.c.l.b16 %v837
    %v4523 = vunpack.c.h.b16 %v837
    %v4524 = vunpack.c.l.b16 %v838
    %v4525 = vunpack.c.h.b16 %v838
    %v4526 = vunpack.c.l.b16 %v839
    %v4527 = vunpack.c.h.b16 %v839
    %v4528 = vunpack.c.l.b16 %v840
    %v4529 = vunpack.c.h.b16 %v840
    %v4530 = vunpack.c.l.b16 %v841
    %v4531 = vunpack.c.h.b16 %v841
    %v4532 = vunpack.c.l.b16 %v842
    %v4533 = vunpack.c.h.b16 %v842
    %v4534 = vunpack.c.l.b16 %v843
    %v4535 = vunpack.c.h.b16 %v843
    %v4536 = vunpack.c.l.b16 %v844
    %v4537 = vunpack.c.h.b16 %v844
    %v4538 = vunpack.c.l.b16 %v845
    %v4539 = vunpack.c.h.b16 %v845
    %v4540 = vunpack.c.l.b16 %v846
    %v4541 = vunpack.c.h.b16 %v846
    %v4542 = vunpack.c.l.b16 %v847
    %v4543 = vunpack.c.h.b16 %v847
    %v4544 = vunpack.c.l.b16 %v848
    %v4545 = vunpack.c.h.b16 %v848
    %v4546 = vunpack.c.l.b16 %v849
    %v4547 = vunpack.c.h.b16 %v849
    %v4548 = vunpack.c.l.b16 %v850
    %v4549 = vunpack.c.h.b16 %v850
    %v4550 = vunpack.c.l.b16 %v851
    %v4551 = vunpack.c.h.b16 %v851
    %v4552 = vunpack.c.l.b16 %v852
    %v4553 = vunpack.c.h.b16 %v852
    %v4554 = vunpack.c.l.b16 %v853
    %v4555 = vunpack.c.h.b16 %v853
    %v4556 = vunpack.c.l.b16 %v854
    %v4557 = vunpack.c.h.b16 %v854
    %v4558 = vunpack.c.l.b16 %v855
    %v4559 = vunpack.c.h.b16 %v855
    %v4560 = vunpack.c.l.b16 %v856
    %v4561 = vunpack.c.h.b16 %v856
    %v4562 = vunpack.c.l.b16 %v857
    %v4563 = vunpack.c.h.b16 %v857
    %v4564 = vunpack.c.l.b16 %v858
    %v4565 = vunpack.c.h.b16 %v858
    %v4566 = vunpack.c.l.b16 %v859
    %v4567 = vunpack.c.h.b16 %v859
    %v4568 = vunpack.c.l.b16 %v860
    %v4569 = vunpack.c.h.b16 %v860
    %v4570 = vunpack.c.l.b16 %v861
    %v4571 = vunpack.c.h.b16 %v861
    %v4572 = vunpack.c.l.b16 %v862
    %v4573 = vunpack.c.h.b16 %v862
    %v4574 = vunpack.c.l.b16 %v863
    %v4575 = vunpack.c.h.b16 %v863
    %v4576 = vunpack.c.l.b16 %v864
    %v4577 = vunpack.c.h.b16 %v864
    %v4578 = vunpack.c.l.b16 %v865
    %v4579 = vunpack.c.h.b16 %v865
    %v4580 = vunpack.c.l.b16 %v866
    %v4581 = vunpack.c.h.b16 %v866
    %v4582 = vunpack.c.l.b16 %v867
    %v4583 = vunpack.c.h.b16 %v867
    %v4584 = vunpack.c.l.b16 %v868
    %v4585 = vunpack.c.h.b16 %v868
    %v4586 = vunpack.c.l.b16 %v869
    %v4587 = vunpack.c.h.b16 %v869
    %v4588 = vunpack.c.l.b16 %v870
    %v4589 = vunpack.c.h.b16 %v870
    %v4590 = vunpack.c.l.b16 %v871
    %v4591 = vunpack.c.h.b16 %v871
    %v4592 = vunpack.c.l.b16 %v872
    %v4593 = vunpack.c.h.b16 %v872
    %v4594 = vunpack.c.l.b16 %v873
    %v4595 = vunpack.c.h.b16 %v873
    %v4596 = vunpack.c.l.b16 %v874
    %v4597 = vunpack.c.h.b16 %v874
    %v4598 = vunpack.c.l.b16 %v875
    %v4599 = vunpack.c.h.b16 %v875
    %v4600 = vunpack.c.l.b16 %v876
    %v4601 = vunpack.c.h.b16 %v876
    %v4602 = vunpack.c.l.b16 %v877
    %v4603 = vunpack.c.h.b16 %v877
    %v4604 = vunpack.c.l.b16 %v878
    %v4605 = vunpack.c.h.b16 %v878
    %v4606 = vunpack.c.l.b16 %v879
    %v4607 = vunpack.c.h.b16 %v879
    %v4608 = vunpack.c.l.b16 %v880
    %v4609 = vunpack.c.h.b16 %v880
    %v4610 = vunpack.c.l.b16 %v881
    %v4611 = vunpack.c.h.b16 %v881
    %v4612 = vunpack.c.l.b16 %v882
    %v4613 = vunpack.c.h.b16 %v882
    %v4614 = vunpack.c.l.b16 %v883
    %v4615 = vunpack.c.h.b16 %v883
    %v4616 = vunpack.c.l.b16 %v884
    %v4617 = vunpack.c.h.b16 %v884
    %v4618 = vunpack.c.l.b16 %v885
    %v4619 = vunpack.c.h.b16 %v885
    %v4620 = vunpack.c.l.b16 %v886
    %v4621 = vunpack.c.h.b16 %v886
    %v4622 = vunpack.c.l.b16 %v887
    %v4623 = vunpack.c.h.b16 %v887
    %v4624 = vunpack.c.l.b16 %v888
    %v4625 = vunpack.c.h.b16 %v888
    %v4626 = vunpack.c.l.b16 %v889
    %v4627 = vunpack.c.h.b16 %v889
    %v4628 = vunpack.c.l.b16 %v890
    %v4629 = vunpack.c.h.b16 %v890
    %v4630 = vunpack.c.l.b16 %v891
    %v4631 = vunpack.c.h.b16 %v891
    %v4632 = vunpack.c.l.b16 %v892
    %v4633 = vunpack.c.h.b16 %v892
    %v4634 = vunpack.c.l.b16 %v893
    %v4635 = vunpack.c.h.b16 %v893
    %v4636 = vunpack.c.l.b16 %v894
    %v4637 = vunpack.c.h.b16 %v894
    %v4638 = vunpack.c.l.b16 %v895
    %v4639 = vunpack.c.h.b16 %v895
    %v4640 = vunpack.c.l.b16 %v896
    %v4641 = vunpack.c.h.b16 %v896
    %v4642 = vunpack.c.l.b16 %v897
    %v4643 = vunpack.c.h.b16 %v897
    %v4644 = vunpack.c.l.b16 %v898
    %v4645 = vunpack.c.h.b16 %v898
    %v4646 = vunpack.c.l.b16 %v899
    %v4647 = vunpack.c.h.b16 %v899
    %v4648 = vunpack.c.l.b16 %v900
    %v4649 = vunpack.c.h.b16 %v900
    %v4650 = vunpack.c.l.b16 %v901
    %v4651 = vunpack.c.h.b16 %v901
    %v4652 = vunpack.c.l.b16 %v902
    %v4653 = vunpack.c.h.b16 %v902
    %v4654 = vunpack.c.l.b16 %v903
    %v4655 = vunpack.c.h.b16 %v903
    %v4656 = vunpack.c.l.b16 %v904
    %v4657 = vunpack.c.h.b16 %v904
    %v4658 = vunpack.c.l.b16 %v905
    %v4659 = vunpack.c.h.b16 %v905
    %v4660 = vunpack.c.l.b16 %v906
    %v4661 = vunpack.c.h.b16 %v906
    %v4662 = vunpack.c.l.b16 %v907
    %v4663 = vunpack.c.h.b16 %v907
    %v4664 = vunpack.c.l.b16 %v908
    %v4665 = vunpack.c.h.b16 %v908
    %v4666 = vunpack.c.l.b16 %v909
    %v4667 = vunpack.c.h.b16 %v909
    %v4668 = vunpack.c.l.b16 %v910
    %v4669 = vunpack.c.h.b16 %v910
    %v4670 = vunpack.c.l.b16 %v911
    %v4671 = vunpack.c.h.b16 %v911
    %v4672 = vunpack.c.l.b16 %v912
    %v4673 = vunpack.c.h.b16 %v912
    %v4674 = vunpack.c.l.b16 %v913
    %v4675 = vunpack.c.h.b16 %v913
    %v4676 = vunpack.c.l.b16 %v914
    %v4677 = vunpack.c.h.b16 %v914
    %v4678 = vunpack.c.l.b16 %v915
    %v4679 = vunpack.c.h.b16 %v915
    %v4680 = vunpack.c.l.b16 %v916
    %v4681 = vunpack.c.h.b16 %v916
    %v4682 = vunpack.c.l.b16 %v917
    %v4683 = vunpack.c.h.b16 %v917
    %v4684 = vunpack.c.l.b16 %v918
    %v4685 = vunpack.c.h.b16 %v918
    %v4686 = vunpack.c.l.b16 %v919
    %v4687 = vunpack.c.h.b16 %v919
    %v4688 = vunpack.c.l.b16 %v920
    %v4689 = vunpack.c.h.b16 %v920
    %v4690 = vunpack.c.l.b16 %v921
    %v4691 = vunpack.c.h.b16 %v921
    %v4692 = vunpack.c.l.b16 %v922
    %v4693 = vunpack.c.h.b16 %v922
    %v4694 = vunpack.c.l.b16 %v923
    %v4695 = vunpack.c.h.b16 %v923
    %v4696 = vunpack.c.l.b16 %v924
    %v4697 = vunpack.c.h.b16 %v924
    %v4698 = vunpack.c.l.b16 %v925
    %v4699 = vunpack.c.h.b16 %v925
    %v4700 = vunpack.c.l.b16 %v926
    %v4701 = vunpack.c.h.b16 %v926
    %v4702 = vunpack.c.l.b16 %v927
    %v4703 = vunpack.c.h.b16 %v927
    %v4704 = vunpack.c.l.b16 %v928
    %v4705 = vunpack.c.h.b16 %v928
    %v4706 = vunpack.c.l.b16 %v929
    %v4707 = vunpack.c.h.b16 %v929
    %v4708 = vunpack.c.l.b16 %v930
    %v4709 = vunpack.c.h.b16 %v930
    %v4710 = vunpack.c.l.b16 %v931
    %v4711 = vunpack.c.h.b16 %v931
    %v4712 = vunpack.c.l.b16 %v932
    %v4713 = vunpack.c.h.b16 %v932
    %v4714 = vunpack.c.l.b16 %v933
    %v4715 = vunpack.c.h.b16 %v933
    %v4716 = vunpack.c.l.b16 %v934
    %v4717 = vunpack.c.h.b16 %v934
    %v4718 = vunpack.c.l.b16 %v935
    %v4719 = vunpack.c.h.b16 %v935
    %v4720 = vunpack.c.l.b16 %v936
    %v4721 = vunpack.c.h.b16 %v936
    %v4722 = vunpack.c.l.b16 %v937
    %v4723 = vunpack.c.h.b16 %v937
    %v4724 = vunpack.c.l.b16 %v938
    %v4725 = vunpack.c.h.b16 %v938
    %v4726 = vunpack.c.l.b16 %v939
    %v4727 = vunpack.c.h.b16 %v939
    %v4728 = vunpack.c.l.b16 %v940
    %v4729 = vunpack.c.h.b16 %v940
    %v4730 = vunpack.c.l.b16 %v941
    %v4731 = vunpack.c.h.b16 %v941
    %v4732 = vunpack.c.l.b16 %v942
    %v4733 = vunpack.c.h.b16 %v942
    %v4734 = vunpack.c.l.b16 %v943
    %v4735 = vunpack.c.h.b16 %v943
    %v4736 = vunpack.c.l.b16 %v944
    %v4737 = vunpack.c.h.b16 %v944
    %v4738 = vunpack.c.l.b16 %v945
    %v4739 = vunpack.c.h.b16 %v945
    %v4740 = vunpack.c.l.b16 %v946
    %v4741 = vunpack.c.h.b16 %v946
    %v4742 = vunpack.c.l.b16 %v947
    %v4743 = vunpack.c.h.b16 %v947
    %v4744 = vunpack.c.l.b16 %v948
    %v4745 = vunpack.c.h.b16 %v948
    %v4746 = vunpack.c.l.b16 %v949
    %v4747 = vunpack.c.h.b16 %v949
    %v4748 = vunpack.c.l.b16 %v950
    %v4749 = vunpack.c.h.b16 %v950
    %v4750 = vunpack.c.l.b16 %v951
    %v4751 = vunpack.c.h.b16 %v951
    %v4752 = vunpack.c.l.b16 %v952
    %v4753 = vunpack.c.h.b16 %v952
    %v4754 = vunpack.c.l.b16 %v953
    %v4755 = vunpack.c.h.b16 %v953
    %v4756 = vunpack.c.l.b16 %v954
    %v4757 = vunpack.c.h.b16 %v954
    %v4758 = vunpack.c.l.b16 %v955
    %v4759 = vunpack.c.h.b16 %v955
    %v4760 = vunpack.c.l.b16 %v956
    %v4761 = vunpack.c.h.b16 %v956
    %v4762 = vunpack.c.l.b16 %v957
    %v4763 = vunpack.c.h.b16 %v957
    %v4764 = vunpack.c.l.b16 %v958
    %v4765 = vunpack.c.h.b16 %v958
    %v4766 = vunpack.c.l.b16 %v959
    %v4767 = vunpack.c.h.b16 %v959
    %v4768 = vunpack.c.l.b16 %v960
    %v4769 = vunpack.c.h.b16 %v960
    %v4770 = vunpack.c.l.b16 %v961
    %v4771 = vunpack.c.h.b16 %v961
    %v4772 = vunpack.c.l.b16 %v962
    %v4773 = vunpack.c.h.b16 %v962
    %v4774 = vunpack.c.l.b16 %v963
    %v4775 = vunpack.c.h.b16 %v963
    %v4776 = vunpack.c.l.b16 %v964
    %v4777 = vunpack.c.h.b16 %v964
    %v4778 = vunpack.c.l.b16 %v965
    %v4779 = vunpack.c.h.b16 %v965
    %v4780 = vunpack.c.l.b16 %v966
    %v4781 = vunpack.c.h.b16 %v966
    %v4782 = vunpack.c.l.b16 %v967
    %v4783 = vunpack.c.h.b16 %v967
    %v4784 = vunpack.c.l.b16 %v968
    %v4785 = vunpack.c.h.b16 %v968
    %v4786 = vunpack.c.l.b16 %v969
    %v4787 = vunpack.c.h.b16 %v969
    %v4788 = vunpack.c.l.b16 %v970
    %v4789 = vunpack.c.h.b16 %v970
    %v4790 = vunpack.c.l.b16 %v971
    %v4791 = vunpack.c.h.b16 %v971
    %v4792 = vunpack.c.l.b16 %v972
    %v4793 = vunpack.c.h.b16 %v972
    %v4794 = vunpack.c.l.b16 %v973
    %v4795 = vunpack.c.h.b16 %v973
    %v4796 = vunpack.c.l.b16 %v974
    %v4797 = vunpack.c.h.b16 %v974
    %v4798 = vunpack.c.l.b16 %v975
    %v4799 = vunpack.c.h.b16 %v975
    %v4800 = vunpack.c.l.b16 %v976
    %v4801 = vunpack.c.h.b16 %v976
    %v4802 = vunpack.c.l.b16 %v977
    %v4803 = vunpack.c.h.b16 %v977
    %v4804 = vunpack.c.l.b16 %v978
    %v4805 = vunpack.c.h.b16 %v978
    %v4806 = vunpack.c.l.b16 %v979
    %v4807 = vunpack.c.h.b16 %v979
    %v4808 = vunpack.c.l.b16 %v980
    %v4809 = vunpack.c.h.b16 %v980
    %v4810 = vunpack.c.l.b16 %v981
    %v4811 = vunpack.c.h.b16 %v981
    %v4812 = vunpack.c.l.b16 %v982
    %v4813 = vunpack.c.h.b16 %v982
    %v4814 = vunpack.c.l.b16 %v983
    %v4815 = vunpack.c.h.b16 %v983
    %v4816 = vunpack.c.l.b16 %v984
    %v4817 = vunpack.c.h.b16 %v984
    %v4818 = vunpack.c.l.b16 %v985
    %v4819 = vunpack.c.h.b16 %v985
    %v4820 = vunpack.c.l.b16 %v986
    %v4821 = vunpack.c.h.b16 %v986
    %v4822 = vunpack.c.l.b16 %v987
    %v4823 = vunpack.c.h.b16 %v987
    %v4824 = vunpack.c.l.b16 %v988
    %v4825 = vunpack.c.h.b16 %v988
    %v4826 = vunpack.c.l.b16 %v989
    %v4827 = vunpack.c.h.b16 %v989
    %v4828 = vunpack.c.l.b16 %v990
    %v4829 = vunpack.c.h.b16 %v990
    %v4830 = vunpack.c.l.b16 %v991
    %v4831 = vunpack.c.h.b16 %v991
    %v4832 = vunpack.c.l.b16 %v992
    %v4833 = vunpack.c.h.b16 %v992
    %v4834 = vunpack.c.l.b16 %v993
    %v4835 = vunpack.c.h.b16 %v993
    %v4836 = vunpack.c.l.b16 %v994
    %v4837 = vunpack.c.h.b16 %v994
    %v4838 = vunpack.c.l.b16 %v995
    %v4839 = vunpack.c.h.b16 %v995
    %v4840 = vunpack.c.l.b16 %v996
    %v4841 = vunpack.c.h.b16 %v996
    %v4842 = vunpack.c.l.b16 %v997
    %v4843 = vunpack.c.h.b16 %v997
    %v4844 = vunpack.c.l.b16 %v998
    %v4845 = vunpack.c.h.b16 %v998
    %v4846 = vunpack.c.l.b16 %v999
    %v4847 = vunpack.c.h.b16 %v999
    %v4848 = vunpack.c.l.b16 %v1000
    %v4849 = vunpack.c.h.b16 %v1000
    %v4850 = vunpack.c.l.b16 %v1001
    %v4851 = vunpack.c.h.b16 %v1001
    %v4852 = vunpack.c.l.b16 %v1002
    %v4853 = vunpack.c.h.b16 %v1002
    %v4854 = vunpack.c.l.b16 %v1003
    %v4855 = vunpack.c.h.b16 %v1003
    %v4856 = vunpack.c.l.b16 %v1004
    %v4857 = vunpack.c.h.b16 %v1004
    %v4858 = vunpack.c.l.b16 %v1005
    %v4859 = vunpack.c.h.b16 %v1005
    %v4860 = vunpack.c.l.b16 %v1006
    %v4861 = vunpack.c.h.b16 %v1006
    %v4862 = vunpack.c.l.b16 %v1007
    %v4863 = vunpack.c.h.b16 %v1007
    %v4864 = vunpack.c.l.b16 %v1008
    %v4865 = vunpack.c.h.b16 %v1008
    %v4866 = vunpack.c.l.b16 %v1009
    %v4867 = vunpack.c.h.b16 %v1009
    %v4868 = vunpack.c.l.b16 %v1010
    %v4869 = vunpack.c.h.b16 %v1010
    %v4870 = vunpack.c.l.b16 %v1011
    %v4871 = vunpack.c.h.b16 %v1011
    %v4872 = vunpack.c.l.b16 %v1012
    %v4873 = vunpack.c.h.b16 %v1012
    %v4874 = vunpack.c.l.b16 %v1013
    %v4875 = vunpack.c.h.b16 %v1013
    %v4876 = vunpack.c.l.b16 %v1014
    %v4877 = vunpack.c.h.b16 %v1014
    %v4878 = vunpack.c.l.b16 %v1015
    %v4879 = vunpack.c.h.b16 %v1015
    %v4880 = vunpack.c.l.b16 %v1016
    %v4881 = vunpack.c.h.b16 %v1016
    %v4882 = vunpack.c.l.b16 %v1017
    %v4883 = vunpack.c.h.b16 %v1017
    %v4884 = vunpack.c.l.b16 %v1018
    %v4885 = vunpack.c.h.b16 %v1018
    %v4886 = vunpack.c.l.b16 %v1019
    %v4887 = vunpack.c.h.b16 %v1019
    %v4888 = vunpack.c.l.b16 %v1020
    %v4889 = vunpack.c.h.b16 %v1020
    %v4890 = vunpack.c.l.b16 %v1021
    %v4891 = vunpack.c.h.b16 %v1021
    %v4892 = vunpack.c.l.b16 %v1022
    %v4893 = vunpack.c.h.b16 %v1022
    %v4894 = vunpack.c.l.b16 %v1023
    %v4895 = vunpack.c.h.b16 %v1023
    %v4896 = vunpack.c.l.b16 %v1024
    %v4897 = vunpack.c.h.b16 %v1024
    %v4898 = vunpack.c.l.b16 %v1025
    %v4899 = vunpack.c.h.b16 %v1025
    %v4900 = vunpack.c.l.b16 %v1026
    %v4901 = vunpack.c.h.b16 %v1026
    %v4902 = vunpack.c.l.b16 %v1027
    %v4903 = vunpack.c.h.b16 %v1027
    %v4904 = vunpack.c.l.b16 %v1028
    %v4905 = vunpack.c.h.b16 %v1028
    %v4906 = vunpack.c.l.b16 %v1029
    %v4907 = vunpack.c.h.b16 %v1029
    %v4908 = vunpack.c.l.b16 %v1030
    %v4909 = vunpack.c.h.b16 %v1030
    %v4910 = vunpack.c.l.b16 %v1031
    %v4911 = vunpack.c.h.b16 %v1031
    %v4912 = vunpack.c.l.b16 %v1032
    %v4913 = vunpack.c.h.b16 %v1032
    %v4914 = vunpack.c.l.b16 %v1033
    %v4915 = vunpack.c.h.b16 %v1033
    %v4916 = vunpack.c.l.b16 %v1034
    %v4917 = vunpack.c.h.b16 %v1034
    %v4918 = vunpack.c.l.b16 %v1035
    %v4919 = vunpack.c.h.b16 %v1035
    %v4920 = vunpack.c.l.b16 %v1036
    %v4921 = vunpack.c.h.b16 %v1036
    %v4922 = vunpack.c.l.b16 %v1037
    %v4923 = vunpack.c.h.b16 %v1037
    %v4924 = vunpack.c.l.b16 %v1038
    %v4925 = vunpack.c.h.b16 %v1038
    %v4926 = vunpack.c.l.b16 %v1039
    %v4927 = vunpack.c.h.b16 %v1039
    %v4928 = vunpack.c.l.b16 %v1040
    %v4929 = vunpack.c.h.b16 %v1040
    %v4930 = vunpack.c.l.b16 %v1041
    %v4931 = vunpack.c.h.b16 %v1041
    %v4932 = vunpack.c.l.b16 %v1042
    %v4933 = vunpack.c.h.b16 %v1042
    %v4934 = vunpack.c.l.b16 %v1043
    %v4935 = vunpack.c.h.b16 %v1043
    %v4936 = vunpack.c.l.b16 %v1044
    %v4937 = vunpack.c.h.b16 %v1044
    %v4938 = vunpack.c.l.b16 %v1045
    %v4939 = vunpack.c.h.b16 %v1045
    %v4940 = vunpack.c.l.b16 %v1046
    %v4941 = vunpack.c.h.b16 %v1046
    %v4942 = vunpack.c.l.b16 %v1047
    %v4943 = vunpack.c.h.b16 %v1047
    %v4944 = vunpack.c.l.b16 %v1048
    %v4945 = vunpack.c.h.b16 %v1048
    %v4946 = vunpack.c.l.b16 %v1049
    %v4947 = vunpack.c.h.b16 %v1049
    %v4948 = vunpack.c.l.b16 %v1050
    %v4949 = vunpack.c.h.b16 %v1050
    %v4950 = vunpack.c.l.b16 %v1051
    %v4951 = vunpack.c.h.b16 %v1051
    %v4952 = vunpack.c.l.b16 %v1052
    %v4953 = vunpack.c.h.b16 %v1052
    %v4954 = vunpack.c.l.b16 %v1053
    %v4955 = vunpack.c.h.b16 %v1053
    %v4956 = vunpack.c.l.b16 %v1054
    %v4957 = vunpack.c.h.b16 %v1054
    %v4958 = vunpack.c.l.b16 %v1055
    %v4959 = vunpack.c.h.b16 %v1055
    %v4960 = vunpack.c.l.b16 %v1056
    %v4961 = vunpack.c.h.b16 %v1056
    %v4962 = vunpack.c.l.b16 %v1057
    %v4963 = vunpack.c.h.b16 %v1057
    %v4964 = vunpack.c.l.b16 %v1058
    %v4965 = vunpack.c.h.b16 %v1058
    %v4966 = vunpack.c.l.b16 %v1059
    %v4967 = vunpack.c.h.b16 %v1059
    %v4968 = vunpack.c.l.b16 %v1060
    %v4969 = vunpack.c.h.b16 %v1060
    %v4970 = vunpack.c.l.b16 %v1061
    %v4971 = vunpack.c.h.b16 %v1061
    %v4972 = vunpack.c.l.b16 %v1062
    %v4973 = vunpack.c.h.b16 %v1062
    %v4974 = vunpack.c.l.b16 %v1063
    %v4975 = vunpack.c.h.b16 %v1063
    %v4976 = vunpack.c.l.b16 %v1064
    %v4977 = vunpack.c.h.b16 %v1064
    %v4978 = vunpack.c.l.b16 %v1065
    %v4979 = vunpack.c.h.b16 %v1065
    %v4980 = vunpack.c.l.b16 %v1066
    %v4981 = vunpack.c.h.b16 %v1066
    %v4982 = vunpack.c.l.b16 %v1067
    %v4983 = vunpack.c.h.b16 %v1067
    %v4984 = vunpack.c.l.b16 %v1068
    %v4985 = vunpack.c.h.b16 %v1068
    %v4986 = vunpack.c.l.b16 %v1069
    %v4987 = vunpack.c.h.b16 %v1069
    %v4988 = vunpack.c.l.b16 %v1070
    %v4989 = vunpack.c.h.b16 %v1070
    %v4990 = vunpack.c.l.b16 %v1071
    %v4991 = vunpack.c.h.b16 %v1071
    %v4992 = vunpack.c.l.b16 %v1072
    %v4993 = vunpack.c.h.b16 %v1072
    %v4994 = vunpack.c.l.b16 %v1073
    %v4995 = vunpack.c.h.b16 %v1073
    %v4996 = vunpack.c.l.b16 %v1074
    %v4997 = vunpack.c.h.b16 %v1074
    %v4998 = vunpack.c.l.b16 %v1075
    %v4999 = vunpack.c.h.b16 %v1075
    %v5000 = vunpack.c.l.b16 %v1076
    %v5001 = vunpack.c.h.b16 %v1076
    %v5002 = vunpack.c.l.b16 %v1077
    %v5003 = vunpack.c.h.b16 %v1077
    %v5004 = vunpack.c.l.b16 %v1078
    %v5005 = vunpack.c.h.b16 %v1078
    %v5006 = vunpack.c.l.b16 %v1079
    %v5007 = vunpack.c.h.b16 %v1079
    %v5008 = vunpack.c.l.b16 %v1080
    %v5009 = vunpack.c.h.b16 %v1080
    %v5010 = vunpack.c.l.b16 %v1081
    %v5011 = vunpack.c.h.b16 %v1081
    %v5012 = vunpack.c.l.b16 %v1082
    %v5013 = vunpack.c.h.b16 %v1082
    %v5014 = vunpack.c.l.b16 %v1083
    %v5015 = vunpack.c.h.b16 %v1083
    %v5016 = vunpack.c.l.b16 %v1084
    %v5017 = vunpack.c.h.b16 %v1084
    %v5018 = vunpack.c.l.b16 %v1085
    %v5019 = vunpack.c.h.b16 %v1085
    %v5020 = vunpack.c.l.b16 %v1086
    %v5021 = vunpack.c.h.b16 %v1086
    %v5022 = vunpack.c.l.b16 %v1087
    %v5023 = vunpack.c.h.b16 %v1087
    %v5024 = vunpack.c.l.b16 %v1088
    %v5025 = vunpack.c.h.b16 %v1088
    %v5026 = vunpack.c.l.b16 %v1089
    %v5027 = vunpack.c.h.b16 %v1089
    %v5028 = vunpack.c.l.b16 %v1090
    %v5029 = vunpack.c.h.b16 %v1090
    %v5030 = vunpack.c.l.b16 %v1091
    %v5031 = vunpack.c.h.b16 %v1091
    %v5032 = vunpack.c.l.b16 %v1092
    %v5033 = vunpack.c.h.b16 %v1092
    %v5034 = vunpack.c.l.b16 %v1093
    %v5035 = vunpack.c.h.b16 %v1093
    %v5036 = vunpack.c.l.b16 %v1094
    %v5037 = vunpack.c.h.b16 %v1094
    %v5038 = vunpack.c.l.b16 %v1095
    %v5039 = vunpack.c.h.b16 %v1095
    %v5040 = vunpack.c.l.b16 %v1096
    %v5041 = vunpack.c.h.b16 %v1096
    %v5042 = vunpack.c.l.b16 %v1097
    %v5043 = vunpack.c.h.b16 %v1097
    %v5044 = vunpack.c.l.b16 %v1098
    %v5045 = vunpack.c.h.b16 %v1098
    %v5046 = vunpack.c.l.b16 %v1099
    %v5047 = vunpack.c.h.b16 %v1099
    %v5048 = vunpack.c.l.b16 %v1100
    %v5049 = vunpack.c.h.b16 %v1100
    %v5050 = vunpack.c.l.b16 %v1101
    %v5051 = vunpack.c.h.b16 %v1101
    %v5052 = vunpack.c.l.b16 %v1102
    %v5053 = vunpack.c.h.b16 %v1102
    %v5054 = vunpack.c.l.b16 %v1103
    %v5055 = vunpack.c.h.b16 %v1103
    %v5056 = vunpack.c.l.b16 %v1104
    %v5057 = vunpack.c.h.b16 %v1104
    %v5058 = vunpack.c.l.b16 %v1105
    %v5059 = vunpack.c.h.b16 %v1105
    %v5060 = vunpack.c.l.b16 %v1106
    %v5061 = vunpack.c.h.b16 %v1106
    %v5062 = vunpack.c.l.b16 %v1107
    %v5063 = vunpack.c.h.b16 %v1107
    %v5064 = vunpack.c.l.b16 %v1108
    %v5065 = vunpack.c.h.b16 %v1108
    %v5066 = vunpack.c.l.b16 %v1109
    %v5067 = vunpack.c.h.b16 %v1109
    %v5068 = vunpack.c.l.b16 %v1110
    %v5069 = vunpack.c.h.b16 %v1110
    %v5070 = vunpack.c.l.b16 %v1111
    %v5071 = vunpack.c.h.b16 %v1111
    %v5072 = vunpack.c.l.b16 %v1112
    %v5073 = vunpack.c.h.b16 %v1112
    %v5074 = vunpack.c.l.b16 %v1113
    %v5075 = vunpack.c.h.b16 %v1113
    %v5076 = vunpack.c.l.b16 %v1114
    %v5077 = vunpack.c.h.b16 %v1114
    %v5078 = vunpack.c.l.b16 %v1115
    %v5079 = vunpack.c.h.b16 %v1115
    %v5080 = vunpack.c.l.b16 %v1116
    %v5081 = vunpack.c.h.b16 %v1116
    %v5082 = vunpack.c.l.b16 %v1117
    %v5083 = vunpack.c.h.b16 %v1117
    %v5084 = vunpack.c.l.b16 %v1118
    %v5085 = vunpack.c.h.b16 %v1118
    %v5086 = vunpack.c.l.b16 %v1119
    %v5087 = vunpack.c.h.b16 %v1119
    %v5088 = vunpack.c.l.b16 %v1120
    %v5089 = vunpack.c.h.b16 %v1120
    %v5090 = vunpack.c.l.b16 %v1121
    %v5091 = vunpack.c.h.b16 %v1121
    %v5092 = vunpack.c.l.b16 %v1122
    %v5093 = vunpack.c.h.b16 %v1122
    %v5094 = vunpack.c.l.b16 %v1123
    %v5095 = vunpack.c.h.b16 %v1123
    %v5096 = vunpack.c.l.b16 %v1124
    %v5097 = vunpack.c.h.b16 %v1124
    %v5098 = vunpack.c.l.b16 %v1125
    %v5099 = vunpack.c.h.b16 %v1125
    %v5100 = vunpack.c.l.b16 %v1126
    %v5101 = vunpack.c.h.b16 %v1126
    %v5102 = vunpack.c.l.b16 %v1127
    %v5103 = vunpack.c.h.b16 %v1127
    %v5104 = vunpack.c.l.b16 %v1128
    %v5105 = vunpack.c.h.b16 %v1128
    %v5106 = vunpack.c.l.b16 %v1129
    %v5107 = vunpack.c.h.b16 %v1129
    %v5108 = vunpack.c.l.b16 %v1130
    %v5109 = vunpack.c.h.b16 %v1130
    %v5110 = vunpack.c.l.b16 %v1131
    %v5111 = vunpack.c.h.b16 %v1131
    %v5112 = vunpack.c.l.b16 %v1132
    %v5113 = vunpack.c.h.b16 %v1132
    %v5114 = vunpack.c.l.b16 %v1133
    %v5115 = vunpack.c.h.b16 %v1133
    %v5116 = vunpack.c.l.b16 %v1134
    %v5117 = vunpack.c.h.b16 %v1134
    %v5118 = vunpack.c.l.b16 %v1135
    %v5119 = vunpack.c.h.b16 %v1135
    %v5120 = vunpack.c.l.b16 %v1136
    %v5121 = vunpack.c.h.b16 %v1136
    %v5122 = vunpack.c.l.b16 %v1137
    %v5123 = vunpack.c.h.b16 %v1137
    %v5124 = vunpack.c.l.b16 %v1138
    %v5125 = vunpack.c.h.b16 %v1138
    %v5126 = vunpack.c.l.b16 %v1139
    %v5127 = vunpack.c.h.b16 %v1139
    %v5128 = vunpack.c.l.b16 %v1140
    %v5129 = vunpack.c.h.b16 %v1140
    %v5130 = vunpack.c.l.b16 %v1141
    %v5131 = vunpack.c.h.b16 %v1141
    %v5132 = vunpack.c.l.b16 %v1142
    %v5133 = vunpack.c.h.b16 %v1142
    %v5134 = vunpack.c.l.b16 %v1143
    %v5135 = vunpack.c.h.b16 %v1143
    %v5136 = vunpack.c.l.b16 %v1144
    %v5137 = vunpack.c.h.b16 %v1144
    %v5138 = vunpack.c.l.b16 %v1145
    %v5139 = vunpack.c.h.b16 %v1145
    %v5140 = vunpack.c.l.b16 %v1146
    %v5141 = vunpack.c.h.b16 %v1146
    %v5142 = vunpack.c.l.b16 %v1147
    %v5143 = vunpack.c.h.b16 %v1147
    %v5144 = vunpack.c.l.b16 %v1148
    %v5145 = vunpack.c.h.b16 %v1148
    %v5146 = vunpack.c.l.b16 %v1149
    %v5147 = vunpack.c.h.b16 %v1149
    %v5148 = vunpack.c.l.b16 %v1150
    %v5149 = vunpack.c.h.b16 %v1150
    %v5150 = vunpack.c.l.b16 %v1151
    %v5151 = vunpack.c.h.b16 %v1151
    %v5152 = vunpack.c.l.b16 %v1152
    %v5153 = vunpack.c.h.b16 %v1152
    %v5154 = vunpack.c.l.b16 %v1153
    %v5155 = vunpack.c.h.b16 %v1153
    %v5156 = vunpack.c.l.b16 %v1154
    %v5157 = vunpack.c.h.b16 %v1154
    %v5158 = vunpack.c.l.b16 %v1155
    %v5159 = vunpack.c.h.b16 %v1155
    %v5160 = vunpack.c.l.b16 %v1156
    %v5161 = vunpack.c.h.b16 %v1156
    %v5162 = vunpack.c.l.b16 %v1157
    %v5163 = vunpack.c.h.b16 %v1157
    %v5164 = vunpack.c.l.b16 %v1158
    %v5165 = vunpack.c.h.b16 %v1158
    %v5166 = vunpack.c.l.b16 %v1159
    %v5167 = vunpack.c.h.b16 %v1159
    %v5168 = vunpack.c.l.b16 %v1160
    %v5169 = vunpack.c.h.b16 %v1160
    %v5170 = vunpack.c.l.b16 %v1161
    %v5171 = vunpack.c.h.b16 %v1161
    %v5172 = vunpack.c.l.b16 %v1162
    %v5173 = vunpack.c.h.b16 %v1162
    %v5174 = vunpack.c.l.b16 %v1163
    %v5175 = vunpack.c.h.b16 %v1163
    %v5176 = vunpack.c.l.b16 %v1164
    %v5177 = vunpack.c.h.b16 %v1164
    %v5178 = vunpack.c.l.b16 %v1165
    %v5179 = vunpack.c.h.b16 %v1165
    %v5180 = vunpack.c.l.b16 %v1166
    %v5181 = vunpack.c.h.b16 %v1166
    %v5182 = vunpack.c.l.b16 %v1167
    %v5183 = vunpack.c.h.b16 %v1167
    %v5184 = vunpack.c.l.b16 %v1168
    %v5185 = vunpack.c.h.b16 %v1168
    %v5186 = vunpack.c.l.b16 %v1169
    %v5187 = vunpack.c.h.b16 %v1169
    %v5188 = vunpack.c.l.b16 %v1170
    %v5189 = vunpack.c.h.b16 %v1170
    %v5190 = vunpack.c.l.b16 %v1171
    %v5191 = vunpack.c.h.b16 %v1171
    %v5192 = vunpack.c.l.b16 %v1172
    %v5193 = vunpack.c.h.b16 %v1172
    %v5194 = vunpack.c.l.b16 %v1173
    %v5195 = vunpack.c.h.b16 %v1173
    %v5196 = vunpack.c.l.b16 %v1174
    %v5197 = vunpack.c.h.b16 %v1174
    %v5198 = vunpack.c.l.b16 %v1175
    %v5199 = vunpack.c.h.b16 %v1175
    %v5200 = vunpack.c.l.b16 %v1176
    %v5201 = vunpack.c.h.b16 %v1176
    %v5202 = vunpack.c.l.b16 %v1177
    %v5203 = vunpack.c.h.b16 %v1177
    %v5204 = vunpack.c.l.b16 %v1178
    %v5205 = vunpack.c.h.b16 %v1178
    %v5206 = vunpack.c.l.b16 %v1179
    %v5207 = vunpack.c.h.b16 %v1179
    %v5208 = vunpack.c.l.b16 %v1180
    %v5209 = vunpack.c.h.b16 %v1180
    %v5210 = vunpack.c.l.b16 %v1181
    %v5211 = vunpack.c.h.b16 %v1181
    %v5212 = vunpack.c.l.b16 %v1182
    %v5213 = vunpack.c.h.b16 %v1182
    %v5214 = vunpack.c.l.b16 %v1183
    %v5215 = vunpack.c.h.b16 %v1183
    %v5216 = vunpack.c.l.b16 %v1184
    %v5217 = vunpack.c.h.b16 %v1184
    %v5218 = vunpack.c.l.b16 %v1185
    %v5219 = vunpack.c.h.b16 %v1185
    %v5220 = vunpack.c.l.b16 %v1186
    %v5221 = vunpack.c.h.b16 %v1186
    %v5222 = vunpack.c.l.b16 %v1187
    %v5223 = vunpack.c.h.b16 %v1187
    %v5224 = vunpack.c.l.b16 %v1188
    %v5225 = vunpack.c.h.b16 %v1188
    %v5226 = vunpack.c.l.b16 %v1189
    %v5227 = vunpack.c.h.b16 %v1189
    %v5228 = vunpack.c.l.b16 %v1190
    %v5229 = vunpack.c.h.b16 %v1190
    %v5230 = vunpack.c.l.b16 %v1191
    %v5231 = vunpack.c.h.b16 %v1191
    %v5232 = vunpack.c.l.b16 %v1192
    %v5233 = vunpack.c.h.b16 %v1192
    %v5234 = vunpack.c.l.b16 %v1193
    %v5235 = vunpack.c.h.b16 %v1193
    %v5236 = vunpack.c.l.b16 %v1194
    %v5237 = vunpack.c.h.b16 %v1194
    %v5238 = vunpack.c.l.b16 %v1195
    %v5239 = vunpack.c.h.b16 %v1195
    %v5240 = vunpack.c.l.b16 %v1196
    %v5241 = vunpack.c.h.b16 %v1196
    %v5242 = vunpack.c.l.b16 %v1197
    %v5243 = vunpack.c.h.b16 %v1197
    %v5244 = vunpack.c.l.b16 %v1198
    %v5245 = vunpack.c.h.b16 %v1198
    %v5246 = vunpack.c.l.b16 %v1199
    %v5247 = vunpack.c.h.b16 %v1199
    %v5248 = vunpack.c.l.b16 %v1200
    %v5249 = vunpack.c.h.b16 %v1200
    %v5250 = vunpack.c.l.b16 %v1201
    %v5251 = vunpack.c.h.b16 %v1201
    %v5252 = vunpack.c.l.b16 %v1202
    %v5253 = vunpack.c.h.b16 %v1202
    %v5254 = vunpack.c.l.b16 %v1203
    %v5255 = vunpack.c.h.b16 %v1203
    %v5256 = vunpack.c.l.b16 %v1204
    %v5257 = vunpack.c.h.b16 %v1204
    %v5258 = vunpack.c.l.b16 %v1205
    %v5259 = vunpack.c.h.b16 %v1205
    %v5260 = vunpack.c.l.b16 %v1206
    %v5261 = vunpack.c.h.b16 %v1206
    %v5262 = vunpack.c.l.b16 %v1207
    %v5263 = vunpack.c.h.b16 %v1207
    %v5264 = vunpack.c.l.b16 %v1208
    %v5265 = vunpack.c.h.b16 %v1208
    %v5266 = vunpack.c.l.b16 %v1209
    %v5267 = vunpack.c.h.b16 %v1209
    %v5268 = vunpack.c.l.b16 %v1210
    %v5269 = vunpack.c.h.b16 %v1210
    %v5270 = vunpack.c.l.b16 %v1211
    %v5271 = vunpack.c.h.b16 %v1211
    %v5272 = vunpack.c.l.b16 %v1212
    %v5273 = vunpack.c.h.b16 %v1212
    %v5274 = vunpack.c.l.b16 %v1213
    %v5275 = vunpack.c.h.b16 %v1213
    %v5276 = vunpack.c.l.b16 %v1214
    %v5277 = vunpack.c.h.b16 %v1214
    %v5278 = vunpack.c.l.b16 %v1215
    %v5279 = vunpack.c.h.b16 %v1215
    %v5280 = vunpack.c.l.b16 %v1216
    %v5281 = vunpack.c.h.b16 %v1216
    %v5282 = vunpack.c.l.b16 %v1217
    %v5283 = vunpack.c.h.b16 %v1217
    %v5284 = vunpack.c.l.b16 %v1218
    %v5285 = vunpack.c.h.b16 %v1218
    %v5286 = vunpack.c.l.b16 %v1219
    %v5287 = vunpack.c.h.b16 %v1219
    %v5288 = vunpack.c.l.b16 %v1220
    %v5289 = vunpack.c.h.b16 %v1220
    %v5290 = vunpack.c.l.b16 %v1221
    %v5291 = vunpack.c.h.b16 %v1221
    %v5292 = vunpack.c.l.b16 %v1222
    %v5293 = vunpack.c.h.b16 %v1222
    %v5294 = vunpack.c.l.b16 %v1223
    %v5295 = vunpack.c.h.b16 %v1223
    %v5296 = vunpack.c.l.b16 %v1224
    %v5297 = vunpack.c.h.b16 %v1224
    %v5298 = vunpack.c.l.b16 %v1225
    %v5299 = vunpack.c.h.b16 %v1225
    %v5300 = vunpack.c.l.b16 %v1226
    %v5301 = vunpack.c.h.b16 %v1226
    %v5302 = vunpack.c.l.b16 %v1227
    %v5303 = vunpack.c.h.b16 %v1227
    %v5304 = vunpack.c.l.b16 %v1228
    %v5305 = vunpack.c.h.b16 %v1228
    %v5306 = vunpack.c.l.b16 %v1229
    %v5307 = vunpack.c.h.b16 %v1229
    %v5308 = vunpack.c.l.b16 %v1230
    %v5309 = vunpack.c.h.b16 %v1230
    %v5310 = vunpack.c.l.b16 %v1231
    %v5311 = vunpack.c.h.b16 %v1231
    %v5312 = vunpack.c.l.b16 %v1232
    %v5313 = vunpack.c.h.b16 %v1232
    %v5314 = vunpack.c.l.b16 %v1233
    %v5315 = vunpack.c.h.b16 %v1233
    %v5316 = vunpack.c.l.b16 %v1234
    %v5317 = vunpack.c.h.b16 %v1234
    %v5318 = vunpack.c.l.b16 %v1235
    %v5319 = vunpack.c.h.b16 %v1235
    %v5320 = vunpack.c.l.b16 %v1236
    %v5321 = vunpack.c.h.b16 %v1236
    %v5322 = vunpack.c.l.b16 %v1237
    %v5323 = vunpack.c.h.b16 %v1237
    %v5324 = vunpack.c.l.b16 %v1238
    %v5325 = vunpack.c.h.b16 %v1238
    %v5326 = vunpack.c.l.b16 %v1239
    %v5327 = vunpack.c.h.b16 %v1239
    %v5328 = vunpack.c.l.b16 %v1240
    %v5329 = vunpack.c.h.b16 %v1240
    %v5330 = vunpack.c.l.b16 %v1241
    %v5331 = vunpack.c.h.b16 %v1241
    %v5332 = vunpack.c.l.b16 %v1242
    %v5333 = vunpack.c.h.b16 %v1242
    %v5334 = vunpack.c.l.b16 %v1243
    %v5335 = vunpack.c.h.b16 %v1243
    %v5336 = vunpack.c.l.b16 %v1244
    %v5337 = vunpack.c.h.b16 %v1244
    %v5338 = vunpack.c.l.b16 %v1245
    %v5339 = vunpack.c.h.b16 %v1245
    %v5340 = vunpack.c.l.b16 %v1246
    %v5341 = vunpack.c.h.b16 %v1246
    %v5342 = vunpack.c.l.b16 %v1247
    %v5343 = vunpack.c.h.b16 %v1247
    %v5344 = vunpack.c.l.b16 %v1248
    %v5345 = vunpack.c.h.b16 %v1248
    %v5346 = vunpack.c.l.b16 %v1249
    %v5347 = vunpack.c.h.b16 %v1249
    %v5348 = vunpack.c.l.b16 %v1250
    %v5349 = vunpack.c.h.b16 %v1250
    %v5350 = vunpack.c.l.b16 %v1251
    %v5351 = vunpack.c.h.b16 %v1251
    %v5352 = vunpack.c.l.b16 %v1252
    %v5353 = vunpack.c.h.b16 %v1252
    %v5354 = vunpack.c.l.b16 %v1253
    %v5355 = vunpack.c.h.b16 %v1253
    %v5356 = vunpack.c.l.b16 %v1254
    %v5357 = vunpack.c.h.b16 %v1254
    %v5358 = vunpack.c.l.b16 %v1255
    %v5359 = vunpack.c.h.b16 %v1255
    %v5360 = vunpack.c.l.b16 %v1256
    %v5361 = vunpack.c.h.b16 %v1256
    %v5362 = vunpack.c.l.b16 %v1257
    %v5363 = vunpack.c.h.b16 %v1257
    %v5364 = vunpack.c.l.b16 %v1258
    %v5365 = vunpack.c.h.b16 %v1258
    %v5366 = vunpack.c.l.b16 %v1259
    %v5367 = vunpack.c.h.b16 %v1259
    %v5368 = vunpack.c.l.b16 %v1260
    %v5369 = vunpack.c.h.b16 %v1260
    %v5370 = vunpack.c.l.b16 %v1261
    %v5371 = vunpack.c.h.b16 %v1261
    %v5372 = vunpack.c.l.b16 %v1262
    %v5373 = vunpack.c.h.b16 %v1262
    %v5374 = vunpack.c.l.b16 %v1263
    %v5375 = vunpack.c.h.b16 %v1263
    %v5376 = vunpack.c.l.b16 %v1264
    %v5377 = vunpack.c.h.b16 %v1264
    %v5378 = vunpack.c.l.b16 %v1265
    %v5379 = vunpack.c.h.b16 %v1265
    %v5380 = vunpack.c.l.b16 %v1266
    %v5381 = vunpack.c.h.b16 %v1266
    %v5382 = vunpack.c.l.b16 %v1267
    %v5383 = vunpack.c.h.b16 %v1267
    %v5384 = vunpack.c.l.b16 %v1268
    %v5385 = vunpack.c.h.b16 %v1268
    %v5386 = vunpack.c.l.b16 %v1269
    %v5387 = vunpack.c.h.b16 %v1269
    %v5388 = vunpack.c.l.b16 %v1270
    %v5389 = vunpack.c.h.b16 %v1270
    %v5390 = vunpack.c.l.b16 %v1271
    %v5391 = vunpack.c.h.b16 %v1271
    %v5392 = vunpack.c.l.b16 %v1272
    %v5393 = vunpack.c.h.b16 %v1272
    %v5394 = vunpack.c.l.b16 %v1273
    %v5395 = vunpack.c.h.b16 %v1273
    %v5396 = vunpack.c.l.b16 %v1274
    %v5397 = vunpack.c.h.b16 %v1274
    %v5398 = vunpack.c.l.b16 %v1275
    %v5399 = vunpack.c.h.b16 %v1275
    %v5400 = vunpack.c.l.b16 %v1276
    %v5401 = vunpack.c.h.b16 %v1276
    %v5402 = vunpack.c.l.b16 %v1277
    %v5403 = vunpack.c.h.b16 %v1277
    %v5404 = vunpack.c.l.b16 %v1278
    %v5405 = vunpack.c.h.b16 %v1278
    %v5406 = vunpack.c.l.b16 %v1279
    %v5407 = vunpack.c.h.b16 %v1279
    %v5408 = vunpack.c.l.b16 %v1280
    %v5409 = vunpack.c.h.b16 %v1280
    %v5410 = vunpack.c.l.b16 %v1281
    %v5411 = vunpack.c.h.b16 %v1281
    %v5412 = vunpack.c.l.b16 %v1282
    %v5413 = vunpack.c.h.b16 %v1282
    %v5414 = vunpack.c.l.b16 %v1283
    %v5415 = vunpack.c.h.b16 %v1283
    %v5416 = vunpack.c.l.b16 %v1284
    %v5417 = vunpack.c.h.b16 %v1284
    %v5418 = vunpack.c.l.b16 %v1285
    %v5419 = vunpack.c.h.b16 %v1285
    %v5420 = vunpack.c.l.b16 %v1286
    %v5421 = vunpack.c.h.b16 %v1286
    %v5422 = vunpack.c.l.b16 %v1287
    %v5423 = vunpack.c.h.b16 %v1287
    %v5424 = vunpack.c.l.b16 %v1288
    %v5425 = vunpack.c.h.b16 %v1288
    %v5426 = vunpack.c.l.b16 %v1289
    %v5427 = vunpack.c.h.b16 %v1289
    %v5428 = vunpack.c.l.b16 %v1290
    %v5429 = vunpack.c.h.b16 %v1290
    %v5430 = vunpack.c.l.b16 %v1291
    %v5431 = vunpack.c.h.b16 %v1291
    %v5432 = vunpack.c.l.b16 %v1292
    %v5433 = vunpack.c.h.b16 %v1292
    %v5434 = vunpack.c.l.b16 %v1293
    %v5435 = vunpack.c.h.b16 %v1293
    %v5436 = vunpack.c.l.b16 %v1294
    %v5437 = vunpack.c.h.b16 %v1294
    %v5438 = vunpack.c.l.b16 %v1295
    %v5439 = vunpack.c.h.b16 %v1295
    %v5440 = vunpack.c.l.b16 %v1296
    %v5441 = vunpack.c.h.b16 %v1296
    %v5442 = vunpack.c.l.b16 %v1297
    %v5443 = vunpack.c.h.b16 %v1297
    %v5444 = vunpack.c.l.b16 %v1298
    %v5445 = vunpack.c.h.b16 %v1298
    %v5446 = vunpack.c.l.b16 %v1299
    %v5447 = vunpack.c.h.b16 %v1299
    %v5448 = vunpack.c.l.b16 %v1300
    %v5449 = vunpack.c.h.b16 %v1300
    %v5450 = vunpack.c.l.b16 %v1301
    %v5451 = vunpack.c.h.b16 %v1301
    %v5452 = vunpack.c.l.b16 %v1302
    %v5453 = vunpack.c.h.b16 %v1302
    %v5454 = vunpack.c.l.b16 %v1303
    %v5455 = vunpack.c.h.b16 %v1303
    %v5456 = vunpack.c.l.b16 %v1304
    %v5457 = vunpack.c.h.b16 %v1304
    %v5458 = vunpack.c.l.b16 %v1305
    %v5459 = vunpack.c.h.b16 %v1305
    %v5460 = vunpack.c.l.b16 %v1306
    %v5461 = vunpack.c.h.b16 %v1306
    %v5462 = vunpack.c.l.b16 %v1307
    %v5463 = vunpack.c.h.b16 %v1307
    %v5464 = vunpack.c.l.b16 %v1308
    %v5465 = vunpack.c.h.b16 %v1308
    %v5466 = vunpack.c.l.b16 %v1309
    %v5467 = vunpack.c.h.b16 %v1309
    %v5468 = vunpack.c.l.b16 %v1310
    %v5469 = vunpack.c.h.b16 %v1310
    %v5470 = vunpack.c.l.b16 %v1311
    %v5471 = vunpack.c.h.b16 %v1311
    %v5472 = vunpack.c.l.b16 %v1312
    %v5473 = vunpack.c.h.b16 %v1312
    %v5474 = vunpack.c.l.b16 %v1313
    %v5475 = vunpack.c.h.b16 %v1313
    %v5476 = vunpack.c.l.b16 %v1314
    %v5477 = vunpack.c.h.b16 %v1314
    %v5478 = vunpack.c.l.b16 %v1315
    %v5479 = vunpack.c.h.b16 %v1315
    %v5480 = vunpack.c.l.b16 %v1316
    %v5481 = vunpack.c.h.b16 %v1316
    %v5482 = vunpack.c.l.b16 %v1317
    %v5483 = vunpack.c.h.b16 %v1317
    %v5484 = vunpack.c.l.b16 %v1318
    %v5485 = vunpack.c.h.b16 %v1318
    %v5486 = vunpack.c.l.b16 %v1319
    %v5487 = vunpack.c.h.b16 %v1319
    %v5488 = vunpack.c.l.b16 %v1320
    %v5489 = vunpack.c.h.b16 %v1320
    %v5490 = vunpack.c.l.b16 %v1321
    %v5491 = vunpack.c.h.b16 %v1321
    %v5492 = vunpack.c.l.b16 %v1322
    %v5493 = vunpack.c.h.b16 %v1322
    %v5494 = vunpack.c.l.b16 %v1323
    %v5495 = vunpack.c.h.b16 %v1323
    %v5496 = vunpack.c.l.b16 %v1324
    %v5497 = vunpack.c.h.b16 %v1324
    %v5498 = vunpack.c.l.b16 %v1325
    %v5499 = vunpack.c.h.b16 %v1325
    %v5500 = vunpack.c.l.b16 %v1326
    %v5501 = vunpack.c.h.b16 %v1326
    %v5502 = vunpack.c.l.b16 %v1327
    %v5503 = vunpack.c.h.b16 %v1327
    %v5504 = vunpack.c.l.b16 %v1328
    %v5505 = vunpack.c.h.b16 %v1328
    %v5506 = vunpack.c.l.b16 %v1329
    %v5507 = vunpack.c.h.b16 %v1329
    %v5508 = vunpack.c.l.b16 %v1330
    %v5509 = vunpack.c.h.b16 %v1330
    %v5510 = vunpack.c.l.b16 %v1331
    %v5511 = vunpack.c.h.b16 %v1331
    %v5512 = vunpack.c.l.b16 %v1332
    %v5513 = vunpack.c.h.b16 %v1332
    %v5514 = vunpack.c.l.b16 %v1333
    %v5515 = vunpack.c.h.b16 %v1333
    %v5516 = vunpack.c.l.b16 %v1334
    %v5517 = vunpack.c.h.b16 %v1334
    %v5518 = vunpack.c.l.b16 %v1335
    %v5519 = vunpack.c.h.b16 %v1335
    %v5520 = vunpack.c.l.b16 %v1336
    %v5521 = vunpack.c.h.b16 %v1336
    %v5522 = vunpack.c.l.b16 %v1337
    %v5523 = vunpack.c.h.b16 %v1337
    %v5524 = vunpack.c.l.b16 %v1338
    %v5525 = vunpack.c.h.b16 %v1338
    %v5526 = vunpack.c.l.b16 %v1339
    %v5527 = vunpack.c.h.b16 %v1339
    %v5528 = vunpack.c.l.b16 %v1340
    %v5529 = vunpack.c.h.b16 %v1340
    %v5530 = vunpack.c.l.b16 %v1341
    %v5531 = vunpack.c.h.b16 %v1341
    %v5532 = vunpack.c.l.b16 %v1342
    %v5533 = vunpack.c.h.b16 %v1342
    %v5534 = vunpack.c.l.b16 %v1343
    %v5535 = vunpack.c.h.b16 %v1343
    %v5536 = vunpack.c.l.b16 %v1344
    %v5537 = vunpack.c.h.b16 %v1344
    %v5538 = vunpack.c.l.b16 %v1345
    %v5539 = vunpack.c.h.b16 %v1345
    %v5540 = vunpack.c.l.b16 %v1346
    %v5541 = vunpack.c.h.b16 %v1346
    %v5542 = vunpack.c.l.b16 %v1347
    %v5543 = vunpack.c.h.b16 %v1347
    %v5544 = vunpack.c.l.b16 %v1348
    %v5545 = vunpack.c.h.b16 %v1348
    %v5546 = vunpack.c.l.b16 %v1349
    %v5547 = vunpack.c.h.b16 %v1349
    %v5548 = vunpack.c.l.b16 %v1350
    %v5549 = vunpack.c.h.b16 %v1350
    %v5550 = vunpack.c.l.b16 %v1351
    %v5551 = vunpack.c.h.b16 %v1351
    %v5552 = vunpack.c.l.b16 %v1352
    %v5553 = vunpack.c.h.b16 %v1352
    %v5554 = vunpack.c.l.b16 %v1353
    %v5555 = vunpack.c.h.b16 %v1353
    %v5556 = vunpack.c.l.b16 %v1354
    %v5557 = vunpack.c.h.b16 %v1354
    %v5558 = vunpack.c.l.b16 %v1355
    %v5559 = vunpack.c.h.b16 %v1355
    %v5560 = vunpack.c.l.b16 %v1356
    %v5561 = vunpack.c.h.b16 %v1356
    %v5562 = vunpack.c.l.b16 %v1357
    %v5563 = vunpack.c.h.b16 %v1357
    %v5564 = vunpack.c.l.b16 %v1358
    %v5565 = vunpack.c.h.b16 %v1358
    %v5566 = vunpack.c.l.b16 %v1359
    %v5567 = vunpack.c.h.b16 %v1359
    %v5568 = vunpack.c.l.b16 %v1360
    %v5569 = vunpack.c.h.b16 %v1360
    %v5570 = vunpack.c.l.b16 %v1361
    %v5571 = vunpack.c.h.b16 %v1361
    %v5572 = vunpack.c.l.b16 %v1362
    %v5573 = vunpack.c.h.b16 %v1362
    %v5574 = vunpack.c.l.b16 %v1363
    %v5575 = vunpack.c.h.b16 %v1363
    %v5576 = vunpack.c.l.b16 %v1364
    %v5577 = vunpack.c.h.b16 %v1364
    %v5578 = vunpack.c.l.b16 %v1365
    %v5579 = vunpack.c.h.b16 %v1365
    %v5580 = vunpack.c.l.b16 %v1366
    %v5581 = vunpack.c.h.b16 %v1366
    %v5582 = vunpack.c.l.b16 %v1367
    %v5583 = vunpack.c.h.b16 %v1367
    %v5584 = vunpack.c.l.b16 %v1368
    %v5585 = vunpack.c.h.b16 %v1368
    %v5586 = vunpack.c.l.b16 %v1369
    %v5587 = vunpack.c.h.b16 %v1369
    %v5588 = vunpack.c.l.b16 %v1370
    %v5589 = vunpack.c.h.b16 %v1370
    %v5590 = vunpack.c.l.b16 %v1371
    %v5591 = vunpack.c.h.b16 %v1371
    %v5592 = vunpack.c.l.b16 %v1372
    %v5593 = vunpack.c.h.b16 %v1372
    %v5594 = vunpack.c.l.b16 %v1373
    %v5595 = vunpack.c.h.b16 %v1373
    %v5596 = vunpack.c.l.b16 %v1374
    %v5597 = vunpack.c.h.b16 %v1374
    %v5598 = vunpack.c.l.b16 %v1375
    %v5599 = vunpack.c.h.b16 %v1375
    %v5600 = vunpack.c.l.b16 %v1376
    %v5601 = vunpack.c.h.b16 %v1376
    %v5602 = vunpack.c.l.b16 %v1377
    %v5603 = vunpack.c.h.b16 %v1377
    %v5604 = vunpack.c.l.b16 %v1378
    %v5605 = vunpack.c.h.b16 %v1378
    %v5606 = vunpack.c.l.b16 %v1379
    %v5607 = vunpack.c.h.b16 %v1379
    %v5608 = vunpack.c.l.b16 %v1380
    %v5609 = vunpack.c.h.b16 %v1380
    %v5610 = vunpack.c.l.b16 %v1381
    %v5611 = vunpack.c.h.b16 %v1381
    %v5612 = vunpack.c.l.b16 %v1382
    %v5613 = vunpack.c.h.b16 %v1382
    %v5614 = vunpack.c.l.b16 %v1383
    %v5615 = vunpack.c.h.b16 %v1383
    %v5616 = vunpack.c.l.b16 %v1384
    %v5617 = vunpack.c.h.b16 %v1384
    %v5618 = vunpack.c.l.b16 %v1385
    %v5619 = vunpack.c.h.b16 %v1385
    %v5620 = vunpack.c.l.b16 %v1386
    %v5621 = vunpack.c.h.b16 %v1386
    %v5622 = vunpack.c.l.b16 %v1387
    %v5623 = vunpack.c.h.b16 %v1387
    %v5624 = vunpack.c.l.b16 %v1388
    %v5625 = vunpack.c.h.b16 %v1388
    %v5626 = vunpack.c.l.b16 %v1389
    %v5627 = vunpack.c.h.b16 %v1389
    %v5628 = vunpack.c.l.b16 %v1390
    %v5629 = vunpack.c.h.b16 %v1390
    %v5630 = vunpack.c.l.b16 %v1391
    %v5631 = vunpack.c.h.b16 %v1391
    %v5632 = vunpack.c.l.b16 %v1392
    %v5633 = vunpack.c.h.b16 %v1392
    %v5634 = vunpack.c.l.b16 %v1393
    %v5635 = vunpack.c.h.b16 %v1393
    %v5636 = vunpack.c.l.b16 %v1394
    %v5637 = vunpack.c.h.b16 %v1394
    %v5638 = vunpack.c.l.b16 %v1395
    %v5639 = vunpack.c.h.b16 %v1395
    %v5640 = vunpack.c.l.b16 %v1396
    %v5641 = vunpack.c.h.b16 %v1396
    %v5642 = vunpack.c.l.b16 %v1397
    %v5643 = vunpack.c.h.b16 %v1397
    %v5644 = vunpack.c.l.b16 %v1398
    %v5645 = vunpack.c.h.b16 %v1398
    %v5646 = vunpack.c.l.b16 %v1399
    %v5647 = vunpack.c.h.b16 %v1399
    %v5648 = vunpack.c.l.b16 %v1400
    %v5649 = vunpack.c.h.b16 %v1400
    %v5650 = vunpack.c.l.b16 %v1401
    %v5651 = vunpack.c.h.b16 %v1401
    %v5652 = vunpack.c.l.b16 %v1402
    %v5653 = vunpack.c.h.b16 %v1402
    %v5654 = vunpack.c.l.b16 %v1403
    %v5655 = vunpack.c.h.b16 %v1403
    %v5656 = vunpack.c.l.b16 %v1404
    %v5657 = vunpack.c.h.b16 %v1404
    %v5658 = vunpack.c.l.b16 %v1405
    %v5659 = vunpack.c.h.b16 %v1405
    %v5660 = vunpack.c.l.b16 %v1406
    %v5661 = vunpack.c.h.b16 %v1406
    %v5662 = vunpack.c.l.b16 %v1407
    %v5663 = vunpack.c.h.b16 %v1407
    %v5664 = vunpack.c.l.b16 %v1408
    %v5665 = vunpack.c.h.b16 %v1408
    %v5666 = vunpack.c.l.b16 %v1409
    %v5667 = vunpack.c.h.b16 %v1409
    %v5668 = vunpack.c.l.b16 %v1410
    %v5669 = vunpack.c.h.b16 %v1410
    %v5670 = vunpack.c.l.b16 %v1411
    %v5671 = vunpack.c.h.b16 %v1411
    %v5672 = vunpack.c.l.b16 %v1412
    %v5673 = vunpack.c.h.b16 %v1412
    %v5674 = vunpack.c.l.b16 %v1413
    %v5675 = vunpack.c.h.b16 %v1413
    %v5676 = vunpack.c.l.b16 %v1414
    %v5677 = vunpack.c.h.b16 %v1414
    %v5678 = vunpack.c.l.b16 %v1415
    %v5679 = vunpack.c.h.b16 %v1415
    %v5680 = vunpack.c.l.b16 %v1416
    %v5681 = vunpack.c.h.b16 %v1416
    %v5682 = vunpack.c.l.b16 %v1417
    %v5683 = vunpack.c.h.b16 %v1417
    %v5684 = vunpack.c.l.b16 %v1418
    %v5685 = vunpack.c.h.b16 %v1418
    %v5686 = vunpack.c.l.b16 %v1419
    %v5687 = vunpack.c.h.b16 %v1419
    %v5688 = vunpack.c.l.b16 %v1420
    %v5689 = vunpack.c.h.b16 %v1420
    %v5690 = vunpack.c.l.b16 %v1421
    %v5691 = vunpack.c.h.b16 %v1421
    %v5692 = vunpack.c.l.b16 %v1422
    %v5693 = vunpack.c.h.b16 %v1422
    %v5694 = vunpack.c.l.b16 %v1423
    %v5695 = vunpack.c.h.b16 %v1423
    %v5696 = vunpack.c.l.b16 %v1424
    %v5697 = vunpack.c.h.b16 %v1424
    %v5698 = vunpack.c.l.b16 %v1425
    %v5699 = vunpack.c.h.b16 %v1425
    %v5700 = vunpack.c.l.b16 %v1426
    %v5701 = vunpack.c.h.b16 %v1426
    %v5702 = vunpack.c.l.b16 %v1427
    %v5703 = vunpack.c.h.b16 %v1427
    %v5704 = vunpack.c.l.b16 %v1428
    %v5705 = vunpack.c.h.b16 %v1428
    %v5706 = vunpack.c.l.b16 %v1429
    %v5707 = vunpack.c.h.b16 %v1429
    %v5708 = vunpack.c.l.b16 %v1430
    %v5709 = vunpack.c.h.b16 %v1430
    %v5710 = vunpack.c.l.b16 %v1431
    %v5711 = vunpack.c.h.b16 %v1431
    %v5712 = vunpack.c.l.b16 %v1432
    %v5713 = vunpack.c.h.b16 %v1432
    %v5714 = vunpack.c.l.b16 %v1433
    %v5715 = vunpack.c.h.b16 %v1433
    %v5716 = vunpack.c.l.b16 %v1434
    %v5717 = vunpack.c.h.b16 %v1434
    %v5718 = vunpack.c.l.b16 %v1435
    %v5719 = vunpack.c.h.b16 %v1435
    %v5720 = vunpack.c.l.b16 %v1436
    %v5721 = vunpack.c.h.b16 %v1436
    %v5722 = vunpack.c.l.b16 %v1437
    %v5723 = vunpack.c.h.b16 %v1437
    %v5724 = vunpack.c.l.b16 %v1438
    %v5725 = vunpack.c.h.b16 %v1438
    %v5726 = vunpack.c.l.b16 %v1439
    %v5727 = vunpack.c.h.b16 %v1439
    %v5728 = vunpack.c.l.b16 %v1440
    %v5729 = vunpack.c.h.b16 %v1440
    %v5730 = vunpack.c.l.b16 %v1441
    %v5731 = vunpack.c.h.b16 %v1441
    %v5732 = vunpack.c.l.b16 %v1442
    %v5733 = vunpack.c.h.b16 %v1442
    %v5734 = vunpack.c.l.b16 %v1443
    %v5735 = vunpack.c.h.b16 %v1443
    %v5736 = vunpack.c.l.b16 %v1444
    %v5737 = vunpack.c.h.b16 %v1444
    %v5738 = vunpack.c.l.b16 %v1445
    %v5739 = vunpack.c.h.b16 %v1445
    %v5740 = vunpack.c.l.b16 %v1446
    %v5741 = vunpack.c.h.b16 %v1446
    %v5742 = vunpack.c.l.b16 %v1447
    %v5743 = vunpack.c.h.b16 %v1447
    %v5744 = vunpack.c.l.b16 %v1448
    %v5745 = vunpack.c.h.b16 %v1448
    %v5746 = vunpack.c.l.b16 %v1449
    %v5747 = vunpack.c.h.b16 %v1449
    %v5748 = vunpack.c.l.b16 %v1450
    %v5749 = vunpack.c.h.b16 %v1450
    %v5750 = vunpack.c.l.b16 %v1451
    %v5751 = vunpack.c.h.b16 %v1451
    %v5752 = vunpack.c.l.b16 %v1452
    %v5753 = vunpack.c.h.b16 %v1452
    %v5754 = vunpack.c.l.b16 %v1453
    %v5755 = vunpack.c.h.b16 %v1453
    %v5756 = vunpack.c.l.b16 %v1454
    %v5757 = vunpack.c.h.b16 %v1454
    %v5758 = vunpack.c.l.b16 %v1455
    %v5759 = vunpack.c.h.b16 %v1455
    %v5760 = vunpack.c.l.b16 %v1456
    %v5761 = vunpack.c.h.b16 %v1456
    %v5762 = vunpack.c.l.b16 %v1457
    %v5763 = vunpack.c.h.b16 %v1457
    %v5764 = vunpack.c.l.b16 %v1458
    %v5765 = vunpack.c.h.b16 %v1458
    %v5766 = vunpack.c.l.b16 %v1459
    %v5767 = vunpack.c.h.b16 %v1459
    %v5768 = vunpack.c.l.b16 %v1460
    %v5769 = vunpack.c.h.b16 %v1460
    %v5770 = vunpack.c.l.b16 %v1461
    %v5771 = vunpack.c.h.b16 %v1461
    %v5772 = vunpack.c.l.b16 %v1462
    %v5773 = vunpack.c.h.b16 %v1462
    %v5774 = vunpack.c.l.b16 %v1463
    %v5775 = vunpack.c.h.b16 %v1463
    %v5776 = vunpack.c.l.b16 %v1464
    %v5777 = vunpack.c.h.b16 %v1464
    %v5778 = vunpack.c.l.b16 %v1465
    %v5779 = vunpack.c.h.b16 %v1465
    %v5780 = vunpack.c.l.b16 %v1466
    %v5781 = vunpack.c.h.b16 %v1466
    %v5782 = vunpack.c.l.b16 %v1467
    %v5783 = vunpack.c.h.b16 %v1467
    %v5784 = vunpack.c.l.b16 %v1468
    %v5785 = vunpack.c.h.b16 %v1468
    %v5786 = vunpack.c.l.b16 %v1469
    %v5787 = vunpack.c.h.b16 %v1469
    %v5788 = vunpack.c.l.b16 %v1470
    %v5789 = vunpack.c.h.b16 %v1470
    %v5790 = vunpack.c.l.b16 %v1471
    %v5791 = vunpack.c.h.b16 %v1471
    %v5792 = vunpack.c.l.b16 %v1472
    %v5793 = vunpack.c.h.b16 %v1472
    %v5794 = vunpack.c.l.b16 %v1473
    %v5795 = vunpack.c.h.b16 %v1473
    %v5796 = vunpack.c.l.b16 %v1474
    %v5797 = vunpack.c.h.b16 %v1474
    %v5798 = vunpack.c.l.b16 %v1475
    %v5799 = vunpack.c.h.b16 %v1475
    %v5800 = vunpack.c.l.b16 %v1476
    %v5801 = vunpack.c.h.b16 %v1476
    %v5802 = vunpack.c.l.b16 %v1477
    %v5803 = vunpack.c.h.b16 %v1477
    %v5804 = vunpack.c.l.b16 %v1478
    %v5805 = vunpack.c.h.b16 %v1478
    %v5806 = vunpack.c.l.b16 %v1479
    %v5807 = vunpack.c.h.b16 %v1479
    %v5808 = vunpack.c.l.b16 %v1480
    %v5809 = vunpack.c.h.b16 %v1480
    %v5810 = vunpack.c.l.b16 %v1481
    %v5811 = vunpack.c.h.b16 %v1481
    %v5812 = vunpack.c.l.b16 %v1482
    %v5813 = vunpack.c.h.b16 %v1482
    %v5814 = vunpack.c.l.b16 %v1483
    %v5815 = vunpack.c.h.b16 %v1483
    %v5816 = vunpack.c.l.b16 %v1484
    %v5817 = vunpack.c.h.b16 %v1484
    %v5818 = vunpack.c.l.b16 %v1485
    %v5819 = vunpack.c.h.b16 %v1485
    %v5820 = vunpack.c.l.b16 %v1486
    %v5821 = vunpack.c.h.b16 %v1486
    %v5822 = vunpack.c.l.b16 %v1487
    %v5823 = vunpack.c.h.b16 %v1487
    %v5824 = vunpack.c.l.b16 %v1488
    %v5825 = vunpack.c.h.b16 %v1488
    %v5826 = vunpack.c.l.b16 %v1489
    %v5827 = vunpack.c.h.b16 %v1489
    %v5828 = vunpack.c.l.b16 %v1490
    %v5829 = vunpack.c.h.b16 %v1490
    %v5830 = vunpack.c.l.b16 %v1491
    %v5831 = vunpack.c.h.b16 %v1491
    %v5832 = vunpack.c.l.b16 %v1492
    %v5833 = vunpack.c.h.b16 %v1492
    %v5834 = vunpack.c.l.b16 %v1493
    %v5835 = vunpack.c.h.b16 %v1493
    %v5836 = vunpack.c.l.b16 %v1494
    %v5837 = vunpack.c.h.b16 %v1494
    %v5838 = vunpack.c.l.b16 %v1495
    %v5839 = vunpack.c.h.b16 %v1495
    %v5840 = vunpack.c.l.b16 %v1496
    %v5841 = vunpack.c.h.b16 %v1496
    %v5842 = vunpack.c.l.b16 %v1497
    %v5843 = vunpack.c.h.b16 %v1497
    %v5844 = vunpack.c.l.b16 %v1498
    %v5845 = vunpack.c.h.b16 %v1498
    %v5846 = vunpack.c.l.b16 %v1499
    %v5847 = vunpack.c.h.b16 %v1499
    %v5848 = vunpack.c.l.b16 %v1500
    %v5849 = vunpack.c.h.b16 %v1500
    %v5850 = vunpack.c.l.b16 %v1501
    %v5851 = vunpack.c.h.b16 %v1501
    %v5852 = vunpack.c.l.b16 %v1502
    %v5853 = vunpack.c.h.b16 %v1502
    %v5854 = vunpack.c.l.b16 %v1503
    %v5855 = vunpack.c.h.b16 %v1503
    %v5856 = vunpack.c.l.b16 %v1504
    %v5857 = vunpack.c.h.b16 %v1504
    %v5858 = vunpack.c.l.b16 %v1505
    %v5859 = vunpack.c.h.b16 %v1505
    %v5860 = vunpack.c.l.b16 %v1506
    %v5861 = vunpack.c.h.b16 %v1506
    %v5862 = vunpack.c.l.b16 %v1507
    %v5863 = vunpack.c.h.b16 %v1507
    %v5864 = vunpack.c.l.b16 %v1508
    %v5865 = vunpack.c.h.b16 %v1508
    %v5866 = vunpack.c.l.b16 %v1509
    %v5867 = vunpack.c.h.b16 %v1509
    %v5868 = vunpack.c.l.b16 %v1510
    %v5869 = vunpack.c.h.b16 %v1510
    %v5870 = vunpack.c.l.b16 %v1511
    %v5871 = vunpack.c.h.b16 %v1511
    %v5872 = vunpack.c.l.b16 %v1512
    %v5873 = vunpack.c.h.b16 %v1512
    %v5874 = vunpack.c.l.b16 %v1513
    %v5875 = vunpack.c.h.b16 %v1513
    %v5876 = vunpack.c.l.b16 %v1514
    %v5877 = vunpack.c.h.b16 %v1514
    %v5878 = vunpack.c.l.b16 %v1515
    %v5879 = vunpack.c.h.b16 %v1515
    %v5880 = vunpack.c.l.b16 %v1516
    %v5881 = vunpack.c.h.b16 %v1516
    %v5882 = vunpack.c.l.b16 %v1517
    %v5883 = vunpack.c.h.b16 %v1517
    %v5884 = vunpack.c.l.b16 %v1518
    %v5885 = vunpack.c.h.b16 %v1518
    %v5886 = vunpack.c.l.b16 %v1519
    %v5887 = vunpack.c.h.b16 %v1519
    %v5888 = vunpack.c.l.b16 %v1520
    %v5889 = vunpack.c.h.b16 %v1520
    %v5890 = vunpack.c.l.b16 %v1521
    %v5891 = vunpack.c.h.b16 %v1521
    %v5892 = vunpack.c.l.b16 %v1522
    %v5893 = vunpack.c.h.b16 %v1522
    %v5894 = vunpack.c.l.b16 %v1523
    %v5895 = vunpack.c.h.b16 %v1523
    %v5896 = vunpack.c.l.b16 %v1524
    %v5897 = vunpack.c.h.b16 %v1524
    %v5898 = vunpack.c.l.b16 %v1525
    %v5899 = vunpack.c.h.b16 %v1525
    %v5900 = vunpack.c.l.b16 %v1526
    %v5901 = vunpack.c.h.b16 %v1526
    %v5902 = vunpack.c.l.b16 %v1527
    %v5903 = vunpack.c.h.b16 %v1527
    %v5904 = vunpack.c.l.b16 %v1528
    %v5905 = vunpack.c.h.b16 %v1528
    %v5906 = vunpack.c.l.b16 %v1529
    %v5907 = vunpack.c.h.b16 %v1529
    %v5908 = vunpack.c.l.b16 %v1530
    %v5909 = vunpack.c.h.b16 %v1530
    %v5910 = vunpack.c.l.b16 %v1531
    %v5911 = vunpack.c.h.b16 %v1531
    %v5912 = vunpack.c.l.b16 %v1532
    %v5913 = vunpack.c.h.b16 %v1532
    %v5914 = vunpack.c.l.b16 %v1533
    %v5915 = vunpack.c.h.b16 %v1533
    %v5916 = vunpack.c.l.b16 %v1534
    %v5917 = vunpack.c.h.b16 %v1534
    %v5918 = vunpack.c.l.b16 %v1535
    %v5919 = vunpack.c.h.b16 %v1535
    %v5920 = vunpack.c.l.b16 %v1536
    %v5921 = vunpack.c.h.b16 %v1536
    %v5922 = vunpack.c.l.b16 %v1537
    %v5923 = vunpack.c.h.b16 %v1537
    %v5924 = vunpack.c.l.b16 %v1538
    %v5925 = vunpack.c.h.b16 %v1538
    %v5926 = vunpack.c.l.b16 %v1539
    %v5927 = vunpack.c.h.b16 %v1539
    %v5928 = vunpack.c.l.b16 %v1540
    %v5929 = vunpack.c.h.b16 %v1540
    %v5930 = vunpack.c.l.b16 %v1541
    %v5931 = vunpack.c.h.b16 %v1541
    %v5932 = vunpack.c.l.b16 %v1542
    %v5933 = vunpack.c.h.b16 %v1542
    %v5934 = vunpack.c.l.b16 %v1543
    %v5935 = vunpack.c.h.b16 %v1543
    %v5936 = vunpack.c.l.b16 %v1544
    %v5937 = vunpack.c.h.b16 %v1544
    %v5938 = vunpack.c.l.b16 %v1545
    %v5939 = vunpack.c.h.b16 %v1545
    %v5940 = vunpack.c.l.b16 %v1546
    %v5941 = vunpack.c.h.b16 %v1546
    %v5942 = vunpack.c.l.b16 %v1547
    %v5943 = vunpack.c.h.b16 %v1547
    %v5944 = vunpack.c.l.b16 %v1548
    %v5945 = vunpack.c.h.b16 %v1548
    %v5946 = vunpack.c.l.b16 %v1549
    %v5947 = vunpack.c.h.b16 %v1549
    %v5948 = vunpack.c.l.b16 %v1550
    %v5949 = vunpack.c.h.b16 %v1550
    %v5950 = vunpack.c.l.b16 %v1551
    %v5951 = vunpack.c.h.b16 %v1551
    %v5952 = vunpack.c.l.b16 %v1552
    %v5953 = vunpack.c.h.b16 %v1552
    %v5954 = vunpack.c.l.b16 %v1553
    %v5955 = vunpack.c.h.b16 %v1553
    %v5956 = vunpack.c.l.b16 %v1554
    %v5957 = vunpack.c.h.b16 %v1554
    %v5958 = vunpack.c.l.b16 %v1555
    %v5959 = vunpack.c.h.b16 %v1555
    %v5960 = vunpack.c.l.b16 %v1556
    %v5961 = vunpack.c.h.b16 %v1556
    %v5962 = vunpack.c.l.b16 %v1557
    %v5963 = vunpack.c.h.b16 %v1557
    %v5964 = vunpack.c.l.b16 %v1558
    %v5965 = vunpack.c.h.b16 %v1558
    %v5966 = vunpack.c.l.b16 %v1559
    %v5967 = vunpack.c.h.b16 %v1559
    %v5968 = vunpack.c.l.b16 %v1560
    %v5969 = vunpack.c.h.b16 %v1560
    %v5970 = vunpack.c.l.b16 %v1561
    %v5971 = vunpack.c.h.b16 %v1561
    %v5972 = vunpack.c.l.b16 %v1562
    %v5973 = vunpack.c.h.b16 %v1562
    %v5974 = vunpack.c.l.b16 %v1563
    %v5975 = vunpack.c.h.b16 %v1563
    %v5976 = vunpack.c.l.b16 %v1564
    %v5977 = vunpack.c.h.b16 %v1564
    %v5978 = vunpack.c.l.b16 %v1565
    %v5979 = vunpack.c.h.b16 %v1565
    %v5980 = vunpack.c.l.b16 %v1566
    %v5981 = vunpack.c.h.b16 %v1566
    %v5982 = vunpack.c.l.b16 %v1567
    %v5983 = vunpack.c.h.b16 %v1567
    %v5984 = vunpack.c.l.b16 %v1568
    %v5985 = vunpack.c.h.b16 %v1568
    %v5986 = vunpack.c.l.b16 %v1569
    %v5987 = vunpack.c.h.b16 %v1569
    %v5988 = vunpack.c.l.b16 %v1570
    %v5989 = vunpack.c.h.b16 %v1570
    %v5990 = vunpack.c.l.b16 %v1571
    %v5991 = vunpack.c.h.b16 %v1571
    %v5992 = vunpack.c.l.b16 %v1572
    %v5993 = vunpack.c.h.b16 %v1572
    %v5994 = vunpack.c.l.b16 %v1573
    %v5995 = vunpack.c.h.b16 %v1573
    %v5996 = vunpack.c.l.b16 %v1574
    %v5997 = vunpack.c.h.b16 %v1574
    %v5998 = vunpack.c.l.b16 %v1575
    %v5999 = vunpack.c.h.b16 %v1575
    %v6000 = vunpack.c.l.b16 %v1576
    %v6001 = vunpack.c.h.b16 %v1576
    %v6002 = vunpack.c.l.b16 %v1577
    %v6003 = vunpack.c.h.b16 %v1577
    %v6004 = vunpack.c.l.b16 %v1578
    %v6005 = vunpack.c.h.b16 %v1578
    %v6006 = vunpack.c.l.b16 %v1579
    %v6007 = vunpack.c.h.b16 %v1579
    %v6008 = vunpack.c.l.b16 %v1580
    %v6009 = vunpack.c.h.b16 %v1580
    %v6010 = vunpack.c.l.b16 %v1581
    %v6011 = vunpack.c.h.b16 %v1581
    %v6012 = vunpack.c.l.b16 %v1582
    %v6013 = vunpack.c.h.b16 %v1582
    %v6014 = vunpack.c.l.b16 %v1583
    %v6015 = vunpack.c.h.b16 %v1583
    %v6016 = vunpack.c.l.b16 %v1584
    %v6017 = vunpack.c.h.b16 %v1584
    %v6018 = vunpack.c.l.b16 %v1585
    %v6019 = vunpack.c.h.b16 %v1585
    %v6020 = vunpack.c.l.b16 %v1586
    %v6021 = vunpack.c.h.b16 %v1586
    %v6022 = vunpack.c.l.b16 %v1587
    %v6023 = vunpack.c.h.b16 %v1587
    %v6024 = vunpack.c.l.b16 %v1588
    %v6025 = vunpack.c.h.b16 %v1588
    %v6026 = vunpack.c.l.b16 %v1589
    %v6027 = vunpack.c.h.b16 %v1589
    %v6028 = vunpack.c.l.b16 %v1590
    %v6029 = vunpack.c.h.b16 %v1590
    %v6030 = vunpack.c.l.b16 %v1591
    %v6031 = vunpack.c.h.b16 %v1591
    %v6032 = vunpack.c.l.b16 %v1592
    %v6033 = vunpack.c.h.b16 %v1592
    %v6034 = vunpack.c.l.b16 %v1593
    %v6035 = vunpack.c.h.b16 %v1593
    %v6036 = vunpack.c.l.b16 %v1594
    %v6037 = vunpack.c.h.b16 %v1594
    %v6038 = vunpack.c.l.b16 %v1595
    %v6039 = vunpack.c.h.b16 %v1595
    %v6040 = vunpack.c.l.b16 %v1596
    %v6041 = vunpack.c.h.b16 %v1596
    %v6042 = vunpack.c.l.b16 %v1597
    %v6043 = vunpack.c.h.b16 %v1597
    %v6044 = vunpack.c.l.b16 %v1598
    %v6045 = vunpack.c.h.b16 %v1598
    %v6046 = vunpack.c.l.b16 %v1599
    %v6047 = vunpack.c.h.b16 %v1599
    %v6048 = vunpack.c.l.b16 %v1600
    %v6049 = vunpack.c.h.b16 %v1600
    %v6050 = vunpack.c.l.b16 %v1601
    %v6051 = vunpack.c.h.b16 %v1601
    %v6052 = vunpack.c.l.b16 %v1602
    %v6053 = vunpack.c.h.b16 %v1602
    %v6054 = vunpack.c.l.b16 %v1603
    %v6055 = vunpack.c.h.b16 %v1603
    %v6056 = vunpack.c.l.b16 %v1604
    %v6057 = vunpack.c.h.b16 %v1604
    %v6058 = vunpack.c.l.b16 %v1605
    %v6059 = vunpack.c.h.b16 %v1605
    %v6060 = vunpack.c.l.b16 %v1606
    %v6061 = vunpack.c.h.b16 %v1606
    %v6062 = vunpack.c.l.b16 %v1607
    %v6063 = vunpack.c.h.b16 %v1607
    %v6064 = vunpack.c.l.b16 %v1608
    %v6065 = vunpack.c.h.b16 %v1608
    %v6066 = vunpack.c.l.b16 %v1609
    %v6067 = vunpack.c.h.b16 %v1609
    %v6068 = vunpack.c.l.b16 %v1610
    %v6069 = vunpack.c.h.b16 %v1610
    %v6070 = vunpack.c.l.b16 %v1611
    %v6071 = vunpack.c.h.b16 %v1611
    %v6072 = vunpack.c.l.b16 %v1612
    %v6073 = vunpack.c.h.b16 %v1612
    %v6074 = vunpack.c.l.b16 %v1613
    %v6075 = vunpack.c.h.b16 %v1613
    %v6076 = vunpack.c.l.b16 %v1614
    %v6077 = vunpack.c.h.b16 %v1614
    %v6078 = vunpack.c.l.b16 %v1615
    %v6079 = vunpack.c.h.b16 %v1615
    %v6080 = vunpack.c.l.b16 %v1616
    %v6081 = vunpack.c.h.b16 %v1616
    %v6082 = vunpack.c.l.b16 %v1617
    %v6083 = vunpack.c.h.b16 %v1617
    %v6084 = vunpack.c.l.b16 %v1618
    %v6085 = vunpack.c.h.b16 %v1618
    %v6086 = vunpack.c.l.b16 %v1619
    %v6087 = vunpack.c.h.b16 %v1619
    %v6088 = vunpack.c.l.b16 %v1620
    %v6089 = vunpack.c.h.b16 %v1620
    %v6090 = vunpack.c.l.b16 %v1621
    %v6091 = vunpack.c.h.b16 %v1621
    %v6092 = vunpack.c.l.b16 %v1622
    %v6093 = vunpack.c.h.b16 %v1622
    %v6094 = vunpack.c.l.b16 %v1623
    %v6095 = vunpack.c.h.b16 %v1623
    %v6096 = vunpack.c.l.b16 %v1624
    %v6097 = vunpack.c.h.b16 %v1624
    %v6098 = vunpack.c.l.b16 %v1625
    %v6099 = vunpack.c.h.b16 %v1625
    %v6100 = vunpack.c.l.b16 %v1626
    %v6101 = vunpack.c.h.b16 %v1626
    %v6102 = vunpack.c.l.b16 %v1627
    %v6103 = vunpack.c.h.b16 %v1627
    %v6104 = vunpack.c.l.b16 %v1628
    %v6105 = vunpack.c.h.b16 %v1628
    %v6106 = vunpack.c.l.b16 %v1629
    %v6107 = vunpack.c.h.b16 %v1629
    %v6108 = vunpack.c.l.b16 %v1630
    %v6109 = vunpack.c.h.b16 %v1630
    %v6110 = vunpack.c.l.b16 %v1631
    %v6111 = vunpack.c.h.b16 %v1631
    %v6112 = vunpack.c.l.b16 %v1632
    %v6113 = vunpack.c.h.b16 %v1632
    %v6114 = vunpack.c.l.b16 %v1633
    %v6115 = vunpack.c.h.b16 %v1633
    %v6116 = vunpack.c.l.b16 %v1634
    %v6117 = vunpack.c.h.b16 %v1634
    %v6118 = vunpack.c.l.b16 %v1635
    %v6119 = vunpack.c.h.b16 %v1635
    %v6120 = vunpack.c.l.b16 %v1636
    %v6121 = vunpack.c.h.b16 %v1636
    %v6122 = vunpack.c.l.b16 %v1637
    %v6123 = vunpack.c.h.b16 %v1637
    %v6124 = vunpack.c.l.b16 %v1638
    %v6125 = vunpack.c.h.b16 %v1638
    %v6126 = vunpack.c.l.b16 %v1639
    %v6127 = vunpack.c.h.b16 %v1639
    %v6128 = vunpack.c.l.b16 %v1640
    %v6129 = vunpack.c.h.b16 %v1640
    %v6130 = vunpack.c.l.b16 %v1641
    %v6131 = vunpack.c.h.b16 %v1641
    %v6132 = vunpack.c.l.b16 %v1642
    %v6133 = vunpack.c.h.b16 %v1642
    %v6134 = vunpack.c.l.b16 %v1643
    %v6135 = vunpack.c.h.b16 %v1643
    %v6136 = vunpack.c.l.b16 %v1644
    %v6137 = vunpack.c.h.b16 %v1644
    %v6138 = vunpack.c.l.b16 %v1645
    %v6139 = vunpack.c.h.b16 %v1645
    %v6140 = vunpack.c.l.b16 %v1646
    %v6141 = vunpack.c.h.b16 %v1646
    %v6142 = vunpack.c.l.b16 %v1647
    %v6143 = vunpack.c.h.b16 %v1647
    %v6144 = vunpack.c.l.b16 %v1648
    %v6145 = vunpack.c.h.b16 %v1648
    %v6146 = vunpack.c.l.b16 %v1649
    %v6147 = vunpack.c.h.b16 %v1649
    %v6148 = vunpack.c.l.b16 %v1650
    %v6149 = vunpack.c.h.b16 %v1650
    %v6150 = vunpack.c.l.b16 %v1651
    %v6151 = vunpack.c.h.b16 %v1651
    %v6152 = vunpack.c.l.b16 %v1652
    %v6153 = vunpack.c.h.b16 %v1652
    %v6154 = vunpack.c.l.b16 %v1653
    %v6155 = vunpack.c.h.b16 %v1653
    %v6156 = vunpack.c.l.b16 %v1654
    %v6157 = vunpack.c.h.b16 %v1654
    %v6158 = vunpack.c.l.b16 %v1655
    %v6159 = vunpack.c.h.b16 %v1655
    %v6160 = vunpack.c.l.b16 %v1656
    %v6161 = vunpack.c.h.b16 %v1656
    %v6162 = vunpack.c.l.b16 %v1657
    %v6163 = vunpack.c.h.b16 %v1657
    %v6164 = vunpack.c.l.b16 %v1658
    %v6165 = vunpack.c.h.b16 %v1658
    %v6166 = vunpack.c.l.b16 %v1659
    %v6167 = vunpack.c.h.b16 %v1659
    %v6168 = vunpack.c.l.b16 %v1660
    %v6169 = vunpack.c.h.b16 %v1660
    %v6170 = vunpack.c.l.b16 %v1661
    %v6171 = vunpack.c.h.b16 %v1661
    %v6172 = vunpack.c.l.b16 %v1662
    %v6173 = vunpack.c.h.b16 %v1662
    %v6174 = vunpack.c.l.b16 %v1663
    %v6175 = vunpack.c.h.b16 %v1663
    %v6176 = vunpack.c.l.b16 %v1664
    %v6177 = vunpack.c.h.b16 %v1664
    %v6178 = vunpack.c.l.b16 %v1665
    %v6179 = vunpack.c.h.b16 %v1665
    %v6180 = vunpack.c.l.b16 %v1666
    %v6181 = vunpack.c.h.b16 %v1666
    %v6182 = vunpack.c.l.b16 %v1667
    %v6183 = vunpack.c.h.b16 %v1667
    %v6184 = vunpack.c.l.b16 %v1668
    %v6185 = vunpack.c.h.b16 %v1668
    %v6186 = vunpack.c.l.b16 %v1669
    %v6187 = vunpack.c.h.b16 %v1669
    %v6188 = vunpack.c.l.b16 %v1670
    %v6189 = vunpack.c.h.b16 %v1670
    %v6190 = vunpack.c.l.b16 %v1671
    %v6191 = vunpack.c.h.b16 %v1671
    %v6192 = vunpack.c.l.b16 %v1672
    %v6193 = vunpack.c.h.b16 %v1672
    %v6194 = vunpack.c.l.b16 %v1673
    %v6195 = vunpack.c.h.b16 %v1673
    %v6196 = vunpack.c.l.b16 %v1674
    %v6197 = vunpack.c.h.b16 %v1674
    %v6198 = vunpack.c.l.b16 %v1675
    %v6199 = vunpack.c.h.b16 %v1675
    %v6200 = vunpack.c.l.b16 %v1676
    %v6201 = vunpack.c.h.b16 %v1676
    %v6202 = vunpack.c.l.b16 %v1677
    %v6203 = vunpack.c.h.b16 %v1677
    %v6204 = vunpack.c.l.b16 %v1678
    %v6205 = vunpack.c.h.b16 %v1678
    %v6206 = vunpack.c.l.b16 %v1679
    %v6207 = vunpack.c.h.b16 %v1679
    %v6208 = vunpack.c.l.b16 %v1680
    %v6209 = vunpack.c.h.b16 %v1680
    %v6210 = vunpack.c.l.b16 %v1681
    %v6211 = vunpack.c.h.b16 %v1681
    %v6212 = vunpack.c.l.b16 %v1682
    %v6213 = vunpack.c.h.b16 %v1682
    %v6214 = vunpack.c.l.b16 %v1683
    %v6215 = vunpack.c.h.b16 %v1683
    %v6216 = vunpack.c.l.b16 %v1684
    %v6217 = vunpack.c.h.b16 %v1684
    %v6218 = vunpack.c.l.b16 %v1685
    %v6219 = vunpack.c.h.b16 %v1685
    %v6220 = vunpack.c.l.b16 %v1686
    %v6221 = vunpack.c.h.b16 %v1686
    %v6222 = vunpack.c.l.b16 %v1687
    %v6223 = vunpack.c.h.b16 %v1687
    %v6224 = vunpack.c.l.b16 %v1688
    %v6225 = vunpack.c.h.b16 %v1688
    %v6226 = vunpack.c.l.b16 %v1689
    %v6227 = vunpack.c.h.b16 %v1689
    %v6228 = vunpack.c.l.b16 %v1690
    %v6229 = vunpack.c.h.b16 %v1690
    %v6230 = vunpack.c.l.b16 %v1691
    %v6231 = vunpack.c.h.b16 %v1691
    %v6232 = vunpack.c.l.b16 %v1692
    %v6233 = vunpack.c.h.b16 %v1692
    %v6234 = vunpack.c.l.b16 %v1693
    %v6235 = vunpack.c.h.b16 %v1693
    %v6236 = vunpack.c.l.b16 %v1694
    %v6237 = vunpack.c.h.b16 %v1694
    %v6238 = vunpack.c.l.b16 %v1695
    %v6239 = vunpack.c.h.b16 %v1695
    %v6240 = vunpack.c.l.b16 %v1696
    %v6241 = vunpack.c.h.b16 %v1696
    %v6242 = vunpack.c.l.b16 %v1697
    %v6243 = vunpack.c.h.b16 %v1697
    %v6244 = vunpack.c.l.b16 %v1698
    %v6245 = vunpack.c.h.b16 %v1698
    %v6246 = vunpack.c.l.b16 %v1699
    %v6247 = vunpack.c.h.b16 %v1699
    %v6248 = vunpack.c.l.b16 %v1700
    %v6249 = vunpack.c.h.b16 %v1700
    %v6250 = vunpack.c.l.b16 %v1701
    %v6251 = vunpack.c.h.b16 %v1701
    %v6252 = vunpack.c.l.b16 %v1702
    %v6253 = vunpack.c.h.b16 %v1702
    %v6254 = vunpack.c.l.b16 %v1703
    %v6255 = vunpack.c.h.b16 %v1703
    %v6256 = vunpack.c.l.b16 %v1704
    %v6257 = vunpack.c.h.b16 %v1704
    %v6258 = vunpack.c.l.b16 %v1705
    %v6259 = vunpack.c.h.b16 %v1705
    %v6260 = vunpack.c.l.b16 %v1706
    %v6261 = vunpack.c.h.b16 %v1706
    %v6262 = vunpack.c.l.b16 %v1707
    %v6263 = vunpack.c.h.b16 %v1707
    %v6264 = vunpack.c.l.b16 %v1708
    %v6265 = vunpack.c.h.b16 %v1708
    %v6266 = vunpack.c.l.b16 %v1709
    %v6267 = vunpack.c.h.b16 %v1709
    %v6268 = vunpack.c.l.b16 %v1710
    %v6269 = vunpack.c.h.b16 %v1710
    %v6270 = vunpack.c.l.b16 %v1711
    %v6271 = vunpack.c.h.b16 %v1711
    %v6272 = vunpack.c.l.b16 %v1712
    %v6273 = vunpack.c.h.b16 %v1712
    %v6274 = vunpack.c.l.b16 %v1713
    %v6275 = vunpack.c.h.b16 %v1713
    %v6276 = vunpack.c.l.b16 %v1714
    %v6277 = vunpack.c.h.b16 %v1714
    %v6278 = vunpack.c.l.b16 %v1715
    %v6279 = vunpack.c.h.b16 %v1715
    %v6280 = vunpack.c.l.b16 %v1716
    %v6281 = vunpack.c.h.b16 %v1716
    %v6282 = vunpack.c.l.b16 %v1717
    %v6283 = vunpack.c.h.b16 %v1717
    %v6284 = vunpack.c.l.b16 %v1718
    %v6285 = vunpack.c.h.b16 %v1718
    %v6286 = vunpack.c.l.b16 %v1719
    %v6287 = vunpack.c.h.b16 %v1719
    %v6288 = vunpack.c.l.b16 %v1720
    %v6289 = vunpack.c.h.b16 %v1720
    %v6290 = vunpack.c.l.b16 %v1721
    %v6291 = vunpack.c.h.b16 %v1721
    %v6292 = vunpack.c.l.b16 %v1722
    %v6293 = vunpack.c.h.b16 %v1722
    %v6294 = vunpack.c.l.b16 %v1723
    %v6295 = vunpack.c.h.b16 %v1723
    %v6296 = vunpack.c.l.b16 %v1724
    %v6297 = vunpack.c.h.b16 %v1724
    %v6298 = vunpack.c.l.b16 %v1725
    %v6299 = vunpack.c.h.b16 %v1725
    %v6300 = vunpack.c.l.b16 %v1726
    %v6301 = vunpack.c.h.b16 %v1726
    %v6302 = vunpack.c.l.b16 %v1727
    %v6303 = vunpack.c.h.b16 %v1727
    %v6304 = vunpack.c.l.b16 %v1728
    %v6305 = vunpack.c.h.b16 %v1728
    %v6306 = vunpack.c.l.b16 %v1729
    %v6307 = vunpack.c.h.b16 %v1729
    %v6308 = vunpack.c.l.b16 %v1730
    %v6309 = vunpack.c.h.b16 %v1730
    %v6310 = vunpack.c.l.b16 %v1731
    %v6311 = vunpack.c.h.b16 %v1731
    %v6312 = vunpack.c.l.b16 %v1732
    %v6313 = vunpack.c.h.b16 %v1732
    %v6314 = vunpack.c.l.b16 %v1733
    %v6315 = vunpack.c.h.b16 %v1733
    %v6316 = vunpack.c.l.b16 %v1734
    %v6317 = vunpack.c.h.b16 %v1734
    %v6318 = vunpack.c.l.b16 %v1735
    %v6319 = vunpack.c.h.b16 %v1735
    %v6320 = vunpack.c.l.b16 %v1736
    %v6321 = vunpack.c.h.b16 %v1736
    %v6322 = vunpack.c.l.b16 %v1737
    %v6323 = vunpack.c.h.b16 %v1737
    %v6324 = vunpack.c.l.b16 %v1738
    %v6325 = vunpack.c.h.b16 %v1738
    %v6326 = vunpack.c.l.b16 %v1739
    %v6327 = vunpack.c.h.b16 %v1739
    %v6328 = vunpack.c.l.b16 %v1740
    %v6329 = vunpack.c.h.b16 %v1740
    %v6330 = vunpack.c.l.b16 %v1741
    %v6331 = vunpack.c.h.b16 %v1741
    %v6332 = vunpack.c.l.b16 %v1742
    %v6333 = vunpack.c.h.b16 %v1742
    %v6334 = vunpack.c.l.b16 %v1743
    %v6335 = vunpack.c.h.b16 %v1743
    %v6336 = vunpack.c.l.b16 %v1744
    %v6337 = vunpack.c.h.b16 %v1744
    %v6338 = vunpack.c.l.b16 %v1745
    %v6339 = vunpack.c.h.b16 %v1745
    %v6340 = vunpack.c.l.b16 %v1746
    %v6341 = vunpack.c.h.b16 %v1746
    %v6342 = vunpack.c.l.b16 %v1747
    %v6343 = vunpack.c.h.b16 %v1747
    %v6344 = vunpack.c.l.b16 %v1748
    %v6345 = vunpack.c.h.b16 %v1748
    %v6346 = vunpack.c.l.b16 %v1749
    %v6347 = vunpack.c.h.b16 %v1749
    %v6348 = vunpack.c.l.b16 %v1750
    %v6349 = vunpack.c.h.b16 %v1750
    %v6350 = vunpack.c.l.b16 %v1751
    %v6351 = vunpack.c.h.b16 %v1751
    %v6352 = vunpack.c.l.b16 %v1752
    %v6353 = vunpack.c.h.b16 %v1752
    %v6354 = vunpack.c.l.b16 %v1753
    %v6355 = vunpack.c.h.b16 %v1753
    %v6356 = vunpack.c.l.b16 %v1754
    %v6357 = vunpack.c.h.b16 %v1754
    %v6358 = vunpack.c.l.b16 %v1755
    %v6359 = vunpack.c.h.b16 %v1755
    %v6360 = vunpack.c.l.b16 %v1756
    %v6361 = vunpack.c.h.b16 %v1756
    %v6362 = vunpack.c.l.b16 %v1757
    %v6363 = vunpack.c.h.b16 %v1757
    %v6364 = vunpack.c.l.b16 %v1758
    %v6365 = vunpack.c.h.b16 %v1758
    %v6366 = vunpack.c.l.b16 %v1759
    %v6367 = vunpack.c.h.b16 %v1759
    %v6368 = vunpack.c.l.b16 %v1760
    %v6369 = vunpack.c.h.b16 %v1760
    %v6370 = vunpack.c.l.b16 %v1761
    %v6371 = vunpack.c.h.b16 %v1761
    %v6372 = vunpack.c.l.b16 %v1762
    %v6373 = vunpack.c.h.b16 %v1762
    %v6374 = vunpack.c.l.b16 %v1763
    %v6375 = vunpack.c.h.b16 %v1763
    %v6376 = vunpack.c.l.b16 %v1764
    %v6377 = vunpack.c.h.b16 %v1764
    %v6378 = vunpack.c.l.b16 %v1765
    %v6379 = vunpack.c.h.b16 %v1765
    %v6380 = vunpack.c.l.b16 %v1766
    %v6381 = vunpack.c.h.b16 %v1766
    %v6382 = vunpack.c.l.b16 %v1767
    %v6383 = vunpack.c.h.b16 %v1767
    %v6384 = vunpack.c.l.b16 %v1768
    %v6385 = vunpack.c.h.b16 %v1768
    %v6386 = vunpack.c.l.b16 %v1769
    %v6387 = vunpack.c.h.b16 %v1769
    %v6388 = vunpack.c.l.b16 %v1770
    %v6389 = vunpack.c.h.b16 %v1770
    %v6390 = vunpack.c.l.b16 %v1771
    %v6391 = vunpack.c.h.b16 %v1771
    %v6392 = vunpack.c.l.b16 %v1772
    %v6393 = vunpack.c.h.b16 %v1772
    %v6394 = vunpack.c.l.b16 %v1773
    %v6395 = vunpack.c.h.b16 %v1773
    %v6396 = vunpack.c.l.b16 %v1774
    %v6397 = vunpack.c.h.b16 %v1774
    %v6398 = vunpack.c.l.b16 %v1775
    %v6399 = vunpack.c.h.b16 %v1775
    %v6400 = vunpack.c.l.b16 %v1776
    %v6401 = vunpack.c.h.b16 %v1776
    %v6402 = vunpack.c.l.b16 %v1777
    %v6403 = vunpack.c.h.b16 %v1777
    %v6404 = vunpack.c.l.b16 %v1778
    %v6405 = vunpack.c.h.b16 %v1778
    %v6406 = vunpack.c.l.b16 %v1779
    %v6407 = vunpack.c.h.b16 %v1779
    %v6408 = vunpack.c.l.b16 %v1780
    %v6409 = vunpack.c.h.b16 %v1780
    %v6410 = vunpack.c.l.b16 %v1781
    %v6411 = vunpack.c.h.b16 %v1781
    %v6412 = vunpack.c.l.b16 %v1782
    %v6413 = vunpack.c.h.b16 %v1782
    %v6414 = vunpack.c.l.b16 %v1783
    %v6415 = vunpack.c.h.b16 %v1783
    %v6416 = vunpack.c.l.b16 %v1784
    %v6417 = vunpack.c.h.b16 %v1784
    %v6418 = vunpack.c.l.b16 %v1785
    %v6419 = vunpack.c.h.b16 %v1785
    %v6420 = vunpack.c.l.b16 %v1786
    %v6421 = vunpack.c.h.b16 %v1786
    %v6422 = vunpack.c.l.b16 %v1787
    %v6423 = vunpack.c.h.b16 %v1787
    %v6424 = vunpack.c.l.b16 %v1788
    %v6425 = vunpack.c.h.b16 %v1788
    %v6426 = vunpack.c.l.b16 %v1789
    %v6427 = vunpack.c.h.b16 %v1789
    %v6428 = vunpack.c.l.b16 %v1790
    %v6429 = vunpack.c.h.b16 %v1790
    %v6430 = vunpack.c.l.b16 %v1791
    %v6431 = vunpack.c.h.b16 %v1791
    %v6432 = vunpack.c.l.b16 %v1792
    %v6433 = vunpack.c.h.b16 %v1792
    %v6434 = vunpack.c.l.b16 %v1793
    %v6435 = vunpack.c.h.b16 %v1793
    %v6436 = vunpack.c.l.b16 %v1794
    %v6437 = vunpack.c.h.b16 %v1794
    %v6438 = vunpack.c.l.b16 %v1795
    %v6439 = vunpack.c.h.b16 %v1795
    %v6440 = vunpack.c.l.b16 %v1796
    %v6441 = vunpack.c.h.b16 %v1796
    %v6442 = vunpack.c.l.b16 %v1797
    %v6443 = vunpack.c.h.b16 %v1797
    %v6444 = vunpack.c.l.b16 %v1798
    %v6445 = vunpack.c.h.b16 %v1798
    %v6446 = vunpack.c.l.b16 %v1799
    %v6447 = vunpack.c.h.b16 %v1799
    %v6448 = vunpack.c.l.b16 %v1800
    %v6449 = vunpack.c.h.b16 %v1800
    %v6450 = vunpack.c.l.b16 %v1801
    %v6451 = vunpack.c.h.b16 %v1801
    %v6452 = vpack.c.b16 %v3388, %v3380
    %v6453 = vpack.c.b16 %v3389, %v3381
    %v6454 = vpack.c.b16 %v3390, %v3382
    %v6455 = vpack.c.b16 %v3391, %v3383
    %v6456 = vpack.c.b16 %v3392, %v3384
    %v6457 = vpack.c.b16 %v3393, %v3385
    %v6458 = vpack.c.b16 %v3394, %v3386
    %v6459 = vpack.c.b16 %v3395, %v3387
    %v6460 = vpack.c.b16 %v3404, %v3396
    %v6461 = vpack.c.b16 %v3405, %v3397
    %v6462 = vpack.c.b16 %v3406, %v3398
    %v6463 = vpack.c.b16 %v3407, %v3399
    %v6464 = vpack.c.b16 %v3408, %v3400
    %v6465 = vpack.c.b16 %v3409, %v3401
    %v6466 = vpack.c.b16 %v3410, %v3402
    %v6467 = vpack.c.b16 %v3411, %v3403
    %v6468 = vpack.c.b16 %v3420, %v3412
    %v6469 = vpack.c.b16 %v3421, %v3413
    %v6470 = vpack.c.b16 %v3422, %v3414
    %v6471 = vpack.c.b16 %v3423, %v3415
    %v6472 = vpack.c.b16 %v3424, %v3416
    %v6473 = vpack.c.b16 %v3425, %v3417
    %v6474 = vpack.c.b16 %v3426, %v3418
    %v6475 = vpack.c.b16 %v3427, %v3419
    %v6476 = vpack.c.b16 %v3436, %v3428
    %v6477 = vpack.c.b16 %v3437, %v3429
    %v6478 = vpack.c.b16 %v3438, %v3430
    %v6479 = vpack.c.b16 %v3439, %v3431
    %v6480 = vpack.c.b16 %v3440, %v3432
    %v6481 = vpack.c.b16 %v3441, %v3433
    %v6482 = vpack.c.b16 %v3442, %v3434
    %v6483 = vpack.c.b16 %v3443, %v3435
    %v6484 = vpack.c.b16 %v3452, %v3444
    %v6485 = vpack.c.b16 %v3453, %v3445
    %v6486 = vpack.c.b16 %v3454, %v3446
    %v6487 = vpack.c.b16 %v3455, %v3447
    %v6488 = vpack.c.b16 %v3456, %v3448
    %v6489 = vpack.c.b16 %v3457, %v3449
    %v6490 = vpack.c.b16 %v3458, %v3450
    %v6491 = vpack.c.b16 %v3459, %v3451
    %v6492 = vpack.c.b16 %v3468, %v3460
    %v6493 = vpack.c.b16 %v3469, %v3461
    %v6494 = vpack.c.b16 %v3470, %v3462
    %v6495 = vpack.c.b16 %v3471, %v3463
    %v6496 = vpack.c.b16 %v3472, %v3464
    %v6497 = vpack.c.b16 %v3473, %v3465
    %v6498 = vpack.c.b16 %v3474, %v3466
    %v6499 = vpack.c.b16 %v3475, %v3467
    %v6500 = vpack.c.b16 %v3484, %v3476
    %v6501 = vpack.c.b16 %v3485, %v3477
    %v6502 = vpack.c.b16 %v3486, %v3478
    %v6503 = vpack.c.b16 %v3487, %v3479
    %v6504 = vpack.c.b16 %v3488, %v3480
    %v6505 = vpack.c.b16 %v3489, %v3481
    %v6506 = vpack.c.b16 %v3490, %v3482
    %v6507 = vpack.c.b16 %v3491, %v3483
    %v6508 = vpack.c.b16 %v3500, %v3492
    %v6509 = vpack.c.b16 %v3501, %v3493
    %v6510 = vpack.c.b16 %v3502, %v3494
    %v6511 = vpack.c.b16 %v3503, %v3495
    %v6512 = vpack.c.b16 %v3504, %v3496
    %v6513 = vpack.c.b16 %v3505, %v3497
    %v6514 = vpack.c.b16 %v3506, %v3498
    %v6515 = vpack.c.b16 %v3507, %v3499
    %v6516 = vpack.c.b16 %v3516, %v3508
    %v6517 = vpack.c.b16 %v3517, %v3509
    %v6518 = vpack.c.b16 %v3518, %v3510
    %v6519 = vpack.c.b16 %v3519, %v3511
    %v6520 = vpack.c.b16 %v3520, %v3512
    %v6521 = vpack.c.b16 %v3521, %v3513
    %v6522 = vpack.c.b16 %v3522, %v3514
    %v6523 = vpack.c.b16 %v3523, %v3515
    %v6524 = vpack.c.b16 %v3532, %v3524
    %v6525 = vpack.c.b16 %v3533, %v3525
    %v6526 = vpack.c.b16 %v3534, %v3526
    %v6527 = vpack.c.b16 %v3535, %v3527
    %v6528 = vpack.c.b16 %v3536, %v3528
    %v6529 = vpack.c.b16 %v3537, %v3529
    %v6530 = vpack.c.b16 %v3538, %v3530
    %v6531 = vpack.c.b16 %v3539, %v3531
    %v6532 = vpack.c.b16 %v3548, %v3540
    %v6533 = vpack.c.b16 %v3549, %v3541
    %v6534 = vpack.c.b16 %v3550, %v3542
    %v6535 = vpack.c.b16 %v3551, %v3543
    %v6536 = vpack.c.b16 %v3552, %v3544
    %v6537 = vpack.c.b16 %v3553, %v3545
    %v6538 = vpack.c.b16 %v3554, %v3546
    %v6539 = vpack.c.b16 %v3555, %v3547
    %v6540 = vpack.c.b16 %v3564, %v3556
    %v6541 = vpack.c.b16 %v3565, %v3557
    %v6542 = vpack.c.b16 %v3566, %v3558
    %v6543 = vpack.c.b16 %v3567, %v3559
    %v6544 = vpack.c.b16 %v3568, %v3560
    %v6545 = vpack.c.b16 %v3569, %v3561
    %v6546 = vpack.c.b16 %v3570, %v3562
    %v6547 = vpack.c.b16 %v3571, %v3563
    %v6548 = vpack.c.b16 %v3580, %v3572
    %v6549 = vpack.c.b16 %v3581, %v3573
    %v6550 = vpack.c.b16 %v3582, %v3574
    %v6551 = vpack.c.b16 %v3583, %v3575
    %v6552 = vpack.c.b16 %v3584, %v3576
    %v6553 = vpack.c.b16 %v3585, %v3577
    %v6554 = vpack.c.b16 %v3586, %v3578
    %v6555 = vpack.c.b16 %v3587, %v3579
    %v6556 = vpack.c.b16 %v3596, %v3588
    %v6557 = vpack.c.b16 %v3597, %v3589
    %v6558 = vpack.c.b16 %v3598, %v3590
    %v6559 = vpack.c.b16 %v3599, %v3591
    %v6560 = vpack.c.b16 %v3600, %v3592
    %v6561 = vpack.c.b16 %v3601, %v3593
    %v6562 = vpack.c.b16 %v3602, %v3594
    %v6563 = vpack.c.b16 %v3603, %v3595
    %v6564 = vpack.c.b16 %v3612, %v3604
    %v6565 = vpack.c.b16 %v3613, %v3605
    %v6566 = vpack.c.b16 %v3614, %v3606
    %v6567 = vpack.c.b16 %v3615, %v3607
    %v6568 = vpack.c.b16 %v3616, %v3608
    %v6569 = vpack.c.b16 %v3617, %v3609
    %v6570 = vpack.c.b16 %v3618, %v3610
    %v6571 = vpack.c.b16 %v3619, %v3611
    %v6572 = vpack.c.b16 %v3628, %v3620
    %v6573 = vpack.c.b16 %v3629, %v3621
    %v6574 = vpack.c.b16 %v3630, %v3622
    %v6575 = vpack.c.b16 %v3631, %v3623
    %v6576 = vpack.c.b16 %v3632, %v3624
    %v6577 = vpack.c.b16 %v3633, %v3625
    %v6578 = vpack.c.b16 %v3634, %v3626
    %v6579 = vpack.c.b16 %v3635, %v3627
    %v6580 = vpack.c.b16 %v3644, %v3636
    %v6581 = vpack.c.b16 %v3645, %v3637
    %v6582 = vpack.c.b16 %v3646, %v3638
    %v6583 = vpack.c.b16 %v3647, %v3639
    %v6584 = vpack.c.b16 %v3648, %v3640
    %v6585 = vpack.c.b16 %v3649, %v3641
    %v6586 = vpack.c.b16 %v3650, %v3642
    %v6587 = vpack.c.b16 %v3651, %v3643
    %v6588 = vpack.c.b16 %v3660, %v3652
    %v6589 = vpack.c.b16 %v3661, %v3653
    %v6590 = vpack.c.b16 %v3662, %v3654
    %v6591 = vpack.c.b16 %v3663, %v3655
    %v6592 = vpack.c.b16 %v3664, %v3656
    %v6593 = vpack.c.b16 %v3665, %v3657
    %v6594 = vpack.c.b16 %v3666, %v3658
    %v6595 = vpack.c.b16 %v3667, %v3659
    %v6596 = vpack.c.b16 %v3676, %v3668
    %v6597 = vpack.c.b16 %v3677, %v3669
    %v6598 = vpack.c.b16 %v3678, %v3670
    %v6599 = vpack.c.b16 %v3679, %v3671
    %v6600 = vpack.c.b16 %v3680, %v3672
    %v6601 = vpack.c.b16 %v3681, %v3673
    %v6602 = vpack.c.b16 %v3682, %v3674
    %v6603 = vpack.c.b16 %v3683, %v3675
    %v6604 = vpack.c.b16 %v3692, %v3684
    %v6605 = vpack.c.b16 %v3693, %v3685
    %v6606 = vpack.c.b16 %v3694, %v3686
    %v6607 = vpack.c.b16 %v3695, %v3687
    %v6608 = vpack.c.b16 %v3696, %v3688
    %v6609 = vpack.c.b16 %v3697, %v3689
    %v6610 = vpack.c.b16 %v3698, %v3690
    %v6611 = vpack.c.b16 %v3699, %v3691
    %v6612 = vpack.c.b16 %v3708, %v3700
    %v6613 = vpack.c.b16 %v3709, %v3701
    %v6614 = vpack.c.b16 %v3710, %v3702
    %v6615 = vpack.c.b16 %v3711, %v3703
    %v6616 = vpack.c.b16 %v3712, %v3704
    %v6617 = vpack.c.b16 %v3713, %v3705
    %v6618 = vpack.c.b16 %v3714, %v3706
    %v6619 = vpack.c.b16 %v3715, %v3707
    %v6620 = vpack.c.b16 %v3724, %v3716
    %v6621 = vpack.c.b16 %v3725, %v3717
    %v6622 = vpack.c.b16 %v3726, %v3718
    %v6623 = vpack.c.b16 %v3727, %v3719
    %v6624 = vpack.c.b16 %v3728, %v3720
    %v6625 = vpack.c.b16 %v3729, %v3721
    %v6626 = vpack.c.b16 %v3730, %v3722
    %v6627 = vpack.c.b16 %v3731, %v3723
    %v6628 = vpack.c.b16 %v3740, %v3732
    %v6629 = vpack.c.b16 %v3741, %v3733
    %v6630 = vpack.c.b16 %v3742, %v3734
    %v6631 = vpack.c.b16 %v3743, %v3735
    %v6632 = vpack.c.b16 %v3744, %v3736
    %v6633 = vpack.c.b16 %v3745, %v3737
    %v6634 = vpack.c.b16 %v3746, %v3738
    %v6635 = vpack.c.b16 %v3747, %v3739
    %v6636 = vpack.c.b16 %v3756, %v3748
    %v6637 = vpack.c.b16 %v3757, %v3749
    %v6638 = vpack.c.b16 %v3758, %v3750
    %v6639 = vpack.c.b16 %v3759, %v3751
    %v6640 = vpack.c.b16 %v3760, %v3752
    %v6641 = vpack.c.b16 %v3761, %v3753
    %v6642 = vpack.c.b16 %v3762, %v3754
    %v6643 = vpack.c.b16 %v3763, %v3755
    %v6644 = vpack.c.b16 %v3772, %v3764
    %v6645 = vpack.c.b16 %v3773, %v3765
    %v6646 = vpack.c.b16 %v3774, %v3766
    %v6647 = vpack.c.b16 %v3775, %v3767
    %v6648 = vpack.c.b16 %v3776, %v3768
    %v6649 = vpack.c.b16 %v3777, %v3769
    %v6650 = vpack.c.b16 %v3778, %v3770
    %v6651 = vpack.c.b16 %v3779, %v3771
    %v6652 = vpack.c.b16 %v3788, %v3780
    %v6653 = vpack.c.b16 %v3789, %v3781
    %v6654 = vpack.c.b16 %v3790, %v3782
    %v6655 = vpack.c.b16 %v3791, %v3783
    %v6656 = vpack.c.b16 %v3792, %v3784
    %v6657 = vpack.c.b16 %v3793, %v3785
    %v6658 = vpack.c.b16 %v3794, %v3786
    %v6659 = vpack.c.b16 %v3795, %v3787
    %v6660 = vpack.c.b16 %v3804, %v3796
    %v6661 = vpack.c.b16 %v3805, %v3797
    %v6662 = vpack.c.b16 %v3806, %v3798
    %v6663 = vpack.c.b16 %v3807, %v3799
    %v6664 = vpack.c.b16 %v3808, %v3800
    %v6665 = vpack.c.b16 %v3809, %v3801
    %v6666 = vpack.c.b16 %v3810, %v3802
    %v6667 = vpack.c.b16 %v3811, %v3803
    %v6668 = vpack.c.b16 %v3820, %v3812
    %v6669 = vpack.c.b16 %v3821, %v3813
    %v6670 = vpack.c.b16 %v3822, %v3814
    %v6671 = vpack.c.b16 %v3823, %v3815
    %v6672 = vpack.c.b16 %v3824, %v3816
    %v6673 = vpack.c.b16 %v3825, %v3817
    %v6674 = vpack.c.b16 %v3826, %v3818
    %v6675 = vpack.c.b16 %v3827, %v3819
    %v6676 = vpack.c.b16 %v3836, %v3828
    %v6677 = vpack.c.b16 %v3837, %v3829
    %v6678 = vpack.c.b16 %v3838, %v3830
    %v6679 = vpack.c.b16 %v3839, %v3831
    %v6680 = vpack.c.b16 %v3840, %v3832
    %v6681 = vpack.c.b16 %v3841, %v3833
    %v6682 = vpack.c.b16 %v3842, %v3834
    %v6683 = vpack.c.b16 %v3843, %v3835
    %v6684 = vpack.c.b16 %v3852, %v3844
    %v6685 = vpack.c.b16 %v3853, %v3845
    %v6686 = vpack.c.b16 %v3854, %v3846
    %v6687 = vpack.c.b16 %v3855, %v3847
    %v6688 = vpack.c.b16 %v3856, %v3848
    %v6689 = vpack.c.b16 %v3857, %v3849
    %v6690 = vpack.c.b16 %v3858, %v3850
    %v6691 = vpack.c.b16 %v3859, %v3851
    %v6692 = vpack.c.b16 %v3868, %v3860
    %v6693 = vpack.c.b16 %v3869, %v3861
    %v6694 = vpack.c.b16 %v3870, %v3862
    %v6695 = vpack.c.b16 %v3871, %v3863
    %v6696 = vpack.c.b16 %v3872, %v3864
    %v6697 = vpack.c.b16 %v3873, %v3865
    %v6698 = vpack.c.b16 %v3874, %v3866
    %v6699 = vpack.c.b16 %v3875, %v3867
    %v6700 = vpack.c.b16 %v3884, %v3876
    %v6701 = vpack.c.b16 %v3885, %v3877
    %v6702 = vpack.c.b16 %v3886, %v3878
    %v6703 = vpack.c.b16 %v3887, %v3879
    %v6704 = vpack.c.b16 %v3888, %v3880
    %v6705 = vpack.c.b16 %v3889, %v3881
    %v6706 = vpack.c.b16 %v3890, %v3882
    %v6707 = vpack.c.b16 %v3891, %v3883
    %v6708 = vpack.c.b16 %v3900, %v3892
    %v6709 = vpack.c.b16 %v3901, %v3893
    %v6710 = vpack.c.b16 %v3902, %v3894
    %v6711 = vpack.c.b16 %v3903, %v3895
    %v6712 = vpack.c.b16 %v3904, %v3896
    %v6713 = vpack.c.b16 %v3905, %v3897
    %v6714 = vpack.c.b16 %v3906, %v3898
    %v6715 = vpack.c.b16 %v3907, %v3899
    %v6716 = vpack.c.b16 %v3916, %v3908
    %v6717 = vpack.c.b16 %v3917, %v3909
    %v6718 = vpack.c.b16 %v3918, %v3910
    %v6719 = vpack.c.b16 %v3919, %v3911
    %v6720 = vpack.c.b16 %v3920, %v3912
    %v6721 = vpack.c.b16 %v3921, %v3913
    %v6722 = vpack.c.b16 %v3922, %v3914
    %v6723 = vpack.c.b16 %v3923, %v3915
    %v6724 = vpack.c.b16 %v3932, %v3924
    %v6725 = vpack.c.b16 %v3933, %v3925
    %v6726 = vpack.c.b16 %v3934, %v3926
    %v6727 = vpack.c.b16 %v3935, %v3927
    %v6728 = vpack.c.b16 %v3936, %v3928
    %v6729 = vpack.c.b16 %v3937, %v3929
    %v6730 = vpack.c.b16 %v3938, %v3930
    %v6731 = vpack.c.b16 %v3939, %v3931
    %v6732 = vpack.c.b16 %v3948, %v3940
    %v6733 = vpack.c.b16 %v3949, %v3941
    %v6734 = vpack.c.b16 %v3950, %v3942
    %v6735 = vpack.c.b16 %v3951, %v3943
    %v6736 = vpack.c.b16 %v3952, %v3944
    %v6737 = vpack.c.b16 %v3953, %v3945
    %v6738 = vpack.c.b16 %v3954, %v3946
    %v6739 = vpack.c.b16 %v3955, %v3947
    %v6740 = vpack.c.b16 %v3964, %v3956
    %v6741 = vpack.c.b16 %v3965, %v3957
    %v6742 = vpack.c.b16 %v3966, %v3958
    %v6743 = vpack.c.b16 %v3967, %v3959
    %v6744 = vpack.c.b16 %v3968, %v3960
    %v6745 = vpack.c.b16 %v3969, %v3961
    %v6746 = vpack.c.b16 %v3970, %v3962
    %v6747 = vpack.c.b16 %v3971, %v3963
    %v6748 = vpack.c.b16 %v3980, %v3972
    %v6749 = vpack.c.b16 %v3981, %v3973
    %v6750 = vpack.c.b16 %v3982, %v3974
    %v6751 = vpack.c.b16 %v3983, %v3975
    %v6752 = vpack.c.b16 %v3984, %v3976
    %v6753 = vpack.c.b16 %v3985, %v3977
    %v6754 = vpack.c.b16 %v3986, %v3978
    %v6755 = vpack.c.b16 %v3987, %v3979
    %v6756 = vpack.c.b16 %v3996, %v3988
    %v6757 = vpack.c.b16 %v3997, %v3989
    %v6758 = vpack.c.b16 %v3998, %v3990
    %v6759 = vpack.c.b16 %v3999, %v3991
    %v6760 = vpack.c.b16 %v4000, %v3992
    %v6761 = vpack.c.b16 %v4001, %v3993
    %v6762 = vpack.c.b16 %v4002, %v3994
    %v6763 = vpack.c.b16 %v4003, %v3995
    %v6764 = vpack.c.b16 %v4012, %v4004
    %v6765 = vpack.c.b16 %v4013, %v4005
    %v6766 = vpack.c.b16 %v4014, %v4006
    %v6767 = vpack.c.b16 %v4015, %v4007
    %v6768 = vpack.c.b16 %v4016, %v4008
    %v6769 = vpack.c.b16 %v4017, %v4009
    %v6770 = vpack.c.b16 %v4018, %v4010
    %v6771 = vpack.c.b16 %v4019, %v4011
    %v6772 = vpack.c.b16 %v4028, %v4020
    %v6773 = vpack.c.b16 %v4029, %v4021
    %v6774 = vpack.c.b16 %v4030, %v4022
    %v6775 = vpack.c.b16 %v4031, %v4023
    %v6776 = vpack.c.b16 %v4032, %v4024
    %v6777 = vpack.c.b16 %v4033, %v4025
    %v6778 = vpack.c.b16 %v4034, %v4026
    %v6779 = vpack.c.b16 %v4035, %v4027
    %v6780 = vpack.c.b16 %v4044, %v4036
    %v6781 = vpack.c.b16 %v4045, %v4037
    %v6782 = vpack.c.b16 %v4046, %v4038
    %v6783 = vpack.c.b16 %v4047, %v4039
    %v6784 = vpack.c.b16 %v4048, %v4040
    %v6785 = vpack.c.b16 %v4049, %v4041
    %v6786 = vpack.c.b16 %v4050, %v4042
    %v6787 = vpack.c.b16 %v4051, %v4043
    %v6788 = vpack.c.b16 %v4060, %v4052
    %v6789 = vpack.c.b16 %v4061, %v4053
    %v6790 = vpack.c.b16 %v4062, %v4054
    %v6791 = vpack.c.b16 %v4063, %v4055
    %v6792 = vpack.c.b16 %v4064, %v4056
    %v6793 = vpack.c.b16 %v4065, %v4057
    %v6794 = vpack.c.b16 %v4066, %v4058
    %v6795 = vpack.c.b16 %v4067, %v4059
    %v6796 = vpack.c.b16 %v4076, %v4068
    %v6797 = vpack.c.b16 %v4077, %v4069
    %v6798 = vpack.c.b16 %v4078, %v4070
    %v6799 = vpack.c.b16 %v4079, %v4071
    %v6800 = vpack.c.b16 %v4080, %v4072
    %v6801 = vpack.c.b16 %v4081, %v4073
    %v6802 = vpack.c.b16 %v4082, %v4074
    %v6803 = vpack.c.b16 %v4083, %v4075
    %v6804 = vpack.c.b16 %v4092, %v4084
    %v6805 = vpack.c.b16 %v4093, %v4085
    %v6806 = vpack.c.b16 %v4094, %v4086
    %v6807 = vpack.c.b16 %v4095, %v4087
    %v6808 = vpack.c.b16 %v4096, %v4088
    %v6809 = vpack.c.b16 %v4097, %v4089
    %v6810 = vpack.c.b16 %v4098, %v4090
    %v6811 = vpack.c.b16 %v4099, %v4091
    %v6812 = vpack.c.b16 %v4108, %v4100
    %v6813 = vpack.c.b16 %v4109, %v4101
    %v6814 = vpack.c.b16 %v4110, %v4102
    %v6815 = vpack.c.b16 %v4111, %v4103
    %v6816 = vpack.c.b16 %v4112, %v4104
    %v6817 = vpack.c.b16 %v4113, %v4105
    %v6818 = vpack.c.b16 %v4114, %v4106
    %v6819 = vpack.c.b16 %v4115, %v4107
    %v6820 = vpack.c.b16 %v4124, %v4116
    %v6821 = vpack.c.b16 %v4125, %v4117
    %v6822 = vpack.c.b16 %v4126, %v4118
    %v6823 = vpack.c.b16 %v4127, %v4119
    %v6824 = vpack.c.b16 %v4128, %v4120
    %v6825 = vpack.c.b16 %v4129, %v4121
    %v6826 = vpack.c.b16 %v4130, %v4122
    %v6827 = vpack.c.b16 %v4131, %v4123
    %v6828 = vpack.c.b16 %v4140, %v4132
    %v6829 = vpack.c.b16 %v4141, %v4133
    %v6830 = vpack.c.b16 %v4142, %v4134
    %v6831 = vpack.c.b16 %v4143, %v4135
    %v6832 = vpack.c.b16 %v4144, %v4136
    %v6833 = vpack.c.b16 %v4145, %v4137
    %v6834 = vpack.c.b16 %v4146, %v4138
    %v6835 = vpack.c.b16 %v4147, %v4139
    %v6836 = vpack.c.b16 %v4156, %v4148
    %v6837 = vpack.c.b16 %v4157, %v4149
    %v6838 = vpack.c.b16 %v4158, %v4150
    %v6839 = vpack.c.b16 %v4159, %v4151
    %v6840 = vpack.c.b16 %v4160, %v4152
    %v6841 = vpack.c.b16 %v4161, %v4153
    %v6842 = vpack.c.b16 %v4162, %v4154
    %v6843 = vpack.c.b16 %v4163, %v4155
    %v6844 = vpack.c.b16 %v4172, %v4164
    %v6845 = vpack.c.b16 %v4173, %v4165
    %v6846 = vpack.c.b16 %v4174, %v4166
    %v6847 = vpack.c.b16 %v4175, %v4167
    %v6848 = vpack.c.b16 %v4176, %v4168
    %v6849 = vpack.c.b16 %v4177, %v4169
    %v6850 = vpack.c.b16 %v4178, %v4170
    %v6851 = vpack.c.b16 %v4179, %v4171
    %v6852 = vpack.c.b16 %v4188, %v4180
    %v6853 = vpack.c.b16 %v4189, %v4181
    %v6854 = vpack.c.b16 %v4190, %v4182
    %v6855 = vpack.c.b16 %v4191, %v4183
    %v6856 = vpack.c.b16 %v4192, %v4184
    %v6857 = vpack.c.b16 %v4193, %v4185
    %v6858 = vpack.c.b16 %v4194, %v4186
    %v6859 = vpack.c.b16 %v4195, %v4187
    %v6860 = vpack.c.b16 %v4204, %v4196
    %v6861 = vpack.c.b16 %v4205, %v4197
    %v6862 = vpack.c.b16 %v4206, %v4198
    %v6863 = vpack.c.b16 %v4207, %v4199
    %v6864 = vpack.c.b16 %v4208, %v4200
    %v6865 = vpack.c.b16 %v4209, %v4201
    %v6866 = vpack.c.b16 %v4210, %v4202
    %v6867 = vpack.c.b16 %v4211, %v4203
    %v6868 = vpack.c.b16 %v4220, %v4212
    %v6869 = vpack.c.b16 %v4221, %v4213
    %v6870 = vpack.c.b16 %v4222, %v4214
    %v6871 = vpack.c.b16 %v4223, %v4215
    %v6872 = vpack.c.b16 %v4224, %v4216
    %v6873 = vpack.c.b16 %v4225, %v4217
    %v6874 = vpack.c.b16 %v4226, %v4218
    %v6875 = vpack.c.b16 %v4227, %v4219
    %v6876 = vpack.c.b16 %v4236, %v4228
    %v6877 = vpack.c.b16 %v4237, %v4229
    %v6878 = vpack.c.b16 %v4238, %v4230
    %v6879 = vpack.c.b16 %v4239, %v4231
    %v6880 = vpack.c.b16 %v4240, %v4232
    %v6881 = vpack.c.b16 %v4241, %v4233
    %v6882 = vpack.c.b16 %v4242, %v4234
    %v6883 = vpack.c.b16 %v4243, %v4235
    %v6884 = vpack.c.b16 %v4252, %v4244
    %v6885 = vpack.c.b16 %v4253, %v4245
    %v6886 = vpack.c.b16 %v4254, %v4246
    %v6887 = vpack.c.b16 %v4255, %v4247
    %v6888 = vpack.c.b16 %v4256, %v4248
    %v6889 = vpack.c.b16 %v4257, %v4249
    %v6890 = vpack.c.b16 %v4258, %v4250
    %v6891 = vpack.c.b16 %v4259, %v4251
    %v6892 = vpack.c.b16 %v4268, %v4260
    %v6893 = vpack.c.b16 %v4269, %v4261
    %v6894 = vpack.c.b16 %v4270, %v4262
    %v6895 = vpack.c.b16 %v4271, %v4263
    %v6896 = vpack.c.b16 %v4272, %v4264
    %v6897 = vpack.c.b16 %v4273, %v4265
    %v6898 = vpack.c.b16 %v4274, %v4266
    %v6899 = vpack.c.b16 %v4275, %v4267
    %v6900 = vpack.c.b16 %v4284, %v4276
    %v6901 = vpack.c.b16 %v4285, %v4277
    %v6902 = vpack.c.b16 %v4286, %v4278
    %v6903 = vpack.c.b16 %v4287, %v4279
    %v6904 = vpack.c.b16 %v4288, %v4280
    %v6905 = vpack.c.b16 %v4289, %v4281
    %v6906 = vpack.c.b16 %v4290, %v4282
    %v6907 = vpack.c.b16 %v4291, %v4283
    %v6908 = vpack.c.b16 %v4300, %v4292
    %v6909 = vpack.c.b16 %v4301, %v4293
    %v6910 = vpack.c.b16 %v4302, %v4294
    %v6911 = vpack.c.b16 %v4303, %v4295
    %v6912 = vpack.c.b16 %v4304, %v4296
    %v6913 = vpack.c.b16 %v4305, %v4297
    %v6914 = vpack.c.b16 %v4306, %v4298
    %v6915 = vpack.c.b16 %v4307, %v4299
    %v6916 = vpack.c.b16 %v4316, %v4308
    %v6917 = vpack.c.b16 %v4317, %v4309
    %v6918 = vpack.c.b16 %v4318, %v4310
    %v6919 = vpack.c.b16 %v4319, %v4311
    %v6920 = vpack.c.b16 %v4320, %v4312
    %v6921 = vpack.c.b16 %v4321, %v4313
    %v6922 = vpack.c.b16 %v4322, %v4314
    %v6923 = vpack.c.b16 %v4323, %v4315
    %v6924 = vpack.c.b16 %v4332, %v4324
    %v6925 = vpack.c.b16 %v4333, %v4325
    %v6926 = vpack.c.b16 %v4334, %v4326
    %v6927 = vpack.c.b16 %v4335, %v4327
    %v6928 = vpack.c.b16 %v4336, %v4328
    %v6929 = vpack.c.b16 %v4337, %v4329
    %v6930 = vpack.c.b16 %v4338, %v4330
    %v6931 = vpack.c.b16 %v4339, %v4331
    %v6932 = vpack.c.b16 %v4348, %v4340
    %v6933 = vpack.c.b16 %v4349, %v4341
    %v6934 = vpack.c.b16 %v4350, %v4342
    %v6935 = vpack.c.b16 %v4351, %v4343
    %v6936 = vpack.c.b16 %v4352, %v4344
    %v6937 = vpack.c.b16 %v4353, %v4345
    %v6938 = vpack.c.b16 %v4354, %v4346
    %v6939 = vpack.c.b16 %v4355, %v4347
    %v6940 = vpack.c.b16 %v4364, %v4356
    %v6941 = vpack.c.b16 %v4365, %v4357
    %v6942 = vpack.c.b16 %v4366, %v4358
    %v6943 = vpack.c.b16 %v4367, %v4359
    %v6944 = vpack.c.b16 %v4368, %v4360
    %v6945 = vpack.c.b16 %v4369, %v4361
    %v6946 = vpack.c.b16 %v4370, %v4362
    %v6947 = vpack.c.b16 %v4371, %v4363
    %v6948 = vpack.c.b16 %v4380, %v4372
    %v6949 = vpack.c.b16 %v4381, %v4373
    %v6950 = vpack.c.b16 %v4382, %v4374
    %v6951 = vpack.c.b16 %v4383, %v4375
    %v6952 = vpack.c.b16 %v4384, %v4376
    %v6953 = vpack.c.b16 %v4385, %v4377
    %v6954 = vpack.c.b16 %v4386, %v4378
    %v6955 = vpack.c.b16 %v4387, %v4379
    %v6956 = vpack.c.b16 %v4396, %v4388
    %v6957 = vpack.c.b16 %v4397, %v4389
    %v6958 = vpack.c.b16 %v4398, %v4390
    %v6959 = vpack.c.b16 %v4399, %v4391
    %v6960 = vpack.c.b16 %v4400, %v4392
    %v6961 = vpack.c.b16 %v4401, %v4393
    %v6962 = vpack.c.b16 %v4402, %v4394
    %v6963 = vpack.c.b16 %v4403, %v4395
    %v6964 = vpack.c.b16 %v4412, %v4404
    %v6965 = vpack.c.b16 %v4413, %v4405
    %v6966 = vpack.c.b16 %v4414, %v4406
    %v6967 = vpack.c.b16 %v4415, %v4407
    %v6968 = vpack.c.b16 %v4416, %v4408
    %v6969 = vpack.c.b16 %v4417, %v4409
    %v6970 = vpack.c.b16 %v4418, %v4410
    %v6971 = vpack.c.b16 %v4419, %v4411
    %v6972 = vpack.c.b16 %v4428, %v4420
    %v6973 = vpack.c.b16 %v4429, %v4421
    %v6974 = vpack.c.b16 %v4430, %v4422
    %v6975 = vpack.c.b16 %v4431, %v4423
    %v6976 = vpack.c.b16 %v4432, %v4424
    %v6977 = vpack.c.b16 %v4433, %v4425
    %v6978 = vpack.c.b16 %v4434, %v4426
    %v6979 = vpack.c.b16 %v4435, %v4427
    %v6980 = vpack.c.b16 %v4444, %v4436
    %v6981 = vpack.c.b16 %v4445, %v4437
    %v6982 = vpack.c.b16 %v4446, %v4438
    %v6983 = vpack.c.b16 %v4447, %v4439
    %v6984 = vpack.c.b16 %v4448, %v4440
    %v6985 = vpack.c.b16 %v4449, %v4441
    %v6986 = vpack.c.b16 %v4450, %v4442
    %v6987 = vpack.c.b16 %v4451, %v4443
    %v6988 = vpack.c.b16 %v4460, %v4452
    %v6989 = vpack.c.b16 %v4461, %v4453
    %v6990 = vpack.c.b16 %v4462, %v4454
    %v6991 = vpack.c.b16 %v4463, %v4455
    %v6992 = vpack.c.b16 %v4464, %v4456
    %v6993 = vpack.c.b16 %v4465, %v4457
    %v6994 = vpack.c.b16 %v4466, %v4458
    %v6995 = vpack.c.b16 %v4467, %v4459
    %v6996 = vpack.c.b16 %v4476, %v4468
    %v6997 = vpack.c.b16 %v4477, %v4469
    %v6998 = vpack.c.b16 %v4478, %v4470
    %v6999 = vpack.c.b16 %v4479, %v4471
    %v7000 = vpack.c.b16 %v4480, %v4472
    %v7001 = vpack.c.b16 %v4481, %v4473
    %v7002 = vpack.c.b16 %v4482, %v4474
    %v7003 = vpack.c.b16 %v4483, %v4475
    %v7004 = vpack.c.b16 %v4492, %v4484
    %v7005 = vpack.c.b16 %v4493, %v4485
    %v7006 = vpack.c.b16 %v4494, %v4486
    %v7007 = vpack.c.b16 %v4495, %v4487
    %v7008 = vpack.c.b16 %v4496, %v4488
    %v7009 = vpack.c.b16 %v4497, %v4489
    %v7010 = vpack.c.b16 %v4498, %v4490
    %v7011 = vpack.c.b16 %v4499, %v4491
    %v7012 = vpack.c.b16 %v4508, %v4500
    %v7013 = vpack.c.b16 %v4509, %v4501
    %v7014 = vpack.c.b16 %v4510, %v4502
    %v7015 = vpack.c.b16 %v4511, %v4503
    %v7016 = vpack.c.b16 %v4512, %v4504
    %v7017 = vpack.c.b16 %v4513, %v4505
    %v7018 = vpack.c.b16 %v4514, %v4506
    %v7019 = vpack.c.b16 %v4515, %v4507
    %v7020 = vpack.c.b16 %v4524, %v4516
    %v7021 = vpack.c.b16 %v4525, %v4517
    %v7022 = vpack.c.b16 %v4526, %v4518
    %v7023 = vpack.c.b16 %v4527, %v4519
    %v7024 = vpack.c.b16 %v4528, %v4520
    %v7025 = vpack.c.b16 %v4529, %v4521
    %v7026 = vpack.c.b16 %v4530, %v4522
    %v7027 = vpack.c.b16 %v4531, %v4523
    %v7028 = vpack.c.b16 %v4540, %v4532
    %v7029 = vpack.c.b16 %v4541, %v4533
    %v7030 = vpack.c.b16 %v4542, %v4534
    %v7031 = vpack.c.b16 %v4543, %v4535
    %v7032 = vpack.c.b16 %v4544, %v4536
    %v7033 = vpack.c.b16 %v4545, %v4537
    %v7034 = vpack.c.b16 %v4546, %v4538
    %v7035 = vpack.c.b16 %v4547, %v4539
    %v7036 = vpack.c.b16 %v4556, %v4548
    %v7037 = vpack.c.b16 %v4557, %v4549
    %v7038 = vpack.c.b16 %v4558, %v4550
    %v7039 = vpack.c.b16 %v4559, %v4551
    %v7040 = vpack.c.b16 %v4560, %v4552
    %v7041 = vpack.c.b16 %v4561, %v4553
    %v7042 = vpack.c.b16 %v4562, %v4554
    %v7043 = vpack.c.b16 %v4563, %v4555
    %v7044 = vpack.c.b16 %v4572, %v4564
    %v7045 = vpack.c.b16 %v4573, %v4565
    %v7046 = vpack.c.b16 %v4574, %v4566
    %v7047 = vpack.c.b16 %v4575, %v4567
    %v7048 = vpack.c.b16 %v4576, %v4568
    %v7049 = vpack.c.b16 %v4577, %v4569
    %v7050 = vpack.c.b16 %v4578, %v4570
    %v7051 = vpack.c.b16 %v4579, %v4571
    %v7052 = vpack.c.b16 %v4588, %v4580
    %v7053 = vpack.c.b16 %v4589, %v4581
    %v7054 = vpack.c.b16 %v4590, %v4582
    %v7055 = vpack.c.b16 %v4591, %v4583
    %v7056 = vpack.c.b16 %v4592, %v4584
    %v7057 = vpack.c.b16 %v4593, %v4585
    %v7058 = vpack.c.b16 %v4594, %v4586
    %v7059 = vpack.c.b16 %v4595, %v4587
    %v7060 = vpack.c.b16 %v4604, %v4596
    %v7061 = vpack.c.b16 %v4605, %v4597
    %v7062 = vpack.c.b16 %v4606, %v4598
    %v7063 = vpack.c.b16 %v4607, %v4599
    %v7064 = vpack.c.b16 %v4608, %v4600
    %v7065 = vpack.c.b16 %v4609, %v4601
    %v7066 = vpack.c.b16 %v4610, %v4602
    %v7067 = vpack.c.b16 %v4611, %v4603
    %v7068 = vpack.c.b16 %v4620, %v4612
    %v7069 = vpack.c.b16 %v4621, %v4613
    %v7070 = vpack.c.b16 %v4622, %v4614
    %v7071 = vpack.c.b16 %v4623, %v4615
    %v7072 = vpack.c.b16 %v4624, %v4616
    %v7073 = vpack.c.b16 %v4625, %v4617
    %v7074 = vpack.c.b16 %v4626, %v4618
    %v7075 = vpack.c.b16 %v4627, %v4619
    %v7076 = vpack.c.b16 %v4636, %v4628
    %v7077 = vpack.c.b16 %v4637, %v4629
    %v7078 = vpack.c.b16 %v4638, %v4630
    %v7079 = vpack.c.b16 %v4639, %v4631
    %v7080 = vpack.c.b16 %v4640, %v4632
    %v7081 = vpack.c.b16 %v4641, %v4633
    %v7082 = vpack.c.b16 %v4642, %v4634
    %v7083 = vpack.c.b16 %v4643, %v4635
    %v7084 = vpack.c.b16 %v4652, %v4644
    %v7085 = vpack.c.b16 %v4653, %v4645
    %v7086 = vpack.c.b16 %v4654, %v4646
    %v7087 = vpack.c.b16 %v4655, %v4647
    %v7088 = vpack.c.b16 %v4656, %v4648
    %v7089 = vpack.c.b16 %v4657, %v4649
    %v7090 = vpack.c.b16 %v4658, %v4650
    %v7091 = vpack.c.b16 %v4659, %v4651
    %v7092 = vpack.c.b16 %v4668, %v4660
    %v7093 = vpack.c.b16 %v4669, %v4661
    %v7094 = vpack.c.b16 %v4670, %v4662
    %v7095 = vpack.c.b16 %v4671, %v4663
    %v7096 = vpack.c.b16 %v4672, %v4664
    %v7097 = vpack.c.b16 %v4673, %v4665
    %v7098 = vpack.c.b16 %v4674, %v4666
    %v7099 = vpack.c.b16 %v4675, %v4667
    %v7100 = vpack.c.b16 %v4684, %v4676
    %v7101 = vpack.c.b16 %v4685, %v4677
    %v7102 = vpack.c.b16 %v4686, %v4678
    %v7103 = vpack.c.b16 %v4687, %v4679
    %v7104 = vpack.c.b16 %v4688, %v4680
    %v7105 = vpack.c.b16 %v4689, %v4681
    %v7106 = vpack.c.b16 %v4690, %v4682
    %v7107 = vpack.c.b16 %v4691, %v4683
    %v7108 = vpack.c.b16 %v4700, %v4692
    %v7109 = vpack.c.b16 %v4701, %v4693
    %v7110 = vpack.c.b16 %v4702, %v4694
    %v7111 = vpack.c.b16 %v4703, %v4695
    %v7112 = vpack.c.b16 %v4704, %v4696
    %v7113 = vpack.c.b16 %v4705, %v4697
    %v7114 = vpack.c.b16 %v4706, %v4698
    %v7115 = vpack.c.b16 %v4707, %v4699
    %v7116 = vpack.c.b16 %v4716, %v4708
    %v7117 = vpack.c.b16 %v4717, %v4709
    %v7118 = vpack.c.b16 %v4718, %v4710
    %v7119 = vpack.c.b16 %v4719, %v4711
    %v7120 = vpack.c.b16 %v4720, %v4712
    %v7121 = vpack.c.b16 %v4721, %v4713
    %v7122 = vpack.c.b16 %v4722, %v4714
    %v7123 = vpack.c.b16 %v4723, %v4715
    %v7124 = vpack.c.b16 %v4732, %v4724
    %v7125 = vpack.c.b16 %v4733, %v4725
    %v7126 = vpack.c.b16 %v4734, %v4726
    %v7127 = vpack.c.b16 %v4735, %v4727
    %v7128 = vpack.c.b16 %v4736, %v4728
    %v7129 = vpack.c.b16 %v4737, %v4729
    %v7130 = vpack.c.b16 %v4738, %v4730
    %v7131 = vpack.c.b16 %v4739, %v4731
    %v7132 = vpack.c.b16 %v4748, %v4740
    %v7133 = vpack.c.b16 %v4749, %v4741
    %v7134 = vpack.c.b16 %v4750, %v4742
    %v7135 = vpack.c.b16 %v4751, %v4743
    %v7136 = vpack.c.b16 %v4752, %v4744
    %v7137 = vpack.c.b16 %v4753, %v4745
    %v7138 = vpack.c.b16 %v4754, %v4746
    %v7139 = vpack.c.b16 %v4755, %v4747
    %v7140 = vpack.c.b16 %v4764, %v4756
    %v7141 = vpack.c.b16 %v4765, %v4757
    %v7142 = vpack.c.b16 %v4766, %v4758
    %v7143 = vpack.c.b16 %v4767, %v4759
    %v7144 = vpack.c.b16 %v4768, %v4760
    %v7145 = vpack.c.b16 %v4769, %v4761
    %v7146 = vpack.c.b16 %v4770, %v4762
    %v7147 = vpack.c.b16 %v4771, %v4763
    %v7148 = vpack.c.b16 %v4780, %v4772
    %v7149 = vpack.c.b16 %v4781, %v4773
    %v7150 = vpack.c.b16 %v4782, %v4774
    %v7151 = vpack.c.b16 %v4783, %v4775
    %v7152 = vpack.c.b16 %v4784, %v4776
    %v7153 = vpack.c.b16 %v4785, %v4777
    %v7154 = vpack.c.b16 %v4786, %v4778
    %v7155 = vpack.c.b16 %v4787, %v4779
    %v7156 = vpack.c.b16 %v4796, %v4788
    %v7157 = vpack.c.b16 %v4797, %v4789
    %v7158 = vpack.c.b16 %v4798, %v4790
    %v7159 = vpack.c.b16 %v4799, %v4791
    %v7160 = vpack.c.b16 %v4800, %v4792
    %v7161 = vpack.c.b16 %v4801, %v4793
    %v7162 = vpack.c.b16 %v4802, %v4794
    %v7163 = vpack.c.b16 %v4803, %v4795
    %v7164 = vpack.c.b16 %v4812, %v4804
    %v7165 = vpack.c.b16 %v4813, %v4805
    %v7166 = vpack.c.b16 %v4814, %v4806
    %v7167 = vpack.c.b16 %v4815, %v4807
    %v7168 = vpack.c.b16 %v4816, %v4808
    %v7169 = vpack.c.b16 %v4817, %v4809
    %v7170 = vpack.c.b16 %v4818, %v4810
    %v7171 = vpack.c.b16 %v4819, %v4811
    %v7172 = vpack.c.b16 %v4828, %v4820
    %v7173 = vpack.c.b16 %v4829, %v4821
    %v7174 = vpack.c.b16 %v4830, %v4822
    %v7175 = vpack.c.b16 %v4831, %v4823
    %v7176 = vpack.c.b16 %v4832, %v4824
    %v7177 = vpack.c.b16 %v4833, %v4825
    %v7178 = vpack.c.b16 %v4834, %v4826
    %v7179 = vpack.c.b16 %v4835, %v4827
    %v7180 = vpack.c.b16 %v4844, %v4836
    %v7181 = vpack.c.b16 %v4845, %v4837
    %v7182 = vpack.c.b16 %v4846, %v4838
    %v7183 = vpack.c.b16 %v4847, %v4839
    %v7184 = vpack.c.b16 %v4848, %v4840
    %v7185 = vpack.c.b16 %v4849, %v4841
    %v7186 = vpack.c.b16 %v4850, %v4842
    %v7187 = vpack.c.b16 %v4851, %v4843
    %v7188 = vpack.c.b16 %v4860, %v4852
    %v7189 = vpack.c.b16 %v4861, %v4853
    %v7190 = vpack.c.b16 %v4862, %v4854
    %v7191 = vpack.c.b16 %v4863, %v4855
    %v7192 = vpack.c.b16 %v4864, %v4856
    %v7193 = vpack.c.b16 %v4865, %v4857
    %v7194 = vpack.c.b16 %v4866, %v4858
    %v7195 = vpack.c.b16 %v4867, %v4859
    %v7196 = vpack.c.b16 %v4876, %v4868
    %v7197 = vpack.c.b16 %v4877, %v4869
    %v7198 = vpack.c.b16 %v4878, %v4870
    %v7199 = vpack.c.b16 %v4879, %v4871
    %v7200 = vpack.c.b16 %v4880, %v4872
    %v7201 = vpack.c.b16 %v4881, %v4873
    %v7202 = vpack.c.b16 %v4882, %v4874
    %v7203 = vpack.c.b16 %v4883, %v4875
    %v7204 = vpack.c.b16 %v4892, %v4884
    %v7205 = vpack.c.b16 %v4893, %v4885
    %v7206 = vpack.c.b16 %v4894, %v4886
    %v7207 = vpack.c.b16 %v4895, %v4887
    %v7208 = vpack.c.b16 %v4896, %v4888
    %v7209 = vpack.c.b16 %v4897, %v4889
    %v7210 = vpack.c.b16 %v4898, %v4890
    %v7211 = vpack.c.b16 %v4899, %v4891
    %v7212 = vpack.c.b16 %v4908, %v4900
    %v7213 = vpack.c.b16 %v4909, %v4901
    %v7214 = vpack.c.b16 %v4910, %v4902
    %v7215 = vpack.c.b16 %v4911, %v4903
    %v7216 = vpack.c.b16 %v4912, %v4904
    %v7217 = vpack.c.b16 %v4913, %v4905
    %v7218 = vpack.c.b16 %v4914, %v4906
    %v7219 = vpack.c.b16 %v4915, %v4907
    %v7220 = vpack.c.b16 %v4924, %v4916
    %v7221 = vpack.c.b16 %v4925, %v4917
    %v7222 = vpack.c.b16 %v4926, %v4918
    %v7223 = vpack.c.b16 %v4927, %v4919
    %v7224 = vpack.c.b16 %v4928, %v4920
    %v7225 = vpack.c.b16 %v4929, %v4921
    %v7226 = vpack.c.b16 %v4930, %v4922
    %v7227 = vpack.c.b16 %v4931, %v4923
    %v7228 = vpack.c.b16 %v4940, %v4932
    %v7229 = vpack.c.b16 %v4941, %v4933
    %v7230 = vpack.c.b16 %v4942, %v4934
    %v7231 = vpack.c.b16 %v4943, %v4935
    %v7232 = vpack.c.b16 %v4944, %v4936
    %v7233 = vpack.c.b16 %v4945, %v4937
    %v7234 = vpack.c.b16 %v4946, %v4938
    %v7235 = vpack.c.b16 %v4947, %v4939
    %v7236 = vpack.c.b16 %v4956, %v4948
    %v7237 = vpack.c.b16 %v4957, %v4949
    %v7238 = vpack.c.b16 %v4958, %v4950
    %v7239 = vpack.c.b16 %v4959, %v4951
    %v7240 = vpack.c.b16 %v4960, %v4952
    %v7241 = vpack.c.b16 %v4961, %v4953
    %v7242 = vpack.c.b16 %v4962, %v4954
    %v7243 = vpack.c.b16 %v4963, %v4955
    %v7244 = vpack.c.b16 %v4972, %v4964
    %v7245 = vpack.c.b16 %v4973, %v4965
    %v7246 = vpack.c.b16 %v4974, %v4966
    %v7247 = vpack.c.b16 %v4975, %v4967
    %v7248 = vpack.c.b16 %v4976, %v4968
    %v7249 = vpack.c.b16 %v4977, %v4969
    %v7250 = vpack.c.b16 %v4978, %v4970
    %v7251 = vpack.c.b16 %v4979, %v4971
    %v7252 = vpack.c.b16 %v4988, %v4980
    %v7253 = vpack.c.b16 %v4989, %v4981
    %v7254 = vpack.c.b16 %v4990, %v4982
    %v7255 = vpack.c.b16 %v4991, %v4983
    %v7256 = vpack.c.b16 %v4992, %v4984
    %v7257 = vpack.c.b16 %v4993, %v4985
    %v7258 = vpack.c.b16 %v4994, %v4986
    %v7259 = vpack.c.b16 %v4995, %v4987
    %v7260 = vpack.c.b16 %v5004, %v4996
    %v7261 = vpack.c.b16 %v5005, %v4997
    %v7262 = vpack.c.b16 %v5006, %v4998
    %v7263 = vpack.c.b16 %v5007, %v4999
    %v7264 = vpack.c.b16 %v5008, %v5000
    %v7265 = vpack.c.b16 %v5009, %v5001
    %v7266 = vpack.c.b16 %v5010, %v5002
    %v7267 = vpack.c.b16 %v5011, %v5003
    %v7268 = vpack.c.b16 %v5020, %v5012
    %v7269 = vpack.c.b16 %v5021, %v5013
    %v7270 = vpack.c.b16 %v5022, %v5014
    %v7271 = vpack.c.b16 %v5023, %v5015
    %v7272 = vpack.c.b16 %v5024, %v5016
    %v7273 = vpack.c.b16 %v5025, %v5017
    %v7274 = vpack.c.b16 %v5026, %v5018
    %v7275 = vpack.c.b16 %v5027, %v5019
    %v7276 = vpack.c.b16 %v5036, %v5028
    %v7277 = vpack.c.b16 %v5037, %v5029
    %v7278 = vpack.c.b16 %v5038, %v5030
    %v7279 = vpack.c.b16 %v5039, %v5031
    %v7280 = vpack.c.b16 %v5040, %v5032
    %v7281 = vpack.c.b16 %v5041, %v5033
    %v7282 = vpack.c.b16 %v5042, %v5034
    %v7283 = vpack.c.b16 %v5043, %v5035
    %v7284 = vpack.c.b16 %v5052, %v5044
    %v7285 = vpack.c.b16 %v5053, %v5045
    %v7286 = vpack.c.b16 %v5054, %v5046
    %v7287 = vpack.c.b16 %v5055, %v5047
    %v7288 = vpack.c.b16 %v5056, %v5048
    %v7289 = vpack.c.b16 %v5057, %v5049
    %v7290 = vpack.c.b16 %v5058, %v5050
    %v7291 = vpack.c.b16 %v5059, %v5051
    %v7292 = vpack.c.b16 %v5068, %v5060
    %v7293 = vpack.c.b16 %v5069, %v5061
    %v7294 = vpack.c.b16 %v5070, %v5062
    %v7295 = vpack.c.b16 %v5071, %v5063
    %v7296 = vpack.c.b16 %v5072, %v5064
    %v7297 = vpack.c.b16 %v5073, %v5065
    %v7298 = vpack.c.b16 %v5074, %v5066
    %v7299 = vpack.c.b16 %v5075, %v5067
    %v7300 = vpack.c.b16 %v5084, %v5076
    %v7301 = vpack.c.b16 %v5085, %v5077
    %v7302 = vpack.c.b16 %v5086, %v5078
    %v7303 = vpack.c.b16 %v5087, %v5079
    %v7304 = vpack.c.b16 %v5088, %v5080
    %v7305 = vpack.c.b16 %v5089, %v5081
    %v7306 = vpack.c.b16 %v5090, %v5082
    %v7307 = vpack.c.b16 %v5091, %v5083
    %v7308 = vpack.c.b16 %v5100, %v5092
    %v7309 = vpack.c.b16 %v5101, %v5093
    %v7310 = vpack.c.b16 %v5102, %v5094
    %v7311 = vpack.c.b16 %v5103, %v5095
    %v7312 = vpack.c.b16 %v5104, %v5096
    %v7313 = vpack.c.b16 %v5105, %v5097
    %v7314 = vpack.c.b16 %v5106, %v5098
    %v7315 = vpack.c.b16 %v5107, %v5099
    %v7316 = vpack.c.b16 %v5116, %v5108
    %v7317 = vpack.c.b16 %v5117, %v5109
    %v7318 = vpack.c.b16 %v5118, %v5110
    %v7319 = vpack.c.b16 %v5119, %v5111
    %v7320 = vpack.c.b16 %v5120, %v5112
    %v7321 = vpack.c.b16 %v5121, %v5113
    %v7322 = vpack.c.b16 %v5122, %v5114
    %v7323 = vpack.c.b16 %v5123, %v5115
    %v7324 = vpack.c.b16 %v5132, %v5124
    %v7325 = vpack.c.b16 %v5133, %v5125
    %v7326 = vpack.c.b16 %v5134, %v5126
    %v7327 = vpack.c.b16 %v5135, %v5127
    %v7328 = vpack.c.b16 %v5136, %v5128
    %v7329 = vpack.c.b16 %v5137, %v5129
    %v7330 = vpack.c.b16 %v5138, %v5130
    %v7331 = vpack.c.b16 %v5139, %v5131
    %v7332 = vpack.c.b16 %v5148, %v5140
    %v7333 = vpack.c.b16 %v5149, %v5141
    %v7334 = vpack.c.b16 %v5150, %v5142
    %v7335 = vpack.c.b16 %v5151, %v5143
    %v7336 = vpack.c.b16 %v5152, %v5144
    %v7337 = vpack.c.b16 %v5153, %v5145
    %v7338 = vpack.c.b16 %v5154, %v5146
    %v7339 = vpack.c.b16 %v5155, %v5147
    %v7340 = vpack.c.b16 %v5164, %v5156
    %v7341 = vpack.c.b16 %v5165, %v5157
    %v7342 = vpack.c.b16 %v5166, %v5158
    %v7343 = vpack.c.b16 %v5167, %v5159
    %v7344 = vpack.c.b16 %v5168, %v5160
    %v7345 = vpack.c.b16 %v5169, %v5161
    %v7346 = vpack.c.b16 %v5170, %v5162
    %v7347 = vpack.c.b16 %v5171, %v5163
    %v7348 = vpack.c.b16 %v5180, %v5172
    %v7349 = vpack.c.b16 %v5181, %v5173
    %v7350 = vpack.c.b16 %v5182, %v5174
    %v7351 = vpack.c.b16 %v5183, %v5175
    %v7352 = vpack.c.b16 %v5184, %v5176
    %v7353 = vpack.c.b16 %v5185, %v5177
    %v7354 = vpack.c.b16 %v5186, %v5178
    %v7355 = vpack.c.b16 %v5187, %v5179
    %v7356 = vpack.c.b16 %v5196, %v5188
    %v7357 = vpack.c.b16 %v5197, %v5189
    %v7358 = vpack.c.b16 %v5198, %v5190
    %v7359 = vpack.c.b16 %v5199, %v5191
    %v7360 = vpack.c.b16 %v5200, %v5192
    %v7361 = vpack.c.b16 %v5201, %v5193
    %v7362 = vpack.c.b16 %v5202, %v5194
    %v7363 = vpack.c.b16 %v5203, %v5195
    %v7364 = vpack.c.b16 %v5212, %v5204
    %v7365 = vpack.c.b16 %v5213, %v5205
    %v7366 = vpack.c.b16 %v5214, %v5206
    %v7367 = vpack.c.b16 %v5215, %v5207
    %v7368 = vpack.c.b16 %v5216, %v5208
    %v7369 = vpack.c.b16 %v5217, %v5209
    %v7370 = vpack.c.b16 %v5218, %v5210
    %v7371 = vpack.c.b16 %v5219, %v5211
    %v7372 = vpack.c.b16 %v5228, %v5220
    %v7373 = vpack.c.b16 %v5229, %v5221
    %v7374 = vpack.c.b16 %v5230, %v5222
    %v7375 = vpack.c.b16 %v5231, %v5223
    %v7376 = vpack.c.b16 %v5232, %v5224
    %v7377 = vpack.c.b16 %v5233, %v5225
    %v7378 = vpack.c.b16 %v5234, %v5226
    %v7379 = vpack.c.b16 %v5235, %v5227
    %v7380 = vpack.c.b16 %v5244, %v5236
    %v7381 = vpack.c.b16 %v5245, %v5237
    %v7382 = vpack.c.b16 %v5246, %v5238
    %v7383 = vpack.c.b16 %v5247, %v5239
    %v7384 = vpack.c.b16 %v5248, %v5240
    %v7385 = vpack.c.b16 %v5249, %v5241
    %v7386 = vpack.c.b16 %v5250, %v5242
    %v7387 = vpack.c.b16 %v5251, %v5243
    %v7388 = vpack.c.b16 %v5260, %v5252
    %v7389 = vpack.c.b16 %v5261, %v5253
    %v7390 = vpack.c.b16 %v5262, %v5254
    %v7391 = vpack.c.b16 %v5263, %v5255
    %v7392 = vpack.c.b16 %v5264, %v5256
    %v7393 = vpack.c.b16 %v5265, %v5257
    %v7394 = vpack.c.b16 %v5266, %v5258
    %v7395 = vpack.c.b16 %v5267, %v5259
    %v7396 = vpack.c.b16 %v5276, %v5268
    %v7397 = vpack.c.b16 %v5277, %v5269
    %v7398 = vpack.c.b16 %v5278, %v5270
    %v7399 = vpack.c.b16 %v5279, %v5271
    %v7400 = vpack.c.b16 %v5280, %v5272
    %v7401 = vpack.c.b16 %v5281, %v5273
    %v7402 = vpack.c.b16 %v5282, %v5274
    %v7403 = vpack.c.b16 %v5283, %v5275
    %v7404 = vpack.c.b16 %v5292, %v5284
    %v7405 = vpack.c.b16 %v5293, %v5285
    %v7406 = vpack.c.b16 %v5294, %v5286
    %v7407 = vpack.c.b16 %v5295, %v5287
    %v7408 = vpack.c.b16 %v5296, %v5288
    %v7409 = vpack.c.b16 %v5297, %v5289
    %v7410 = vpack.c.b16 %v5298, %v5290
    %v7411 = vpack.c.b16 %v5299, %v5291
    %v7412 = vpack.c.b16 %v5308, %v5300
    %v7413 = vpack.c.b16 %v5309, %v5301
    %v7414 = vpack.c.b16 %v5310, %v5302
    %v7415 = vpack.c.b16 %v5311, %v5303
    %v7416 = vpack.c.b16 %v5312, %v5304
    %v7417 = vpack.c.b16 %v5313, %v5305
    %v7418 = vpack.c.b16 %v5314, %v5306
    %v7419 = vpack.c.b16 %v5315, %v5307
    %v7420 = vpack.c.b16 %v5324, %v5316
    %v7421 = vpack.c.b16 %v5325, %v5317
    %v7422 = vpack.c.b16 %v5326, %v5318
    %v7423 = vpack.c.b16 %v5327, %v5319
    %v7424 = vpack.c.b16 %v5328, %v5320
    %v7425 = vpack.c.b16 %v5329, %v5321
    %v7426 = vpack.c.b16 %v5330, %v5322
    %v7427 = vpack.c.b16 %v5331, %v5323
    %v7428 = vpack.c.b16 %v5340, %v5332
    %v7429 = vpack.c.b16 %v5341, %v5333
    %v7430 = vpack.c.b16 %v5342, %v5334
    %v7431 = vpack.c.b16 %v5343, %v5335
    %v7432 = vpack.c.b16 %v5344, %v5336
    %v7433 = vpack.c.b16 %v5345, %v5337
    %v7434 = vpack.c.b16 %v5346, %v5338
    %v7435 = vpack.c.b16 %v5347, %v5339
    %v7436 = vpack.c.b16 %v5356, %v5348
    %v7437 = vpack.c.b16 %v5357, %v5349
    %v7438 = vpack.c.b16 %v5358, %v5350
    %v7439 = vpack.c.b16 %v5359, %v5351
    %v7440 = vpack.c.b16 %v5360, %v5352
    %v7441 = vpack.c.b16 %v5361, %v5353
    %v7442 = vpack.c.b16 %v5362, %v5354
    %v7443 = vpack.c.b16 %v5363, %v5355
    %v7444 = vpack.c.b16 %v5372, %v5364
    %v7445 = vpack.c.b16 %v5373, %v5365
    %v7446 = vpack.c.b16 %v5374, %v5366
    %v7447 = vpack.c.b16 %v5375, %v5367
    %v7448 = vpack.c.b16 %v5376, %v5368
    %v7449 = vpack.c.b16 %v5377, %v5369
    %v7450 = vpack.c.b16 %v5378, %v5370
    %v7451 = vpack.c.b16 %v5379, %v5371
    %v7452 = vpack.c.b16 %v5388, %v5380
    %v7453 = vpack.c.b16 %v5389, %v5381
    %v7454 = vpack.c.b16 %v5390, %v5382
    %v7455 = vpack.c.b16 %v5391, %v5383
    %v7456 = vpack.c.b16 %v5392, %v5384
    %v7457 = vpack.c.b16 %v5393, %v5385
    %v7458 = vpack.c.b16 %v5394, %v5386
    %v7459 = vpack.c.b16 %v5395, %v5387
    %v7460 = vpack.c.b16 %v5404, %v5396
    %v7461 = vpack.c.b16 %v5405, %v5397
    %v7462 = vpack.c.b16 %v5406, %v5398
    %v7463 = vpack.c.b16 %v5407, %v5399
    %v7464 = vpack.c.b16 %v5408, %v5400
    %v7465 = vpack.c.b16 %v5409, %v5401
    %v7466 = vpack.c.b16 %v5410, %v5402
    %v7467 = vpack.c.b16 %v5411, %v5403
    %v7468 = vpack.c.b16 %v5420, %v5412
    %v7469 = vpack.c.b16 %v5421, %v5413
    %v7470 = vpack.c.b16 %v5422, %v5414
    %v7471 = vpack.c.b16 %v5423, %v5415
    %v7472 = vpack.c.b16 %v5424, %v5416
    %v7473 = vpack.c.b16 %v5425, %v5417
    %v7474 = vpack.c.b16 %v5426, %v5418
    %v7475 = vpack.c.b16 %v5427, %v5419
    %v7476 = vpack.c.b16 %v5436, %v5428
    %v7477 = vpack.c.b16 %v5437, %v5429
    %v7478 = vpack.c.b16 %v5438, %v5430
    %v7479 = vpack.c.b16 %v5439, %v5431
    %v7480 = vpack.c.b16 %v5440, %v5432
    %v7481 = vpack.c.b16 %v5441, %v5433
    %v7482 = vpack.c.b16 %v5442, %v5434
    %v7483 = vpack.c.b16 %v5443, %v5435
    %v7484 = vpack.c.b16 %v5452, %v5444
    %v7485 = vpack.c.b16 %v5453, %v5445
    %v7486 = vpack.c.b16 %v5454, %v5446
    %v7487 = vpack.c.b16 %v5455, %v5447
    %v7488 = vpack.c.b16 %v5456, %v5448
    %v7489 = vpack.c.b16 %v5457, %v5449
    %v7490 = vpack.c.b16 %v5458, %v5450
    %v7491 = vpack.c.b16 %v5459, %v5451
    %v7492 = vpack.c.b16 %v5468, %v5460
    %v7493 = vpack.c.b16 %v5469, %v5461
    %v7494 = vpack.c.b16 %v5470, %v5462
    %v7495 = vpack.c.b16 %v5471, %v5463
    %v7496 = vpack.c.b16 %v5472, %v5464
    %v7497 = vpack.c.b16 %v5473, %v5465
    %v7498 = vpack.c.b16 %v5474, %v5466
    %v7499 = vpack.c.b16 %v5475, %v5467
    %v7500 = vpack.c.b16 %v5484, %v5476
    %v7501 = vpack.c.b16 %v5485, %v5477
    %v7502 = vpack.c.b16 %v5486, %v5478
    %v7503 = vpack.c.b16 %v5487, %v5479
    %v7504 = vpack.c.b16 %v5488, %v5480
    %v7505 = vpack.c.b16 %v5489, %v5481
    %v7506 = vpack.c.b16 %v5490, %v5482
    %v7507 = vpack.c.b16 %v5491, %v5483
    %v7508 = vpack.c.b16 %v5500, %v5492
    %v7509 = vpack.c.b16 %v5501, %v5493
    %v7510 = vpack.c.b16 %v5502, %v5494
    %v7511 = vpack.c.b16 %v5503, %v5495
    %v7512 = vpack.c.b16 %v5504, %v5496
    %v7513 = vpack.c.b16 %v5505, %v5497
    %v7514 = vpack.c.b16 %v5506, %v5498
    %v7515 = vpack.c.b16 %v5507, %v5499
    %v7516 = vpack.c.b16 %v5516, %v5508
    %v7517 = vpack.c.b16 %v5517, %v5509
    %v7518 = vpack.c.b16 %v5518, %v5510
    %v7519 = vpack.c.b16 %v5519, %v5511
    %v7520 = vpack.c.b16 %v5520, %v5512
    %v7521 = vpack.c.b16 %v5521, %v5513
    %v7522 = vpack.c.b16 %v5522, %v5514
    %v7523 = vpack.c.b16 %v5523, %v5515
    %v7524 = vpack.c.b16 %v5532, %v5524
    %v7525 = vpack.c.b16 %v5533, %v5525
    %v7526 = vpack.c.b16 %v5534, %v5526
    %v7527 = vpack.c.b16 %v5535, %v5527
    %v7528 = vpack.c.b16 %v5536, %v5528
    %v7529 = vpack.c.b16 %v5537, %v5529
    %v7530 = vpack.c.b16 %v5538, %v5530
    %v7531 = vpack.c.b16 %v5539, %v5531
    %v7532 = vpack.c.b16 %v5548, %v5540
    %v7533 = vpack.c.b16 %v5549, %v5541
    %v7534 = vpack.c.b16 %v5550, %v5542
    %v7535 = vpack.c.b16 %v5551, %v5543
    %v7536 = vpack.c.b16 %v5552, %v5544
    %v7537 = vpack.c.b16 %v5553, %v5545
    %v7538 = vpack.c.b16 %v5554, %v5546
    %v7539 = vpack.c.b16 %v5555, %v5547
    %v7540 = vpack.c.b16 %v5564, %v5556
    %v7541 = vpack.c.b16 %v5565, %v5557
    %v7542 = vpack.c.b16 %v5566, %v5558
    %v7543 = vpack.c.b16 %v5567, %v5559
    %v7544 = vpack.c.b16 %v5568, %v5560
    %v7545 = vpack.c.b16 %v5569, %v5561
    %v7546 = vpack.c.b16 %v5570, %v5562
    %v7547 = vpack.c.b16 %v5571, %v5563
    %v7548 = vpack.c.b16 %v5580, %v5572
    %v7549 = vpack.c.b16 %v5581, %v5573
    %v7550 = vpack.c.b16 %v5582, %v5574
    %v7551 = vpack.c.b16 %v5583, %v5575
    %v7552 = vpack.c.b16 %v5584, %v5576
    %v7553 = vpack.c.b16 %v5585, %v5577
    %v7554 = vpack.c.b16 %v5586, %v5578
    %v7555 = vpack.c.b16 %v5587, %v5579
    %v7556 = vpack.c.b16 %v5596, %v5588
    %v7557 = vpack.c.b16 %v5597, %v5589
    %v7558 = vpack.c.b16 %v5598, %v5590
    %v7559 = vpack.c.b16 %v5599, %v5591
    %v7560 = vpack.c.b16 %v5600, %v5592
    %v7561 = vpack.c.b16 %v5601, %v5593
    %v7562 = vpack.c.b16 %v5602, %v5594
    %v7563 = vpack.c.b16 %v5603, %v5595
    %v7564 = vpack.c.b16 %v5612, %v5604
    %v7565 = vpack.c.b16 %v5613, %v5605
    %v7566 = vpack.c.b16 %v5614, %v5606
    %v7567 = vpack.c.b16 %v5615, %v5607
    %v7568 = vpack.c.b16 %v5616, %v5608
    %v7569 = vpack.c.b16 %v5617, %v5609
    %v7570 = vpack.c.b16 %v5618, %v5610
    %v7571 = vpack.c.b16 %v5619, %v5611
    %v7572 = vpack.c.b16 %v5628, %v5620
    %v7573 = vpack.c.b16 %v5629, %v5621
    %v7574 = vpack.c.b16 %v5630, %v5622
    %v7575 = vpack.c.b16 %v5631, %v5623
    %v7576 = vpack.c.b16 %v5632, %v5624
    %v7577 = vpack.c.b16 %v5633, %v5625
    %v7578 = vpack.c.b16 %v5634, %v5626
    %v7579 = vpack.c.b16 %v5635, %v5627
    %v7580 = vpack.c.b16 %v5644, %v5636
    %v7581 = vpack.c.b16 %v5645, %v5637
    %v7582 = vpack.c.b16 %v5646, %v5638
    %v7583 = vpack.c.b16 %v5647, %v5639
    %v7584 = vpack.c.b16 %v5648, %v5640
    %v7585 = vpack.c.b16 %v5649, %v5641
    %v7586 = vpack.c.b16 %v5650, %v5642
    %v7587 = vpack.c.b16 %v5651, %v5643
    %v7588 = vpack.c.b16 %v5660, %v5652
    %v7589 = vpack.c.b16 %v5661, %v5653
    %v7590 = vpack.c.b16 %v5662, %v5654
    %v7591 = vpack.c.b16 %v5663, %v5655
    %v7592 = vpack.c.b16 %v5664, %v5656
    %v7593 = vpack.c.b16 %v5665, %v5657
    %v7594 = vpack.c.b16 %v5666, %v5658
    %v7595 = vpack.c.b16 %v5667, %v5659
    %v7596 = vpack.c.b16 %v5676, %v5668
    %v7597 = vpack.c.b16 %v5677, %v5669
    %v7598 = vpack.c.b16 %v5678, %v5670
    %v7599 = vpack.c.b16 %v5679, %v5671
    %v7600 = vpack.c.b16 %v5680, %v5672
    %v7601 = vpack.c.b16 %v5681, %v5673
    %v7602 = vpack.c.b16 %v5682, %v5674
    %v7603 = vpack.c.b16 %v5683, %v5675
    %v7604 = vpack.c.b16 %v5692, %v5684
    %v7605 = vpack.c.b16 %v5693, %v5685
    %v7606 = vpack.c.b16 %v5694, %v5686
    %v7607 = vpack.c.b16 %v5695, %v5687
    %v7608 = vpack.c.b16 %v5696, %v5688
    %v7609 = vpack.c.b16 %v5697, %v5689
    %v7610 = vpack.c.b16 %v5698, %v5690
    %v7611 = vpack.c.b16 %v5699, %v5691
    %v7612 = vpack.c.b16 %v5708, %v5700
    %v7613 = vpack.c.b16 %v5709, %v5701
    %v7614 = vpack.c.b16 %v5710, %v5702
    %v7615 = vpack.c.b16 %v5711, %v5703
    %v7616 = vpack.c.b16 %v5712, %v5704
    %v7617 = vpack.c.b16 %v5713, %v5705
    %v7618 = vpack.c.b16 %v5714, %v5706
    %v7619 = vpack.c.b16 %v5715, %v5707
    %v7620 = vpack.c.b16 %v5724, %v5716
    %v7621 = vpack.c.b16 %v5725, %v5717
    %v7622 = vpack.c.b16 %v5726, %v5718
    %v7623 = vpack.c.b16 %v5727, %v5719
    %v7624 = vpack.c.b16 %v5728, %v5720
    %v7625 = vpack.c.b16 %v5729, %v5721
    %v7626 = vpack.c.b16 %v5730, %v5722
    %v7627 = vpack.c.b16 %v5731, %v5723
    %v7628 = vpack.c.b16 %v5740, %v5732
    %v7629 = vpack.c.b16 %v5741, %v5733
    %v7630 = vpack.c.b16 %v5742, %v5734
    %v7631 = vpack.c.b16 %v5743, %v5735
    %v7632 = vpack.c.b16 %v5744, %v5736
    %v7633 = vpack.c.b16 %v5745, %v5737
    %v7634 = vpack.c.b16 %v5746, %v5738
    %v7635 = vpack.c.b16 %v5747, %v5739
    %v7636 = vpack.c.b16 %v5756, %v5748
    %v7637 = vpack.c.b16 %v5757, %v5749
    %v7638 = vpack.c.b16 %v5758, %v5750
    %v7639 = vpack.c.b16 %v5759, %v5751
    %v7640 = vpack.c.b16 %v5760, %v5752
    %v7641 = vpack.c.b16 %v5761, %v5753
    %v7642 = vpack.c.b16 %v5762, %v5754
    %v7643 = vpack.c.b16 %v5763, %v5755
    %v7644 = vpack.c.b16 %v5772, %v5764
    %v7645 = vpack.c.b16 %v5773, %v5765
    %v7646 = vpack.c.b16 %v5774, %v5766
    %v7647 = vpack.c.b16 %v5775, %v5767
    %v7648 = vpack.c.b16 %v5776, %v5768
    %v7649 = vpack.c.b16 %v5777, %v5769
    %v7650 = vpack.c.b16 %v5778, %v5770
    %v7651 = vpack.c.b16 %v5779, %v5771
    %v7652 = vpack.c.b16 %v5788, %v5780
    %v7653 = vpack.c.b16 %v5789, %v5781
    %v7654 = vpack.c.b16 %v5790, %v5782
    %v7655 = vpack.c.b16 %v5791, %v5783
    %v7656 = vpack.c.b16 %v5792, %v5784
    %v7657 = vpack.c.b16 %v5793, %v5785
    %v7658 = vpack.c.b16 %v5794, %v5786
    %v7659 = vpack.c.b16 %v5795, %v5787
    %v7660 = vpack.c.b16 %v5804, %v5796
    %v7661 = vpack.c.b16 %v5805, %v5797
    %v7662 = vpack.c.b16 %v5806, %v5798
    %v7663 = vpack.c.b16 %v5807, %v5799
    %v7664 = vpack.c.b16 %v5808, %v5800
    %v7665 = vpack.c.b16 %v5809, %v5801
    %v7666 = vpack.c.b16 %v5810, %v5802
    %v7667 = vpack.c.b16 %v5811, %v5803
    %v7668 = vpack.c.b16 %v5820, %v5812
    %v7669 = vpack.c.b16 %v5821, %v5813
    %v7670 = vpack.c.b16 %v5822, %v5814
    %v7671 = vpack.c.b16 %v5823, %v5815
    %v7672 = vpack.c.b16 %v5824, %v5816
    %v7673 = vpack.c.b16 %v5825, %v5817
    %v7674 = vpack.c.b16 %v5826, %v5818
    %v7675 = vpack.c.b16 %v5827, %v5819
    %v7676 = vpack.c.b16 %v5836, %v5828
    %v7677 = vpack.c.b16 %v5837, %v5829
    %v7678 = vpack.c.b16 %v5838, %v5830
    %v7679 = vpack.c.b16 %v5839, %v5831
    %v7680 = vpack.c.b16 %v5840, %v5832
    %v7681 = vpack.c.b16 %v5841, %v5833
    %v7682 = vpack.c.b16 %v5842, %v5834
    %v7683 = vpack.c.b16 %v5843, %v5835
    %v7684 = vpack.c.b16 %v5852, %v5844
    %v7685 = vpack.c.b16 %v5853, %v5845
    %v7686 = vpack.c.b16 %v5854, %v5846
    %v7687 = vpack.c.b16 %v5855, %v5847
    %v7688 = vpack.c.b16 %v5856, %v5848
    %v7689 = vpack.c.b16 %v5857, %v5849
    %v7690 = vpack.c.b16 %v5858, %v5850
    %v7691 = vpack.c.b16 %v5859, %v5851
    %v7692 = vpack.c.b16 %v5868, %v5860
    %v7693 = vpack.c.b16 %v5869, %v5861
    %v7694 = vpack.c.b16 %v5870, %v5862
    %v7695 = vpack.c.b16 %v5871, %v5863
    %v7696 = vpack.c.b16 %v5872, %v5864
    %v7697 = vpack.c.b16 %v5873, %v5865
    %v7698 = vpack.c.b16 %v5874, %v5866
    %v7699 = vpack.c.b16 %v5875, %v5867
    %v7700 = vpack.c.b16 %v5884, %v5876
    %v7701 = vpack.c.b16 %v5885, %v5877
    %v7702 = vpack.c.b16 %v5886, %v5878
    %v7703 = vpack.c.b16 %v5887, %v5879
    %v7704 = vpack.c.b16 %v5888, %v5880
    %v7705 = vpack.c.b16 %v5889, %v5881
    %v7706 = vpack.c.b16 %v5890, %v5882
    %v7707 = vpack.c.b16 %v5891, %v5883
    %v7708 = vpack.c.b16 %v5900, %v5892
    %v7709 = vpack.c.b16 %v5901, %v5893
    %v7710 = vpack.c.b16 %v5902, %v5894
    %v7711 = vpack.c.b16 %v5903, %v5895
    %v7712 = vpack.c.b16 %v5904, %v5896
    %v7713 = vpack.c.b16 %v5905, %v5897
    %v7714 = vpack.c.b16 %v5906, %v5898
    %v7715 = vpack.c.b16 %v5907, %v5899
    %v7716 = vpack.c.b16 %v5916, %v5908
    %v7717 = vpack.c.b16 %v5917, %v5909
    %v7718 = vpack.c.b16 %v5918, %v5910
    %v7719 = vpack.c.b16 %v5919, %v5911
    %v7720 = vpack.c.b16 %v5920, %v5912
    %v7721 = vpack.c.b16 %v5921, %v5913
    %v7722 = vpack.c.b16 %v5922, %v5914
    %v7723 = vpack.c.b16 %v5923, %v5915
    %v7724 = vpack.c.b16 %v5932, %v5924
    %v7725 = vpack.c.b16 %v5933, %v5925
    %v7726 = vpack.c.b16 %v5934, %v5926
    %v7727 = vpack.c.b16 %v5935, %v5927
    %v7728 = vpack.c.b16 %v5936, %v5928
    %v7729 = vpack.c.b16 %v5937, %v5929
    %v7730 = vpack.c.b16 %v5938, %v5930
    %v7731 = vpack.c.b16 %v5939, %v5931
    %v7732 = vpack.c.b16 %v5948, %v5940
    %v7733 = vpack.c.b16 %v5949, %v5941
    %v7734 = vpack.c.b16 %v5950, %v5942
    %v7735 = vpack.c.b16 %v5951, %v5943
    %v7736 = vpack.c.b16 %v5952, %v5944
    %v7737 = vpack.c.b16 %v5953, %v5945
    %v7738 = vpack.c.b16 %v5954, %v5946
    %v7739 = vpack.c.b16 %v5955, %v5947
    %v7740 = vpack.c.b16 %v5964, %v5956
    %v7741 = vpack.c.b16 %v5965, %v5957
    %v7742 = vpack.c.b16 %v5966, %v5958
    %v7743 = vpack.c.b16 %v5967, %v5959
    %v7744 = vpack.c.b16 %v5968, %v5960
    %v7745 = vpack.c.b16 %v5969, %v5961
    %v7746 = vpack.c.b16 %v5970, %v5962
    %v7747 = vpack.c.b16 %v5971, %v5963
    %v7748 = vpack.c.b16 %v5980, %v5972
    %v7749 = vpack.c.b16 %v5981, %v5973
    %v7750 = vpack.c.b16 %v5982, %v5974
    %v7751 = vpack.c.b16 %v5983, %v5975
    %v7752 = vpack.c.b16 %v5984, %v5976
    %v7753 = vpack.c.b16 %v5985, %v5977
    %v7754 = vpack.c.b16 %v5986, %v5978
    %v7755 = vpack.c.b16 %v5987, %v5979
    %v7756 = vpack.c.b16 %v5996, %v5988
    %v7757 = vpack.c.b16 %v5997, %v5989
    %v7758 = vpack.c.b16 %v5998, %v5990
    %v7759 = vpack.c.b16 %v5999, %v5991
    %v7760 = vpack.c.b16 %v6000, %v5992
    %v7761 = vpack.c.b16 %v6001, %v5993
    %v7762 = vpack.c.b16 %v6002, %v5994
    %v7763 = vpack.c.b16 %v6003, %v5995
    %v7764 = vpack.c.b16 %v6012, %v6004
    %v7765 = vpack.c.b16 %v6013, %v6005
    %v7766 = vpack.c.b16 %v6014, %v6006
    %v7767 = vpack.c.b16 %v6015, %v6007
    %v7768 = vpack.c.b16 %v6016, %v6008
    %v7769 = vpack.c.b16 %v6017, %v6009
    %v7770 = vpack.c.b16 %v6018, %v6010
    %v7771 = vpack.c.b16 %v6019, %v6011
    %v7772 = vpack.c.b16 %v6028, %v6020
    %v7773 = vpack.c.b16 %v6029, %v6021
    %v7774 = vpack.c.b16 %v6030, %v6022
    %v7775 = vpack.c.b16 %v6031, %v6023
    %v7776 = vpack.c.b16 %v6032, %v6024
    %v7777 = vpack.c.b16 %v6033, %v6025
    %v7778 = vpack.c.b16 %v6034, %v6026
    %v7779 = vpack.c.b16 %v6035, %v6027
    %v7780 = vpack.c.b16 %v6044, %v6036
    %v7781 = vpack.c.b16 %v6045, %v6037
    %v7782 = vpack.c.b16 %v6046, %v6038
    %v7783 = vpack.c.b16 %v6047, %v6039
    %v7784 = vpack.c.b16 %v6048, %v6040
    %v7785 = vpack.c.b16 %v6049, %v6041
    %v7786 = vpack.c.b16 %v6050, %v6042
    %v7787 = vpack.c.b16 %v6051, %v6043
    %v7788 = vpack.c.b16 %v6060, %v6052
    %v7789 = vpack.c.b16 %v6061, %v6053
    %v7790 = vpack.c.b16 %v6062, %v6054
    %v7791 = vpack.c.b16 %v6063, %v6055
    %v7792 = vpack.c.b16 %v6064, %v6056
    %v7793 = vpack.c.b16 %v6065, %v6057
    %v7794 = vpack.c.b16 %v6066, %v6058
    %v7795 = vpack.c.b16 %v6067, %v6059
    %v7796 = vpack.c.b16 %v6076, %v6068
    %v7797 = vpack.c.b16 %v6077, %v6069
    %v7798 = vpack.c.b16 %v6078, %v6070
    %v7799 = vpack.c.b16 %v6079, %v6071
    %v7800 = vpack.c.b16 %v6080, %v6072
    %v7801 = vpack.c.b16 %v6081, %v6073
    %v7802 = vpack.c.b16 %v6082, %v6074
    %v7803 = vpack.c.b16 %v6083, %v6075
    %v7804 = vpack.c.b16 %v6092, %v6084
    %v7805 = vpack.c.b16 %v6093, %v6085
    %v7806 = vpack.c.b16 %v6094, %v6086
    %v7807 = vpack.c.b16 %v6095, %v6087
    %v7808 = vpack.c.b16 %v6096, %v6088
    %v7809 = vpack.c.b16 %v6097, %v6089
    %v7810 = vpack.c.b16 %v6098, %v6090
    %v7811 = vpack.c.b16 %v6099, %v6091
    %v7812 = vpack.c.b16 %v6108, %v6100
    %v7813 = vpack.c.b16 %v6109, %v6101
    %v7814 = vpack.c.b16 %v6110, %v6102
    %v7815 = vpack.c.b16 %v6111, %v6103
    %v7816 = vpack.c.b16 %v6112, %v6104
    %v7817 = vpack.c.b16 %v6113, %v6105
    %v7818 = vpack.c.b16 %v6114, %v6106
    %v7819 = vpack.c.b16 %v6115, %v6107
    %v7820 = vpack.c.b16 %v6124, %v6116
    %v7821 = vpack.c.b16 %v6125, %v6117
    %v7822 = vpack.c.b16 %v6126, %v6118
    %v7823 = vpack.c.b16 %v6127, %v6119
    %v7824 = vpack.c.b16 %v6128, %v6120
    %v7825 = vpack.c.b16 %v6129, %v6121
    %v7826 = vpack.c.b16 %v6130, %v6122
    %v7827 = vpack.c.b16 %v6131, %v6123
    %v7828 = vpack.c.b16 %v6140, %v6132
    %v7829 = vpack.c.b16 %v6141, %v6133
    %v7830 = vpack.c.b16 %v6142, %v6134
    %v7831 = vpack.c.b16 %v6143, %v6135
    %v7832 = vpack.c.b16 %v6144, %v6136
    %v7833 = vpack.c.b16 %v6145, %v6137
    %v7834 = vpack.c.b16 %v6146, %v6138
    %v7835 = vpack.c.b16 %v6147, %v6139
    %v7836 = vpack.c.b16 %v6156, %v6148
    %v7837 = vpack.c.b16 %v6157, %v6149
    %v7838 = vpack.c.b16 %v6158, %v6150
    %v7839 = vpack.c.b16 %v6159, %v6151
    %v7840 = vpack.c.b16 %v6160, %v6152
    %v7841 = vpack.c.b16 %v6161, %v6153
    %v7842 = vpack.c.b16 %v6162, %v6154
    %v7843 = vpack.c.b16 %v6163, %v6155
    %v7844 = vpack.c.b16 %v6172, %v6164
    %v7845 = vpack.c.b16 %v6173, %v6165
    %v7846 = vpack.c.b16 %v6174, %v6166
    %v7847 = vpack.c.b16 %v6175, %v6167
    %v7848 = vpack.c.b16 %v6176, %v6168
    %v7849 = vpack.c.b16 %v6177, %v6169
    %v7850 = vpack.c.b16 %v6178, %v6170
    %v7851 = vpack.c.b16 %v6179, %v6171
    %v7852 = vpack.c.b16 %v6188, %v6180
    %v7853 = vpack.c.b16 %v6189, %v6181
    %v7854 = vpack.c.b16 %v6190, %v6182
    %v7855 = vpack.c.b16 %v6191, %v6183
    %v7856 = vpack.c.b16 %v6192, %v6184
    %v7857 = vpack.c.b16 %v6193, %v6185
    %v7858 = vpack.c.b16 %v6194, %v6186
    %v7859 = vpack.c.b16 %v6195, %v6187
    %v7860 = vpack.c.b16 %v6204, %v6196
    %v7861 = vpack.c.b16 %v6205, %v6197
    %v7862 = vpack.c.b16 %v6206, %v6198
    %v7863 = vpack.c.b16 %v6207, %v6199
    %v7864 = vpack.c.b16 %v6208, %v6200
    %v7865 = vpack.c.b16 %v6209, %v6201
    %v7866 = vpack.c.b16 %v6210, %v6202
    %v7867 = vpack.c.b16 %v6211, %v6203
    %v7868 = vpack.c.b16 %v6220, %v6212
    %v7869 = vpack.c.b16 %v6221, %v6213
    %v7870 = vpack.c.b16 %v6222, %v6214
    %v7871 = vpack.c.b16 %v6223, %v6215
    %v7872 = vpack.c.b16 %v6224, %v6216
    %v7873 = vpack.c.b16 %v6225, %v6217
    %v7874 = vpack.c.b16 %v6226, %v6218
    %v7875 = vpack.c.b16 %v6227, %v6219
    %v7876 = vpack.c.b16 %v6236, %v6228
    %v7877 = vpack.c.b16 %v6237, %v6229
    %v7878 = vpack.c.b16 %v6238, %v6230
    %v7879 = vpack.c.b16 %v6239, %v6231
    %v7880 = vpack.c.b16 %v6240, %v6232
    %v7881 = vpack.c.b16 %v6241, %v6233
    %v7882 = vpack.c.b16 %v6242, %v6234
    %v7883 = vpack.c.b16 %v6243, %v6235
    %v7884 = vpack.c.b16 %v6252, %v6244
    %v7885 = vpack.c.b16 %v6253, %v6245
    %v7886 = vpack.c.b16 %v6254, %v6246
    %v7887 = vpack.c.b16 %v6255, %v6247
    %v7888 = vpack.c.b16 %v6256, %v6248
    %v7889 = vpack.c.b16 %v6257, %v6249
    %v7890 = vpack.c.b16 %v6258, %v6250
    %v7891 = vpack.c.b16 %v6259, %v6251
    %v7892 = vpack.c.b16 %v6268, %v6260
    %v7893 = vpack.c.b16 %v6269, %v6261
    %v7894 = vpack.c.b16 %v6270, %v6262
    %v7895 = vpack.c.b16 %v6271, %v6263
    %v7896 = vpack.c.b16 %v6272, %v6264
    %v7897 = vpack.c.b16 %v6273, %v6265
    %v7898 = vpack.c.b16 %v6274, %v6266
    %v7899 = vpack.c.b16 %v6275, %v6267
    %v7900 = vpack.c.b16 %v6284, %v6276
    %v7901 = vpack.c.b16 %v6285, %v6277
    %v7902 = vpack.c.b16 %v6286, %v6278
    %v7903 = vpack.c.b16 %v6287, %v6279
    %v7904 = vpack.c.b16 %v6288, %v6280
    %v7905 = vpack.c.b16 %v6289, %v6281
    %v7906 = vpack.c.b16 %v6290, %v6282
    %v7907 = vpack.c.b16 %v6291, %v6283
    %v7908 = vpack.c.b16 %v6300, %v6292
    %v7909 = vpack.c.b16 %v6301, %v6293
    %v7910 = vpack.c.b16 %v6302, %v6294
    %v7911 = vpack.c.b16 %v6303, %v6295
    %v7912 = vpack.c.b16 %v6304, %v6296
    %v7913 = vpack.c.b16 %v6305, %v6297
    %v7914 = vpack.c.b16 %v6306, %v6298
    %v7915 = vpack.c.b16 %v6307, %v6299
    %v7916 = vpack.c.b16 %v6316, %v6308
    %v7917 = vpack.c.b16 %v6317, %v6309
    %v7918 = vpack.c.b16 %v6318, %v6310
    %v7919 = vpack.c.b16 %v6319, %v6311
    %v7920 = vpack.c.b16 %v6320, %v6312
    %v7921 = vpack.c.b16 %v6321, %v6313
    %v7922 = vpack.c.b16 %v6322, %v6314
    %v7923 = vpack.c.b16 %v6323, %v6315
    %v7924 = vpack.c.b16 %v6332, %v6324
    %v7925 = vpack.c.b16 %v6333, %v6325
    %v7926 = vpack.c.b16 %v6334, %v6326
    %v7927 = vpack.c.b16 %v6335, %v6327
    %v7928 = vpack.c.b16 %v6336, %v6328
    %v7929 = vpack.c.b16 %v6337, %v6329
    %v7930 = vpack.c.b16 %v6338, %v6330
    %v7931 = vpack.c.b16 %v6339, %v6331
    %v7932 = vpack.c.b16 %v6348, %v6340
    %v7933 = vpack.c.b16 %v6349, %v6341
    %v7934 = vpack.c.b16 %v6350, %v6342
    %v7935 = vpack.c.b16 %v6351, %v6343
    %v7936 = vpack.c.b16 %v6352, %v6344
    %v7937 = vpack.c.b16 %v6353, %v6345
    %v7938 = vpack.c.b16 %v6354, %v6346
    %v7939 = vpack.c.b16 %v6355, %v6347
    %v7940 = vpack.c.b16 %v6364, %v6356
    %v7941 = vpack.c.b16 %v6365, %v6357
    %v7942 = vpack.c.b16 %v6366, %v6358
    %v7943 = vpack.c.b16 %v6367, %v6359
    %v7944 = vpack.c.b16 %v6368, %v6360
    %v7945 = vpack.c.b16 %v6369, %v6361
    %v7946 = vpack.c.b16 %v6370, %v6362
    %v7947 = vpack.c.b16 %v6371, %v6363
    %v7948 = vpack.c.b16 %v6380, %v6372
    %v7949 = vpack.c.b16 %v6381, %v6373
    %v7950 = vpack.c.b16 %v6382, %v6374
    %v7951 = vpack.c.b16 %v6383, %v6375
    %v7952 = vpack.c.b16 %v6384, %v6376
    %v7953 = vpack.c.b16 %v6385, %v6377
    %v7954 = vpack.c.b16 %v6386, %v6378
    %v7955 = vpack.c.b16 %v6387, %v6379
    %v7956 = vpack.c.b16 %v6396, %v6388
    %v7957 = vpack.c.b16 %v6397, %v6389
    %v7958 = vpack.c.b16 %v6398, %v6390
    %v7959 = vpack.c.b16 %v6399, %v6391
    %v7960 = vpack.c.b16 %v6400, %v6392
    %v7961 = vpack.c.b16 %v6401, %v6393
    %v7962 = vpack.c.b16 %v6402, %v6394
    %v7963 = vpack.c.b16 %v6403, %v6395
    %v7964 = vpack.c.b16 %v6412, %v6404
    %v7965 = vpack.c.b16 %v6413, %v6405
    %v7966 = vpack.c.b16 %v6414, %v6406
    %v7967 = vpack.c.b16 %v6415, %v6407
    %v7968 = vpack.c.b16 %v6416, %v6408
    %v7969 = vpack.c.b16 %v6417, %v6409
    %v7970 = vpack.c.b16 %v6418, %v6410
    %v7971 = vpack.c.b16 %v6419, %v6411
    %v7972 = vpack.c.b16 %v6428, %v6420
    %v7973 = vpack.c.b16 %v6429, %v6421
    %v7974 = vpack.c.b16 %v6430, %v6422
    %v7975 = vpack.c.b16 %v6431, %v6423
    %v7976 = vpack.c.b16 %v6432, %v6424
    %v7977 = vpack.c.b16 %v6433, %v6425
    %v7978 = vpack.c.b16 %v6434, %v6426
    %v7979 = vpack.c.b16 %v6435, %v6427
    %v7980 = vpack.c.b16 %v6444, %v6436
    %v7981 = vpack.c.b16 %v6445, %v6437
    %v7982 = vpack.c.b16 %v6446, %v6438
    %v7983 = vpack.c.b16 %v6447, %v6439
    %v7984 = vpack.c.b16 %v6448, %v6440
    %v7985 = vpack.c.b16 %v6449, %v6441
    %v7986 = vpack.c.b16 %v6450, %v6442
    %v7987 = vpack.c.b16 %v6451, %v6443
    %9524 = vmatprep.subr.bf16.mxu0 %v6453
    %9525 = vmatpush1.bf16.msra.mxu0 %v6452
    %9526 = vmatprep.subr.bf16.mxu0 %v6461
    %9527 = vmatpush1.bf16.msra.mxu0 %v6460
    %9528 = vmatprep.subr.bf16.mxu0 %v6469
    %9529 = vmatpush1.bf16.msra.mxu0 %v6468
    %9530 = vmatprep.subr.bf16.mxu0 %v6477
    %9531 = vmatpush1.bf16.msra.mxu0 %v6476
    %9532 = vmatprep.subr.bf16.mxu0 %v6485
    %9533 = vmatpush1.bf16.msra.mxu0 %v6484
    %9534 = vmatprep.subr.bf16.mxu0 %v6493
    %9535 = vmatpush1.bf16.msra.mxu0 %v6492
    %9536 = vmatprep.subr.bf16.mxu0 %v6501
    %9537 = vmatpush1.bf16.msra.mxu0 %v6500
    %9538 = vmatprep.subr.bf16.mxu0 %v6509
    %9539 = vmatpush1.bf16.msra.mxu0 %v6508
    %9540 = vmatprep.subr.bf16.mxu0 %v6517
    %9541 = vmatpush1.bf16.msra.mxu0 %v6516
    %9542 = vmatprep.subr.bf16.mxu0 %v6525
    %9543 = vmatpush1.bf16.msra.mxu0 %v6524
    %9544 = vmatprep.subr.bf16.mxu0 %v6533
    %9545 = vmatpush1.bf16.msra.mxu0 %v6532
    %9546 = vmatprep.subr.bf16.mxu0 %v6541
    %9547 = vmatpush1.bf16.msra.mxu0 %v6540
    %9548 = vmatprep.subr.bf16.mxu0 %v6549
    %9549 = vmatpush1.bf16.msra.mxu0 %v6548
    %9550 = vmatprep.subr.bf16.mxu0 %v6557
    %9551 = vmatpush1.bf16.msra.mxu0 %v6556
    %9552 = vmatprep.subr.bf16.mxu0 %v6565
    %9553 = vmatpush1.bf16.msra.mxu0 %v6564
    %9554 = vmatprep.subr.bf16.mxu0 %v6573
    %9555 = vmatpush1.bf16.msra.mxu0 %v6572
    %9556 = vmatprep.mubr.bf16.mxu0 %v243
    %9557 = vmatmul.mubr.bf16.gmra.mrb[0].mxu0 %v242
    %v9558 = vpop.f32.mrb[0].mxu0
    %v9559 = vadd.f32 %v1807, %v9558
    %v9560 = vpop.f32.mrb[0].mxu0
    %v9561 = vadd.f32 %v1811, %v9560
    %v9562 = vpop.f32.mrb[0].mxu0
    %v9563 = vpop.f32.mrb[0].mxu0
    %9564 = vdwg.mxu0
    %9565 = vmatprep.subr.bf16.mxu0 %v6581
    %9566 = vmatpush1.bf16.msra.mxu0 %v6580
    %9567 = vmatprep.subr.bf16.mxu0 %v6589
    %9568 = vmatpush1.bf16.msra.mxu0 %v6588
    %9569 = vmatprep.subr.bf16.mxu0 %v6597
    %9570 = vmatpush1.bf16.msra.mxu0 %v6596
    %9571 = vmatprep.subr.bf16.mxu0 %v6605
    %9572 = vmatpush1.bf16.msra.mxu0 %v6604
    %9573 = vmatprep.subr.bf16.mxu0 %v6613
    %9574 = vmatpush1.bf16.msra.mxu0 %v6612
    %9575 = vmatprep.subr.bf16.mxu0 %v6621
    %9576 = vmatpush1.bf16.msra.mxu0 %v6620
    %9577 = vmatprep.subr.bf16.mxu0 %v6629
    %9578 = vmatpush1.bf16.msra.mxu0 %v6628
    %9579 = vmatprep.subr.bf16.mxu0 %v6637
    %9580 = vmatpush1.bf16.msra.mxu0 %v6636
    %9581 = vmatprep.subr.bf16.mxu0 %v6645
    %9582 = vmatpush1.bf16.msra.mxu0 %v6644
    %9583 = vmatprep.subr.bf16.mxu0 %v6653
    %9584 = vmatpush1.bf16.msra.mxu0 %v6652
    %9585 = vmatprep.subr.bf16.mxu0 %v6661
    %9586 = vmatpush1.bf16.msra.mxu0 %v6660
    %9587 = vmatprep.subr.bf16.mxu0 %v6669
    %9588 = vmatpush1.bf16.msra.mxu0 %v6668
    %9589 = vmatprep.subr.bf16.mxu0 %v6677
    %9590 = vmatpush1.bf16.msra.mxu0 %v6676
    %9591 = vmatprep.subr.bf16.mxu0 %v6685
    %9592 = vmatpush1.bf16.msra.mxu0 %v6684
    %9593 = vmatprep.subr.bf16.mxu0 %v6693
    %9594 = vmatpush1.bf16.msra.mxu0 %v6692
    %9595 = vmatprep.subr.bf16.mxu0 %v6701
    %9596 = vmatpush1.bf16.msra.mxu0 %v6700
    %9597 = vmatprep.mubr.bf16.mxu0 %v245
    %9598 = vmatmul.mubr.bf16.gmra.mrb[0].mxu0 %v244
    %v9599 = vpop.f32.mrb[0].mxu0
    %v9600 = vadd.f32 %v9559, %v9599
    %v9601 = vpop.f32.mrb[0].mxu0
    %v9602 = vadd.f32 %v9561, %v9601
    %v9603 = vpop.f32.mrb[0].mxu0
    %v9604 = vpop.f32.mrb[0].mxu0
    %9605 = vdwg.mxu0
    %9606 = vmatprep.subr.bf16.mxu0 %v6709
    %9607 = vmatpush1.bf16.msra.mxu0 %v6708
    %9608 = vmatprep.subr.bf16.mxu0 %v6717
    %9609 = vmatpush1.bf16.msra.mxu0 %v6716
    %9610 = vmatprep.subr.bf16.mxu0 %v6725
    %9611 = vmatpush1.bf16.msra.mxu0 %v6724
    %9612 = vmatprep.subr.bf16.mxu0 %v6733
    %9613 = vmatpush1.bf16.msra.mxu0 %v6732
    %9614 = vmatprep.subr.bf16.mxu0 %v6741
    %9615 = vmatpush1.bf16.msra.mxu0 %v6740
    %9616 = vmatprep.subr.bf16.mxu0 %v6749
    %9617 = vmatpush1.bf16.msra.mxu0 %v6748
    %9618 = vmatprep.subr.bf16.mxu0 %v6757
    %9619 = vmatpush1.bf16.msra.mxu0 %v6756
    %9620 = vmatprep.subr.bf16.mxu0 %v6765
    %9621 = vmatpush1.bf16.msra.mxu0 %v6764
    %9622 = vmatprep.subr.bf16.mxu0 %v6773
    %9623 = vmatpush1.bf16.msra.mxu0 %v6772
    %9624 = vmatprep.subr.bf16.mxu0 %v6781
    %9625 = vmatpush1.bf16.msra.mxu0 %v6780
    %9626 = vmatprep.subr.bf16.mxu0 %v6789
    %9627 = vmatpush1.bf16.msra.mxu0 %v6788
    %9628 = vmatprep.subr.bf16.mxu0 %v6797
    %9629 = vmatpush1.bf16.msra.mxu0 %v6796
    %9630 = vmatprep.subr.bf16.mxu0 %v6805
    %9631 = vmatpush1.bf16.msra.mxu0 %v6804
    %9632 = vmatprep.subr.bf16.mxu0 %v6813
    %9633 = vmatpush1.bf16.msra.mxu0 %v6812
    %9634 = vmatprep.subr.bf16.mxu0 %v6821
    %9635 = vmatpush1.bf16.msra.mxu0 %v6820
    %9636 = vmatprep.subr.bf16.mxu0 %v6829
    %9637 = vmatpush1.bf16.msra.mxu0 %v6828
    %9638 = vmatprep.mubr.bf16.mxu0 %v247
    %9639 = vmatmul.mubr.bf16.gmra.mrb[0].mxu0 %v246
    %v9640 = vpop.f32.mrb[0].mxu0
    %v9641 = vadd.f32 %v9600, %v9640
    %v9642 = vpop.f32.mrb[0].mxu0
    %v9643 = vadd.f32 %v9602, %v9642
    %v9644 = vpop.f32.mrb[0].mxu0
    %v9645 = vpop.f32.mrb[0].mxu0
    %9646 = vdwg.mxu0
    %9647 = vmatprep.subr.bf16.mxu0 %v6837
    %9648 = vmatpush1.bf16.msra.mxu0 %v6836
    %9649 = vmatprep.subr.bf16.mxu0 %v6845
    %9650 = vmatpush1.bf16.msra.mxu0 %v6844
    %9651 = vmatprep.subr.bf16.mxu0 %v6853
    %9652 = vmatpush1.bf16.msra.mxu0 %v6852
    %9653 = vmatprep.subr.bf16.mxu0 %v6861
    %9654 = vmatpush1.bf16.msra.mxu0 %v6860
    %9655 = vmatprep.subr.bf16.mxu0 %v6869
    %9656 = vmatpush1.bf16.msra.mxu0 %v6868
    %9657 = vmatprep.subr.bf16.mxu0 %v6877
    %9658 = vmatpush1.bf16.msra.mxu0 %v6876
    %9659 = vmatprep.subr.bf16.mxu0 %v6885
    %9660 = vmatpush1.bf16.msra.mxu0 %v6884
    %9661 = vmatprep.subr.bf16.mxu0 %v6893
    %9662 = vmatpush1.bf16.msra.mxu0 %v6892
    %9663 = vmatprep.subr.bf16.mxu0 %v6901
    %9664 = vmatpush1.bf16.msra.mxu0 %v6900
    %9665 = vmatprep.subr.bf16.mxu0 %v6909
    %9666 = vmatpush1.bf16.msra.mxu0 %v6908
    %9667 = vmatprep.subr.bf16.mxu0 %v6917
    %9668 = vmatpush1.bf16.msra.mxu0 %v6916
    %9669 = vmatprep.subr.bf16.mxu0 %v6925
    %9670 = vmatpush1.bf16.msra.mxu0 %v6924
    %9671 = vmatprep.subr.bf16.mxu0 %v6933
    %9672 = vmatpush1.bf16.msra.mxu0 %v6932
    %9673 = vmatprep.subr.bf16.mxu0 %v6941
    %9674 = vmatpush1.bf16.msra.mxu0 %v6940
    %9675 = vmatprep.subr.bf16.mxu0 %v6949
    %9676 = vmatpush1.bf16.msra.mxu0 %v6948
    %9677 = vmatprep.subr.bf16.mxu0 %v6957
    %9678 = vmatpush1.bf16.msra.mxu0 %v6956
    %9679 = vmatprep.mubr.bf16.mxu0 %v249
    %9680 = vmatmul.mubr.bf16.gmra.mrb[0].mxu0 %v248
    %v9681 = vpop.f32.mrb[0].mxu0
    %v9682 = vadd.f32 %v9641, %v9681
    %v9683 = vpop.f32.mrb[0].mxu0
    %v9684 = vadd.f32 %v9643, %v9683
    %v9685 = vpop.f32.mrb[0].mxu0
    %v9686 = vpop.f32.mrb[0].mxu0
    %9687 = vdwg.mxu0
    %9688 = vmatprep.subr.bf16.mxu0 %v6965
    %9689 = vmatpush1.bf16.msra.mxu0 %v6964
    %9690 = vmatprep.subr.bf16.mxu0 %v6973
    %9691 = vmatpush1.bf16.msra.mxu0 %v6972
    %9692 = vmatprep.subr.bf16.mxu0 %v6981
    %9693 = vmatpush1.bf16.msra.mxu0 %v6980
    %9694 = vmatprep.subr.bf16.mxu0 %v6989
    %9695 = vmatpush1.bf16.msra.mxu0 %v6988
    %9696 = vmatprep.subr.bf16.mxu0 %v6997
    %9697 = vmatpush1.bf16.msra.mxu0 %v6996
    %9698 = vmatprep.subr.bf16.mxu0 %v7005
    %9699 = vmatpush1.bf16.msra.mxu0 %v7004
    %9700 = vmatprep.subr.bf16.mxu0 %v7013
    %9701 = vmatpush1.bf16.msra.mxu0 %v7012
    %9702 = vmatprep.subr.bf16.mxu0 %v7021
    %9703 = vmatpush1.bf16.msra.mxu0 %v7020
    %9704 = vmatprep.subr.bf16.mxu0 %v7029
    %9705 = vmatpush1.bf16.msra.mxu0 %v7028
    %9706 = vmatprep.subr.bf16.mxu0 %v7037
    %9707 = vmatpush1.bf16.msra.mxu0 %v7036
    %9708 = vmatprep.subr.bf16.mxu0 %v7045
    %9709 = vmatpush1.bf16.msra.mxu0 %v7044
    %9710 = vmatprep.subr.bf16.mxu0 %v7053
    %9711 = vmatpush1.bf16.msra.mxu0 %v7052
    %9712 = vmatprep.subr.bf16.mxu0 %v7061
    %9713 = vmatpush1.bf16.msra.mxu0 %v7060
    %9714 = vmatprep.subr.bf16.mxu0 %v7069
    %9715 = vmatpush1.bf16.msra.mxu0 %v7068
    %9716 = vmatprep.subr.bf16.mxu0 %v7077
    %9717 = vmatpush1.bf16.msra.mxu0 %v7076
    %9718 = vmatprep.subr.bf16.mxu0 %v7085
    %9719 = vmatpush1.bf16.msra.mxu0 %v7084
    %9720 = vmatprep.mubr.bf16.mxu0 %v251
    %9721 = vmatmul.mubr.bf16.gmra.mrb[0].mxu0 %v250
    %v9722 = vpop.f32.mrb[0].mxu0
    %v9723 = vadd.f32 %v9682, %v9722
    %v9724 = vpop.f32.mrb[0].mxu0
    %v9725 = vadd.f32 %v9684, %v9724
    %v9726 = vpop.f32.mrb[0].mxu0
    %v9727 = vpop.f32.mrb[0].mxu0
    %9728 = vdwg.mxu0
    %9729 = vmatprep.subr.bf16.mxu0 %v7093
    %9730 = vmatpush1.bf16.msra.mxu0 %v7092
    %9731 = vmatprep.subr.bf16.mxu0 %v7101
    %9732 = vmatpush1.bf16.msra.mxu0 %v7100
    %9733 = vmatprep.subr.bf16.mxu0 %v7109
    %9734 = vmatpush1.bf16.msra.mxu0 %v7108
    %9735 = vmatprep.subr.bf16.mxu0 %v7117
    %9736 = vmatpush1.bf16.msra.mxu0 %v7116
    %9737 = vmatprep.subr.bf16.mxu0 %v7125
    %9738 = vmatpush1.bf16.msra.mxu0 %v7124
    %9739 = vmatprep.subr.bf16.mxu0 %v7133
    %9740 = vmatpush1.bf16.msra.mxu0 %v7132
    %9741 = vmatprep.subr.bf16.mxu0 %v7141
    %9742 = vmatpush1.bf16.msra.mxu0 %v7140
    %9743 = vmatprep.subr.bf16.mxu0 %v7149
    %9744 = vmatpush1.bf16.msra.mxu0 %v7148
    %9745 = vmatprep.subr.bf16.mxu0 %v7157
    %9746 = vmatpush1.bf16.msra.mxu0 %v7156
    %9747 = vmatprep.subr.bf16.mxu0 %v7165
    %9748 = vmatpush1.bf16.msra.mxu0 %v7164
    %9749 = vmatprep.subr.bf16.mxu0 %v7173
    %9750 = vmatpush1.bf16.msra.mxu0 %v7172
    %9751 = vmatprep.subr.bf16.mxu0 %v7181
    %9752 = vmatpush1.bf16.msra.mxu0 %v7180
    %9753 = vmatprep.subr.bf16.mxu0 %v7189
    %9754 = vmatpush1.bf16.msra.mxu0 %v7188
    %9755 = vmatprep.subr.bf16.mxu0 %v7197
    %9756 = vmatpush1.bf16.msra.mxu0 %v7196
    %9757 = vmatprep.subr.bf16.mxu0 %v7205
    %9758 = vmatpush1.bf16.msra.mxu0 %v7204
    %9759 = vmatprep.subr.bf16.mxu0 %v7213
    %9760 = vmatpush1.bf16.msra.mxu0 %v7212
    %9761 = vmatprep.mubr.bf16.mxu0 %v253
    %9762 = vmatmul.mubr.bf16.gmra.mrb[0].mxu0 %v252
    %v9763 = vpop.f32.mrb[0].mxu0
    %v9764 = vadd.f32 %v9723, %v9763
    %v9765 = vpop.f32.mrb[0].mxu0
    %v9766 = vadd.f32 %v9725, %v9765
    %v9767 = vpop.f32.mrb[0].mxu0
    %v9768 = vpop.f32.mrb[0].mxu0
    %9769 = vdwg.mxu0
    %9770 = vmatprep.subr.bf16.mxu0 %v7221
    %9771 = vmatpush1.bf16.msra.mxu0 %v7220
    %9772 = vmatprep.subr.bf16.mxu0 %v7229
    %9773 = vmatpush1.bf16.msra.mxu0 %v7228
    %9774 = vmatprep.subr.bf16.mxu0 %v7237
    %9775 = vmatpush1.bf16.msra.mxu0 %v7236
    %9776 = vmatprep.subr.bf16.mxu0 %v7245
    %9777 = vmatpush1.bf16.msra.mxu0 %v7244
    %9778 = vmatprep.subr.bf16.mxu0 %v7253
    %9779 = vmatpush1.bf16.msra.mxu0 %v7252
    %9780 = vmatprep.subr.bf16.mxu0 %v7261
    %9781 = vmatpush1.bf16.msra.mxu0 %v7260
    %9782 = vmatprep.subr.bf16.mxu0 %v7269
    %9783 = vmatpush1.bf16.msra.mxu0 %v7268
    %9784 = vmatprep.subr.bf16.mxu0 %v7277
    %9785 = vmatpush1.bf16.msra.mxu0 %v7276
    %9786 = vmatprep.subr.bf16.mxu0 %v7285
    %9787 = vmatpush1.bf16.msra.mxu0 %v7284
    %9788 = vmatprep.subr.bf16.mxu0 %v7293
    %9789 = vmatpush1.bf16.msra.mxu0 %v7292
    %9790 = vmatprep.subr.bf16.mxu0 %v7301
    %9791 = vmatpush1.bf16.msra.mxu0 %v7300
    %9792 = vmatprep.subr.bf16.mxu0 %v7309
    %9793 = vmatpush1.bf16.msra.mxu0 %v7308
    %9794 = vmatprep.subr.bf16.mxu0 %v7317
    %9795 = vmatpush1.bf16.msra.mxu0 %v7316
    %9796 = vmatprep.subr.bf16.mxu0 %v7325
    %9797 = vmatpush1.bf16.msra.mxu0 %v7324
    %9798 = vmatprep.subr.bf16.mxu0 %v7333
    %9799 = vmatpush1.bf16.msra.mxu0 %v7332
    %9800 = vmatprep.subr.bf16.mxu0 %v7341
    %9801 = vmatpush1.bf16.msra.mxu0 %v7340
    %9802 = vmatprep.mubr.bf16.mxu0 %v255
    %9803 = vmatmul.mubr.bf16.gmra.mrb[0].mxu0 %v254
    %v9804 = vpop.f32.mrb[0].mxu0
    %v9805 = vadd.f32 %v9764, %v9804
    %v9806 = vpop.f32.mrb[0].mxu0
    %v9807 = vadd.f32 %v9766, %v9806
    %v9808 = vpop.f32.mrb[0].mxu0
    %v9809 = vpop.f32.mrb[0].mxu0
    %9810 = vdwg.mxu0
    %9811 = vmatprep.subr.bf16.mxu0 %v7349
    %9812 = vmatpush1.bf16.msra.mxu0 %v7348
    %9813 = vmatprep.subr.bf16.mxu0 %v7357
    %9814 = vmatpush1.bf16.msra.mxu0 %v7356
    %9815 = vmatprep.subr.bf16.mxu0 %v7365
    %9816 = vmatpush1.bf16.msra.mxu0 %v7364
    %9817 = vmatprep.subr.bf16.mxu0 %v7373
    %9818 = vmatpush1.bf16.msra.mxu0 %v7372
    %9819 = vmatprep.subr.bf16.mxu0 %v7381
    %9820 = vmatpush1.bf16.msra.mxu0 %v7380
    %9821 = vmatprep.subr.bf16.mxu0 %v7389
    %9822 = vmatpush1.bf16.msra.mxu0 %v7388
    %9823 = vmatprep.subr.bf16.mxu0 %v7397
    %9824 = vmatpush1.bf16.msra.mxu0 %v7396
    %9825 = vmatprep.subr.bf16.mxu0 %v7405
    %9826 = vmatpush1.bf16.msra.mxu0 %v7404
    %9827 = vmatprep.subr.bf16.mxu0 %v7413
    %9828 = vmatpush1.bf16.msra.mxu0 %v7412
    %9829 = vmatprep.subr.bf16.mxu0 %v7421
    %9830 = vmatpush1.bf16.msra.mxu0 %v7420
    %9831 = vmatprep.subr.bf16.mxu0 %v7429
    %9832 = vmatpush1.bf16.msra.mxu0 %v7428
    %9833 = vmatprep.subr.bf16.mxu0 %v7437
    %9834 = vmatpush1.bf16.msra.mxu0 %v7436
    %9835 = vmatprep.subr.bf16.mxu0 %v7445
    %9836 = vmatpush1.bf16.msra.mxu0 %v7444
    %9837 = vmatprep.subr.bf16.mxu0 %v7453
    %9838 = vmatpush1.bf16.msra.mxu0 %v7452
    %9839 = vmatprep.subr.bf16.mxu0 %v7461
    %9840 = vmatpush1.bf16.msra.mxu0 %v7460
    %9841 = vmatprep.subr.bf16.mxu0 %v7469
    %9842 = vmatpush1.bf16.msra.mxu0 %v7468
    %9843 = vmatprep.mubr.bf16.mxu0 %v257
    %9844 = vmatmul.mubr.bf16.gmra.mrb[0].mxu0 %v256
    %v9845 = vpop.f32.mrb[0].mxu0
    %v9846 = vadd.f32 %v9805, %v9845
    %v9847 = vpop.f32.mrb[0].mxu0
    %v9848 = vadd.f32 %v9807, %v9847
    %v9849 = vpop.f32.mrb[0].mxu0
    %v9850 = vpop.f32.mrb[0].mxu0
    %9851 = vdwg.mxu0
    %9852 = vmatprep.subr.bf16.mxu0 %v7477
    %9853 = vmatpush1.bf16.msra.mxu0 %v7476
    %9854 = vmatprep.subr.bf16.mxu0 %v7485
    %9855 = vmatpush1.bf16.msra.mxu0 %v7484
    %9856 = vmatprep.subr.bf16.mxu0 %v7493
    %9857 = vmatpush1.bf16.msra.mxu0 %v7492
    %9858 = vmatprep.subr.bf16.mxu0 %v7501
    %9859 = vmatpush1.bf16.msra.mxu0 %v7500
    %9860 = vmatprep.subr.bf16.mxu0 %v7509
    %9861 = vmatpush1.bf16.msra.mxu0 %v7508
    %9862 = vmatprep.subr.bf16.mxu0 %v7517
    %9863 = vmatpush1.bf16.msra.mxu0 %v7516
    %9864 = vmatprep.subr.bf16.mxu0 %v7525
    %9865 = vmatpush1.bf16.msra.mxu0 %v7524
    %9866 = vmatprep.subr.bf16.mxu0 %v7533
    %9867 = vmatpush1.bf16.msra.mxu0 %v7532
    %9868 = vmatprep.subr.bf16.mxu0 %v7541
    %9869 = vmatpush1.bf16.msra.mxu0 %v7540
    %9870 = vmatprep.subr.bf16.mxu0 %v7549
    %9871 = vmatpush1.bf16.msra.mxu0 %v7548
    %9872 = vmatprep.subr.bf16.mxu0 %v7557
    %9873 = vmatpush1.bf16.msra.mxu0 %v7556
    %9874 = vmatprep.subr.bf16.mxu0 %v7565
    %9875 = vmatpush1.bf16.msra.mxu0 %v7564
    %9876 = vmatprep.subr.bf16.mxu0 %v7573
    %9877 = vmatpush1.bf16.msra.mxu0 %v7572
    %9878 = vmatprep.subr.bf16.mxu0 %v7581
    %9879 = vmatpush1.bf16.msra.mxu0 %v7580
    %9880 = vmatprep.subr.bf16.mxu0 %v7589
    %9881 = vmatpush1.bf16.msra.mxu0 %v7588
    %9882 = vmatprep.subr.bf16.mxu0 %v7597
    %9883 = vmatpush1.bf16.msra.mxu0 %v7596
    %9884 = vmatprep.mubr.bf16.mxu0 %v259
    %9885 = vmatmul.mubr.bf16.gmra.mrb[0].mxu0 %v258
    %v9886 = vpop.f32.mrb[0].mxu0
    %v9887 = vadd.f32 %v9846, %v9886
    %v9888 = vpop.f32.mrb[0].mxu0
    %v9889 = vadd.f32 %v9848, %v9888
    %v9890 = vpop.f32.mrb[0].mxu0
    %v9891 = vpop.f32.mrb[0].mxu0
    %9892 = vdwg.mxu0
    %9893 = vmatprep.subr.bf16.mxu0 %v7605
    %9894 = vmatpush1.bf16.msra.mxu0 %v7604
    %9895 = vmatprep.subr.bf16.mxu0 %v7613
    %9896 = vmatpush1.bf16.msra.mxu0 %v7612
    %9897 = vmatprep.subr.bf16.mxu0 %v7621
    %9898 = vmatpush1.bf16.msra.mxu0 %v7620
    %9899 = vmatprep.subr.bf16.mxu0 %v7629
    %9900 = vmatpush1.bf16.msra.mxu0 %v7628
    %9901 = vmatprep.subr.bf16.mxu0 %v7637
    %9902 = vmatpush1.bf16.msra.mxu0 %v7636
    %9903 = vmatprep.subr.bf16.mxu0 %v7645
    %9904 = vmatpush1.bf16.msra.mxu0 %v7644
    %9905 = vmatprep.subr.bf16.mxu0 %v7653
    %9906 = vmatpush1.bf16.msra.mxu0 %v7652
    %9907 = vmatprep.subr.bf16.mxu0 %v7661
    %9908 = vmatpush1.bf16.msra.mxu0 %v7660
    %9909 = vmatprep.subr.bf16.mxu0 %v7669
    %9910 = vmatpush1.bf16.msra.mxu0 %v7668
    %9911 = vmatprep.subr.bf16.mxu0 %v7677
    %9912 = vmatpush1.bf16.msra.mxu0 %v7676
    %9913 = vmatprep.subr.bf16.mxu0 %v7685
    %9914 = vmatpush1.bf16.msra.mxu0 %v7684
    %9915 = vmatprep.subr.bf16.mxu0 %v7693
    %9916 = vmatpush1.bf16.msra.mxu0 %v7692
    %9917 = vmatprep.subr.bf16.mxu0 %v7701
    %9918 = vmatpush1.bf16.msra.mxu0 %v7700
    %9919 = vmatprep.subr.bf16.mxu0 %v7709
    %9920 = vmatpush1.bf16.msra.mxu0 %v7708
    %9921 = vmatprep.subr.bf16.mxu0 %v7717
    %9922 = vmatpush1.bf16.msra.mxu0 %v7716
    %9923 = vmatprep.subr.bf16.mxu0 %v7725
    %9924 = vmatpush1.bf16.msra.mxu0 %v7724
    %9925 = vmatprep.mubr.bf16.mxu0 %v261
    %9926 = vmatmul.mubr.bf16.gmra.mrb[0].mxu0 %v260
    %v9927 = vpop.f32.mrb[0].mxu0
    %v9928 = vadd.f32 %v9887, %v9927
    %v9929 = vpop.f32.mrb[0].mxu0
    %v9930 = vadd.f32 %v9889, %v9929
    %v9931 = vpop.f32.mrb[0].mxu0
    %v9932 = vpop.f32.mrb[0].mxu0
    %9933 = vdwg.mxu0
    %9934 = vmatprep.subr.bf16.mxu0 %v7733
    %9935 = vmatpush1.bf16.msra.mxu0 %v7732
    %9936 = vmatprep.subr.bf16.mxu0 %v7741
    %9937 = vmatpush1.bf16.msra.mxu0 %v7740
    %9938 = vmatprep.subr.bf16.mxu0 %v7749
    %9939 = vmatpush1.bf16.msra.mxu0 %v7748
    %9940 = vmatprep.subr.bf16.mxu0 %v7757
    %9941 = vmatpush1.bf16.msra.mxu0 %v7756
    %9942 = vmatprep.subr.bf16.mxu0 %v7765
    %9943 = vmatpush1.bf16.msra.mxu0 %v7764
    %9944 = vmatprep.subr.bf16.mxu0 %v7773
    %9945 = vmatpush1.bf16.msra.mxu0 %v7772
    %9946 = vmatprep.subr.bf16.mxu0 %v7781
    %9947 = vmatpush1.bf16.msra.mxu0 %v7780
    %9948 = vmatprep.subr.bf16.mxu0 %v7789
    %9949 = vmatpush1.bf16.msra.mxu0 %v7788
    %9950 = vmatprep.subr.bf16.mxu0 %v7797
    %9951 = vmatpush1.bf16.msra.mxu0 %v7796
    %9952 = vmatprep.subr.bf16.mxu0 %v7805
    %9953 = vmatpush1.bf16.msra.mxu0 %v7804
    %9954 = vmatprep.subr.bf16.mxu0 %v7813
    %9955 = vmatpush1.bf16.msra.mxu0 %v7812
    %9956 = vmatprep.subr.bf16.mxu0 %v7821
    %9957 = vmatpush1.bf16.msra.mxu0 %v7820
    %9958 = vmatprep.subr.bf16.mxu0 %v7829
    %9959 = vmatpush1.bf16.msra.mxu0 %v7828
    %9960 = vmatprep.subr.bf16.mxu0 %v7837
    %9961 = vmatpush1.bf16.msra.mxu0 %v7836
    %9962 = vmatprep.subr.bf16.mxu0 %v7845
    %9963 = vmatpush1.bf16.msra.mxu0 %v7844
    %9964 = vmatprep.subr.bf16.mxu0 %v7853
    %9965 = vmatpush1.bf16.msra.mxu0 %v7852
    %9966 = vmatprep.mubr.bf16.mxu0 %v263
    %9967 = vmatmul.mubr.bf16.gmra.mrb[0].mxu0 %v262
    %v9968 = vpop.f32.mrb[0].mxu0
    %v9969 = vadd.f32 %v9928, %v9968
    %v9970 = vpop.f32.mrb[0].mxu0
    %v9971 = vadd.f32 %v9930, %v9970
    %v9972 = vpop.f32.mrb[0].mxu0
    %v9973 = vpop.f32.mrb[0].mxu0
    %9974 = vdwg.mxu0
    %9975 = vmatprep.subr.bf16.mxu0 %v7861
    %9976 = vmatpush1.bf16.msra.mxu0 %v7860
    %9977 = vmatprep.subr.bf16.mxu0 %v7869
    %9978 = vmatpush1.bf16.msra.mxu0 %v7868
    %9979 = vmatprep.subr.bf16.mxu0 %v7877
    %9980 = vmatpush1.bf16.msra.mxu0 %v7876
    %9981 = vmatprep.subr.bf16.mxu0 %v7885
    %9982 = vmatpush1.bf16.msra.mxu0 %v7884
    %9983 = vmatprep.subr.bf16.mxu0 %v7893
    %9984 = vmatpush1.bf16.msra.mxu0 %v7892
    %9985 = vmatprep.subr.bf16.mxu0 %v7901
    %9986 = vmatpush1.bf16.msra.mxu0 %v7900
    %9987 = vmatprep.subr.bf16.mxu0 %v7909
    %9988 = vmatpush1.bf16.msra.mxu0 %v7908
    %9989 = vmatprep.subr.bf16.mxu0 %v7917
    %9990 = vmatpush1.bf16.msra.mxu0 %v7916
    %9991 = vmatprep.subr.bf16.mxu0 %v7925
    %9992 = vmatpush1.bf16.msra.mxu0 %v7924
    %9993 = vmatprep.subr.bf16.mxu0 %v7933
    %9994 = vmatpush1.bf16.msra.mxu0 %v7932
    %9995 = vmatprep.subr.bf16.mxu0 %v7941
    %9996 = vmatpush1.bf16.msra.mxu0 %v7940
    %9997 = vmatprep.subr.bf16.mxu0 %v7949
    %9998 = vmatpush1.bf16.msra.mxu0 %v7948
    %9999 = vmatprep.subr.bf16.mxu0 %v7957
    %10000 = vmatpush1.bf16.msra.mxu0 %v7956
    %10001 = vmatprep.subr.bf16.mxu0 %v7965
    %10002 = vmatpush1.bf16.msra.mxu0 %v7964
    %10003 = vmatprep.subr.bf16.mxu0 %v7973
    %10004 = vmatpush1.bf16.msra.mxu0 %v7972
    %10005 = vmatprep.subr.bf16.mxu0 %v7981
    %10006 = vmatpush1.bf16.msra.mxu0 %v7980
    %10007 = vmatprep.mubr.bf16.mxu0 %v265
    %10008 = vmatmul.mubr.bf16.gmra.mrb[0].mxu0 %v264
    %v10009 = vpop.f32.mrb[0].mxu0
    %v10010 = vadd.f32 %v9969, %v10009
    %v10011 = vpop.f32.mrb[0].mxu0
    %v10012 = vadd.f32 %v9971, %v10011
    %v10013 = vpop.f32.mrb[0].mxu0
    %v10014 = vpop.f32.mrb[0].mxu0
    %10015 = vdwg.mxu0
    %10016 = vmatprep.subr.bf16.mxu0 %v6455
    %10017 = vmatpush1.bf16.msra.mxu0 %v6454
    %10018 = vmatprep.subr.bf16.mxu0 %v6463
    %10019 = vmatpush1.bf16.msra.mxu0 %v6462
    %10020 = vmatprep.subr.bf16.mxu0 %v6471
    %10021 = vmatpush1.bf16.msra.mxu0 %v6470
    %10022 = vmatprep.subr.bf16.mxu0 %v6479
    %10023 = vmatpush1.bf16.msra.mxu0 %v6478
    %10024 = vmatprep.subr.bf16.mxu0 %v6487
    %10025 = vmatpush1.bf16.msra.mxu0 %v6486
    %10026 = vmatprep.subr.bf16.mxu0 %v6495
    %10027 = vmatpush1.bf16.msra.mxu0 %v6494
    %10028 = vmatprep.subr.bf16.mxu0 %v6503
    %10029 = vmatpush1.bf16.msra.mxu0 %v6502
    %10030 = vmatprep.subr.bf16.mxu0 %v6511
    %10031 = vmatpush1.bf16.msra.mxu0 %v6510
    %10032 = vmatprep.subr.bf16.mxu0 %v6519
    %10033 = vmatpush1.bf16.msra.mxu0 %v6518
    %10034 = vmatprep.subr.bf16.mxu0 %v6527
    %10035 = vmatpush1.bf16.msra.mxu0 %v6526
    %10036 = vmatprep.subr.bf16.mxu0 %v6535
    %10037 = vmatpush1.bf16.msra.mxu0 %v6534
    %10038 = vmatprep.subr.bf16.mxu0 %v6543
    %10039 = vmatpush1.bf16.msra.mxu0 %v6542
    %10040 = vmatprep.subr.bf16.mxu0 %v6551
    %10041 = vmatpush1.bf16.msra.mxu0 %v6550
    %10042 = vmatprep.subr.bf16.mxu0 %v6559
    %10043 = vmatpush1.bf16.msra.mxu0 %v6558
    %10044 = vmatprep.subr.bf16.mxu0 %v6567
    %10045 = vmatpush1.bf16.msra.mxu0 %v6566
    %10046 = vmatprep.subr.bf16.mxu0 %v6575
    %10047 = vmatpush1.bf16.msra.mxu0 %v6574
    %10048 = vmatprep.mubr.bf16.mxu0 %v243
    %10049 = vmatmul.mubr.bf16.gmra.mrb[0].mxu0 %v242
    %v10050 = vpop.f32.mrb[0].mxu0
    %v10051 = vadd.f32 %v1815, %v10050
    %v10052 = vpop.f32.mrb[0].mxu0
    %v10053 = vadd.f32 %v1819, %v10052
    %v10054 = vpop.f32.mrb[0].mxu0
    %v10055 = vpop.f32.mrb[0].mxu0
    %10056 = vdwg.mxu0
    %10057 = vmatprep.subr.bf16.mxu0 %v6583
    %10058 = vmatpush1.bf16.msra.mxu0 %v6582
    %10059 = vmatprep.subr.bf16.mxu0 %v6591
    %10060 = vmatpush1.bf16.msra.mxu0 %v6590
    %10061 = vmatprep.subr.bf16.mxu0 %v6599
    %10062 = vmatpush1.bf16.msra.mxu0 %v6598
    %10063 = vmatprep.subr.bf16.mxu0 %v6607
    %10064 = vmatpush1.bf16.msra.mxu0 %v6606
    %10065 = vmatprep.subr.bf16.mxu0 %v6615
    %10066 = vmatpush1.bf16.msra.mxu0 %v6614
    %10067 = vmatprep.subr.bf16.mxu0 %v6623
    %10068 = vmatpush1.bf16.msra.mxu0 %v6622
    %10069 = vmatprep.subr.bf16.mxu0 %v6631
    %10070 = vmatpush1.bf16.msra.mxu0 %v6630
    %10071 = vmatprep.subr.bf16.mxu0 %v6639
    %10072 = vmatpush1.bf16.msra.mxu0 %v6638
    %10073 = vmatprep.subr.bf16.mxu0 %v6647
    %10074 = vmatpush1.bf16.msra.mxu0 %v6646
    %10075 = vmatprep.subr.bf16.mxu0 %v6655
    %10076 = vmatpush1.bf16.msra.mxu0 %v6654
    %10077 = vmatprep.subr.bf16.mxu0 %v6663
    %10078 = vmatpush1.bf16.msra.mxu0 %v6662
    %10079 = vmatprep.subr.bf16.mxu0 %v6671
    %10080 = vmatpush1.bf16.msra.mxu0 %v6670
    %10081 = vmatprep.subr.bf16.mxu0 %v6679
    %10082 = vmatpush1.bf16.msra.mxu0 %v6678
    %10083 = vmatprep.subr.bf16.mxu0 %v6687
    %10084 = vmatpush1.bf16.msra.mxu0 %v6686
    %10085 = vmatprep.subr.bf16.mxu0 %v6695
    %10086 = vmatpush1.bf16.msra.mxu0 %v6694
    %10087 = vmatprep.subr.bf16.mxu0 %v6703
    %10088 = vmatpush1.bf16.msra.mxu0 %v6702
    %10089 = vmatprep.mubr.bf16.mxu0 %v245
    %10090 = vmatmul.mubr.bf16.gmra.mrb[0].mxu0 %v244
    %v10091 = vpop.f32.mrb[0].mxu0
    %v10092 = vadd.f32 %v10051, %v10091
    %v10093 = vpop.f32.mrb[0].mxu0
    %v10094 = vadd.f32 %v10053, %v10093
    %v10095 = vpop.f32.mrb[0].mxu0
    %v10096 = vpop.f32.mrb[0].mxu0
    %10097 = vdwg.mxu0
    %10098 = vmatprep.subr.bf16.mxu0 %v6711
    %10099 = vmatpush1.bf16.msra.mxu0 %v6710
    %10100 = vmatprep.subr.bf16.mxu0 %v6719
    %10101 = vmatpush1.bf16.msra.mxu0 %v6718
    %10102 = vmatprep.subr.bf16.mxu0 %v6727
    %10103 = vmatpush1.bf16.msra.mxu0 %v6726
    %10104 = vmatprep.subr.bf16.mxu0 %v6735
    %10105 = vmatpush1.bf16.msra.mxu0 %v6734
    %10106 = vmatprep.subr.bf16.mxu0 %v6743
    %10107 = vmatpush1.bf16.msra.mxu0 %v6742
    %10108 = vmatprep.subr.bf16.mxu0 %v6751
    %10109 = vmatpush1.bf16.msra.mxu0 %v6750
    %10110 = vmatprep.subr.bf16.mxu0 %v6759
    %10111 = vmatpush1.bf16.msra.mxu0 %v6758
    %10112 = vmatprep.subr.bf16.mxu0 %v6767
    %10113 = vmatpush1.bf16.msra.mxu0 %v6766
    %10114 = vmatprep.subr.bf16.mxu0 %v6775
    %10115 = vmatpush1.bf16.msra.mxu0 %v6774
    %10116 = vmatprep.subr.bf16.mxu0 %v6783
    %10117 = vmatpush1.bf16.msra.mxu0 %v6782
    %10118 = vmatprep.subr.bf16.mxu0 %v6791
    %10119 = vmatpush1.bf16.msra.mxu0 %v6790
    %10120 = vmatprep.subr.bf16.mxu0 %v6799
    %10121 = vmatpush1.bf16.msra.mxu0 %v6798
    %10122 = vmatprep.subr.bf16.mxu0 %v6807
    %10123 = vmatpush1.bf16.msra.mxu0 %v6806
    %10124 = vmatprep.subr.bf16.mxu0 %v6815
    %10125 = vmatpush1.bf16.msra.mxu0 %v6814
    %10126 = vmatprep.subr.bf16.mxu0 %v6823
    %10127 = vmatpush1.bf16.msra.mxu0 %v6822
    %10128 = vmatprep.subr.bf16.mxu0 %v6831
    %10129 = vmatpush1.bf16.msra.mxu0 %v6830
    %10130 = vmatprep.mubr.bf16.mxu0 %v247
    %10131 = vmatmul.mubr.bf16.gmra.mrb[0].mxu0 %v246
    %v10132 = vpop.f32.mrb[0].mxu0
    %v10133 = vadd.f32 %v10092, %v10132
    %v10134 = vpop.f32.mrb[0].mxu0
    %v10135 = vadd.f32 %v10094, %v10134
    %v10136 = vpop.f32.mrb[0].mxu0
    %v10137 = vpop.f32.mrb[0].mxu0
    %10138 = vdwg.mxu0
    %10139 = vmatprep.subr.bf16.mxu0 %v6839
    %10140 = vmatpush1.bf16.msra.mxu0 %v6838
    %10141 = vmatprep.subr.bf16.mxu0 %v6847
    %10142 = vmatpush1.bf16.msra.mxu0 %v6846
    %10143 = vmatprep.subr.bf16.mxu0 %v6855
    %10144 = vmatpush1.bf16.msra.mxu0 %v6854
    %10145 = vmatprep.subr.bf16.mxu0 %v6863
    %10146 = vmatpush1.bf16.msra.mxu0 %v6862
    %10147 = vmatprep.subr.bf16.mxu0 %v6871
    %10148 = vmatpush1.bf16.msra.mxu0 %v6870
    %10149 = vmatprep.subr.bf16.mxu0 %v6879
    %10150 = vmatpush1.bf16.msra.mxu0 %v6878
    %10151 = vmatprep.subr.bf16.mxu0 %v6887
    %10152 = vmatpush1.bf16.msra.mxu0 %v6886
    %10153 = vmatprep.subr.bf16.mxu0 %v6895
    %10154 = vmatpush1.bf16.msra.mxu0 %v6894
    %10155 = vmatprep.subr.bf16.mxu0 %v6903
    %10156 = vmatpush1.bf16.msra.mxu0 %v6902
    %10157 = vmatprep.subr.bf16.mxu0 %v6911
    %10158 = vmatpush1.bf16.msra.mxu0 %v6910
    %10159 = vmatprep.subr.bf16.mxu0 %v6919
    %10160 = vmatpush1.bf16.msra.mxu0 %v6918
    %10161 = vmatprep.subr.bf16.mxu0 %v6927
    %10162 = vmatpush1.bf16.msra.mxu0 %v6926
    %10163 = vmatprep.subr.bf16.mxu0 %v6935
    %10164 = vmatpush1.bf16.msra.mxu0 %v6934
    %10165 = vmatprep.subr.bf16.mxu0 %v6943
    %10166 = vmatpush1.bf16.msra.mxu0 %v6942
    %10167 = vmatprep.subr.bf16.mxu0 %v6951
    %10168 = vmatpush1.bf16.msra.mxu0 %v6950
    %10169 = vmatprep.subr.bf16.mxu0 %v6959
    %10170 = vmatpush1.bf16.msra.mxu0 %v6958
    %10171 = vmatprep.mubr.bf16.mxu0 %v249
    %10172 = vmatmul.mubr.bf16.gmra.mrb[0].mxu0 %v248
    %v10173 = vpop.f32.mrb[0].mxu0
    %v10174 = vadd.f32 %v10133, %v10173
    %v10175 = vpop.f32.mrb[0].mxu0
    %v10176 = vadd.f32 %v10135, %v10175
    %v10177 = vpop.f32.mrb[0].mxu0
    %v10178 = vpop.f32.mrb[0].mxu0
    %10179 = vdwg.mxu0
    %10180 = vmatprep.subr.bf16.mxu0 %v6967
    %10181 = vmatpush1.bf16.msra.mxu0 %v6966
    %10182 = vmatprep.subr.bf16.mxu0 %v6975
    %10183 = vmatpush1.bf16.msra.mxu0 %v6974
    %10184 = vmatprep.subr.bf16.mxu0 %v6983
    %10185 = vmatpush1.bf16.msra.mxu0 %v6982
    %10186 = vmatprep.subr.bf16.mxu0 %v6991
    %10187 = vmatpush1.bf16.msra.mxu0 %v6990
    %10188 = vmatprep.subr.bf16.mxu0 %v6999
    %10189 = vmatpush1.bf16.msra.mxu0 %v6998
    %10190 = vmatprep.subr.bf16.mxu0 %v7007
    %10191 = vmatpush1.bf16.msra.mxu0 %v7006
    %10192 = vmatprep.subr.bf16.mxu0 %v7015
    %10193 = vmatpush1.bf16.msra.mxu0 %v7014
    %10194 = vmatprep.subr.bf16.mxu0 %v7023
    %10195 = vmatpush1.bf16.msra.mxu0 %v7022
    %10196 = vmatprep.subr.bf16.mxu0 %v7031
    %10197 = vmatpush1.bf16.msra.mxu0 %v7030
    %10198 = vmatprep.subr.bf16.mxu0 %v7039
    %10199 = vmatpush1.bf16.msra.mxu0 %v7038
    %10200 = vmatprep.subr.bf16.mxu0 %v7047
    %10201 = vmatpush1.bf16.msra.mxu0 %v7046
    %10202 = vmatprep.subr.bf16.mxu0 %v7055
    %10203 = vmatpush1.bf16.msra.mxu0 %v7054
    %10204 = vmatprep.subr.bf16.mxu0 %v7063
    %10205 = vmatpush1.bf16.msra.mxu0 %v7062
    %10206 = vmatprep.subr.bf16.mxu0 %v7071
    %10207 = vmatpush1.bf16.msra.mxu0 %v7070
    %10208 = vmatprep.subr.bf16.mxu0 %v7079
    %10209 = vmatpush1.bf16.msra.mxu0 %v7078
    %10210 = vmatprep.subr.bf16.mxu0 %v7087
    %10211 = vmatpush1.bf16.msra.mxu0 %v7086
    %10212 = vmatprep.mubr.bf16.mxu0 %v251
    %10213 = vmatmul.mubr.bf16.gmra.mrb[0].mxu0 %v250
    %v10214 = vpop.f32.mrb[0].mxu0
    %v10215 = vadd.f32 %v10174, %v10214
    %v10216 = vpop.f32.mrb[0].mxu0
    %v10217 = vadd.f32 %v10176, %v10216
    %v10218 = vpop.f32.mrb[0].mxu0
    %v10219 = vpop.f32.mrb[0].mxu0
    %10220 = vdwg.mxu0
    %10221 = vmatprep.subr.bf16.mxu0 %v7095
    %10222 = vmatpush1.bf16.msra.mxu0 %v7094
    %10223 = vmatprep.subr.bf16.mxu0 %v7103
    %10224 = vmatpush1.bf16.msra.mxu0 %v7102
    %10225 = vmatprep.subr.bf16.mxu0 %v7111
    %10226 = vmatpush1.bf16.msra.mxu0 %v7110
    %10227 = vmatprep.subr.bf16.mxu0 %v7119
    %10228 = vmatpush1.bf16.msra.mxu0 %v7118
    %10229 = vmatprep.subr.bf16.mxu0 %v7127
    %10230 = vmatpush1.bf16.msra.mxu0 %v7126
    %10231 = vmatprep.subr.bf16.mxu0 %v7135
    %10232 = vmatpush1.bf16.msra.mxu0 %v7134
    %10233 = vmatprep.subr.bf16.mxu0 %v7143
    %10234 = vmatpush1.bf16.msra.mxu0 %v7142
    %10235 = vmatprep.subr.bf16.mxu0 %v7151
    %10236 = vmatpush1.bf16.msra.mxu0 %v7150
    %10237 = vmatprep.subr.bf16.mxu0 %v7159
    %10238 = vmatpush1.bf16.msra.mxu0 %v7158
    %10239 = vmatprep.subr.bf16.mxu0 %v7167
    %10240 = vmatpush1.bf16.msra.mxu0 %v7166
    %10241 = vmatprep.subr.bf16.mxu0 %v7175
    %10242 = vmatpush1.bf16.msra.mxu0 %v7174
    %10243 = vmatprep.subr.bf16.mxu0 %v7183
    %10244 = vmatpush1.bf16.msra.mxu0 %v7182
    %10245 = vmatprep.subr.bf16.mxu0 %v7191
    %10246 = vmatpush1.bf16.msra.mxu0 %v7190
    %10247 = vmatprep.subr.bf16.mxu0 %v7199
    %10248 = vmatpush1.bf16.msra.mxu0 %v7198
    %10249 = vmatprep.subr.bf16.mxu0 %v7207
    %10250 = vmatpush1.bf16.msra.mxu0 %v7206
    %10251 = vmatprep.subr.bf16.mxu0 %v7215
    %10252 = vmatpush1.bf16.msra.mxu0 %v7214
    %10253 = vmatprep.mubr.bf16.mxu0 %v253
    %10254 = vmatmul.mubr.bf16.gmra.mrb[0].mxu0 %v252
    %v10255 = vpop.f32.mrb[0].mxu0
    %v10256 = vadd.f32 %v10215, %v10255
    %v10257 = vpop.f32.mrb[0].mxu0
    %v10258 = vadd.f32 %v10217, %v10257
    %v10259 = vpop.f32.mrb[0].mxu0
    %v10260 = vpop.f32.mrb[0].mxu0
    %10261 = vdwg.mxu0
    %10262 = vmatprep.subr.bf16.mxu0 %v7223
    %10263 = vmatpush1.bf16.msra.mxu0 %v7222
    %10264 = vmatprep.subr.bf16.mxu0 %v7231
    %10265 = vmatpush1.bf16.msra.mxu0 %v7230
    %10266 = vmatprep.subr.bf16.mxu0 %v7239
    %10267 = vmatpush1.bf16.msra.mxu0 %v7238
    %10268 = vmatprep.subr.bf16.mxu0 %v7247
    %10269 = vmatpush1.bf16.msra.mxu0 %v7246
    %10270 = vmatprep.subr.bf16.mxu0 %v7255
    %10271 = vmatpush1.bf16.msra.mxu0 %v7254
    %10272 = vmatprep.subr.bf16.mxu0 %v7263
    %10273 = vmatpush1.bf16.msra.mxu0 %v7262
    %10274 = vmatprep.subr.bf16.mxu0 %v7271
    %10275 = vmatpush1.bf16.msra.mxu0 %v7270
    %10276 = vmatprep.subr.bf16.mxu0 %v7279
    %10277 = vmatpush1.bf16.msra.mxu0 %v7278
    %10278 = vmatprep.subr.bf16.mxu0 %v7287
    %10279 = vmatpush1.bf16.msra.mxu0 %v7286
    %10280 = vmatprep.subr.bf16.mxu0 %v7295
    %10281 = vmatpush1.bf16.msra.mxu0 %v7294
    %10282 = vmatprep.subr.bf16.mxu0 %v7303
    %10283 = vmatpush1.bf16.msra.mxu0 %v7302
    %10284 = vmatprep.subr.bf16.mxu0 %v7311
    %10285 = vmatpush1.bf16.msra.mxu0 %v7310
    %10286 = vmatprep.subr.bf16.mxu0 %v7319
    %10287 = vmatpush1.bf16.msra.mxu0 %v7318
    %10288 = vmatprep.subr.bf16.mxu0 %v7327
    %10289 = vmatpush1.bf16.msra.mxu0 %v7326
    %10290 = vmatprep.subr.bf16.mxu0 %v7335
    %10291 = vmatpush1.bf16.msra.mxu0 %v7334
    %10292 = vmatprep.subr.bf16.mxu0 %v7343
    %10293 = vmatpush1.bf16.msra.mxu0 %v7342
    %10294 = vmatprep.mubr.bf16.mxu0 %v255
    %10295 = vmatmul.mubr.bf16.gmra.mrb[0].mxu0 %v254
    %v10296 = vpop.f32.mrb[0].mxu0
    %v10297 = vadd.f32 %v10256, %v10296
    %v10298 = vpop.f32.mrb[0].mxu0
    %v10299 = vadd.f32 %v10258, %v10298
    %v10300 = vpop.f32.mrb[0].mxu0
    %v10301 = vpop.f32.mrb[0].mxu0
    %10302 = vdwg.mxu0
    %10303 = vmatprep.subr.bf16.mxu0 %v7351
    %10304 = vmatpush1.bf16.msra.mxu0 %v7350
    %10305 = vmatprep.subr.bf16.mxu0 %v7359
    %10306 = vmatpush1.bf16.msra.mxu0 %v7358
    %10307 = vmatprep.subr.bf16.mxu0 %v7367
    %10308 = vmatpush1.bf16.msra.mxu0 %v7366
    %10309 = vmatprep.subr.bf16.mxu0 %v7375
    %10310 = vmatpush1.bf16.msra.mxu0 %v7374
    %10311 = vmatprep.subr.bf16.mxu0 %v7383
    %10312 = vmatpush1.bf16.msra.mxu0 %v7382
    %10313 = vmatprep.subr.bf16.mxu0 %v7391
    %10314 = vmatpush1.bf16.msra.mxu0 %v7390
    %10315 = vmatprep.subr.bf16.mxu0 %v7399
    %10316 = vmatpush1.bf16.msra.mxu0 %v7398
    %10317 = vmatprep.subr.bf16.mxu0 %v7407
    %10318 = vmatpush1.bf16.msra.mxu0 %v7406
    %10319 = vmatprep.subr.bf16.mxu0 %v7415
    %10320 = vmatpush1.bf16.msra.mxu0 %v7414
    %10321 = vmatprep.subr.bf16.mxu0 %v7423
    %10322 = vmatpush1.bf16.msra.mxu0 %v7422
    %10323 = vmatprep.subr.bf16.mxu0 %v7431
    %10324 = vmatpush1.bf16.msra.mxu0 %v7430
    %10325 = vmatprep.subr.bf16.mxu0 %v7439
    %10326 = vmatpush1.bf16.msra.mxu0 %v7438
    %10327 = vmatprep.subr.bf16.mxu0 %v7447
    %10328 = vmatpush1.bf16.msra.mxu0 %v7446
    %10329 = vmatprep.subr.bf16.mxu0 %v7455
    %10330 = vmatpush1.bf16.msra.mxu0 %v7454
    %10331 = vmatprep.subr.bf16.mxu0 %v7463
    %10332 = vmatpush1.bf16.msra.mxu0 %v7462
    %10333 = vmatprep.subr.bf16.mxu0 %v7471
    %10334 = vmatpush1.bf16.msra.mxu0 %v7470
    %10335 = vmatprep.mubr.bf16.mxu0 %v257
    %10336 = vmatmul.mubr.bf16.gmra.mrb[0].mxu0 %v256
    %v10337 = vpop.f32.mrb[0].mxu0
    %v10338 = vadd.f32 %v10297, %v10337
    %v10339 = vpop.f32.mrb[0].mxu0
    %v10340 = vadd.f32 %v10299, %v10339
    %v10341 = vpop.f32.mrb[0].mxu0
    %v10342 = vpop.f32.mrb[0].mxu0
    %10343 = vdwg.mxu0
    %10344 = vmatprep.subr.bf16.mxu0 %v7479
    %10345 = vmatpush1.bf16.msra.mxu0 %v7478
    %10346 = vmatprep.subr.bf16.mxu0 %v7487
    %10347 = vmatpush1.bf16.msra.mxu0 %v7486
    %10348 = vmatprep.subr.bf16.mxu0 %v7495
    %10349 = vmatpush1.bf16.msra.mxu0 %v7494
    %10350 = vmatprep.subr.bf16.mxu0 %v7503
    %10351 = vmatpush1.bf16.msra.mxu0 %v7502
    %10352 = vmatprep.subr.bf16.mxu0 %v7511
    %10353 = vmatpush1.bf16.msra.mxu0 %v7510
    %10354 = vmatprep.subr.bf16.mxu0 %v7519
    %10355 = vmatpush1.bf16.msra.mxu0 %v7518
    %10356 = vmatprep.subr.bf16.mxu0 %v7527
    %10357 = vmatpush1.bf16.msra.mxu0 %v7526
    %10358 = vmatprep.subr.bf16.mxu0 %v7535
    %10359 = vmatpush1.bf16.msra.mxu0 %v7534
    %10360 = vmatprep.subr.bf16.mxu0 %v7543
    %10361 = vmatpush1.bf16.msra.mxu0 %v7542
    %10362 = vmatprep.subr.bf16.mxu0 %v7551
    %10363 = vmatpush1.bf16.msra.mxu0 %v7550
    %10364 = vmatprep.subr.bf16.mxu0 %v7559
    %10365 = vmatpush1.bf16.msra.mxu0 %v7558
    %10366 = vmatprep.subr.bf16.mxu0 %v7567
    %10367 = vmatpush1.bf16.msra.mxu0 %v7566
    %10368 = vmatprep.subr.bf16.mxu0 %v7575
    %10369 = vmatpush1.bf16.msra.mxu0 %v7574
    %10370 = vmatprep.subr.bf16.mxu0 %v7583
    %10371 = vmatpush1.bf16.msra.mxu0 %v7582
    %10372 = vmatprep.subr.bf16.mxu0 %v7591
    %10373 = vmatpush1.bf16.msra.mxu0 %v7590
    %10374 = vmatprep.subr.bf16.mxu0 %v7599
    %10375 = vmatpush1.bf16.msra.mxu0 %v7598
    %10376 = vmatprep.mubr.bf16.mxu0 %v259
    %10377 = vmatmul.mubr.bf16.gmra.mrb[0].mxu0 %v258
    %v10378 = vpop.f32.mrb[0].mxu0
    %v10379 = vadd.f32 %v10338, %v10378
    %v10380 = vpop.f32.mrb[0].mxu0
    %v10381 = vadd.f32 %v10340, %v10380
    %v10382 = vpop.f32.mrb[0].mxu0
    %v10383 = vpop.f32.mrb[0].mxu0
    %10384 = vdwg.mxu0
    %10385 = vmatprep.subr.bf16.mxu0 %v7607
    %10386 = vmatpush1.bf16.msra.mxu0 %v7606
    %10387 = vmatprep.subr.bf16.mxu0 %v7615
    %10388 = vmatpush1.bf16.msra.mxu0 %v7614
    %10389 = vmatprep.subr.bf16.mxu0 %v7623
    %10390 = vmatpush1.bf16.msra.mxu0 %v7622
    %10391 = vmatprep.subr.bf16.mxu0 %v7631
    %10392 = vmatpush1.bf16.msra.mxu0 %v7630
    %10393 = vmatprep.subr.bf16.mxu0 %v7639
    %10394 = vmatpush1.bf16.msra.mxu0 %v7638
    %10395 = vmatprep.subr.bf16.mxu0 %v7647
    %10396 = vmatpush1.bf16.msra.mxu0 %v7646
    %10397 = vmatprep.subr.bf16.mxu0 %v7655
    %10398 = vmatpush1.bf16.msra.mxu0 %v7654
    %10399 = vmatprep.subr.bf16.mxu0 %v7663
    %10400 = vmatpush1.bf16.msra.mxu0 %v7662
    %10401 = vmatprep.subr.bf16.mxu0 %v7671
    %10402 = vmatpush1.bf16.msra.mxu0 %v7670
    %10403 = vmatprep.subr.bf16.mxu0 %v7679
    %10404 = vmatpush1.bf16.msra.mxu0 %v7678
    %10405 = vmatprep.subr.bf16.mxu0 %v7687
    %10406 = vmatpush1.bf16.msra.mxu0 %v7686
    %10407 = vmatprep.subr.bf16.mxu0 %v7695
    %10408 = vmatpush1.bf16.msra.mxu0 %v7694
    %10409 = vmatprep.subr.bf16.mxu0 %v7703
    %10410 = vmatpush1.bf16.msra.mxu0 %v7702
    %10411 = vmatprep.subr.bf16.mxu0 %v7711
    %10412 = vmatpush1.bf16.msra.mxu0 %v7710
    %10413 = vmatprep.subr.bf16.mxu0 %v7719
    %10414 = vmatpush1.bf16.msra.mxu0 %v7718
    %10415 = vmatprep.subr.bf16.mxu0 %v7727
    %10416 = vmatpush1.bf16.msra.mxu0 %v7726
    %10417 = vmatprep.mubr.bf16.mxu0 %v261
    %10418 = vmatmul.mubr.bf16.gmra.mrb[0].mxu0 %v260
    %v10419 = vpop.f32.mrb[0].mxu0
    %v10420 = vadd.f32 %v10379, %v10419
    %v10421 = vpop.f32.mrb[0].mxu0
    %v10422 = vadd.f32 %v10381, %v10421
    %v10423 = vpop.f32.mrb[0].mxu0
    %v10424 = vpop.f32.mrb[0].mxu0
    %10425 = vdwg.mxu0
    %10426 = vmatprep.subr.bf16.mxu0 %v7735
    %10427 = vmatpush1.bf16.msra.mxu0 %v7734
    %10428 = vmatprep.subr.bf16.mxu0 %v7743
    %10429 = vmatpush1.bf16.msra.mxu0 %v7742
    %10430 = vmatprep.subr.bf16.mxu0 %v7751
    %10431 = vmatpush1.bf16.msra.mxu0 %v7750
    %10432 = vmatprep.subr.bf16.mxu0 %v7759
    %10433 = vmatpush1.bf16.msra.mxu0 %v7758
    %10434 = vmatprep.subr.bf16.mxu0 %v7767
    %10435 = vmatpush1.bf16.msra.mxu0 %v7766
    %10436 = vmatprep.subr.bf16.mxu0 %v7775
    %10437 = vmatpush1.bf16.msra.mxu0 %v7774
    %10438 = vmatprep.subr.bf16.mxu0 %v7783
    %10439 = vmatpush1.bf16.msra.mxu0 %v7782
    %10440 = vmatprep.subr.bf16.mxu0 %v7791
    %10441 = vmatpush1.bf16.msra.mxu0 %v7790
    %10442 = vmatprep.subr.bf16.mxu0 %v7799
    %10443 = vmatpush1.bf16.msra.mxu0 %v7798
    %10444 = vmatprep.subr.bf16.mxu0 %v7807
    %10445 = vmatpush1.bf16.msra.mxu0 %v7806
    %10446 = vmatprep.subr.bf16.mxu0 %v7815
    %10447 = vmatpush1.bf16.msra.mxu0 %v7814
    %10448 = vmatprep.subr.bf16.mxu0 %v7823
    %10449 = vmatpush1.bf16.msra.mxu0 %v7822
    %10450 = vmatprep.subr.bf16.mxu0 %v7831
    %10451 = vmatpush1.bf16.msra.mxu0 %v7830
    %10452 = vmatprep.subr.bf16.mxu0 %v7839
    %10453 = vmatpush1.bf16.msra.mxu0 %v7838
    %10454 = vmatprep.subr.bf16.mxu0 %v7847
    %10455 = vmatpush1.bf16.msra.mxu0 %v7846
    %10456 = vmatprep.subr.bf16.mxu0 %v7855
    %10457 = vmatpush1.bf16.msra.mxu0 %v7854
    %10458 = vmatprep.mubr.bf16.mxu0 %v263
    %10459 = vmatmul.mubr.bf16.gmra.mrb[0].mxu0 %v262
    %v10460 = vpop.f32.mrb[0].mxu0
    %v10461 = vadd.f32 %v10420, %v10460
    %v10462 = vpop.f32.mrb[0].mxu0
    %v10463 = vadd.f32 %v10422, %v10462
    %v10464 = vpop.f32.mrb[0].mxu0
    %v10465 = vpop.f32.mrb[0].mxu0
    %10466 = vdwg.mxu0
    %10467 = vmatprep.subr.bf16.mxu0 %v7863
    %10468 = vmatpush1.bf16.msra.mxu0 %v7862
    %10469 = vmatprep.subr.bf16.mxu0 %v7871
    %10470 = vmatpush1.bf16.msra.mxu0 %v7870
    %10471 = vmatprep.subr.bf16.mxu0 %v7879
    %10472 = vmatpush1.bf16.msra.mxu0 %v7878
    %10473 = vmatprep.subr.bf16.mxu0 %v7887
    %10474 = vmatpush1.bf16.msra.mxu0 %v7886
    %10475 = vmatprep.subr.bf16.mxu0 %v7895
    %10476 = vmatpush1.bf16.msra.mxu0 %v7894
    %10477 = vmatprep.subr.bf16.mxu0 %v7903
    %10478 = vmatpush1.bf16.msra.mxu0 %v7902
    %10479 = vmatprep.subr.bf16.mxu0 %v7911
    %10480 = vmatpush1.bf16.msra.mxu0 %v7910
    %10481 = vmatprep.subr.bf16.mxu0 %v7919
    %10482 = vmatpush1.bf16.msra.mxu0 %v7918
    %10483 = vmatprep.subr.bf16.mxu0 %v7927
    %10484 = vmatpush1.bf16.msra.mxu0 %v7926
    %10485 = vmatprep.subr.bf16.mxu0 %v7935
    %10486 = vmatpush1.bf16.msra.mxu0 %v7934
    %10487 = vmatprep.subr.bf16.mxu0 %v7943
    %10488 = vmatpush1.bf16.msra.mxu0 %v7942
    %10489 = vmatprep.subr.bf16.mxu0 %v7951
    %10490 = vmatpush1.bf16.msra.mxu0 %v7950
    %10491 = vmatprep.subr.bf16.mxu0 %v7959
    %10492 = vmatpush1.bf16.msra.mxu0 %v7958
    %10493 = vmatprep.subr.bf16.mxu0 %v7967
    %10494 = vmatpush1.bf16.msra.mxu0 %v7966
    %10495 = vmatprep.subr.bf16.mxu0 %v7975
    %10496 = vmatpush1.bf16.msra.mxu0 %v7974
    %10497 = vmatprep.subr.bf16.mxu0 %v7983
    %10498 = vmatpush1.bf16.msra.mxu0 %v7982
    %10499 = vmatprep.mubr.bf16.mxu0 %v265
    %10500 = vmatmul.mubr.bf16.gmra.mrb[0].mxu0 %v264
    %v10501 = vpop.f32.mrb[0].mxu0
    %v10502 = vadd.f32 %v10461, %v10501
    %v10503 = vpop.f32.mrb[0].mxu0
    %v10504 = vadd.f32 %v10463, %v10503
    %v10505 = vpop.f32.mrb[0].mxu0
    %v10506 = vpop.f32.mrb[0].mxu0
    %10507 = vdwg.mxu0
    %10508 = vmatprep.subr.bf16.mxu0 %v6457
    %10509 = vmatpush1.bf16.msra.mxu0 %v6456
    %10510 = vmatprep.subr.bf16.mxu0 %v6465
    %10511 = vmatpush1.bf16.msra.mxu0 %v6464
    %10512 = vmatprep.subr.bf16.mxu0 %v6473
    %10513 = vmatpush1.bf16.msra.mxu0 %v6472
    %10514 = vmatprep.subr.bf16.mxu0 %v6481
    %10515 = vmatpush1.bf16.msra.mxu0 %v6480
    %10516 = vmatprep.subr.bf16.mxu0 %v6489
    %10517 = vmatpush1.bf16.msra.mxu0 %v6488
    %10518 = vmatprep.subr.bf16.mxu0 %v6497
    %10519 = vmatpush1.bf16.msra.mxu0 %v6496
    %10520 = vmatprep.subr.bf16.mxu0 %v6505
    %10521 = vmatpush1.bf16.msra.mxu0 %v6504
    %10522 = vmatprep.subr.bf16.mxu0 %v6513
    %10523 = vmatpush1.bf16.msra.mxu0 %v6512
    %10524 = vmatprep.subr.bf16.mxu0 %v6521
    %10525 = vmatpush1.bf16.msra.mxu0 %v6520
    %10526 = vmatprep.subr.bf16.mxu0 %v6529
    %10527 = vmatpush1.bf16.msra.mxu0 %v6528
    %10528 = vmatprep.subr.bf16.mxu0 %v6537
    %10529 = vmatpush1.bf16.msra.mxu0 %v6536
    %10530 = vmatprep.subr.bf16.mxu0 %v6545
    %10531 = vmatpush1.bf16.msra.mxu0 %v6544
    %10532 = vmatprep.subr.bf16.mxu0 %v6553
    %10533 = vmatpush1.bf16.msra.mxu0 %v6552
    %10534 = vmatprep.subr.bf16.mxu0 %v6561
    %10535 = vmatpush1.bf16.msra.mxu0 %v6560
    %10536 = vmatprep.subr.bf16.mxu0 %v6569
    %10537 = vmatpush1.bf16.msra.mxu0 %v6568
    %10538 = vmatprep.subr.bf16.mxu0 %v6577
    %10539 = vmatpush1.bf16.msra.mxu0 %v6576
    %10540 = vmatprep.mubr.bf16.mxu0 %v243
    %10541 = vmatmul.mubr.bf16.gmra.mrb[0].mxu0 %v242
    %v10542 = vpop.f32.mrb[0].mxu0
    %v10543 = vadd.f32 %v1823, %v10542
    %v10544 = vpop.f32.mrb[0].mxu0
    %v10545 = vadd.f32 %v1827, %v10544
    %v10546 = vpop.f32.mrb[0].mxu0
    %v10547 = vpop.f32.mrb[0].mxu0
    %10548 = vdwg.mxu0
    %10549 = vmatprep.subr.bf16.mxu0 %v6585
    %10550 = vmatpush1.bf16.msra.mxu0 %v6584
    %10551 = vmatprep.subr.bf16.mxu0 %v6593
    %10552 = vmatpush1.bf16.msra.mxu0 %v6592
    %10553 = vmatprep.subr.bf16.mxu0 %v6601
    %10554 = vmatpush1.bf16.msra.mxu0 %v6600
    %10555 = vmatprep.subr.bf16.mxu0 %v6609
    %10556 = vmatpush1.bf16.msra.mxu0 %v6608
    %10557 = vmatprep.subr.bf16.mxu0 %v6617
    %10558 = vmatpush1.bf16.msra.mxu0 %v6616
    %10559 = vmatprep.subr.bf16.mxu0 %v6625
    %10560 = vmatpush1.bf16.msra.mxu0 %v6624
    %10561 = vmatprep.subr.bf16.mxu0 %v6633
    %10562 = vmatpush1.bf16.msra.mxu0 %v6632
    %10563 = vmatprep.subr.bf16.mxu0 %v6641
    %10564 = vmatpush1.bf16.msra.mxu0 %v6640
    %10565 = vmatprep.subr.bf16.mxu0 %v6649
    %10566 = vmatpush1.bf16.msra.mxu0 %v6648
    %10567 = vmatprep.subr.bf16.mxu0 %v6657
    %10568 = vmatpush1.bf16.msra.mxu0 %v6656
    %10569 = vmatprep.subr.bf16.mxu0 %v6665
    %10570 = vmatpush1.bf16.msra.mxu0 %v6664
    %10571 = vmatprep.subr.bf16.mxu0 %v6673
    %10572 = vmatpush1.bf16.msra.mxu0 %v6672
    %10573 = vmatprep.subr.bf16.mxu0 %v6681
    %10574 = vmatpush1.bf16.msra.mxu0 %v6680
    %10575 = vmatprep.subr.bf16.mxu0 %v6689
    %10576 = vmatpush1.bf16.msra.mxu0 %v6688
    %10577 = vmatprep.subr.bf16.mxu0 %v6697
    %10578 = vmatpush1.bf16.msra.mxu0 %v6696
    %10579 = vmatprep.subr.bf16.mxu0 %v6705
    %10580 = vmatpush1.bf16.msra.mxu0 %v6704
    %10581 = vmatprep.mubr.bf16.mxu0 %v245
    %10582 = vmatmul.mubr.bf16.gmra.mrb[0].mxu0 %v244
    %v10583 = vpop.f32.mrb[0].mxu0
    %v10584 = vadd.f32 %v10543, %v10583
    %v10585 = vpop.f32.mrb[0].mxu0
    %v10586 = vadd.f32 %v10545, %v10585
    %v10587 = vpop.f32.mrb[0].mxu0
    %v10588 = vpop.f32.mrb[0].mxu0
    %10589 = vdwg.mxu0
    %10590 = vmatprep.subr.bf16.mxu0 %v6713
    %10591 = vmatpush1.bf16.msra.mxu0 %v6712
    %10592 = vmatprep.subr.bf16.mxu0 %v6721
    %10593 = vmatpush1.bf16.msra.mxu0 %v6720
    %10594 = vmatprep.subr.bf16.mxu0 %v6729
    %10595 = vmatpush1.bf16.msra.mxu0 %v6728
    %10596 = vmatprep.subr.bf16.mxu0 %v6737
    %10597 = vmatpush1.bf16.msra.mxu0 %v6736
    %10598 = vmatprep.subr.bf16.mxu0 %v6745
    %10599 = vmatpush1.bf16.msra.mxu0 %v6744
    %10600 = vmatprep.subr.bf16.mxu0 %v6753
    %10601 = vmatpush1.bf16.msra.mxu0 %v6752
    %10602 = vmatprep.subr.bf16.mxu0 %v6761
    %10603 = vmatpush1.bf16.msra.mxu0 %v6760
    %10604 = vmatprep.subr.bf16.mxu0 %v6769
    %10605 = vmatpush1.bf16.msra.mxu0 %v6768
    %10606 = vmatprep.subr.bf16.mxu0 %v6777
    %10607 = vmatpush1.bf16.msra.mxu0 %v6776
    %10608 = vmatprep.subr.bf16.mxu0 %v6785
    %10609 = vmatpush1.bf16.msra.mxu0 %v6784
    %10610 = vmatprep.subr.bf16.mxu0 %v6793
    %10611 = vmatpush1.bf16.msra.mxu0 %v6792
    %10612 = vmatprep.subr.bf16.mxu0 %v6801
    %10613 = vmatpush1.bf16.msra.mxu0 %v6800
    %10614 = vmatprep.subr.bf16.mxu0 %v6809
    %10615 = vmatpush1.bf16.msra.mxu0 %v6808
    %10616 = vmatprep.subr.bf16.mxu0 %v6817
    %10617 = vmatpush1.bf16.msra.mxu0 %v6816
    %10618 = vmatprep.subr.bf16.mxu0 %v6825
    %10619 = vmatpush1.bf16.msra.mxu0 %v6824
    %10620 = vmatprep.subr.bf16.mxu0 %v6833
    %10621 = vmatpush1.bf16.msra.mxu0 %v6832
    %10622 = vmatprep.mubr.bf16.mxu0 %v247
    %10623 = vmatmul.mubr.bf16.gmra.mrb[0].mxu0 %v246
    %v10624 = vpop.f32.mrb[0].mxu0
    %v10625 = vadd.f32 %v10584, %v10624
    %v10626 = vpop.f32.mrb[0].mxu0
    %v10627 = vadd.f32 %v10586, %v10626
    %v10628 = vpop.f32.mrb[0].mxu0
    %v10629 = vpop.f32.mrb[0].mxu0
    %10630 = vdwg.mxu0
    %10631 = vmatprep.subr.bf16.mxu0 %v6841
    %10632 = vmatpush1.bf16.msra.mxu0 %v6840
    %10633 = vmatprep.subr.bf16.mxu0 %v6849
    %10634 = vmatpush1.bf16.msra.mxu0 %v6848
    %10635 = vmatprep.subr.bf16.mxu0 %v6857
    %10636 = vmatpush1.bf16.msra.mxu0 %v6856
    %10637 = vmatprep.subr.bf16.mxu0 %v6865
    %10638 = vmatpush1.bf16.msra.mxu0 %v6864
    %10639 = vmatprep.subr.bf16.mxu0 %v6873
    %10640 = vmatpush1.bf16.msra.mxu0 %v6872
    %10641 = vmatprep.subr.bf16.mxu0 %v6881
    %10642 = vmatpush1.bf16.msra.mxu0 %v6880
    %10643 = vmatprep.subr.bf16.mxu0 %v6889
    %10644 = vmatpush1.bf16.msra.mxu0 %v6888
    %10645 = vmatprep.subr.bf16.mxu0 %v6897
    %10646 = vmatpush1.bf16.msra.mxu0 %v6896
    %10647 = vmatprep.subr.bf16.mxu0 %v6905
    %10648 = vmatpush1.bf16.msra.mxu0 %v6904
    %10649 = vmatprep.subr.bf16.mxu0 %v6913
    %10650 = vmatpush1.bf16.msra.mxu0 %v6912
    %10651 = vmatprep.subr.bf16.mxu0 %v6921
    %10652 = vmatpush1.bf16.msra.mxu0 %v6920
    %10653 = vmatprep.subr.bf16.mxu0 %v6929
    %10654 = vmatpush1.bf16.msra.mxu0 %v6928
    %10655 = vmatprep.subr.bf16.mxu0 %v6937
    %10656 = vmatpush1.bf16.msra.mxu0 %v6936
    %10657 = vmatprep.subr.bf16.mxu0 %v6945
    %10658 = vmatpush1.bf16.msra.mxu0 %v6944
    %10659 = vmatprep.subr.bf16.mxu0 %v6953
    %10660 = vmatpush1.bf16.msra.mxu0 %v6952
    %10661 = vmatprep.subr.bf16.mxu0 %v6961
    %10662 = vmatpush1.bf16.msra.mxu0 %v6960
    %10663 = vmatprep.mubr.bf16.mxu0 %v249
    %10664 = vmatmul.mubr.bf16.gmra.mrb[0].mxu0 %v248
    %v10665 = vpop.f32.mrb[0].mxu0
    %v10666 = vadd.f32 %v10625, %v10665
    %v10667 = vpop.f32.mrb[0].mxu0
    %v10668 = vadd.f32 %v10627, %v10667
    %v10669 = vpop.f32.mrb[0].mxu0
    %v10670 = vpop.f32.mrb[0].mxu0
    %10671 = vdwg.mxu0
    %10672 = vmatprep.subr.bf16.mxu0 %v6969
    %10673 = vmatpush1.bf16.msra.mxu0 %v6968
    %10674 = vmatprep.subr.bf16.mxu0 %v6977
    %10675 = vmatpush1.bf16.msra.mxu0 %v6976
    %10676 = vmatprep.subr.bf16.mxu0 %v6985
    %10677 = vmatpush1.bf16.msra.mxu0 %v6984
    %10678 = vmatprep.subr.bf16.mxu0 %v6993
    %10679 = vmatpush1.bf16.msra.mxu0 %v6992
    %10680 = vmatprep.subr.bf16.mxu0 %v7001
    %10681 = vmatpush1.bf16.msra.mxu0 %v7000
    %10682 = vmatprep.subr.bf16.mxu0 %v7009
    %10683 = vmatpush1.bf16.msra.mxu0 %v7008
    %10684 = vmatprep.subr.bf16.mxu0 %v7017
    %10685 = vmatpush1.bf16.msra.mxu0 %v7016
    %10686 = vmatprep.subr.bf16.mxu0 %v7025
    %10687 = vmatpush1.bf16.msra.mxu0 %v7024
    %10688 = vmatprep.subr.bf16.mxu0 %v7033
    %10689 = vmatpush1.bf16.msra.mxu0 %v7032
    %10690 = vmatprep.subr.bf16.mxu0 %v7041
    %10691 = vmatpush1.bf16.msra.mxu0 %v7040
    %10692 = vmatprep.subr.bf16.mxu0 %v7049
    %10693 = vmatpush1.bf16.msra.mxu0 %v7048
    %10694 = vmatprep.subr.bf16.mxu0 %v7057
    %10695 = vmatpush1.bf16.msra.mxu0 %v7056
    %10696 = vmatprep.subr.bf16.mxu0 %v7065
    %10697 = vmatpush1.bf16.msra.mxu0 %v7064
    %10698 = vmatprep.subr.bf16.mxu0 %v7073
    %10699 = vmatpush1.bf16.msra.mxu0 %v7072
    %10700 = vmatprep.subr.bf16.mxu0 %v7081
    %10701 = vmatpush1.bf16.msra.mxu0 %v7080
    %10702 = vmatprep.subr.bf16.mxu0 %v7089
    %10703 = vmatpush1.bf16.msra.mxu0 %v7088
    %10704 = vmatprep.mubr.bf16.mxu0 %v251
    %10705 = vmatmul.mubr.bf16.gmra.mrb[0].mxu0 %v250
    %v10706 = vpop.f32.mrb[0].mxu0
    %v10707 = vadd.f32 %v10666, %v10706
    %v10708 = vpop.f32.mrb[0].mxu0
    %v10709 = vadd.f32 %v10668, %v10708
    %v10710 = vpop.f32.mrb[0].mxu0
    %v10711 = vpop.f32.mrb[0].mxu0
    %10712 = vdwg.mxu0
    %10713 = vmatprep.subr.bf16.mxu0 %v7097
    %10714 = vmatpush1.bf16.msra.mxu0 %v7096
    %10715 = vmatprep.subr.bf16.mxu0 %v7105
    %10716 = vmatpush1.bf16.msra.mxu0 %v7104
    %10717 = vmatprep.subr.bf16.mxu0 %v7113
    %10718 = vmatpush1.bf16.msra.mxu0 %v7112
    %10719 = vmatprep.subr.bf16.mxu0 %v7121
    %10720 = vmatpush1.bf16.msra.mxu0 %v7120
    %10721 = vmatprep.subr.bf16.mxu0 %v7129
    %10722 = vmatpush1.bf16.msra.mxu0 %v7128
    %10723 = vmatprep.subr.bf16.mxu0 %v7137
    %10724 = vmatpush1.bf16.msra.mxu0 %v7136
    %10725 = vmatprep.subr.bf16.mxu0 %v7145
    %10726 = vmatpush1.bf16.msra.mxu0 %v7144
    %10727 = vmatprep.subr.bf16.mxu0 %v7153
    %10728 = vmatpush1.bf16.msra.mxu0 %v7152
    %10729 = vmatprep.subr.bf16.mxu0 %v7161
    %10730 = vmatpush1.bf16.msra.mxu0 %v7160
    %10731 = vmatprep.subr.bf16.mxu0 %v7169
    %10732 = vmatpush1.bf16.msra.mxu0 %v7168
    %10733 = vmatprep.subr.bf16.mxu0 %v7177
    %10734 = vmatpush1.bf16.msra.mxu0 %v7176
    %10735 = vmatprep.subr.bf16.mxu0 %v7185
    %10736 = vmatpush1.bf16.msra.mxu0 %v7184
    %10737 = vmatprep.subr.bf16.mxu0 %v7193
    %10738 = vmatpush1.bf16.msra.mxu0 %v7192
    %10739 = vmatprep.subr.bf16.mxu0 %v7201
    %10740 = vmatpush1.bf16.msra.mxu0 %v7200
    %10741 = vmatprep.subr.bf16.mxu0 %v7209
    %10742 = vmatpush1.bf16.msra.mxu0 %v7208
    %10743 = vmatprep.subr.bf16.mxu0 %v7217
    %10744 = vmatpush1.bf16.msra.mxu0 %v7216
    %10745 = vmatprep.mubr.bf16.mxu0 %v253
    %10746 = vmatmul.mubr.bf16.gmra.mrb[0].mxu0 %v252
    %v10747 = vpop.f32.mrb[0].mxu0
    %v10748 = vadd.f32 %v10707, %v10747
    %v10749 = vpop.f32.mrb[0].mxu0
    %v10750 = vadd.f32 %v10709, %v10749
    %v10751 = vpop.f32.mrb[0].mxu0
    %v10752 = vpop.f32.mrb[0].mxu0
    %10753 = vdwg.mxu0
    %10754 = vmatprep.subr.bf16.mxu0 %v7225
    %10755 = vmatpush1.bf16.msra.mxu0 %v7224
    %10756 = vmatprep.subr.bf16.mxu0 %v7233
    %10757 = vmatpush1.bf16.msra.mxu0 %v7232
    %10758 = vmatprep.subr.bf16.mxu0 %v7241
    %10759 = vmatpush1.bf16.msra.mxu0 %v7240
    %10760 = vmatprep.subr.bf16.mxu0 %v7249
    %10761 = vmatpush1.bf16.msra.mxu0 %v7248
    %10762 = vmatprep.subr.bf16.mxu0 %v7257
    %10763 = vmatpush1.bf16.msra.mxu0 %v7256
    %10764 = vmatprep.subr.bf16.mxu0 %v7265
    %10765 = vmatpush1.bf16.msra.mxu0 %v7264
    %10766 = vmatprep.subr.bf16.mxu0 %v7273
    %10767 = vmatpush1.bf16.msra.mxu0 %v7272
    %10768 = vmatprep.subr.bf16.mxu0 %v7281
    %10769 = vmatpush1.bf16.msra.mxu0 %v7280
    %10770 = vmatprep.subr.bf16.mxu0 %v7289
    %10771 = vmatpush1.bf16.msra.mxu0 %v7288
    %10772 = vmatprep.subr.bf16.mxu0 %v7297
    %10773 = vmatpush1.bf16.msra.mxu0 %v7296
    %10774 = vmatprep.subr.bf16.mxu0 %v7305
    %10775 = vmatpush1.bf16.msra.mxu0 %v7304
    %10776 = vmatprep.subr.bf16.mxu0 %v7313
    %10777 = vmatpush1.bf16.msra.mxu0 %v7312
    %10778 = vmatprep.subr.bf16.mxu0 %v7321
    %10779 = vmatpush1.bf16.msra.mxu0 %v7320
    %10780 = vmatprep.subr.bf16.mxu0 %v7329
    %10781 = vmatpush1.bf16.msra.mxu0 %v7328
    %10782 = vmatprep.subr.bf16.mxu0 %v7337
    %10783 = vmatpush1.bf16.msra.mxu0 %v7336
    %10784 = vmatprep.subr.bf16.mxu0 %v7345
    %10785 = vmatpush1.bf16.msra.mxu0 %v7344
    %10786 = vmatprep.mubr.bf16.mxu0 %v255
    %10787 = vmatmul.mubr.bf16.gmra.mrb[0].mxu0 %v254
    %v10788 = vpop.f32.mrb[0].mxu0
    %v10789 = vadd.f32 %v10748, %v10788
    %v10790 = vpop.f32.mrb[0].mxu0
    %v10791 = vadd.f32 %v10750, %v10790
    %v10792 = vpop.f32.mrb[0].mxu0
    %v10793 = vpop.f32.mrb[0].mxu0
    %10794 = vdwg.mxu0
    %10795 = vmatprep.subr.bf16.mxu0 %v7353
    %10796 = vmatpush1.bf16.msra.mxu0 %v7352
    %10797 = vmatprep.subr.bf16.mxu0 %v7361
    %10798 = vmatpush1.bf16.msra.mxu0 %v7360
    %10799 = vmatprep.subr.bf16.mxu0 %v7369
    %10800 = vmatpush1.bf16.msra.mxu0 %v7368
    %10801 = vmatprep.subr.bf16.mxu0 %v7377
    %10802 = vmatpush1.bf16.msra.mxu0 %v7376
    %10803 = vmatprep.subr.bf16.mxu0 %v7385
    %10804 = vmatpush1.bf16.msra.mxu0 %v7384
    %10805 = vmatprep.subr.bf16.mxu0 %v7393
    %10806 = vmatpush1.bf16.msra.mxu0 %v7392
    %10807 = vmatprep.subr.bf16.mxu0 %v7401
    %10808 = vmatpush1.bf16.msra.mxu0 %v7400
    %10809 = vmatprep.subr.bf16.mxu0 %v7409
    %10810 = vmatpush1.bf16.msra.mxu0 %v7408
    %10811 = vmatprep.subr.bf16.mxu0 %v7417
    %10812 = vmatpush1.bf16.msra.mxu0 %v7416
    %10813 = vmatprep.subr.bf16.mxu0 %v7425
    %10814 = vmatpush1.bf16.msra.mxu0 %v7424
    %10815 = vmatprep.subr.bf16.mxu0 %v7433
    %10816 = vmatpush1.bf16.msra.mxu0 %v7432
    %10817 = vmatprep.subr.bf16.mxu0 %v7441
    %10818 = vmatpush1.bf16.msra.mxu0 %v7440
    %10819 = vmatprep.subr.bf16.mxu0 %v7449
    %10820 = vmatpush1.bf16.msra.mxu0 %v7448
    %10821 = vmatprep.subr.bf16.mxu0 %v7457
    %10822 = vmatpush1.bf16.msra.mxu0 %v7456
    %10823 = vmatprep.subr.bf16.mxu0 %v7465
    %10824 = vmatpush1.bf16.msra.mxu0 %v7464
    %10825 = vmatprep.subr.bf16.mxu0 %v7473
    %10826 = vmatpush1.bf16.msra.mxu0 %v7472
    %10827 = vmatprep.mubr.bf16.mxu0 %v257
    %10828 = vmatmul.mubr.bf16.gmra.mrb[0].mxu0 %v256
    %v10829 = vpop.f32.mrb[0].mxu0
    %v10830 = vadd.f32 %v10789, %v10829
    %v10831 = vpop.f32.mrb[0].mxu0
    %v10832 = vadd.f32 %v10791, %v10831
    %v10833 = vpop.f32.mrb[0].mxu0
    %v10834 = vpop.f32.mrb[0].mxu0
    %10835 = vdwg.mxu0
    %10836 = vmatprep.subr.bf16.mxu0 %v7481
    %10837 = vmatpush1.bf16.msra.mxu0 %v7480
    %10838 = vmatprep.subr.bf16.mxu0 %v7489
    %10839 = vmatpush1.bf16.msra.mxu0 %v7488
    %10840 = vmatprep.subr.bf16.mxu0 %v7497
    %10841 = vmatpush1.bf16.msra.mxu0 %v7496
    %10842 = vmatprep.subr.bf16.mxu0 %v7505
    %10843 = vmatpush1.bf16.msra.mxu0 %v7504
    %10844 = vmatprep.subr.bf16.mxu0 %v7513
    %10845 = vmatpush1.bf16.msra.mxu0 %v7512
    %10846 = vmatprep.subr.bf16.mxu0 %v7521
    %10847 = vmatpush1.bf16.msra.mxu0 %v7520
    %10848 = vmatprep.subr.bf16.mxu0 %v7529
    %10849 = vmatpush1.bf16.msra.mxu0 %v7528
    %10850 = vmatprep.subr.bf16.mxu0 %v7537
    %10851 = vmatpush1.bf16.msra.mxu0 %v7536
    %10852 = vmatprep.subr.bf16.mxu0 %v7545
    %10853 = vmatpush1.bf16.msra.mxu0 %v7544
    %10854 = vmatprep.subr.bf16.mxu0 %v7553
    %10855 = vmatpush1.bf16.msra.mxu0 %v7552
    %10856 = vmatprep.subr.bf16.mxu0 %v7561
    %10857 = vmatpush1.bf16.msra.mxu0 %v7560
    %10858 = vmatprep.subr.bf16.mxu0 %v7569
    %10859 = vmatpush1.bf16.msra.mxu0 %v7568
    %10860 = vmatprep.subr.bf16.mxu0 %v7577
    %10861 = vmatpush1.bf16.msra.mxu0 %v7576
    %10862 = vmatprep.subr.bf16.mxu0 %v7585
    %10863 = vmatpush1.bf16.msra.mxu0 %v7584
    %10864 = vmatprep.subr.bf16.mxu0 %v7593
    %10865 = vmatpush1.bf16.msra.mxu0 %v7592
    %10866 = vmatprep.subr.bf16.mxu0 %v7601
    %10867 = vmatpush1.bf16.msra.mxu0 %v7600
    %10868 = vmatprep.mubr.bf16.mxu0 %v259
    %10869 = vmatmul.mubr.bf16.gmra.mrb[0].mxu0 %v258
    %v10870 = vpop.f32.mrb[0].mxu0
    %v10871 = vadd.f32 %v10830, %v10870
    %v10872 = vpop.f32.mrb[0].mxu0
    %v10873 = vadd.f32 %v10832, %v10872
    %v10874 = vpop.f32.mrb[0].mxu0
    %v10875 = vpop.f32.mrb[0].mxu0
    %10876 = vdwg.mxu0
    %10877 = vmatprep.subr.bf16.mxu0 %v7609
    %10878 = vmatpush1.bf16.msra.mxu0 %v7608
    %10879 = vmatprep.subr.bf16.mxu0 %v7617
    %10880 = vmatpush1.bf16.msra.mxu0 %v7616
    %10881 = vmatprep.subr.bf16.mxu0 %v7625
    %10882 = vmatpush1.bf16.msra.mxu0 %v7624
    %10883 = vmatprep.subr.bf16.mxu0 %v7633
    %10884 = vmatpush1.bf16.msra.mxu0 %v7632
    %10885 = vmatprep.subr.bf16.mxu0 %v7641
    %10886 = vmatpush1.bf16.msra.mxu0 %v7640
    %10887 = vmatprep.subr.bf16.mxu0 %v7649
    %10888 = vmatpush1.bf16.msra.mxu0 %v7648
    %10889 = vmatprep.subr.bf16.mxu0 %v7657
    %10890 = vmatpush1.bf16.msra.mxu0 %v7656
    %10891 = vmatprep.subr.bf16.mxu0 %v7665
    %10892 = vmatpush1.bf16.msra.mxu0 %v7664
    %10893 = vmatprep.subr.bf16.mxu0 %v7673
    %10894 = vmatpush1.bf16.msra.mxu0 %v7672
    %10895 = vmatprep.subr.bf16.mxu0 %v7681
    %10896 = vmatpush1.bf16.msra.mxu0 %v7680
    %10897 = vmatprep.subr.bf16.mxu0 %v7689
    %10898 = vmatpush1.bf16.msra.mxu0 %v7688
    %10899 = vmatprep.subr.bf16.mxu0 %v7697
    %10900 = vmatpush1.bf16.msra.mxu0 %v7696
    %10901 = vmatprep.subr.bf16.mxu0 %v7705
    %10902 = vmatpush1.bf16.msra.mxu0 %v7704
    %10903 = vmatprep.subr.bf16.mxu0 %v7713
    %10904 = vmatpush1.bf16.msra.mxu0 %v7712
    %10905 = vmatprep.subr.bf16.mxu0 %v7721
    %10906 = vmatpush1.bf16.msra.mxu0 %v7720
    %10907 = vmatprep.subr.bf16.mxu0 %v7729
    %10908 = vmatpush1.bf16.msra.mxu0 %v7728
    %10909 = vmatprep.mubr.bf16.mxu0 %v261
    %10910 = vmatmul.mubr.bf16.gmra.mrb[0].mxu0 %v260
    %v10911 = vpop.f32.mrb[0].mxu0
    %v10912 = vadd.f32 %v10871, %v10911
    %v10913 = vpop.f32.mrb[0].mxu0
    %v10914 = vadd.f32 %v10873, %v10913
    %v10915 = vpop.f32.mrb[0].mxu0
    %v10916 = vpop.f32.mrb[0].mxu0
    %10917 = vdwg.mxu0
    %10918 = vmatprep.subr.bf16.mxu0 %v7737
    %10919 = vmatpush1.bf16.msra.mxu0 %v7736
    %10920 = vmatprep.subr.bf16.mxu0 %v7745
    %10921 = vmatpush1.bf16.msra.mxu0 %v7744
    %10922 = vmatprep.subr.bf16.mxu0 %v7753
    %10923 = vmatpush1.bf16.msra.mxu0 %v7752
    %10924 = vmatprep.subr.bf16.mxu0 %v7761
    %10925 = vmatpush1.bf16.msra.mxu0 %v7760
    %10926 = vmatprep.subr.bf16.mxu0 %v7769
    %10927 = vmatpush1.bf16.msra.mxu0 %v7768
    %10928 = vmatprep.subr.bf16.mxu0 %v7777
    %10929 = vmatpush1.bf16.msra.mxu0 %v7776
    %10930 = vmatprep.subr.bf16.mxu0 %v7785
    %10931 = vmatpush1.bf16.msra.mxu0 %v7784
    %10932 = vmatprep.subr.bf16.mxu0 %v7793
    %10933 = vmatpush1.bf16.msra.mxu0 %v7792
    %10934 = vmatprep.subr.bf16.mxu0 %v7801
    %10935 = vmatpush1.bf16.msra.mxu0 %v7800
    %10936 = vmatprep.subr.bf16.mxu0 %v7809
    %10937 = vmatpush1.bf16.msra.mxu0 %v7808
    %10938 = vmatprep.subr.bf16.mxu0 %v7817
    %10939 = vmatpush1.bf16.msra.mxu0 %v7816
    %10940 = vmatprep.subr.bf16.mxu0 %v7825
    %10941 = vmatpush1.bf16.msra.mxu0 %v7824
    %10942 = vmatprep.subr.bf16.mxu0 %v7833
    %10943 = vmatpush1.bf16.msra.mxu0 %v7832
    %10944 = vmatprep.subr.bf16.mxu0 %v7841
    %10945 = vmatpush1.bf16.msra.mxu0 %v7840
    %10946 = vmatprep.subr.bf16.mxu0 %v7849
    %10947 = vmatpush1.bf16.msra.mxu0 %v7848
    %10948 = vmatprep.subr.bf16.mxu0 %v7857
    %10949 = vmatpush1.bf16.msra.mxu0 %v7856
    %10950 = vmatprep.mubr.bf16.mxu0 %v263
    %10951 = vmatmul.mubr.bf16.gmra.mrb[0].mxu0 %v262
    %v10952 = vpop.f32.mrb[0].mxu0
    %v10953 = vadd.f32 %v10912, %v10952
    %v10954 = vpop.f32.mrb[0].mxu0
    %v10955 = vadd.f32 %v10914, %v10954
    %v10956 = vpop.f32.mrb[0].mxu0
    %v10957 = vpop.f32.mrb[0].mxu0
    %10958 = vdwg.mxu0
    %10959 = vmatprep.subr.bf16.mxu0 %v7865
    %10960 = vmatpush1.bf16.msra.mxu0 %v7864
    %10961 = vmatprep.subr.bf16.mxu0 %v7873
    %10962 = vmatpush1.bf16.msra.mxu0 %v7872
    %10963 = vmatprep.subr.bf16.mxu0 %v7881
    %10964 = vmatpush1.bf16.msra.mxu0 %v7880
    %10965 = vmatprep.subr.bf16.mxu0 %v7889
    %10966 = vmatpush1.bf16.msra.mxu0 %v7888
    %10967 = vmatprep.subr.bf16.mxu0 %v7897
    %10968 = vmatpush1.bf16.msra.mxu0 %v7896
    %10969 = vmatprep.subr.bf16.mxu0 %v7905
    %10970 = vmatpush1.bf16.msra.mxu0 %v7904
    %10971 = vmatprep.subr.bf16.mxu0 %v7913
    %10972 = vmatpush1.bf16.msra.mxu0 %v7912
    %10973 = vmatprep.subr.bf16.mxu0 %v7921
    %10974 = vmatpush1.bf16.msra.mxu0 %v7920
    %10975 = vmatprep.subr.bf16.mxu0 %v7929
    %10976 = vmatpush1.bf16.msra.mxu0 %v7928
    %10977 = vmatprep.subr.bf16.mxu0 %v7937
    %10978 = vmatpush1.bf16.msra.mxu0 %v7936
    %10979 = vmatprep.subr.bf16.mxu0 %v7945
    %10980 = vmatpush1.bf16.msra.mxu0 %v7944
    %10981 = vmatprep.subr.bf16.mxu0 %v7953
    %10982 = vmatpush1.bf16.msra.mxu0 %v7952
    %10983 = vmatprep.subr.bf16.mxu0 %v7961
    %10984 = vmatpush1.bf16.msra.mxu0 %v7960
    %10985 = vmatprep.subr.bf16.mxu0 %v7969
    %10986 = vmatpush1.bf16.msra.mxu0 %v7968
    %10987 = vmatprep.subr.bf16.mxu0 %v7977
    %10988 = vmatpush1.bf16.msra.mxu0 %v7976
    %10989 = vmatprep.subr.bf16.mxu0 %v7985
    %10990 = vmatpush1.bf16.msra.mxu0 %v7984
    %10991 = vmatprep.mubr.bf16.mxu0 %v265
    %10992 = vmatmul.mubr.bf16.gmra.mrb[0].mxu0 %v264
    %v10993 = vpop.f32.mrb[0].mxu0
    %v10994 = vadd.f32 %v10953, %v10993
    %v10995 = vpop.f32.mrb[0].mxu0
    %v10996 = vadd.f32 %v10955, %v10995
    %v10997 = vpop.f32.mrb[0].mxu0
    %v10998 = vpop.f32.mrb[0].mxu0
    %10999 = vdwg.mxu0
    %11000 = vmatprep.subr.bf16.mxu0 %v6459
    %11001 = vmatpush1.bf16.msra.mxu0 %v6458
    %11002 = vmatprep.subr.bf16.mxu0 %v6467
    %11003 = vmatpush1.bf16.msra.mxu0 %v6466
    %11004 = vmatprep.subr.bf16.mxu0 %v6475
    %11005 = vmatpush1.bf16.msra.mxu0 %v6474
    %11006 = vmatprep.subr.bf16.mxu0 %v6483
    %11007 = vmatpush1.bf16.msra.mxu0 %v6482
    %11008 = vmatprep.subr.bf16.mxu0 %v6491
    %11009 = vmatpush1.bf16.msra.mxu0 %v6490
    %11010 = vmatprep.subr.bf16.mxu0 %v6499
    %11011 = vmatpush1.bf16.msra.mxu0 %v6498
    %11012 = vmatprep.subr.bf16.mxu0 %v6507
    %11013 = vmatpush1.bf16.msra.mxu0 %v6506
    %11014 = vmatprep.subr.bf16.mxu0 %v6515
    %11015 = vmatpush1.bf16.msra.mxu0 %v6514
    %11016 = vmatprep.subr.bf16.mxu0 %v6523
    %11017 = vmatpush1.bf16.msra.mxu0 %v6522
    %11018 = vmatprep.subr.bf16.mxu0 %v6531
    %11019 = vmatpush1.bf16.msra.mxu0 %v6530
    %11020 = vmatprep.subr.bf16.mxu0 %v6539
    %11021 = vmatpush1.bf16.msra.mxu0 %v6538
    %11022 = vmatprep.subr.bf16.mxu0 %v6547
    %11023 = vmatpush1.bf16.msra.mxu0 %v6546
    %11024 = vmatprep.subr.bf16.mxu0 %v6555
    %11025 = vmatpush1.bf16.msra.mxu0 %v6554
    %11026 = vmatprep.subr.bf16.mxu0 %v6563
    %11027 = vmatpush1.bf16.msra.mxu0 %v6562
    %11028 = vmatprep.subr.bf16.mxu0 %v6571
    %11029 = vmatpush1.bf16.msra.mxu0 %v6570
    %11030 = vmatprep.subr.bf16.mxu0 %v6579
    %11031 = vmatpush1.bf16.msra.mxu0 %v6578
    %11032 = vmatprep.mubr.bf16.mxu0 %v243
    %11033 = vmatmul.mubr.bf16.gmra.mrb[0].mxu0 %v242
    %v11034 = vpop.f32.mrb[0].mxu0
    %v11035 = vadd.f32 %v1831, %v11034
    %v11036 = vpop.f32.mrb[0].mxu0
    %v11037 = vadd.f32 %v1835, %v11036
    %v11038 = vpop.f32.mrb[0].mxu0
    %v11039 = vpop.f32.mrb[0].mxu0
    %11040 = vdwg.mxu0
    %11041 = vmatprep.subr.bf16.mxu0 %v6587
    %11042 = vmatpush1.bf16.msra.mxu0 %v6586
    %11043 = vmatprep.subr.bf16.mxu0 %v6595
    %11044 = vmatpush1.bf16.msra.mxu0 %v6594
    %11045 = vmatprep.subr.bf16.mxu0 %v6603
    %11046 = vmatpush1.bf16.msra.mxu0 %v6602
    %11047 = vmatprep.subr.bf16.mxu0 %v6611
    %11048 = vmatpush1.bf16.msra.mxu0 %v6610
    %11049 = vmatprep.subr.bf16.mxu0 %v6619
    %11050 = vmatpush1.bf16.msra.mxu0 %v6618
    %11051 = vmatprep.subr.bf16.mxu0 %v6627
    %11052 = vmatpush1.bf16.msra.mxu0 %v6626
    %11053 = vmatprep.subr.bf16.mxu0 %v6635
    %11054 = vmatpush1.bf16.msra.mxu0 %v6634
    %11055 = vmatprep.subr.bf16.mxu0 %v6643
    %11056 = vmatpush1.bf16.msra.mxu0 %v6642
    %11057 = vmatprep.subr.bf16.mxu0 %v6651
    %11058 = vmatpush1.bf16.msra.mxu0 %v6650
    %11059 = vmatprep.subr.bf16.mxu0 %v6659
    %11060 = vmatpush1.bf16.msra.mxu0 %v6658
    %11061 = vmatprep.subr.bf16.mxu0 %v6667
    %11062 = vmatpush1.bf16.msra.mxu0 %v6666
    %11063 = vmatprep.subr.bf16.mxu0 %v6675
    %11064 = vmatpush1.bf16.msra.mxu0 %v6674
    %11065 = vmatprep.subr.bf16.mxu0 %v6683
    %11066 = vmatpush1.bf16.msra.mxu0 %v6682
    %11067 = vmatprep.subr.bf16.mxu0 %v6691
    %11068 = vmatpush1.bf16.msra.mxu0 %v6690
    %11069 = vmatprep.subr.bf16.mxu0 %v6699
    %11070 = vmatpush1.bf16.msra.mxu0 %v6698
    %11071 = vmatprep.subr.bf16.mxu0 %v6707
    %11072 = vmatpush1.bf16.msra.mxu0 %v6706
    %11073 = vmatprep.mubr.bf16.mxu0 %v245
    %11074 = vmatmul.mubr.bf16.gmra.mrb[0].mxu0 %v244
    %v11075 = vpop.f32.mrb[0].mxu0
    %v11076 = vadd.f32 %v11035, %v11075
    %v11077 = vpop.f32.mrb[0].mxu0
    %v11078 = vadd.f32 %v11037, %v11077
    %v11079 = vpop.f32.mrb[0].mxu0
    %v11080 = vpop.f32.mrb[0].mxu0
    %11081 = vdwg.mxu0
    %11082 = vmatprep.subr.bf16.mxu0 %v6715
    %11083 = vmatpush1.bf16.msra.mxu0 %v6714
    %11084 = vmatprep.subr.bf16.mxu0 %v6723
    %11085 = vmatpush1.bf16.msra.mxu0 %v6722
    %11086 = vmatprep.subr.bf16.mxu0 %v6731
    %11087 = vmatpush1.bf16.msra.mxu0 %v6730
    %11088 = vmatprep.subr.bf16.mxu0 %v6739
    %11089 = vmatpush1.bf16.msra.mxu0 %v6738
    %11090 = vmatprep.subr.bf16.mxu0 %v6747
    %11091 = vmatpush1.bf16.msra.mxu0 %v6746
    %11092 = vmatprep.subr.bf16.mxu0 %v6755
    %11093 = vmatpush1.bf16.msra.mxu0 %v6754
    %11094 = vmatprep.subr.bf16.mxu0 %v6763
    %11095 = vmatpush1.bf16.msra.mxu0 %v6762
    %11096 = vmatprep.subr.bf16.mxu0 %v6771
    %11097 = vmatpush1.bf16.msra.mxu0 %v6770
    %11098 = vmatprep.subr.bf16.mxu0 %v6779
    %11099 = vmatpush1.bf16.msra.mxu0 %v6778
    %11100 = vmatprep.subr.bf16.mxu0 %v6787
    %11101 = vmatpush1.bf16.msra.mxu0 %v6786
    %11102 = vmatprep.subr.bf16.mxu0 %v6795
    %11103 = vmatpush1.bf16.msra.mxu0 %v6794
    %11104 = vmatprep.subr.bf16.mxu0 %v6803
    %11105 = vmatpush1.bf16.msra.mxu0 %v6802
    %11106 = vmatprep.subr.bf16.mxu0 %v6811
    %11107 = vmatpush1.bf16.msra.mxu0 %v6810
    %11108 = vmatprep.subr.bf16.mxu0 %v6819
    %11109 = vmatpush1.bf16.msra.mxu0 %v6818
    %11110 = vmatprep.subr.bf16.mxu0 %v6827
    %11111 = vmatpush1.bf16.msra.mxu0 %v6826
    %11112 = vmatprep.subr.bf16.mxu0 %v6835
    %11113 = vmatpush1.bf16.msra.mxu0 %v6834
    %11114 = vmatprep.mubr.bf16.mxu0 %v247
    %11115 = vmatmul.mubr.bf16.gmra.mrb[0].mxu0 %v246
    %v11116 = vpop.f32.mrb[0].mxu0
    %v11117 = vadd.f32 %v11076, %v11116
    %v11118 = vpop.f32.mrb[0].mxu0
    %v11119 = vadd.f32 %v11078, %v11118
    %v11120 = vpop.f32.mrb[0].mxu0
    %v11121 = vpop.f32.mrb[0].mxu0
    %11122 = vdwg.mxu0
    %11123 = vmatprep.subr.bf16.mxu0 %v6843
    %11124 = vmatpush1.bf16.msra.mxu0 %v6842
    %11125 = vmatprep.subr.bf16.mxu0 %v6851
    %11126 = vmatpush1.bf16.msra.mxu0 %v6850
    %11127 = vmatprep.subr.bf16.mxu0 %v6859
    %11128 = vmatpush1.bf16.msra.mxu0 %v6858
    %11129 = vmatprep.subr.bf16.mxu0 %v6867
    %11130 = vmatpush1.bf16.msra.mxu0 %v6866
    %11131 = vmatprep.subr.bf16.mxu0 %v6875
    %11132 = vmatpush1.bf16.msra.mxu0 %v6874
    %11133 = vmatprep.subr.bf16.mxu0 %v6883
    %11134 = vmatpush1.bf16.msra.mxu0 %v6882
    %11135 = vmatprep.subr.bf16.mxu0 %v6891
    %11136 = vmatpush1.bf16.msra.mxu0 %v6890
    %11137 = vmatprep.subr.bf16.mxu0 %v6899
    %11138 = vmatpush1.bf16.msra.mxu0 %v6898
    %11139 = vmatprep.subr.bf16.mxu0 %v6907
    %11140 = vmatpush1.bf16.msra.mxu0 %v6906
    %11141 = vmatprep.subr.bf16.mxu0 %v6915
    %11142 = vmatpush1.bf16.msra.mxu0 %v6914
    %11143 = vmatprep.subr.bf16.mxu0 %v6923
    %11144 = vmatpush1.bf16.msra.mxu0 %v6922
    %11145 = vmatprep.subr.bf16.mxu0 %v6931
    %11146 = vmatpush1.bf16.msra.mxu0 %v6930
    %11147 = vmatprep.subr.bf16.mxu0 %v6939
    %11148 = vmatpush1.bf16.msra.mxu0 %v6938
    %11149 = vmatprep.subr.bf16.mxu0 %v6947
    %11150 = vmatpush1.bf16.msra.mxu0 %v6946
    %11151 = vmatprep.subr.bf16.mxu0 %v6955
    %11152 = vmatpush1.bf16.msra.mxu0 %v6954
    %11153 = vmatprep.subr.bf16.mxu0 %v6963
    %11154 = vmatpush1.bf16.msra.mxu0 %v6962
    %11155 = vmatprep.mubr.bf16.mxu0 %v249
    %11156 = vmatmul.mubr.bf16.gmra.mrb[0].mxu0 %v248
    %v11157 = vpop.f32.mrb[0].mxu0
    %v11158 = vadd.f32 %v11117, %v11157
    %v11159 = vpop.f32.mrb[0].mxu0
    %v11160 = vadd.f32 %v11119, %v11159
    %v11161 = vpop.f32.mrb[0].mxu0
    %v11162 = vpop.f32.mrb[0].mxu0
    %11163 = vdwg.mxu0
    %11164 = vmatprep.subr.bf16.mxu0 %v6971
    %11165 = vmatpush1.bf16.msra.mxu0 %v6970
    %11166 = vmatprep.subr.bf16.mxu0 %v6979
    %11167 = vmatpush1.bf16.msra.mxu0 %v6978
    %11168 = vmatprep.subr.bf16.mxu0 %v6987
    %11169 = vmatpush1.bf16.msra.mxu0 %v6986
    %11170 = vmatprep.subr.bf16.mxu0 %v6995
    %11171 = vmatpush1.bf16.msra.mxu0 %v6994
    %11172 = vmatprep.subr.bf16.mxu0 %v7003
    %11173 = vmatpush1.bf16.msra.mxu0 %v7002
    %11174 = vmatprep.subr.bf16.mxu0 %v7011
    %11175 = vmatpush1.bf16.msra.mxu0 %v7010
    %11176 = vmatprep.subr.bf16.mxu0 %v7019
    %11177 = vmatpush1.bf16.msra.mxu0 %v7018
    %11178 = vmatprep.subr.bf16.mxu0 %v7027
    %11179 = vmatpush1.bf16.msra.mxu0 %v7026
    %11180 = vmatprep.subr.bf16.mxu0 %v7035
    %11181 = vmatpush1.bf16.msra.mxu0 %v7034
    %11182 = vmatprep.subr.bf16.mxu0 %v7043
    %11183 = vmatpush1.bf16.msra.mxu0 %v7042
    %11184 = vmatprep.subr.bf16.mxu0 %v7051
    %11185 = vmatpush1.bf16.msra.mxu0 %v7050
    %11186 = vmatprep.subr.bf16.mxu0 %v7059
    %11187 = vmatpush1.bf16.msra.mxu0 %v7058
    %11188 = vmatprep.subr.bf16.mxu0 %v7067
    %11189 = vmatpush1.bf16.msra.mxu0 %v7066
    %11190 = vmatprep.subr.bf16.mxu0 %v7075
    %11191 = vmatpush1.bf16.msra.mxu0 %v7074
    %11192 = vmatprep.subr.bf16.mxu0 %v7083
    %11193 = vmatpush1.bf16.msra.mxu0 %v7082
    %11194 = vmatprep.subr.bf16.mxu0 %v7091
    %11195 = vmatpush1.bf16.msra.mxu0 %v7090
    %11196 = vmatprep.mubr.bf16.mxu0 %v251
    %11197 = vmatmul.mubr.bf16.gmra.mrb[0].mxu0 %v250
    %v11198 = vpop.f32.mrb[0].mxu0
    %v11199 = vadd.f32 %v11158, %v11198
    %v11200 = vpop.f32.mrb[0].mxu0
    %v11201 = vadd.f32 %v11160, %v11200
    %v11202 = vpop.f32.mrb[0].mxu0
    %v11203 = vpop.f32.mrb[0].mxu0
    %11204 = vdwg.mxu0
    %11205 = vmatprep.subr.bf16.mxu0 %v7099
    %11206 = vmatpush1.bf16.msra.mxu0 %v7098
    %11207 = vmatprep.subr.bf16.mxu0 %v7107
    %11208 = vmatpush1.bf16.msra.mxu0 %v7106
    %11209 = vmatprep.subr.bf16.mxu0 %v7115
    %11210 = vmatpush1.bf16.msra.mxu0 %v7114
    %11211 = vmatprep.subr.bf16.mxu0 %v7123
    %11212 = vmatpush1.bf16.msra.mxu0 %v7122
    %11213 = vmatprep.subr.bf16.mxu0 %v7131
    %11214 = vmatpush1.bf16.msra.mxu0 %v7130
    %11215 = vmatprep.subr.bf16.mxu0 %v7139
    %11216 = vmatpush1.bf16.msra.mxu0 %v7138
    %11217 = vmatprep.subr.bf16.mxu0 %v7147
    %11218 = vmatpush1.bf16.msra.mxu0 %v7146
    %11219 = vmatprep.subr.bf16.mxu0 %v7155
    %11220 = vmatpush1.bf16.msra.mxu0 %v7154
    %11221 = vmatprep.subr.bf16.mxu0 %v7163
    %11222 = vmatpush1.bf16.msra.mxu0 %v7162
    %11223 = vmatprep.subr.bf16.mxu0 %v7171
    %11224 = vmatpush1.bf16.msra.mxu0 %v7170
    %11225 = vmatprep.subr.bf16.mxu0 %v7179
    %11226 = vmatpush1.bf16.msra.mxu0 %v7178
    %11227 = vmatprep.subr.bf16.mxu0 %v7187
    %11228 = vmatpush1.bf16.msra.mxu0 %v7186
    %11229 = vmatprep.subr.bf16.mxu0 %v7195
    %11230 = vmatpush1.bf16.msra.mxu0 %v7194
    %11231 = vmatprep.subr.bf16.mxu0 %v7203
    %11232 = vmatpush1.bf16.msra.mxu0 %v7202
    %11233 = vmatprep.subr.bf16.mxu0 %v7211
    %11234 = vmatpush1.bf16.msra.mxu0 %v7210
    %11235 = vmatprep.subr.bf16.mxu0 %v7219
    %11236 = vmatpush1.bf16.msra.mxu0 %v7218
    %11237 = vmatprep.mubr.bf16.mxu0 %v253
    %11238 = vmatmul.mubr.bf16.gmra.mrb[0].mxu0 %v252
    %v11239 = vpop.f32.mrb[0].mxu0
    %v11240 = vadd.f32 %v11199, %v11239
    %v11241 = vpop.f32.mrb[0].mxu0
    %v11242 = vadd.f32 %v11201, %v11241
    %v11243 = vpop.f32.mrb[0].mxu0
    %v11244 = vpop.f32.mrb[0].mxu0
    %11245 = vdwg.mxu0
    %11246 = vmatprep.subr.bf16.mxu0 %v7227
    %11247 = vmatpush1.bf16.msra.mxu0 %v7226
    %11248 = vmatprep.subr.bf16.mxu0 %v7235
    %11249 = vmatpush1.bf16.msra.mxu0 %v7234
    %11250 = vmatprep.subr.bf16.mxu0 %v7243
    %11251 = vmatpush1.bf16.msra.mxu0 %v7242
    %11252 = vmatprep.subr.bf16.mxu0 %v7251
    %11253 = vmatpush1.bf16.msra.mxu0 %v7250
    %11254 = vmatprep.subr.bf16.mxu0 %v7259
    %11255 = vmatpush1.bf16.msra.mxu0 %v7258
    %11256 = vmatprep.subr.bf16.mxu0 %v7267
    %11257 = vmatpush1.bf16.msra.mxu0 %v7266
    %11258 = vmatprep.subr.bf16.mxu0 %v7275
    %11259 = vmatpush1.bf16.msra.mxu0 %v7274
    %11260 = vmatprep.subr.bf16.mxu0 %v7283
    %11261 = vmatpush1.bf16.msra.mxu0 %v7282
    %11262 = vmatprep.subr.bf16.mxu0 %v7291
    %11263 = vmatpush1.bf16.msra.mxu0 %v7290
    %11264 = vmatprep.subr.bf16.mxu0 %v7299
    %11265 = vmatpush1.bf16.msra.mxu0 %v7298
    %11266 = vmatprep.subr.bf16.mxu0 %v7307
    %11267 = vmatpush1.bf16.msra.mxu0 %v7306
    %11268 = vmatprep.subr.bf16.mxu0 %v7315
    %11269 = vmatpush1.bf16.msra.mxu0 %v7314
    %11270 = vmatprep.subr.bf16.mxu0 %v7323
    %11271 = vmatpush1.bf16.msra.mxu0 %v7322
    %11272 = vmatprep.subr.bf16.mxu0 %v7331
    %11273 = vmatpush1.bf16.msra.mxu0 %v7330
    %11274 = vmatprep.subr.bf16.mxu0 %v7339
    %11275 = vmatpush1.bf16.msra.mxu0 %v7338
    %11276 = vmatprep.subr.bf16.mxu0 %v7347
    %11277 = vmatpush1.bf16.msra.mxu0 %v7346
    %11278 = vmatprep.mubr.bf16.mxu0 %v255
    %11279 = vmatmul.mubr.bf16.gmra.mrb[0].mxu0 %v254
    %v11280 = vpop.f32.mrb[0].mxu0
    %v11281 = vadd.f32 %v11240, %v11280
    %v11282 = vpop.f32.mrb[0].mxu0
    %v11283 = vadd.f32 %v11242, %v11282
    %v11284 = vpop.f32.mrb[0].mxu0
    %v11285 = vpop.f32.mrb[0].mxu0
    %11286 = vdwg.mxu0
    %11287 = vmatprep.subr.bf16.mxu0 %v7355
    %11288 = vmatpush1.bf16.msra.mxu0 %v7354
    %11289 = vmatprep.subr.bf16.mxu0 %v7363
    %11290 = vmatpush1.bf16.msra.mxu0 %v7362
    %11291 = vmatprep.subr.bf16.mxu0 %v7371
    %11292 = vmatpush1.bf16.msra.mxu0 %v7370
    %11293 = vmatprep.subr.bf16.mxu0 %v7379
    %11294 = vmatpush1.bf16.msra.mxu0 %v7378
    %11295 = vmatprep.subr.bf16.mxu0 %v7387
    %11296 = vmatpush1.bf16.msra.mxu0 %v7386
    %11297 = vmatprep.subr.bf16.mxu0 %v7395
    %11298 = vmatpush1.bf16.msra.mxu0 %v7394
    %11299 = vmatprep.subr.bf16.mxu0 %v7403
    %11300 = vmatpush1.bf16.msra.mxu0 %v7402
    %11301 = vmatprep.subr.bf16.mxu0 %v7411
    %11302 = vmatpush1.bf16.msra.mxu0 %v7410
    %11303 = vmatprep.subr.bf16.mxu0 %v7419
    %11304 = vmatpush1.bf16.msra.mxu0 %v7418
    %11305 = vmatprep.subr.bf16.mxu0 %v7427
    %11306 = vmatpush1.bf16.msra.mxu0 %v7426
    %11307 = vmatprep.subr.bf16.mxu0 %v7435
    %11308 = vmatpush1.bf16.msra.mxu0 %v7434
    %11309 = vmatprep.subr.bf16.mxu0 %v7443
    %11310 = vmatpush1.bf16.msra.mxu0 %v7442
    %11311 = vmatprep.subr.bf16.mxu0 %v7451
    %11312 = vmatpush1.bf16.msra.mxu0 %v7450
    %11313 = vmatprep.subr.bf16.mxu0 %v7459
    %11314 = vmatpush1.bf16.msra.mxu0 %v7458
    %11315 = vmatprep.subr.bf16.mxu0 %v7467
    %11316 = vmatpush1.bf16.msra.mxu0 %v7466
    %11317 = vmatprep.subr.bf16.mxu0 %v7475
    %11318 = vmatpush1.bf16.msra.mxu0 %v7474
    %11319 = vmatprep.mubr.bf16.mxu0 %v257
    %11320 = vmatmul.mubr.bf16.gmra.mrb[0].mxu0 %v256
    %v11321 = vpop.f32.mrb[0].mxu0
    %v11322 = vadd.f32 %v11281, %v11321
    %v11323 = vpop.f32.mrb[0].mxu0
    %v11324 = vadd.f32 %v11283, %v11323
    %v11325 = vpop.f32.mrb[0].mxu0
    %v11326 = vpop.f32.mrb[0].mxu0
    %11327 = vdwg.mxu0
    %11328 = vmatprep.subr.bf16.mxu0 %v7483
    %11329 = vmatpush1.bf16.msra.mxu0 %v7482
    %11330 = vmatprep.subr.bf16.mxu0 %v7491
    %11331 = vmatpush1.bf16.msra.mxu0 %v7490
    %11332 = vmatprep.subr.bf16.mxu0 %v7499
    %11333 = vmatpush1.bf16.msra.mxu0 %v7498
    %11334 = vmatprep.subr.bf16.mxu0 %v7507
    %11335 = vmatpush1.bf16.msra.mxu0 %v7506
    %11336 = vmatprep.subr.bf16.mxu0 %v7515
    %11337 = vmatpush1.bf16.msra.mxu0 %v7514
    %11338 = vmatprep.subr.bf16.mxu0 %v7523
    %11339 = vmatpush1.bf16.msra.mxu0 %v7522
    %11340 = vmatprep.subr.bf16.mxu0 %v7531
    %11341 = vmatpush1.bf16.msra.mxu0 %v7530
    %11342 = vmatprep.subr.bf16.mxu0 %v7539
    %11343 = vmatpush1.bf16.msra.mxu0 %v7538
    %11344 = vmatprep.subr.bf16.mxu0 %v7547
    %11345 = vmatpush1.bf16.msra.mxu0 %v7546
    %11346 = vmatprep.subr.bf16.mxu0 %v7555
    %11347 = vmatpush1.bf16.msra.mxu0 %v7554
    %11348 = vmatprep.subr.bf16.mxu0 %v7563
    %11349 = vmatpush1.bf16.msra.mxu0 %v7562
    %11350 = vmatprep.subr.bf16.mxu0 %v7571
    %11351 = vmatpush1.bf16.msra.mxu0 %v7570
    %11352 = vmatprep.subr.bf16.mxu0 %v7579
    %11353 = vmatpush1.bf16.msra.mxu0 %v7578
    %11354 = vmatprep.subr.bf16.mxu0 %v7587
    %11355 = vmatpush1.bf16.msra.mxu0 %v7586
    %11356 = vmatprep.subr.bf16.mxu0 %v7595
    %11357 = vmatpush1.bf16.msra.mxu0 %v7594
    %11358 = vmatprep.subr.bf16.mxu0 %v7603
    %11359 = vmatpush1.bf16.msra.mxu0 %v7602
    %11360 = vmatprep.mubr.bf16.mxu0 %v259
    %11361 = vmatmul.mubr.bf16.gmra.mrb[0].mxu0 %v258
    %v11362 = vpop.f32.mrb[0].mxu0
    %v11363 = vadd.f32 %v11322, %v11362
    %v11364 = vpop.f32.mrb[0].mxu0
    %v11365 = vadd.f32 %v11324, %v11364
    %v11366 = vpop.f32.mrb[0].mxu0
    %v11367 = vpop.f32.mrb[0].mxu0
    %11368 = vdwg.mxu0
    %11369 = vmatprep.subr.bf16.mxu0 %v7611
    %11370 = vmatpush1.bf16.msra.mxu0 %v7610
    %11371 = vmatprep.subr.bf16.mxu0 %v7619
    %11372 = vmatpush1.bf16.msra.mxu0 %v7618
    %11373 = vmatprep.subr.bf16.mxu0 %v7627
    %11374 = vmatpush1.bf16.msra.mxu0 %v7626
    %11375 = vmatprep.subr.bf16.mxu0 %v7635
    %11376 = vmatpush1.bf16.msra.mxu0 %v7634
    %11377 = vmatprep.subr.bf16.mxu0 %v7643
    %11378 = vmatpush1.bf16.msra.mxu0 %v7642
    %11379 = vmatprep.subr.bf16.mxu0 %v7651
    %11380 = vmatpush1.bf16.msra.mxu0 %v7650
    %11381 = vmatprep.subr.bf16.mxu0 %v7659
    %11382 = vmatpush1.bf16.msra.mxu0 %v7658
    %11383 = vmatprep.subr.bf16.mxu0 %v7667
    %11384 = vmatpush1.bf16.msra.mxu0 %v7666
    %11385 = vmatprep.subr.bf16.mxu0 %v7675
    %11386 = vmatpush1.bf16.msra.mxu0 %v7674
    %11387 = vmatprep.subr.bf16.mxu0 %v7683
    %11388 = vmatpush1.bf16.msra.mxu0 %v7682
    %11389 = vmatprep.subr.bf16.mxu0 %v7691
    %11390 = vmatpush1.bf16.msra.mxu0 %v7690
    %11391 = vmatprep.subr.bf16.mxu0 %v7699
    %11392 = vmatpush1.bf16.msra.mxu0 %v7698
    %11393 = vmatprep.subr.bf16.mxu0 %v7707
    %11394 = vmatpush1.bf16.msra.mxu0 %v7706
    %11395 = vmatprep.subr.bf16.mxu0 %v7715
    %11396 = vmatpush1.bf16.msra.mxu0 %v7714
    %11397 = vmatprep.subr.bf16.mxu0 %v7723
    %11398 = vmatpush1.bf16.msra.mxu0 %v7722
    %11399 = vmatprep.subr.bf16.mxu0 %v7731
    %11400 = vmatpush1.bf16.msra.mxu0 %v7730
    %11401 = vmatprep.mubr.bf16.mxu0 %v261
    %11402 = vmatmul.mubr.bf16.gmra.mrb[0].mxu0 %v260
    %v11403 = vpop.f32.mrb[0].mxu0
    %v11404 = vadd.f32 %v11363, %v11403
    %v11405 = vpop.f32.mrb[0].mxu0
    %v11406 = vadd.f32 %v11365, %v11405
    %v11407 = vpop.f32.mrb[0].mxu0
    %v11408 = vpop.f32.mrb[0].mxu0
    %11409 = vdwg.mxu0
    %11410 = vmatprep.subr.bf16.mxu0 %v7739
    %11411 = vmatpush1.bf16.msra.mxu0 %v7738
    %11412 = vmatprep.subr.bf16.mxu0 %v7747
    %11413 = vmatpush1.bf16.msra.mxu0 %v7746
    %11414 = vmatprep.subr.bf16.mxu0 %v7755
    %11415 = vmatpush1.bf16.msra.mxu0 %v7754
    %11416 = vmatprep.subr.bf16.mxu0 %v7763
    %11417 = vmatpush1.bf16.msra.mxu0 %v7762
    %11418 = vmatprep.subr.bf16.mxu0 %v7771
    %11419 = vmatpush1.bf16.msra.mxu0 %v7770
    %11420 = vmatprep.subr.bf16.mxu0 %v7779
    %11421 = vmatpush1.bf16.msra.mxu0 %v7778
    %11422 = vmatprep.subr.bf16.mxu0 %v7787
    %11423 = vmatpush1.bf16.msra.mxu0 %v7786
    %11424 = vmatprep.subr.bf16.mxu0 %v7795
    %11425 = vmatpush1.bf16.msra.mxu0 %v7794
    %11426 = vmatprep.subr.bf16.mxu0 %v7803
    %11427 = vmatpush1.bf16.msra.mxu0 %v7802
    %11428 = vmatprep.subr.bf16.mxu0 %v7811
    %11429 = vmatpush1.bf16.msra.mxu0 %v7810
    %11430 = vmatprep.subr.bf16.mxu0 %v7819
    %11431 = vmatpush1.bf16.msra.mxu0 %v7818
    %11432 = vmatprep.subr.bf16.mxu0 %v7827
    %11433 = vmatpush1.bf16.msra.mxu0 %v7826
    %11434 = vmatprep.subr.bf16.mxu0 %v7835
    %11435 = vmatpush1.bf16.msra.mxu0 %v7834
    %11436 = vmatprep.subr.bf16.mxu0 %v7843
    %11437 = vmatpush1.bf16.msra.mxu0 %v7842
    %11438 = vmatprep.subr.bf16.mxu0 %v7851
    %11439 = vmatpush1.bf16.msra.mxu0 %v7850
    %11440 = vmatprep.subr.bf16.mxu0 %v7859
    %11441 = vmatpush1.bf16.msra.mxu0 %v7858
    %11442 = vmatprep.mubr.bf16.mxu0 %v263
    %11443 = vmatmul.mubr.bf16.gmra.mrb[0].mxu0 %v262
    %v11444 = vpop.f32.mrb[0].mxu0
    %v11445 = vadd.f32 %v11404, %v11444
    %v11446 = vpop.f32.mrb[0].mxu0
    %v11447 = vadd.f32 %v11406, %v11446
    %v11448 = vpop.f32.mrb[0].mxu0
    %v11449 = vpop.f32.mrb[0].mxu0
    %11450 = vdwg.mxu0
    %11451 = vmatprep.subr.bf16.mxu0 %v7867
    %11452 = vmatpush1.bf16.msra.mxu0 %v7866
    %11453 = vmatprep.subr.bf16.mxu0 %v7875
    %11454 = vmatpush1.bf16.msra.mxu0 %v7874
    %11455 = vmatprep.subr.bf16.mxu0 %v7883
    %11456 = vmatpush1.bf16.msra.mxu0 %v7882
    %11457 = vmatprep.subr.bf16.mxu0 %v7891
    %11458 = vmatpush1.bf16.msra.mxu0 %v7890
    %11459 = vmatprep.subr.bf16.mxu0 %v7899
    %11460 = vmatpush1.bf16.msra.mxu0 %v7898
    %11461 = vmatprep.subr.bf16.mxu0 %v7907
    %11462 = vmatpush1.bf16.msra.mxu0 %v7906
    %11463 = vmatprep.subr.bf16.mxu0 %v7915
    %11464 = vmatpush1.bf16.msra.mxu0 %v7914
    %11465 = vmatprep.subr.bf16.mxu0 %v7923
    %11466 = vmatpush1.bf16.msra.mxu0 %v7922
    %11467 = vmatprep.subr.bf16.mxu0 %v7931
    %11468 = vmatpush1.bf16.msra.mxu0 %v7930
    %11469 = vmatprep.subr.bf16.mxu0 %v7939
    %11470 = vmatpush1.bf16.msra.mxu0 %v7938
    %11471 = vmatprep.subr.bf16.mxu0 %v7947
    %11472 = vmatpush1.bf16.msra.mxu0 %v7946
    %11473 = vmatprep.subr.bf16.mxu0 %v7955
    %11474 = vmatpush1.bf16.msra.mxu0 %v7954
    %11475 = vmatprep.subr.bf16.mxu0 %v7963
    %11476 = vmatpush1.bf16.msra.mxu0 %v7962
    %11477 = vmatprep.subr.bf16.mxu0 %v7971
    %11478 = vmatpush1.bf16.msra.mxu0 %v7970
    %11479 = vmatprep.subr.bf16.mxu0 %v7979
    %11480 = vmatpush1.bf16.msra.mxu0 %v7978
    %11481 = vmatprep.subr.bf16.mxu0 %v7987
    %11482 = vmatpush1.bf16.msra.mxu0 %v7986
    %11483 = vmatprep.mubr.bf16.mxu0 %v265
    %11484 = vmatmul.mubr.bf16.gmra.mrb[0].mxu0 %v264
    %v11485 = vpop.f32.mrb[0].mxu0
    %v11486 = vadd.f32 %v11445, %v11485
    %v11487 = vpop.f32.mrb[0].mxu0
    %v11488 = vadd.f32 %v11447, %v11487
    %v11489 = vpop.f32.mrb[0].mxu0
    %v11490 = vpop.f32.mrb[0].mxu0
    %11491 = vdwg.mxu0
    %v11492 = vmax.f32 %v10010, 0.0
    %v11493 = vmax.f32 %v10012, 0.0
    %v11494 = vmax.f32 %v10502, 0.0
    %v11495 = vmax.f32 %v10504, 0.0
    %v11496 = vmax.f32 %v10994, 0.0
    %v11497 = vmax.f32 %v10996, 0.0
    %v11498 = vmax.f32 %v11486, 0.0
    %v11499 = vmax.f32 %v11488, 0.0
    %v11500 = vpack.c.bf16 %v11492, %v11492
    %v11501 = vpack.c.bf16 %v11493, %v11493
    %v11502 = vpack.c.bf16 %v11494, %v11494
    %v11503 = vpack.c.bf16 %v11495, %v11495
    %v11504 = vpack.c.bf16 %v11496, %v11496
    %v11505 = vpack.c.bf16 %v11497, %v11497
    %v11506 = vpack.c.bf16 %v11498, %v11498
    %v11507 = vpack.c.bf16 %v11499, %v11499
    %v11508 = vld [vmem:[#allocation7] sm:$0xff]
    %v11509 = vld [vmem:[#allocation7 + $0x8] sm:$0xff]
    %v11510 = vld [vmem:[#allocation7 + $0x10] sm:$0xff]
    %v11511 = vld [vmem:[#allocation7 + $0x18] sm:$0xff]
    %v11512 = vld [vmem:[#allocation7 + $0x20] sm:$0xff]
    %v11513 = vld [vmem:[#allocation7 + $0x28] sm:$0xff]
    %v11514 = vld [vmem:[#allocation7 + $0x30] sm:$0xff]
    %v11515 = vld [vmem:[#allocation7 + $0x38] sm:$0xff]
    %v11516 = vld [vmem:[#allocation7 + $0x40] sm:$0xff]
    %v11517 = vld [vmem:[#allocation7 + $0x48] sm:$0xff]
    %v11518 = vld [vmem:[#allocation7 + $0x50] sm:$0xff]
    %v11519 = vld [vmem:[#allocation7 + $0x58] sm:$0xff]
    %v11520 = vld [vmem:[#allocation7 + $0x60] sm:$0xff]
    %v11521 = vld [vmem:[#allocation7 + $0x68] sm:$0xff]
    %v11522 = vld [vmem:[#allocation7 + $0x70] sm:$0xff]
    %v11523 = vld [vmem:[#allocation7 + $0x78] sm:$0xff]
    %v11524 = vld [vmem:[#allocation7 + $0x80] sm:$0xff]
    %v11525 = vld [vmem:[#allocation7 + $0x88] sm:$0xff]
    %v11526 = vld [vmem:[#allocation7 + $0x90] sm:$0xff]
    %v11527 = vld [vmem:[#allocation7 + $0x98] sm:$0xff]
    %v11528 = vld [vmem:[#allocation7 + $0xa0] sm:$0xff]
    %v11529 = vld [vmem:[#allocation7 + $0xa8] sm:$0xff]
    %v11530 = vld [vmem:[#allocation7 + $0xb0] sm:$0xff]
    %v11531 = vld [vmem:[#allocation7 + $0xb8] sm:$0xff]
    %v11532 = vld [vmem:[#allocation7 + $0xc0] sm:$0xff]
    %v11533 = vld [vmem:[#allocation7 + $0xc8] sm:$0xff]
    %v11534 = vld [vmem:[#allocation7 + $0xd0] sm:$0xff]
    %v11535 = vld [vmem:[#allocation7 + $0xd8] sm:$0xff]
    %v11536 = vld [vmem:[#allocation7 + $0xe0] sm:$0xff]
    %v11537 = vld [vmem:[#allocation7 + $0xe8] sm:$0xff]
    %v11538 = vld [vmem:[#allocation7 + $0xf0] sm:$0xff]
    %v11539 = vld [vmem:[#allocation7 + $0xf8] sm:$0xff]
    %v11540 = vld [vmem:[#allocation7 + $0x100] sm:$0xff]
    %v11541 = vld [vmem:[#allocation7 + $0x108] sm:$0xff]
    %v11542 = vld [vmem:[#allocation7 + $0x110] sm:$0xff]
    %v11543 = vld [vmem:[#allocation7 + $0x118] sm:$0xff]
    %v11544 = vld [vmem:[#allocation7 + $0x120] sm:$0xff]
    %v11545 = vld [vmem:[#allocation7 + $0x128] sm:$0xff]
    %v11546 = vld [vmem:[#allocation7 + $0x130] sm:$0xff]
    %v11547 = vld [vmem:[#allocation7 + $0x138] sm:$0xff]
    %v11548 = vld [vmem:[#allocation7 + $0x140] sm:$0xff]
    %v11549 = vld [vmem:[#allocation7 + $0x148] sm:$0xff]
    %v11550 = vld [vmem:[#allocation7 + $0x150] sm:$0xff]
    %v11551 = vld [vmem:[#allocation7 + $0x158] sm:$0xff]
    %v11552 = vld [vmem:[#allocation7 + $0x160] sm:$0xff]
    %v11553 = vld [vmem:[#allocation7 + $0x168] sm:$0xff]
    %v11554 = vld [vmem:[#allocation7 + $0x170] sm:$0xff]
    %v11555 = vld [vmem:[#allocation7 + $0x178] sm:$0xff]
    %v11556 = vld [vmem:[#allocation7 + $0x180] sm:$0xff]
    %v11557 = vld [vmem:[#allocation7 + $0x188] sm:$0xff]
    %v11558 = vld [vmem:[#allocation7 + $0x190] sm:$0xff]
    %v11559 = vld [vmem:[#allocation7 + $0x198] sm:$0xff]
    %v11560 = vld [vmem:[#allocation7 + $0x1a0] sm:$0xff]
    %v11561 = vld [vmem:[#allocation7 + $0x1a8] sm:$0xff]
    %v11562 = vld [vmem:[#allocation7 + $0x1b0] sm:$0xff]
    %v11563 = vld [vmem:[#allocation7 + $0x1b8] sm:$0xff]
    %v11564 = vld [vmem:[#allocation7 + $0x1c0] sm:$0xff]
    %v11565 = vld [vmem:[#allocation7 + $0x1c8] sm:$0xff]
    %v11566 = vld [vmem:[#allocation7 + $0x1d0] sm:$0xff]
    %v11567 = vld [vmem:[#allocation7 + $0x1d8] sm:$0xff]
    %v11568 = vld [vmem:[#allocation7 + $0x1e0] sm:$0xff]
    %v11569 = vld [vmem:[#allocation7 + $0x1e8] sm:$0xff]
    %v11570 = vld [vmem:[#allocation7 + $0x1f0] sm:$0xff]
    %v11571 = vld [vmem:[#allocation7 + $0x1f8] sm:$0xff]
    %v11572 = vld [vmem:[#allocation7 + $0x200] sm:$0xff]
    %v11573 = vld [vmem:[#allocation7 + $0x208] sm:$0xff]
    %v11574 = vld [vmem:[#allocation7 + $0x210] sm:$0xff]
    %v11575 = vld [vmem:[#allocation7 + $0x218] sm:$0xff]
    %v11576 = vld [vmem:[#allocation7 + $0x220] sm:$0xff]
    %v11577 = vld [vmem:[#allocation7 + $0x228] sm:$0xff]
    %v11578 = vld [vmem:[#allocation7 + $0x230] sm:$0xff]
    %v11579 = vld [vmem:[#allocation7 + $0x238] sm:$0xff]
    %v11580 = vld [vmem:[#allocation7 + $0x240] sm:$0xff]
    %v11581 = vld [vmem:[#allocation7 + $0x248] sm:$0xff]
    %v11582 = vld [vmem:[#allocation7 + $0x250] sm:$0xff]
    %v11583 = vld [vmem:[#allocation7 + $0x258] sm:$0xff]
    %v11584 = vld [vmem:[#allocation7 + $0x260] sm:$0xff]
    %v11585 = vld [vmem:[#allocation7 + $0x268] sm:$0xff]
    %v11586 = vld [vmem:[#allocation7 + $0x270] sm:$0xff]
    %v11587 = vld [vmem:[#allocation7 + $0x278] sm:$0xff]
    %v11588 = vld [vmem:[#allocation7 + $0x280] sm:$0xff]
    %v11589 = vld [vmem:[#allocation7 + $0x288] sm:$0xff]
    %v11590 = vld [vmem:[#allocation7 + $0x290] sm:$0xff]
    %v11591 = vld [vmem:[#allocation7 + $0x298] sm:$0xff]
    %v11592 = vld [vmem:[#allocation7 + $0x2a0] sm:$0xff]
    %v11593 = vld [vmem:[#allocation7 + $0x2a8] sm:$0xff]
    %v11594 = vld [vmem:[#allocation7 + $0x2b0] sm:$0xff]
    %v11595 = vld [vmem:[#allocation7 + $0x2b8] sm:$0xff]
    %v11596 = vld [vmem:[#allocation7 + $0x2c0] sm:$0xff]
    %v11597 = vld [vmem:[#allocation7 + $0x2c8] sm:$0xff]
    %v11598 = vld [vmem:[#allocation7 + $0x2d0] sm:$0xff]
    %v11599 = vld [vmem:[#allocation7 + $0x2d8] sm:$0xff]
    %v11600 = vld [vmem:[#allocation7 + $0x2e0] sm:$0xff]
    %v11601 = vld [vmem:[#allocation7 + $0x2e8] sm:$0xff]
    %v11602 = vld [vmem:[#allocation7 + $0x2f0] sm:$0xff]
    %v11603 = vld [vmem:[#allocation7 + $0x2f8] sm:$0xff]
    %v11604 = vld [vmem:[#allocation7 + $0x300] sm:$0xff]
    %v11605 = vld [vmem:[#allocation7 + $0x308] sm:$0xff]
    %v11606 = vld [vmem:[#allocation7 + $0x310] sm:$0xff]
    %v11607 = vld [vmem:[#allocation7 + $0x318] sm:$0xff]
    %v11608 = vld [vmem:[#allocation7 + $0x320] sm:$0xff]
    %v11609 = vld [vmem:[#allocation7 + $0x328] sm:$0xff]
    %v11610 = vld [vmem:[#allocation7 + $0x330] sm:$0xff]
    %v11611 = vld [vmem:[#allocation7 + $0x338] sm:$0xff]
    %v11612 = vld [vmem:[#allocation7 + $0x340] sm:$0xff]
    %v11613 = vld [vmem:[#allocation7 + $0x348] sm:$0xff]
    %v11614 = vld [vmem:[#allocation7 + $0x350] sm:$0xff]
    %v11615 = vld [vmem:[#allocation7 + $0x358] sm:$0xff]
    %v11616 = vld [vmem:[#allocation7 + $0x360] sm:$0xff]
    %v11617 = vld [vmem:[#allocation7 + $0x368] sm:$0xff]
    %v11618 = vld [vmem:[#allocation7 + $0x370] sm:$0xff]
    %v11619 = vld [vmem:[#allocation7 + $0x378] sm:$0xff]
    %v11620 = vld [vmem:[#allocation7 + $0x380] sm:$0xff]
    %v11621 = vld [vmem:[#allocation7 + $0x388] sm:$0xff]
    %v11622 = vld [vmem:[#allocation7 + $0x390] sm:$0xff]
    %v11623 = vld [vmem:[#allocation7 + $0x398] sm:$0xff]
    %v11624 = vld [vmem:[#allocation7 + $0x3a0] sm:$0xff]
    %v11625 = vld [vmem:[#allocation7 + $0x3a8] sm:$0xff]
    %v11626 = vld [vmem:[#allocation7 + $0x3b0] sm:$0xff]
    %v11627 = vld [vmem:[#allocation7 + $0x3b8] sm:$0xff]
    %v11628 = vld [vmem:[#allocation7 + $0x3c0] sm:$0xff]
    %v11629 = vld [vmem:[#allocation7 + $0x3c8] sm:$0xff]
    %v11630 = vld [vmem:[#allocation7 + $0x3d0] sm:$0xff]
    %v11631 = vld [vmem:[#allocation7 + $0x3d8] sm:$0xff]
    %v11632 = vld [vmem:[#allocation7 + $0x3e0] sm:$0xff]
    %v11633 = vld [vmem:[#allocation7 + $0x3e8] sm:$0xff]
    %v11634 = vld [vmem:[#allocation7 + $0x3f0] sm:$0xff]
    %v11635 = vld [vmem:[#allocation7 + $0x3f8] sm:$0xff]
    %v11636 = vld [vmem:[#allocation8] sm:$0x3]
    %v11638 = vlaneseq
    %v11639 = vshrl.u32 %v11638, 7
    %v11640 = vsub.s32 0, %v11639
    %v11641 = vrot.slane %v11636, %v11640
    %v11642 = vlaneseq
    %v11643 = vshrl.u32 %v11642, 7
    %v11644 = vsub.s32 1, %v11643
    %v11645 = vrot.slane %v11636, %v11644
    %v11776 = vunpack.c.l.b16 %v11508
    %v11777 = vunpack.c.h.b16 %v11508
    %v11778 = vunpack.c.l.b16 %v11509
    %v11779 = vunpack.c.h.b16 %v11509
    %v11780 = vunpack.c.l.b16 %v11510
    %v11781 = vunpack.c.h.b16 %v11510
    %v11782 = vunpack.c.l.b16 %v11511
    %v11783 = vunpack.c.h.b16 %v11511
    %v11784 = vunpack.c.l.b16 %v11512
    %v11785 = vunpack.c.h.b16 %v11512
    %v11786 = vunpack.c.l.b16 %v11513
    %v11787 = vunpack.c.h.b16 %v11513
    %v11788 = vunpack.c.l.b16 %v11514
    %v11789 = vunpack.c.h.b16 %v11514
    %v11790 = vunpack.c.l.b16 %v11515
    %v11791 = vunpack.c.h.b16 %v11515
    %v11792 = vunpack.c.l.b16 %v11516
    %v11793 = vunpack.c.h.b16 %v11516
    %v11794 = vunpack.c.l.b16 %v11517
    %v11795 = vunpack.c.h.b16 %v11517
    %v11796 = vunpack.c.l.b16 %v11518
    %v11797 = vunpack.c.h.b16 %v11518
    %v11798 = vunpack.c.l.b16 %v11519
    %v11799 = vunpack.c.h.b16 %v11519
    %v11800 = vunpack.c.l.b16 %v11520
    %v11801 = vunpack.c.h.b16 %v11520
    %v11802 = vunpack.c.l.b16 %v11521
    %v11803 = vunpack.c.h.b16 %v11521
    %v11804 = vunpack.c.l.b16 %v11522
    %v11805 = vunpack.c.h.b16 %v11522
    %v11806 = vunpack.c.l.b16 %v11523
    %v11807 = vunpack.c.h.b16 %v11523
    %v11808 = vunpack.c.l.b16 %v11524
    %v11809 = vunpack.c.h.b16 %v11524
    %v11810 = vunpack.c.l.b16 %v11525
    %v11811 = vunpack.c.h.b16 %v11525
    %v11812 = vunpack.c.l.b16 %v11526
    %v11813 = vunpack.c.h.b16 %v11526
    %v11814 = vunpack.c.l.b16 %v11527
    %v11815 = vunpack.c.h.b16 %v11527
    %v11816 = vunpack.c.l.b16 %v11528
    %v11817 = vunpack.c.h.b16 %v11528
    %v11818 = vunpack.c.l.b16 %v11529
    %v11819 = vunpack.c.h.b16 %v11529
    %v11820 = vunpack.c.l.b16 %v11530
    %v11821 = vunpack.c.h.b16 %v11530
    %v11822 = vunpack.c.l.b16 %v11531
    %v11823 = vunpack.c.h.b16 %v11531
    %v11824 = vunpack.c.l.b16 %v11532
    %v11825 = vunpack.c.h.b16 %v11532
    %v11826 = vunpack.c.l.b16 %v11533
    %v11827 = vunpack.c.h.b16 %v11533
    %v11828 = vunpack.c.l.b16 %v11534
    %v11829 = vunpack.c.h.b16 %v11534
    %v11830 = vunpack.c.l.b16 %v11535
    %v11831 = vunpack.c.h.b16 %v11535
    %v11832 = vunpack.c.l.b16 %v11536
    %v11833 = vunpack.c.h.b16 %v11536
    %v11834 = vunpack.c.l.b16 %v11537
    %v11835 = vunpack.c.h.b16 %v11537
    %v11836 = vunpack.c.l.b16 %v11538
    %v11837 = vunpack.c.h.b16 %v11538
    %v11838 = vunpack.c.l.b16 %v11539
    %v11839 = vunpack.c.h.b16 %v11539
    %v11840 = vunpack.c.l.b16 %v11540
    %v11841 = vunpack.c.h.b16 %v11540
    %v11842 = vunpack.c.l.b16 %v11541
    %v11843 = vunpack.c.h.b16 %v11541
    %v11844 = vunpack.c.l.b16 %v11542
    %v11845 = vunpack.c.h.b16 %v11542
    %v11846 = vunpack.c.l.b16 %v11543
    %v11847 = vunpack.c.h.b16 %v11543
    %v11848 = vunpack.c.l.b16 %v11544
    %v11849 = vunpack.c.h.b16 %v11544
    %v11850 = vunpack.c.l.b16 %v11545
    %v11851 = vunpack.c.h.b16 %v11545
    %v11852 = vunpack.c.l.b16 %v11546
    %v11853 = vunpack.c.h.b16 %v11546
    %v11854 = vunpack.c.l.b16 %v11547
    %v11855 = vunpack.c.h.b16 %v11547
    %v11856 = vunpack.c.l.b16 %v11548
    %v11857 = vunpack.c.h.b16 %v11548
    %v11858 = vunpack.c.l.b16 %v11549
    %v11859 = vunpack.c.h.b16 %v11549
    %v11860 = vunpack.c.l.b16 %v11550
    %v11861 = vunpack.c.h.b16 %v11550
    %v11862 = vunpack.c.l.b16 %v11551
    %v11863 = vunpack.c.h.b16 %v11551
    %v11864 = vunpack.c.l.b16 %v11552
    %v11865 = vunpack.c.h.b16 %v11552
    %v11866 = vunpack.c.l.b16 %v11553
    %v11867 = vunpack.c.h.b16 %v11553
    %v11868 = vunpack.c.l.b16 %v11554
    %v11869 = vunpack.c.h.b16 %v11554
    %v11870 = vunpack.c.l.b16 %v11555
    %v11871 = vunpack.c.h.b16 %v11555
    %v11872 = vunpack.c.l.b16 %v11556
    %v11873 = vunpack.c.h.b16 %v11556
    %v11874 = vunpack.c.l.b16 %v11557
    %v11875 = vunpack.c.h.b16 %v11557
    %v11876 = vunpack.c.l.b16 %v11558
    %v11877 = vunpack.c.h.b16 %v11558
    %v11878 = vunpack.c.l.b16 %v11559
    %v11879 = vunpack.c.h.b16 %v11559
    %v11880 = vunpack.c.l.b16 %v11560
    %v11881 = vunpack.c.h.b16 %v11560
    %v11882 = vunpack.c.l.b16 %v11561
    %v11883 = vunpack.c.h.b16 %v11561
    %v11884 = vunpack.c.l.b16 %v11562
    %v11885 = vunpack.c.h.b16 %v11562
    %v11886 = vunpack.c.l.b16 %v11563
    %v11887 = vunpack.c.h.b16 %v11563
    %v11888 = vunpack.c.l.b16 %v11564
    %v11889 = vunpack.c.h.b16 %v11564
    %v11890 = vunpack.c.l.b16 %v11565
    %v11891 = vunpack.c.h.b16 %v11565
    %v11892 = vunpack.c.l.b16 %v11566
    %v11893 = vunpack.c.h.b16 %v11566
    %v11894 = vunpack.c.l.b16 %v11567
    %v11895 = vunpack.c.h.b16 %v11567
    %v11896 = vunpack.c.l.b16 %v11568
    %v11897 = vunpack.c.h.b16 %v11568
    %v11898 = vunpack.c.l.b16 %v11569
    %v11899 = vunpack.c.h.b16 %v11569
    %v11900 = vunpack.c.l.b16 %v11570
    %v11901 = vunpack.c.h.b16 %v11570
    %v11902 = vunpack.c.l.b16 %v11571
    %v11903 = vunpack.c.h.b16 %v11571
    %v11904 = vunpack.c.l.b16 %v11572
    %v11905 = vunpack.c.h.b16 %v11572
    %v11906 = vunpack.c.l.b16 %v11573
    %v11907 = vunpack.c.h.b16 %v11573
    %v11908 = vunpack.c.l.b16 %v11574
    %v11909 = vunpack.c.h.b16 %v11574
    %v11910 = vunpack.c.l.b16 %v11575
    %v11911 = vunpack.c.h.b16 %v11575
    %v11912 = vunpack.c.l.b16 %v11576
    %v11913 = vunpack.c.h.b16 %v11576
    %v11914 = vunpack.c.l.b16 %v11577
    %v11915 = vunpack.c.h.b16 %v11577
    %v11916 = vunpack.c.l.b16 %v11578
    %v11917 = vunpack.c.h.b16 %v11578
    %v11918 = vunpack.c.l.b16 %v11579
    %v11919 = vunpack.c.h.b16 %v11579
    %v11920 = vunpack.c.l.b16 %v11580
    %v11921 = vunpack.c.h.b16 %v11580
    %v11922 = vunpack.c.l.b16 %v11581
    %v11923 = vunpack.c.h.b16 %v11581
    %v11924 = vunpack.c.l.b16 %v11582
    %v11925 = vunpack.c.h.b16 %v11582
    %v11926 = vunpack.c.l.b16 %v11583
    %v11927 = vunpack.c.h.b16 %v11583
    %v11928 = vunpack.c.l.b16 %v11584
    %v11929 = vunpack.c.h.b16 %v11584
    %v11930 = vunpack.c.l.b16 %v11585
    %v11931 = vunpack.c.h.b16 %v11585
    %v11932 = vunpack.c.l.b16 %v11586
    %v11933 = vunpack.c.h.b16 %v11586
    %v11934 = vunpack.c.l.b16 %v11587
    %v11935 = vunpack.c.h.b16 %v11587
    %v11936 = vunpack.c.l.b16 %v11588
    %v11937 = vunpack.c.h.b16 %v11588
    %v11938 = vunpack.c.l.b16 %v11589
    %v11939 = vunpack.c.h.b16 %v11589
    %v11940 = vunpack.c.l.b16 %v11590
    %v11941 = vunpack.c.h.b16 %v11590
    %v11942 = vunpack.c.l.b16 %v11591
    %v11943 = vunpack.c.h.b16 %v11591
    %v11944 = vunpack.c.l.b16 %v11592
    %v11945 = vunpack.c.h.b16 %v11592
    %v11946 = vunpack.c.l.b16 %v11593
    %v11947 = vunpack.c.h.b16 %v11593
    %v11948 = vunpack.c.l.b16 %v11594
    %v11949 = vunpack.c.h.b16 %v11594
    %v11950 = vunpack.c.l.b16 %v11595
    %v11951 = vunpack.c.h.b16 %v11595
    %v11952 = vunpack.c.l.b16 %v11596
    %v11953 = vunpack.c.h.b16 %v11596
    %v11954 = vunpack.c.l.b16 %v11597
    %v11955 = vunpack.c.h.b16 %v11597
    %v11956 = vunpack.c.l.b16 %v11598
    %v11957 = vunpack.c.h.b16 %v11598
    %v11958 = vunpack.c.l.b16 %v11599
    %v11959 = vunpack.c.h.b16 %v11599
    %v11960 = vunpack.c.l.b16 %v11600
    %v11961 = vunpack.c.h.b16 %v11600
    %v11962 = vunpack.c.l.b16 %v11601
    %v11963 = vunpack.c.h.b16 %v11601
    %v11964 = vunpack.c.l.b16 %v11602
    %v11965 = vunpack.c.h.b16 %v11602
    %v11966 = vunpack.c.l.b16 %v11603
    %v11967 = vunpack.c.h.b16 %v11603
    %v11968 = vunpack.c.l.b16 %v11604
    %v11969 = vunpack.c.h.b16 %v11604
    %v11970 = vunpack.c.l.b16 %v11605
    %v11971 = vunpack.c.h.b16 %v11605
    %v11972 = vunpack.c.l.b16 %v11606
    %v11973 = vunpack.c.h.b16 %v11606
    %v11974 = vunpack.c.l.b16 %v11607
    %v11975 = vunpack.c.h.b16 %v11607
    %v11976 = vunpack.c.l.b16 %v11608
    %v11977 = vunpack.c.h.b16 %v11608
    %v11978 = vunpack.c.l.b16 %v11609
    %v11979 = vunpack.c.h.b16 %v11609
    %v11980 = vunpack.c.l.b16 %v11610
    %v11981 = vunpack.c.h.b16 %v11610
    %v11982 = vunpack.c.l.b16 %v11611
    %v11983 = vunpack.c.h.b16 %v11611
    %v11984 = vunpack.c.l.b16 %v11612
    %v11985 = vunpack.c.h.b16 %v11612
    %v11986 = vunpack.c.l.b16 %v11613
    %v11987 = vunpack.c.h.b16 %v11613
    %v11988 = vunpack.c.l.b16 %v11614
    %v11989 = vunpack.c.h.b16 %v11614
    %v11990 = vunpack.c.l.b16 %v11615
    %v11991 = vunpack.c.h.b16 %v11615
    %v11992 = vunpack.c.l.b16 %v11616
    %v11993 = vunpack.c.h.b16 %v11616
    %v11994 = vunpack.c.l.b16 %v11617
    %v11995 = vunpack.c.h.b16 %v11617
    %v11996 = vunpack.c.l.b16 %v11618
    %v11997 = vunpack.c.h.b16 %v11618
    %v11998 = vunpack.c.l.b16 %v11619
    %v11999 = vunpack.c.h.b16 %v11619
    %v12000 = vunpack.c.l.b16 %v11620
    %v12001 = vunpack.c.h.b16 %v11620
    %v12002 = vunpack.c.l.b16 %v11621
    %v12003 = vunpack.c.h.b16 %v11621
    %v12004 = vunpack.c.l.b16 %v11622
    %v12005 = vunpack.c.h.b16 %v11622
    %v12006 = vunpack.c.l.b16 %v11623
    %v12007 = vunpack.c.h.b16 %v11623
    %v12008 = vunpack.c.l.b16 %v11624
    %v12009 = vunpack.c.h.b16 %v11624
    %v12010 = vunpack.c.l.b16 %v11625
    %v12011 = vunpack.c.h.b16 %v11625
    %v12012 = vunpack.c.l.b16 %v11626
    %v12013 = vunpack.c.h.b16 %v11626
    %v12014 = vunpack.c.l.b16 %v11627
    %v12015 = vunpack.c.h.b16 %v11627
    %v12016 = vunpack.c.l.b16 %v11628
    %v12017 = vunpack.c.h.b16 %v11628
    %v12018 = vunpack.c.l.b16 %v11629
    %v12019 = vunpack.c.h.b16 %v11629
    %v12020 = vunpack.c.l.b16 %v11630
    %v12021 = vunpack.c.h.b16 %v11630
    %v12022 = vunpack.c.l.b16 %v11631
    %v12023 = vunpack.c.h.b16 %v11631
    %v12024 = vunpack.c.l.b16 %v11632
    %v12025 = vunpack.c.h.b16 %v11632
    %v12026 = vunpack.c.l.b16 %v11633
    %v12027 = vunpack.c.h.b16 %v11633
    %v12028 = vunpack.c.l.b16 %v11634
    %v12029 = vunpack.c.h.b16 %v11634
    %v12030 = vunpack.c.l.b16 %v11635
    %v12031 = vunpack.c.h.b16 %v11635
    %v12032 = vpack.c.b16 %v11778, %v11776
    %v12033 = vpack.c.b16 %v11779, %v11777
    %v12034 = vpack.c.b16 %v11782, %v11780
    %v12035 = vpack.c.b16 %v11783, %v11781
    %v12036 = vpack.c.b16 %v11786, %v11784
    %v12037 = vpack.c.b16 %v11787, %v11785
    %v12038 = vpack.c.b16 %v11790, %v11788
    %v12039 = vpack.c.b16 %v11791, %v11789
    %v12040 = vpack.c.b16 %v11794, %v11792
    %v12041 = vpack.c.b16 %v11795, %v11793
    %v12042 = vpack.c.b16 %v11798, %v11796
    %v12043 = vpack.c.b16 %v11799, %v11797
    %v12044 = vpack.c.b16 %v11802, %v11800
    %v12045 = vpack.c.b16 %v11803, %v11801
    %v12046 = vpack.c.b16 %v11806, %v11804
    %v12047 = vpack.c.b16 %v11807, %v11805
    %v12048 = vpack.c.b16 %v11810, %v11808
    %v12049 = vpack.c.b16 %v11811, %v11809
    %v12050 = vpack.c.b16 %v11814, %v11812
    %v12051 = vpack.c.b16 %v11815, %v11813
    %v12052 = vpack.c.b16 %v11818, %v11816
    %v12053 = vpack.c.b16 %v11819, %v11817
    %v12054 = vpack.c.b16 %v11822, %v11820
    %v12055 = vpack.c.b16 %v11823, %v11821
    %v12056 = vpack.c.b16 %v11826, %v11824
    %v12057 = vpack.c.b16 %v11827, %v11825
    %v12058 = vpack.c.b16 %v11830, %v11828
    %v12059 = vpack.c.b16 %v11831, %v11829
    %v12060 = vpack.c.b16 %v11834, %v11832
    %v12061 = vpack.c.b16 %v11835, %v11833
    %v12062 = vpack.c.b16 %v11838, %v11836
    %v12063 = vpack.c.b16 %v11839, %v11837
    %v12064 = vpack.c.b16 %v11842, %v11840
    %v12065 = vpack.c.b16 %v11843, %v11841
    %v12066 = vpack.c.b16 %v11846, %v11844
    %v12067 = vpack.c.b16 %v11847, %v11845
    %v12068 = vpack.c.b16 %v11850, %v11848
    %v12069 = vpack.c.b16 %v11851, %v11849
    %v12070 = vpack.c.b16 %v11854, %v11852
    %v12071 = vpack.c.b16 %v11855, %v11853
    %v12072 = vpack.c.b16 %v11858, %v11856
    %v12073 = vpack.c.b16 %v11859, %v11857
    %v12074 = vpack.c.b16 %v11862, %v11860
    %v12075 = vpack.c.b16 %v11863, %v11861
    %v12076 = vpack.c.b16 %v11866, %v11864
    %v12077 = vpack.c.b16 %v11867, %v11865
    %v12078 = vpack.c.b16 %v11870, %v11868
    %v12079 = vpack.c.b16 %v11871, %v11869
    %v12080 = vpack.c.b16 %v11874, %v11872
    %v12081 = vpack.c.b16 %v11875, %v11873
    %v12082 = vpack.c.b16 %v11878, %v11876
    %v12083 = vpack.c.b16 %v11879, %v11877
    %v12084 = vpack.c.b16 %v11882, %v11880
    %v12085 = vpack.c.b16 %v11883, %v11881
    %v12086 = vpack.c.b16 %v11886, %v11884
    %v12087 = vpack.c.b16 %v11887, %v11885
    %v12088 = vpack.c.b16 %v11890, %v11888
    %v12089 = vpack.c.b16 %v11891, %v11889
    %v12090 = vpack.c.b16 %v11894, %v11892
    %v12091 = vpack.c.b16 %v11895, %v11893
    %v12092 = vpack.c.b16 %v11898, %v11896
    %v12093 = vpack.c.b16 %v11899, %v11897
    %v12094 = vpack.c.b16 %v11902, %v11900
    %v12095 = vpack.c.b16 %v11903, %v11901
    %v12096 = vpack.c.b16 %v11906, %v11904
    %v12097 = vpack.c.b16 %v11907, %v11905
    %v12098 = vpack.c.b16 %v11910, %v11908
    %v12099 = vpack.c.b16 %v11911, %v11909
    %v12100 = vpack.c.b16 %v11914, %v11912
    %v12101 = vpack.c.b16 %v11915, %v11913
    %v12102 = vpack.c.b16 %v11918, %v11916
    %v12103 = vpack.c.b16 %v11919, %v11917
    %v12104 = vpack.c.b16 %v11922, %v11920
    %v12105 = vpack.c.b16 %v11923, %v11921
    %v12106 = vpack.c.b16 %v11926, %v11924
    %v12107 = vpack.c.b16 %v11927, %v11925
    %v12108 = vpack.c.b16 %v11930, %v11928
    %v12109 = vpack.c.b16 %v11931, %v11929
    %v12110 = vpack.c.b16 %v11934, %v11932
    %v12111 = vpack.c.b16 %v11935, %v11933
    %v12112 = vpack.c.b16 %v11938, %v11936
    %v12113 = vpack.c.b16 %v11939, %v11937
    %v12114 = vpack.c.b16 %v11942, %v11940
    %v12115 = vpack.c.b16 %v11943, %v11941
    %v12116 = vpack.c.b16 %v11946, %v11944
    %v12117 = vpack.c.b16 %v11947, %v11945
    %v12118 = vpack.c.b16 %v11950, %v11948
    %v12119 = vpack.c.b16 %v11951, %v11949
    %v12120 = vpack.c.b16 %v11954, %v11952
    %v12121 = vpack.c.b16 %v11955, %v11953
    %v12122 = vpack.c.b16 %v11958, %v11956
    %v12123 = vpack.c.b16 %v11959, %v11957
    %v12124 = vpack.c.b16 %v11962, %v11960
    %v12125 = vpack.c.b16 %v11963, %v11961
    %v12126 = vpack.c.b16 %v11966, %v11964
    %v12127 = vpack.c.b16 %v11967, %v11965
    %v12128 = vpack.c.b16 %v11970, %v11968
    %v12129 = vpack.c.b16 %v11971, %v11969
    %v12130 = vpack.c.b16 %v11974, %v11972
    %v12131 = vpack.c.b16 %v11975, %v11973
    %v12132 = vpack.c.b16 %v11978, %v11976
    %v12133 = vpack.c.b16 %v11979, %v11977
    %v12134 = vpack.c.b16 %v11982, %v11980
    %v12135 = vpack.c.b16 %v11983, %v11981
    %v12136 = vpack.c.b16 %v11986, %v11984
    %v12137 = vpack.c.b16 %v11987, %v11985
    %v12138 = vpack.c.b16 %v11990, %v11988
    %v12139 = vpack.c.b16 %v11991, %v11989
    %v12140 = vpack.c.b16 %v11994, %v11992
    %v12141 = vpack.c.b16 %v11995, %v11993
    %v12142 = vpack.c.b16 %v11998, %v11996
    %v12143 = vpack.c.b16 %v11999, %v11997
    %v12144 = vpack.c.b16 %v12002, %v12000
    %v12145 = vpack.c.b16 %v12003, %v12001
    %v12146 = vpack.c.b16 %v12006, %v12004
    %v12147 = vpack.c.b16 %v12007, %v12005
    %v12148 = vpack.c.b16 %v12010, %v12008
    %v12149 = vpack.c.b16 %v12011, %v12009
    %v12150 = vpack.c.b16 %v12014, %v12012
    %v12151 = vpack.c.b16 %v12015, %v12013
    %v12152 = vpack.c.b16 %v12018, %v12016
    %v12153 = vpack.c.b16 %v12019, %v12017
    %v12154 = vpack.c.b16 %v12022, %v12020
    %v12155 = vpack.c.b16 %v12023, %v12021
    %v12156 = vpack.c.b16 %v12026, %v12024
    %v12157 = vpack.c.b16 %v12027, %v12025
    %v12158 = vpack.c.b16 %v12030, %v12028
    %v12159 = vpack.c.b16 %v12031, %v12029
    %12288 = vmatprep.subr.bf16.mxu0 %v12033
    %12289 = vmatpush1.bf16.msra.mxu0 %v12032
    %12290 = vmatprep.subr.bf16.mxu0 %v12035
    %12291 = vmatpush1.bf16.msra.mxu0 %v12034
    %12292 = vmatprep.subr.bf16.mxu0 %v12037
    %12293 = vmatpush1.bf16.msra.mxu0 %v12036
    %12294 = vmatprep.subr.bf16.mxu0 %v12039
    %12295 = vmatpush1.bf16.msra.mxu0 %v12038
    %12296 = vmatprep.subr.bf16.mxu0 %v12041
    %12297 = vmatpush1.bf16.msra.mxu0 %v12040
    %12298 = vmatprep.subr.bf16.mxu0 %v12043
    %12299 = vmatpush1.bf16.msra.mxu0 %v12042
    %12300 = vmatprep.subr.bf16.mxu0 %v12045
    %12301 = vmatpush1.bf16.msra.mxu0 %v12044
    %12302 = vmatprep.subr.bf16.mxu0 %v12047
    %12303 = vmatpush1.bf16.msra.mxu0 %v12046
    %12304 = vmatprep.subr.bf16.mxu0 %v12049
    %12305 = vmatpush1.bf16.msra.mxu0 %v12048
    %12306 = vmatprep.subr.bf16.mxu0 %v12051
    %12307 = vmatpush1.bf16.msra.mxu0 %v12050
    %12308 = vmatprep.subr.bf16.mxu0 %v12053
    %12309 = vmatpush1.bf16.msra.mxu0 %v12052
    %12310 = vmatprep.subr.bf16.mxu0 %v12055
    %12311 = vmatpush1.bf16.msra.mxu0 %v12054
    %12312 = vmatprep.subr.bf16.mxu0 %v12057
    %12313 = vmatpush1.bf16.msra.mxu0 %v12056
    %12314 = vmatprep.subr.bf16.mxu0 %v12059
    %12315 = vmatpush1.bf16.msra.mxu0 %v12058
    %12316 = vmatprep.subr.bf16.mxu0 %v12061
    %12317 = vmatpush1.bf16.msra.mxu0 %v12060
    %12318 = vmatprep.subr.bf16.mxu0 %v12063
    %12319 = vmatpush1.bf16.msra.mxu0 %v12062
    %12320 = vmatprep.mubr.bf16.mxu0 %v11501
    %12321 = vmatmul.mubr.bf16.gmra.mrb[0].mxu0 %v11500
    %v12322 = vpop.f32.mrb[0].mxu0
    %v12323 = vadd.f32 %v11641, %v12322
    %v12324 = vpop.f32.mrb[0].mxu0
    %v12325 = vadd.f32 %v11645, %v12324
    %v12326 = vpop.f32.mrb[0].mxu0
    %v12327 = vpop.f32.mrb[0].mxu0
    %12328 = vdwg.mxu0
    %12329 = vmatprep.subr.bf16.mxu0 %v12065
    %12330 = vmatpush1.bf16.msra.mxu0 %v12064
    %12331 = vmatprep.subr.bf16.mxu0 %v12067
    %12332 = vmatpush1.bf16.msra.mxu0 %v12066
    %12333 = vmatprep.subr.bf16.mxu0 %v12069
    %12334 = vmatpush1.bf16.msra.mxu0 %v12068
    %12335 = vmatprep.subr.bf16.mxu0 %v12071
    %12336 = vmatpush1.bf16.msra.mxu0 %v12070
    %12337 = vmatprep.subr.bf16.mxu0 %v12073
    %12338 = vmatpush1.bf16.msra.mxu0 %v12072
    %12339 = vmatprep.subr.bf16.mxu0 %v12075
    %12340 = vmatpush1.bf16.msra.mxu0 %v12074
    %12341 = vmatprep.subr.bf16.mxu0 %v12077
    %12342 = vmatpush1.bf16.msra.mxu0 %v12076
    %12343 = vmatprep.subr.bf16.mxu0 %v12079
    %12344 = vmatpush1.bf16.msra.mxu0 %v12078
    %12345 = vmatprep.subr.bf16.mxu0 %v12081
    %12346 = vmatpush1.bf16.msra.mxu0 %v12080
    %12347 = vmatprep.subr.bf16.mxu0 %v12083
    %12348 = vmatpush1.bf16.msra.mxu0 %v12082
    %12349 = vmatprep.subr.bf16.mxu0 %v12085
    %12350 = vmatpush1.bf16.msra.mxu0 %v12084
    %12351 = vmatprep.subr.bf16.mxu0 %v12087
    %12352 = vmatpush1.bf16.msra.mxu0 %v12086
    %12353 = vmatprep.subr.bf16.mxu0 %v12089
    %12354 = vmatpush1.bf16.msra.mxu0 %v12088
    %12355 = vmatprep.subr.bf16.mxu0 %v12091
    %12356 = vmatpush1.bf16.msra.mxu0 %v12090
    %12357 = vmatprep.subr.bf16.mxu0 %v12093
    %12358 = vmatpush1.bf16.msra.mxu0 %v12092
    %12359 = vmatprep.subr.bf16.mxu0 %v12095
    %12360 = vmatpush1.bf16.msra.mxu0 %v12094
    %12361 = vmatprep.mubr.bf16.mxu0 %v11503
    %12362 = vmatmul.mubr.bf16.gmra.mrb[0].mxu0 %v11502
    %v12363 = vpop.f32.mrb[0].mxu0
    %v12364 = vadd.f32 %v12323, %v12363
    %v12365 = vpop.f32.mrb[0].mxu0
    %v12366 = vadd.f32 %v12325, %v12365
    %v12367 = vpop.f32.mrb[0].mxu0
    %v12368 = vpop.f32.mrb[0].mxu0
    %12369 = vdwg.mxu0
    %12370 = vmatprep.subr.bf16.mxu0 %v12097
    %12371 = vmatpush1.bf16.msra.mxu0 %v12096
    %12372 = vmatprep.subr.bf16.mxu0 %v12099
    %12373 = vmatpush1.bf16.msra.mxu0 %v12098
    %12374 = vmatprep.subr.bf16.mxu0 %v12101
    %12375 = vmatpush1.bf16.msra.mxu0 %v12100
    %12376 = vmatprep.subr.bf16.mxu0 %v12103
    %12377 = vmatpush1.bf16.msra.mxu0 %v12102
    %12378 = vmatprep.subr.bf16.mxu0 %v12105
    %12379 = vmatpush1.bf16.msra.mxu0 %v12104
    %12380 = vmatprep.subr.bf16.mxu0 %v12107
    %12381 = vmatpush1.bf16.msra.mxu0 %v12106
    %12382 = vmatprep.subr.bf16.mxu0 %v12109
    %12383 = vmatpush1.bf16.msra.mxu0 %v12108
    %12384 = vmatprep.subr.bf16.mxu0 %v12111
    %12385 = vmatpush1.bf16.msra.mxu0 %v12110
    %12386 = vmatprep.subr.bf16.mxu0 %v12113
    %12387 = vmatpush1.bf16.msra.mxu0 %v12112
    %12388 = vmatprep.subr.bf16.mxu0 %v12115
    %12389 = vmatpush1.bf16.msra.mxu0 %v12114
    %12390 = vmatprep.subr.bf16.mxu0 %v12117
    %12391 = vmatpush1.bf16.msra.mxu0 %v12116
    %12392 = vmatprep.subr.bf16.mxu0 %v12119
    %12393 = vmatpush1.bf16.msra.mxu0 %v12118
    %12394 = vmatprep.subr.bf16.mxu0 %v12121
    %12395 = vmatpush1.bf16.msra.mxu0 %v12120
    %12396 = vmatprep.subr.bf16.mxu0 %v12123
    %12397 = vmatpush1.bf16.msra.mxu0 %v12122
    %12398 = vmatprep.subr.bf16.mxu0 %v12125
    %12399 = vmatpush1.bf16.msra.mxu0 %v12124
    %12400 = vmatprep.subr.bf16.mxu0 %v12127
    %12401 = vmatpush1.bf16.msra.mxu0 %v12126
    %12402 = vmatprep.mubr.bf16.mxu0 %v11505
    %12403 = vmatmul.mubr.bf16.gmra.mrb[0].mxu0 %v11504
    %v12404 = vpop.f32.mrb[0].mxu0
    %v12405 = vadd.f32 %v12364, %v12404
    %v12406 = vpop.f32.mrb[0].mxu0
    %v12407 = vadd.f32 %v12366, %v12406
    %v12408 = vpop.f32.mrb[0].mxu0
    %v12409 = vpop.f32.mrb[0].mxu0
    %12410 = vdwg.mxu0
    %12411 = vmatprep.subr.bf16.mxu0 %v12129
    %12412 = vmatpush1.bf16.msra.mxu0 %v12128
    %12413 = vmatprep.subr.bf16.mxu0 %v12131
    %12414 = vmatpush1.bf16.msra.mxu0 %v12130
    %12415 = vmatprep.subr.bf16.mxu0 %v12133
    %12416 = vmatpush1.bf16.msra.mxu0 %v12132
    %12417 = vmatprep.subr.bf16.mxu0 %v12135
    %12418 = vmatpush1.bf16.msra.mxu0 %v12134
    %12419 = vmatprep.subr.bf16.mxu0 %v12137
    %12420 = vmatpush1.bf16.msra.mxu0 %v12136
    %12421 = vmatprep.subr.bf16.mxu0 %v12139
    %12422 = vmatpush1.bf16.msra.mxu0 %v12138
    %12423 = vmatprep.subr.bf16.mxu0 %v12141
    %12424 = vmatpush1.bf16.msra.mxu0 %v12140
    %12425 = vmatprep.subr.bf16.mxu0 %v12143
    %12426 = vmatpush1.bf16.msra.mxu0 %v12142
    %12427 = vmatprep.subr.bf16.mxu0 %v12145
    %12428 = vmatpush1.bf16.msra.mxu0 %v12144
    %12429 = vmatprep.subr.bf16.mxu0 %v12147
    %12430 = vmatpush1.bf16.msra.mxu0 %v12146
    %12431 = vmatprep.subr.bf16.mxu0 %v12149
    %12432 = vmatpush1.bf16.msra.mxu0 %v12148
    %12433 = vmatprep.subr.bf16.mxu0 %v12151
    %12434 = vmatpush1.bf16.msra.mxu0 %v12150
    %12435 = vmatprep.subr.bf16.mxu0 %v12153
    %12436 = vmatpush1.bf16.msra.mxu0 %v12152
    %12437 = vmatprep.subr.bf16.mxu0 %v12155
    %12438 = vmatpush1.bf16.msra.mxu0 %v12154
    %12439 = vmatprep.subr.bf16.mxu0 %v12157
    %12440 = vmatpush1.bf16.msra.mxu0 %v12156
    %12441 = vmatprep.subr.bf16.mxu0 %v12159
    %12442 = vmatpush1.bf16.msra.mxu0 %v12158
    %12443 = vmatprep.mubr.bf16.mxu0 %v11507
    %12444 = vmatmul.mubr.bf16.gmra.mrb[0].mxu0 %v11506
    %v12445 = vpop.f32.mrb[0].mxu0
    %v12446 = vadd.f32 %v12405, %v12445
    %v12447 = vpop.f32.mrb[0].mxu0
    %v12448 = vadd.f32 %v12407, %v12447
    %v12449 = vpop.f32.mrb[0].mxu0
    %v12450 = vpop.f32.mrb[0].mxu0
    %12451 = vdwg.mxu0
    %v12452 = vmax.f32 %v12446, 0.0
    %v12453 = vmax.f32 %v12448, 0.0
    %v12454 = vpack.c.bf16 %v12452, %v12452
    %v12455 = vpack.c.bf16 %v12453, %v12453
    %v12456 = vld [vmem:[#allocation10] sm:$0xf]
    %v12457 = vld [vmem:[#allocation10 + $0x4] sm:$0xf]
    %v12458 = vld [vmem:[#allocation10 + $0x8] sm:$0xf]
    %v12459 = vld [vmem:[#allocation10 + $0xc] sm:$0xf]
    %v12460 = vld [vmem:[#allocation10 + $0x10] sm:$0xf]
    %v12461 = vld [vmem:[#allocation10 + $0x14] sm:$0xf]
    %v12462 = vld [vmem:[#allocation10 + $0x18] sm:$0xf]
    %v12463 = vld [vmem:[#allocation10 + $0x1c] sm:$0xf]
    %v12464 = vld [vmem:[#allocation10 + $0x20] sm:$0xf]
    %v12465 = vld [vmem:[#allocation10 + $0x24] sm:$0xf]
    %v12466 = vld [vmem:[#allocation10 + $0x28] sm:$0xf]
    %v12467 = vld [vmem:[#allocation10 + $0x2c] sm:$0xf]
    %v12468 = vld [vmem:[#allocation10 + $0x30] sm:$0xf]
    %v12469 = vld [vmem:[#allocation10 + $0x34] sm:$0xf]
    %v12470 = vld [vmem:[#allocation10 + $0x38] sm:$0xf]
    %v12471 = vld [vmem:[#allocation10 + $0x3c] sm:$0xf]
    %v12472 = vld [vmem:[#allocation10 + $0x40] sm:$0xf]
    %v12473 = vld [vmem:[#allocation10 + $0x44] sm:$0xf]
    %v12474 = vld [vmem:[#allocation10 + $0x48] sm:$0xf]
    %v12475 = vld [vmem:[#allocation10 + $0x4c] sm:$0xf]
    %v12476 = vld [vmem:[#allocation10 + $0x50] sm:$0xf]
    %v12477 = vld [vmem:[#allocation10 + $0x54] sm:$0xf]
    %v12478 = vld [vmem:[#allocation10 + $0x58] sm:$0xf]
    %v12479 = vld [vmem:[#allocation10 + $0x5c] sm:$0xf]
    %v12480 = vld [vmem:[#allocation10 + $0x60] sm:$0xf]
    %v12481 = vld [vmem:[#allocation10 + $0x64] sm:$0xf]
    %v12482 = vld [vmem:[#allocation10 + $0x68] sm:$0xf]
    %v12483 = vld [vmem:[#allocation10 + $0x6c] sm:$0xf]
    %v12484 = vld [vmem:[#allocation10 + $0x70] sm:$0xf]
    %v12485 = vld [vmem:[#allocation10 + $0x74] sm:$0xf]
    %v12486 = vld [vmem:[#allocation10 + $0x78] sm:$0xf]
    %v12487 = vld [vmem:[#allocation10 + $0x7c] sm:$0xf]
    %v12488 = vld [vmem:[#allocation11] sm:$0x1]
    %v12490 = vlaneseq
    %v12491 = vshrl.u32 %v12490, 7
    %v12492 = vsub.s32 0, %v12491
    %v12493 = vrot.slane %v12488, %v12492
    %v12527 = vunpack.c.l.b16 %v12456
    %v12528 = vunpack.c.l.b16 %v12457
    %v12529 = vunpack.c.l.b16 %v12458
    %v12530 = vunpack.c.l.b16 %v12459
    %v12531 = vunpack.c.l.b16 %v12460
    %v12532 = vunpack.c.l.b16 %v12461
    %v12533 = vunpack.c.l.b16 %v12462
    %v12534 = vunpack.c.l.b16 %v12463
    %v12535 = vunpack.c.l.b16 %v12464
    %v12536 = vunpack.c.l.b16 %v12465
    %v12537 = vunpack.c.l.b16 %v12466
    %v12538 = vunpack.c.l.b16 %v12467
    %v12539 = vunpack.c.l.b16 %v12468
    %v12540 = vunpack.c.l.b16 %v12469
    %v12541 = vunpack.c.l.b16 %v12470
    %v12542 = vunpack.c.l.b16 %v12471
    %v12543 = vunpack.c.l.b16 %v12472
    %v12544 = vunpack.c.l.b16 %v12473
    %v12545 = vunpack.c.l.b16 %v12474
    %v12546 = vunpack.c.l.b16 %v12475
    %v12547 = vunpack.c.l.b16 %v12476
    %v12548 = vunpack.c.l.b16 %v12477
    %v12549 = vunpack.c.l.b16 %v12478
    %v12550 = vunpack.c.l.b16 %v12479
    %v12551 = vunpack.c.l.b16 %v12480
    %v12552 = vunpack.c.l.b16 %v12481
    %v12553 = vunpack.c.l.b16 %v12482
    %v12554 = vunpack.c.l.b16 %v12483
    %v12555 = vunpack.c.l.b16 %v12484
    %v12556 = vunpack.c.l.b16 %v12485
    %v12557 = vunpack.c.l.b16 %v12486
    %v12558 = vunpack.c.l.b16 %v12487
    %v12559 = vpack.c.b16 %v12528, %v12527
    %v12560 = vpack.c.b16 %v12530, %v12529
    %v12561 = vpack.c.b16 %v12532, %v12531
    %v12562 = vpack.c.b16 %v12534, %v12533
    %v12563 = vpack.c.b16 %v12536, %v12535
    %v12564 = vpack.c.b16 %v12538, %v12537
    %v12565 = vpack.c.b16 %v12540, %v12539
    %v12566 = vpack.c.b16 %v12542, %v12541
    %v12567 = vpack.c.b16 %v12544, %v12543
    %v12568 = vpack.c.b16 %v12546, %v12545
    %v12569 = vpack.c.b16 %v12548, %v12547
    %v12570 = vpack.c.b16 %v12550, %v12549
    %v12571 = vpack.c.b16 %v12552, %v12551
    %v12572 = vpack.c.b16 %v12554, %v12553
    %v12573 = vpack.c.b16 %v12556, %v12555
    %v12574 = vpack.c.b16 %v12558, %v12557
    %12591 = vmatprep.subr.bf16.mxu0 0
    %12592 = vmatpush1.bf16.msra.mxu0 %v12559
    %12593 = vmatprep.subr.bf16.mxu0 0
    %12594 = vmatpush1.bf16.msra.mxu0 %v12560
    %12595 = vmatprep.subr.bf16.mxu0 0
    %12596 = vmatpush1.bf16.msra.mxu0 %v12561
    %12597 = vmatprep.subr.bf16.mxu0 0
    %12598 = vmatpush1.bf16.msra.mxu0 %v12562
    %12599 = vmatprep.subr.bf16.mxu0 0
    %12600 = vmatpush1.bf16.msra.mxu0 %v12563
    %12601 = vmatprep.subr.bf16.mxu0 0
    %12602 = vmatpush1.bf16.msra.mxu0 %v12564
    %12603 = vmatprep.subr.bf16.mxu0 0
    %12604 = vmatpush1.bf16.msra.mxu0 %v12565
    %12605 = vmatprep.subr.bf16.mxu0 0
    %12606 = vmatpush1.bf16.msra.mxu0 %v12566
    %12607 = vmatprep.subr.bf16.mxu0 0
    %12608 = vmatpush1.bf16.msra.mxu0 %v12567
    %12609 = vmatprep.subr.bf16.mxu0 0
    %12610 = vmatpush1.bf16.msra.mxu0 %v12568
    %12611 = vmatprep.subr.bf16.mxu0 0
    %12612 = vmatpush1.bf16.msra.mxu0 %v12569
    %12613 = vmatprep.subr.bf16.mxu0 0
    %12614 = vmatpush1.bf16.msra.mxu0 %v12570
    %12615 = vmatprep.subr.bf16.mxu0 0
    %12616 = vmatpush1.bf16.msra.mxu0 %v12571
    %12617 = vmatprep.subr.bf16.mxu0 0
    %12618 = vmatpush1.bf16.msra.mxu0 %v12572
    %12619 = vmatprep.subr.bf16.mxu0 0
    %12620 = vmatpush1.bf16.msra.mxu0 %v12573
    %12621 = vmatprep.subr.bf16.mxu0 0
    %12622 = vmatpush1.bf16.msra.mxu0 %v12574
    %12623 = vmatprep.mubr.bf16.mxu0 %v12455
    %12624 = vmatmul.mubr.bf16.gmra.mrb[0].mxu0 %v12454
    %v12625 = vpop.f32.mrb[0].mxu0
    %v12626 = vadd.f32 %v12493, %v12625
    %v12627 = vpop.f32.mrb[0].mxu0
    %v12628 = vpop.f32.mrb[0].mxu0
    %v12629 = vpop.f32.mrb[0].mxu0
    %12630 = vdwg.mxu0
    %vm12631 = vcmask 1041408
    %v12632 = vsel %vm12631, %v12626, -inf
    %v12633 = vrot.slane %v12632, 4
    %v12634 = vmax.f32 %v12632, %v12633
    %v12635 = vrot.slane %v12634, 2
    %v12636 = vmax.f32 %v12634, %v12635
    %v12637 = vrot.slane %v12636, 1
    %v12638 = vmax.f32 %v12636, %v12637
    %v12639 = vsub.f32 %v12626, %v12638
    %v12640 = vmul.f32 %v12639, 1.442695
    %v12641 = vpow.pop %v12640
    %v12642 = vsel %vm12631, %v12641, 0.0
    %v12643 = vrot.slane %v12642, 4
    %v12644 = vadd.f32 %v12642, %v12643
    %v12645 = vrot.slane %v12644, 2
    %v12646 = vadd.f32 %v12644, %v12645
    %v12647 = vrot.slane %v12646, 1
    %v12648 = vadd.f32 %v12646, %v12647
    %v12649 = vlog2.pop %v12648
    %v12650 = vmul.f32 %v12649, 0.6931472
    %v12651 = vsub.f32 %v12639, %v12650
    %vm12652 = vcmask 132096
    %12653 = vst.msk [vmem:[#allocation13] sm:$0x3] %vm12652, %v12651
    // Predicated region
    $region54: #{net_forward.1} parent=1 // pred_check
      _
    $region55: #{net_forward.1} parent=1 // pred_check_branch
      %12655 = sbr.rel (0) target = $region57
    $region56: #{net_forward.1} parent=1 // pred_region
      %s12657 = ssub.s32 32, 32
      %12658 = vsyncadd [#allocation4], %s12657
      %s12660 = sshll.u32 [#allocation13], 4
      %s12661 = int_to_ptr.vmem [resolvable:$true] %s12660
      %12663 = dma.vmem_to_hbm [thread:$0]  %s12661, 32, %s7, [#allocation4]
    $region57: #{net_forward.1} parent=1 // pred_fallthru
      _
    // Predicated region
    $region58: #{net_forward.1} parent=1 // pred_check
      _
    $region59: #{net_forward.1} parent=1 // pred_check_branch
      %12665 = sbr.rel (0) target = $region61
    $region60: #{net_forward.1} parent=1 // pred_region
      %12666 = dma.done [#allocation4], 32
    $region61: #{net_forward.1} parent=1 // pred_fallthru
      _
    %12667 = vsyncpa [#allocation3], 1
    %12668 = vsyncpa [#allocation6], 1
    %12669 = vsyncpa [#allocation9], 1
    %12670 = vsyncpa [#allocation12], 1
    %12671 = vsyncpa [#allocation4], 1

</llo_original>
